<compile_context>
chip_gen: v7x
topology: tpu7x:2x2x1
jax: 0.10.0
libtpu: 0.0.40
codegen_flags: <defaults>
</compile_context>

<pallas_src>
import numpy as np
import jax
import jax.numpy as jnp
from jax.experimental import pallas as pl
from jax.experimental.pallas import tpu as pltpu

# ----- Decoder geometry (fixed by the PyTorch module: view(-1, 64, 161, 3)) -----
H0, W0, C0 = 161, 3, 64        # conv-stack input spatial/channels
F_IN = W0 * C0                 # 192  folded (width, channel) feature dim
F1 = 3 * 32                    # 96   convt1 real folded features (W=3,  C=32)
F2 = 2 * 6 * 16                # 192  convt2 real folded features (2 rows packed)
F1P = 128                      # lane-dense padded F1
F2P = 256                      # lane-dense padded F2
F3 = 4 * 12 * 1                # 48   convt3 output, 4 rows packed  (W=12, C=1)
N_COLS = C0 * H0 * W0          # 30912 = linear4 fan-out
H_PAD = 168                    # 161 folded rows padded to a multiple of 8
N_PAD = H_PAD * F_IN           # 32256 = 252 * 128


def _pick_linear_steps():
    """2 big column tiles on single-TC chips (v5e/v6e); 4 on v7x so both
    TensorCores still get >=2 'parallel' steps each."""
    try:
        kind = jax.devices()[0].device_kind.lower()
    except Exception:
        kind = ""
    return 4 if "v7" in kind else 2


LIN_STEPS = _pick_linear_steps()
TN = N_PAD // LIN_STEPS        # 16128 (2 steps) or 8064 (4 steps); both %128==0


# =========================== Kernel 1: linear stage ===========================
def _linear_stage_kernel(emb_ref, w3_ref, b3_ref, w4q_ref, s4_ref, b4_ref, o_ref):
    # h = relu(emb @ W3 + b3): tiny, recomputed per step (hidden under W4 DMA).
    h = jnp.dot(emb_ref[...], w3_ref[...], preferred_element_type=jnp.float32)
    h = jnp.maximum(h + b3_ref[...], 0.0).astype(jnp.bfloat16)
    # int8 W4 tile -> bf16 on the VPU (free; kernel is HBM-bound), MXU dot with
    # f32 accumulation, per-column dequant scale folded in after the matmul.
    w = w4q_ref[...].astype(jnp.bfloat16)
    acc = jnp.dot(h, w, preferred_element_type=jnp.float32)
    y = jnp.maximum(acc * s4_ref[...] + b4_ref[...], 0.0)
    o_ref[...] = y.astype(jnp.bfloat16)


def _linear_stage(emb, w3, b3, w4q, w4s, b4):
    B, E = emb.shape
    return pl.pallas_call(
        _linear_stage_kernel,
        out_shape=jax.ShapeDtypeStruct((B, N_PAD), jnp.bfloat16),
        grid=(LIN_STEPS,),
        in_specs=[
            pl.BlockSpec((B, E), lambda j: (0, 0)),      # embeddings (resident)
            pl.BlockSpec((E, 128), lambda j: (0, 0)),    # W3 (resident)
            pl.BlockSpec((1, 128), lambda j: (0, 0)),    # b3
            pl.BlockSpec((128, TN), lambda j: (0, j)),   # W4 column tile (int8)
            pl.BlockSpec((1, TN), lambda j: (0, j)),     # per-column scale
            pl.BlockSpec((1, TN), lambda j: (0, j)),     # b4 tile
        ],
        out_specs=pl.BlockSpec((B, TN), lambda j: (0, j)),
        compiler_params=pltpu.CompilerParams(
            dimension_semantics=("parallel",),
            vmem_limit_bytes=32 * 1024 * 1024),
    )(emb, w3, b3, w4q, w4s, b4)


# ======================= Kernel 2: fused ConvTranspose stack ===================
def _conv_stack_kernel(x_ref, l1w_ref, l1b_ref, l2w_ref, l2b_ref,
                       l3w_ref, l3b_ref, o_ref, x_s, a1_s, a2_s):
    f32 = jnp.float32
    # Build the zero-boundary-padded activation in VMEM (no host-side pad op):
    #   x_s[0]       = 0            (x[-1] top boundary)
    #   x_s[1..162]  = x[0..161]    (x[161] is already exactly 0: pad columns of
    #                                W4 are zero-weight/zero-bias -> relu(0)=0)
    x_s[0:1, :] = jnp.zeros((1, F_IN), f32)
    x_s[1:H0 + 2, :] = x_ref[0, 0:H0 + 1, :].astype(f32)

    # --- convt1 (64->32, s=1, p=1): three height taps.
    #     out1[h] = x[h+1]@M0 + x[h]@M1 + x[h-1]@M2 + b
    a1 = jnp.dot(x_s[2:H0 + 2, :], l1w_ref[0], preferred_element_type=f32)
    a1 = a1 + jnp.dot(x_s[1:H0 + 1, :], l1w_ref[1], preferred_element_type=f32)
    a1 = a1 + jnp.dot(x_s[0:H0, :], l1w_ref[2], preferred_element_type=f32)
    a1_s[0:H0, :] = jnp.maximum(a1 + l1b_ref[...], 0.0)
    a1_s[H0:H0 + 1, :] = jnp.zeros((1, F1P), f32)          # boundary row := 0

    # --- convt2 (32->16, s=2, p=1, op=1): even/odd output rows packed.
    #     A2[m] = a1[m] @ R + a1[m+1] @ S + b2
    a2 = jnp.dot(a1_s[0:H0, :], l2w_ref[0], preferred_element_type=f32)
    a2 = a2 + jnp.dot(a1_s[1:H0 + 1, :], l2w_ref[1], preferred_element_type=f32)
    a2_s[0:H0, :] = jnp.maximum(a2 + l2b_ref[...], 0.0)
    a2_s[H0:H0 + 1, :] = jnp.zeros((1, F2P), f32)

    # --- convt3 (16->1, s=2, p=1, op=1): four output rows packed, tanh.
    #     A3[m] = A2[m] @ P + A2[m+1] @ Q + b3
    a3 = jnp.dot(a2_s[0:H0, :], l3w_ref[0], preferred_element_type=f32)
    a3 = a3 + jnp.dot(a2_s[1:H0 + 1, :], l3w_ref[1], preferred_element_type=f32)
    o_ref[0, :, :] = jnp.tanh(a3 + l3b_ref[...])


def _conv_stage(x, cw1, cb1, cw2, cb2, cw3, cb3):
    B = x.shape[0]
    return pl.pallas_call(
        _conv_stack_kernel,
        out_shape=jax.ShapeDtypeStruct((B, H0, F3), jnp.float32),
        grid=(B,),
        in_specs=[
            pl.BlockSpec((1, H_PAD, F_IN), lambda b: (b, 0, 0)),  # folded x (bf16)
            pl.BlockSpec((3, F_IN, F1P), lambda b: (0, 0, 0)),    # convt1 taps
            pl.BlockSpec((1, F1P), lambda b: (0, 0)),
            pl.BlockSpec((2, F1P, F2P), lambda b: (0, 0, 0)),     # convt2 R,S
            pl.BlockSpec((1, F2P), lambda b: (0, 0)),
            pl.BlockSpec((2, F2P, F3), lambda b: (0, 0, 0)),      # convt3 P,Q
            pl.BlockSpec((1, F3), lambda b: (0, 0)),
        ],
        out_specs=pl.BlockSpec((1, H0, F3), lambda b: (b, 0, 0)),
        scratch_shapes=[pltpu.VMEM((H0 + 2, F_IN), jnp.float32),
                        pltpu.VMEM((H0 + 1, F1P), jnp.float32),
                        pltpu.VMEM((H0 + 1, F2P), jnp.float32)],
        compiler_params=pltpu.CompilerParams(
            dimension_semantics=("parallel",)),
    )(x, cw1, cb1, cw2, cb2, cw3, cb3)


# ============================ parameter preparation ============================
def _quantize_cols(w):
    """Per-column symmetric int8 quantization (numpy, one-time)."""
    amax = np.max(np.abs(w), axis=0)
    scale = np.where(amax > 0.0, amax / 127.0, 1.0).astype(np.float32)
    q = np.clip(np.rint(w / scale[None, :]), -127.0, 127.0).astype(np.int8)
    return q, scale


def _fold_convt_weight(wt, stride, padding, w_in, w_out):
    """ConvTranspose2d weight (Cin,Cout,kh,kw) -> per-height-tap dense matrices
    (kh, W_in*Cin, W_out*Cout) acting on width&channel-folded feature rows."""
    cin, cout, k_h, k_w = wt.shape
    m = np.zeros((k_h, w_in * cin, w_out * cout), np.float32)
    for kh in range(k_h):
        for wi in range(w_in):
            for kw in range(k_w):
                wo = wi * stride - padding + kw
                if 0 <= wo < w_out:
                    m[kh, wi * cin:(wi + 1) * cin,
                      wo * cout:(wo + 1) * cout] = wt[:, :, kh, kw]
    return m


def prepare_params(params):
    """One-time repack of PyTorch-layout parameters (outside the hot path)."""
    w4 = np.asarray(params["w4"], np.float32)            # (128, 30912)
    b4 = np.asarray(params["b4"], np.float32)
    # Permute linear4 columns from (c,h,w) to (h,w,c) so the linear stage emits
    # the conv input already in folded-NHWC order (no activation transpose),
    # padded to H_PAD*192 columns so the wrapper reshape is a free bitcast.
    hh = np.arange(H0)[:, None, None]
    ww = np.arange(W0)[None, :, None]
    cc = np.arange(C0)[None, None, :]
    perm = (cc * (H0 * W0) + hh * W0 + ww).reshape(-1)
    w4p = np.zeros((w4.shape[0], N_PAD), np.float32)
    b4p = np.zeros((N_PAD,), np.float32)
    w4p[:, :N_COLS] = w4[:, perm]
    b4p[:N_COLS] = b4[perm]
    w4q, w4s = _quantize_cols(w4p)                        # int8 + per-column scale

    wt1 = np.asarray(params["wt1"], np.float32)
    wt2 = np.asarray(params["wt2"], np.float32)
    wt3 = np.asarray(params["wt3"], np.float32)
    bt1 = np.asarray(params["bt1"], np.float32)
    bt2 = np.asarray(params["bt2"], np.float32)
    bt3 = np.asarray(params["bt3"], np.float32)

    m1 = _fold_convt_weight(wt1, stride=1, padding=1, w_in=3, w_out=3)   # (3,192,96)
    m2 = _fold_convt_weight(wt2, stride=2, padding=1, w_in=3, w_out=6)   # (3,96,96)
    m3 = _fold_convt_weight(wt3, stride=2, padding=1, w_in=6, w_out=12)  # (3,96,12)

    # convt1:  out1[h] = x[h+1]@m1[0] + x[h]@m1[1] + x[h-1]@m1[2] + b1
    cw1 = np.zeros((3, F_IN, F1P), np.float32)
    cw1[:, :, :F1] = m1
    cb1 = np.zeros((1, F1P), np.float32)
    cb1[0, :F1] = np.tile(bt1, 3)

    # convt2 (stride 2), output rows packed in pairs:
    #   A2[m] = a1[m] @ [m2[1]|m2[2]]  +  a1[m+1] @ [0|m2[0]]  +  [b|b]
    r2 = np.concatenate([m2[1], m2[2]], axis=1)
    s2 = np.concatenate([np.zeros_like(m2[0]), m2[0]], axis=1)
    cw2 = np.zeros((2, F1P, F2P), np.float32)
    cw2[0, :F1, :F2] = r2
    cw2[1, :F1, :F2] = s2
    cb2 = np.zeros((1, F2P), np.float32)
    cb2[0, :F2] = np.tile(bt2, 12)

    # convt3 (stride 2) consumes pair-packed rows, emits 4-row packs:
    n0, n1, n2 = m3[0], m3[1], m3[2]
    p3 = np.zeros((F2P, F3), np.float32)
    q3 = np.zeros((F2P, F3), np.float32)
    p3[0:96, 0:12] = n1            # z[4m]   <- y[2m]   @ N1
    p3[0:96, 12:24] = n2           # z[4m+1] <- y[2m]   @ N2
    p3[96:192, 12:24] = n0         # z[4m+1] <- y[2m+1] @ N0
    p3[96:192, 24:36] = n1         # z[4m+2] <- y[2m+1] @ N1
    p3[96:192, 36:48] = n2         # z[4m+3] <- y[2m+1] @ N2
    q3[0:96, 36:48] = n0           # z[4m+3] <- y[2m+2] @ N0
    cw3 = np.stack([p3, q3])                                             # (2,256,48)
    cb3 = np.tile(bt3, 48)[None, :]                                      # (1,48)

    return {
        "w3": jnp.asarray(params["w3"], jnp.float32),
        "b3": jnp.asarray(params["b3"], jnp.float32)[None, :],
        "w4q": jnp.asarray(w4q, jnp.int8),                # int8 W4 stream
        "w4s": jnp.asarray(w4s, jnp.float32)[None, :],    # per-column scales
        "b4": jnp.asarray(b4p, jnp.float32)[None, :],
        "cw1": jnp.asarray(cw1), "cb1": jnp.asarray(cb1),
        "cw2": jnp.asarray(cw2), "cb2": jnp.asarray(cb2),
        "cw3": jnp.asarray(cw3), "cb3": jnp.asarray(cb3),
    }


# ================================ forward pass =================================
@jax.jit
def decoder_forward(prep, emb):
    B = emb.shape[0]
    lin = _linear_stage(emb, prep["w3"], prep["b3"],
                        prep["w4q"], prep["w4s"], prep["b4"])   # (B, N_PAD) bf16
    x = lin.reshape(B, H_PAD, F_IN)                 # contiguous -> free bitcast
    pk = _conv_stage(x, prep["cw1"], prep["cb1"], prep["cw2"], prep["cb2"],
                     prep["cw3"], prep["cb3"])
    return pk.reshape(B, 1, 4 * H0, 12)             # (B,1,644,12) NCHW, free reshape


def init_decoder_params(key, embedding_dim):
    ks = jax.random.split(key, 10)
    s = 0.05
    f32 = jnp.float32
    return {
        "w3": jax.random.normal(ks[0], (embedding_dim, 128), f32) * s,
        "b3": jax.random.normal(ks[1], (128,), f32) * s,
        "w4": jax.random.normal(ks[2], (128, 64 * 161 * 3), f32) * s,
        "b4": jax.random.normal(ks[3], (64 * 161 * 3,), f32) * s,
        "wt1": jax.random.normal(ks[4], (64, 32, 3, 3), f32) * s,
        "bt1": jax.random.normal(ks[5], (32,), f32) * s,
        "wt2": jax.random.normal(ks[6], (32, 16, 3, 3), f32) * s,
        "bt2": jax.random.normal(ks[7], (16,), f32) * s,
        "wt3": jax.random.normal(ks[8], (16, 1, 3, 3), f32) * s,
        "bt3": jax.random.normal(ks[9], (1,), f32) * s,
    }


# ===================== pure-JAX reference (PyTorch semantics) ==================
def _ref_conv_transpose2d(x, w, b, stride, padding, output_padding):
    B, Cin, H, W = x.shape
    _, Cout, k, _ = w.shape
    Hd = (H - 1) * stride + 1
    Wd = (W - 1) * stride + 1
    xd = jnp.zeros((B, Cin, Hd, Wd), x.dtype).at[:, :, ::stride, ::stride].set(x)
    lo = k - 1 - padding
    hi = k - 1 - padding + output_padding
    xp = jnp.pad(xd, ((0, 0), (0, 0), (lo, hi), (lo, hi)))
    Hout = Hd + lo + hi - k + 1
    Wout = Wd + lo + hi - k + 1
    cols = [xp[:, :, ky:ky + Hout, kx:kx + Wout]
            for ky in range(k) for kx in range(k)]
    patches = jnp.stack(cols, axis=-1).transpose(0, 2, 3, 1, 4)
    patches = patches.reshape(B * Hout * Wout, Cin * k * k)
    wf = w[:, :, ::-1, ::-1].transpose(0, 2, 3, 1).reshape(Cin * k * k, Cout)
    out = jnp.dot(patches, wf, precision=jax.lax.Precision.HIGHEST) + b
    return out.reshape(B, Hout, Wout, Cout).transpose(0, 3, 1, 2)


def _ref_conv_stack(params, y):
    x = y.reshape(-1, 64, 161, 3)
    x = jnp.maximum(_ref_conv_transpose2d(x, params["wt1"], params["bt1"], 1, 1, 0), 0.0)
    x = jnp.maximum(_ref_conv_transpose2d(x, params["wt2"], params["bt2"], 2, 1, 1), 0.0)
    x = jnp.tanh(_ref_conv_transpose2d(x, params["wt3"], params["bt3"], 2, 1, 1))
    return x


@jax.jit
def _ref_decoder_exact(params, emb):
    """Full-f32 mirror of the PyTorch forward pass."""
    h = jnp.maximum(jnp.dot(emb, params["w3"],
                            precision=jax.lax.Precision.HIGHEST) + params["b3"], 0.0)
    y = jnp.maximum(jnp.dot(h, params["w4"],
                            precision=jax.lax.Precision.HIGHEST) + params["b4"], 0.0)
    return _ref_conv_stack(params, y)


@jax.jit
def _ref_decoder_quant(params, emb, w4q_f32, w4s):
    """Mirror of the kernel numerics (int8 W4 + bf16 matmul, bf16 handoff)."""
    h = jnp.maximum(jnp.dot(emb, params["w3"],
                            precision=jax.lax.Precision.HIGHEST) + params["b3"], 0.0)
    y = jnp.dot(h.astype(jnp.bfloat16), w4q_f32.astype(jnp.bfloat16),
                preferred_element_type=jnp.float32) * w4s + params["b4"]
    y = jnp.maximum(y, 0.0).astype(jnp.bfloat16).astype(jnp.float32)
    return _ref_conv_stack(params, y)


if __name__ == "__main__":
    key = jax.random.PRNGKey(0)
    k_params, k_emb = jax.random.split(key)

    EMBEDDING_DIM = 32
    BATCH = 2

    params = init_decoder_params(k_params, EMBEDDING_DIM)
    emb = jax.random.normal(k_emb, (BATCH, EMBEDDING_DIM), jnp.float32)

    prep = prepare_params(params)
    out = decoder_forward(prep, emb)
    out = jax.block_until_ready(out)

    assert out.shape == (BATCH, 1, 644, 12), out.shape
    assert bool(jnp.all(jnp.isfinite(out)))

    # Primary check: against a pure-JAX mirror that uses the same per-column
    # int8 W4 quantization and bf16 matmul/handoff as the kernel.
    w4_np = np.asarray(params["w4"], np.float32)
    w4q_ref, w4s_ref = _quantize_cols(w4_np)
    ref_q = _ref_decoder_quant(params, emb,
                               jnp.asarray(w4q_ref, jnp.float32),
                               jnp.asarray(w4s_ref, jnp.float32))
    err_q = float(jnp.max(jnp.abs(out - ref_q)))
    assert err_q < 5e-3, f"max abs err vs quantized reference = {err_q}"

    # Secondary check: against the true fp32 forward pass (bounds the int8/bf16
    # quantization error end-to-end).
    ref_f = _ref_decoder_exact(params, emb)
    err_f = float(jnp.max(jnp.abs(out - ref_f)))
    assert err_f < 2e-2, f"max abs err vs fp32 reference = {err_f}"

    print("KERNEL_OK")
</pallas_src>

<mosaic_0001>
module attributes {stable_mosaic.version = 11 : i64} {
  func.func @_linear_stage_kernel(%arg0: i32, %arg1: memref<2x32xf32, #tpu.memory_space<vmem>>, %arg2: memref<32x128xf32, #tpu.memory_space<vmem>>, %arg3: memref<1x128xf32, #tpu.memory_space<vmem>>, %arg4: memref<128x16128xi8, #tpu.memory_space<vmem>>, %arg5: memref<1x16128xf32, #tpu.memory_space<vmem>>, %arg6: memref<1x16128xf32, #tpu.memory_space<vmem>>, %arg7: memref<2x16128xbf16, #tpu.memory_space<vmem>>) attributes {dimension_semantics = [#tpu.dimension_semantics<parallel>], iteration_bounds = array<i64: 2>, scalar_prefetch = 0 : i64, scratch_operands = 0 : i64, tpu.core_type = #tpu.core_type<tc>, window_params = [{pipeline_mode = #tpu.pipeline_mode<synchronous>, transform_indices = @transform_0, window_bounds = array<i64: 2, 32>}, {pipeline_mode = #tpu.pipeline_mode<synchronous>, transform_indices = @transform_1, window_bounds = array<i64: 32, 128>}, {pipeline_mode = #tpu.pipeline_mode<synchronous>, transform_indices = @transform_2, window_bounds = array<i64: 1, 128>}, {transform_indices = @transform_3, window_bounds = array<i64: 128, 16128>}, {transform_indices = @transform_4, window_bounds = array<i64: 1, 16128>}, {transform_indices = @transform_5, window_bounds = array<i64: 1, 16128>}, {transform_indices = @transform_6, window_bounds = array<i64: 2, 16128>}]} {
    %c0 = arith.constant 0 : index
    %c0_0 = arith.constant 0 : index
    %0 = vector.load %arg1[%c0, %c0_0] : memref<2x32xf32, #tpu.memory_space<vmem>>, vector<2x32xf32>
    %c0_1 = arith.constant 0 : index
    %c0_2 = arith.constant 0 : index
    %1 = vector.load %arg2[%c0_1, %c0_2] : memref<32x128xf32, #tpu.memory_space<vmem>>, vector<32x128xf32>
    %cst = arith.constant dense<0.000000e+00> : vector<2x128xf32>
    %2 = tpu.matmul %0, %1, %cst {dimension_numbers = #tpu.dot_dimension_numbers<[1], [0], [0], [1], [0, 0, 1, 1], [], []>} : vector<2x32xf32>, vector<32x128xf32>, vector<2x128xf32> -> vector<2x128xf32>
    %c0_3 = arith.constant 0 : index
    %c0_4 = arith.constant 0 : index
    %3 = vector.load %arg3[%c0_3, %c0_4] : memref<1x128xf32, #tpu.memory_space<vmem>>, vector<1x128xf32>
    %4 = vector.broadcast %3 : vector<1x128xf32> to vector<2x128xf32>
    %5 = arith.addf %2, %4 : vector<2x128xf32>
    %cst_5 = arith.constant 0.000000e+00 : f32
    %6 = vector.broadcast %cst_5 : f32 to vector<2x128xf32>
    %7 = arith.maximumf %5, %6 : vector<2x128xf32>
    %8 = arith.truncf %7 : vector<2x128xf32> to vector<2x128xbf16>
    %c0_6 = arith.constant 0 : index
    %c0_7 = arith.constant 0 : index
    %9 = vector.load %arg4[%c0_6, %c0_7] : memref<128x16128xi8, #tpu.memory_space<vmem>>, vector<128x16128xi8>
    %10 = arith.sitofp %9 : vector<128x16128xi8> to vector<128x16128xbf16>
    %cst_8 = arith.constant dense<0.000000e+00> : vector<2x16128xf32>
    %11 = tpu.matmul %8, %10, %cst_8 {dimension_numbers = #tpu.dot_dimension_numbers<[1], [0], [0], [1], [0, 0, 1, 1], [], []>} : vector<2x128xbf16>, vector<128x16128xbf16>, vector<2x16128xf32> -> vector<2x16128xf32>
    %c0_9 = arith.constant 0 : index
    %c0_10 = arith.constant 0 : index
    %12 = vector.load %arg5[%c0_9, %c0_10] : memref<1x16128xf32, #tpu.memory_space<vmem>>, vector<1x16128xf32>
    %13 = vector.broadcast %12 : vector<1x16128xf32> to vector<2x16128xf32>
    %14 = arith.mulf %11, %13 : vector<2x16128xf32>
    %c0_11 = arith.constant 0 : index
    %c0_12 = arith.constant 0 : index
    %15 = vector.load %arg6[%c0_11, %c0_12] : memref<1x16128xf32, #tpu.memory_space<vmem>>, vector<1x16128xf32>
    %16 = vector.broadcast %15 : vector<1x16128xf32> to vector<2x16128xf32>
    %17 = arith.addf %14, %16 : vector<2x16128xf32>
    %cst_13 = arith.constant 0.000000e+00 : f32
    %18 = vector.broadcast %cst_13 : f32 to vector<2x16128xf32>
    %19 = arith.maximumf %17, %18 : vector<2x16128xf32>
    %20 = arith.truncf %19 : vector<2x16128xf32> to vector<2x16128xbf16>
    %c0_14 = arith.constant 0 : index
    %c0_15 = arith.constant 0 : index
    %21 = vector.load %arg7[%c0_14, %c0_15] : memref<2x16128xbf16, #tpu.memory_space<vmem>>, vector<2x16128xbf16>
    tpu.vector_store %arg7[%c0_14, %c0_15], %20 {strides = array<i32>} : memref<2x16128xbf16, #tpu.memory_space<vmem>>, vector<2x16128xbf16>,
    return
  }
  func.func @transform_0(%arg0: i32) -> (i32, i32) {
    %c0_i32 = arith.constant 0 : i32
    %c0_i32_0 = arith.constant 0 : i32
    %c0_i32_1 = arith.constant 0 : i32
    return %c0_i32, %c0_i32_0 : i32, i32
  }
  func.func @transform_1(%arg0: i32) -> (i32, i32) {
    %c0_i32 = arith.constant 0 : i32
    %c0_i32_0 = arith.constant 0 : i32
    %c0_i32_1 = arith.constant 0 : i32
    return %c0_i32, %c0_i32_0 : i32, i32
  }
  func.func @transform_2(%arg0: i32) -> (i32, i32) {
    %c0_i32 = arith.constant 0 : i32
    %c0_i32_0 = arith.constant 0 : i32
    %c0_i32_1 = arith.constant 0 : i32
    return %c0_i32, %c0_i32_0 : i32, i32
  }
  func.func @transform_3(%arg0: i32) -> (i32, i32) {
    %c0_i32 = arith.constant 0 : i32
    %c0_i32_0 = arith.constant 0 : i32
    return %c0_i32, %arg0 : i32, i32
  }
  func.func @transform_4(%arg0: i32) -> (i32, i32) {
    %c0_i32 = arith.constant 0 : i32
    %c0_i32_0 = arith.constant 0 : i32
    return %c0_i32, %arg0 : i32, i32
  }
  func.func @transform_5(%arg0: i32) -> (i32, i32) {
    %c0_i32 = arith.constant 0 : i32
    %c0_i32_0 = arith.constant 0 : i32
    return %c0_i32, %arg0 : i32, i32
  }
  func.func @transform_6(%arg0: i32) -> (i32, i32) {
    %c0_i32 = arith.constant 0 : i32
    %c0_i32_0 = arith.constant 0 : i32
    return %c0_i32, %arg0 : i32, i32
  }
}

module attributes {stable_mosaic.version = 11 : i64} {
  func.func @_conv_stack_kernel(%arg0: i32, %arg1: memref<1x168x192xbf16, #tpu.memory_space<vmem>>, %arg2: memref<3x192x128xf32, #tpu.memory_space<vmem>>, %arg3: memref<1x128xf32, #tpu.memory_space<vmem>>, %arg4: memref<2x128x256xf32, #tpu.memory_space<vmem>>, %arg5: memref<1x256xf32, #tpu.memory_space<vmem>>, %arg6: memref<2x256x48xf32, #tpu.memory_space<vmem>>, %arg7: memref<1x48xf32, #tpu.memory_space<vmem>>, %arg8: memref<1x161x48xf32, #tpu.memory_space<vmem>>, %arg9: memref<163x192xf32, #tpu.memory_space<vmem>>, %arg10: memref<162x128xf32, #tpu.memory_space<vmem>>, %arg11: memref<162x256xf32, #tpu.memory_space<vmem>>) attributes {dimension_semantics = [#tpu.dimension_semantics<parallel>], iteration_bounds = array<i64: 2>, scalar_prefetch = 0 : i64, scratch_operands = 3 : i64, tpu.core_type = #tpu.core_type<tc>, window_params = [{transform_indices = @transform_0, window_bounds = array<i64: 1, 168, 192>}, {pipeline_mode = #tpu.pipeline_mode<synchronous>, transform_indices = @transform_1, window_bounds = array<i64: 3, 192, 128>}, {pipeline_mode = #tpu.pipeline_mode<synchronous>, transform_indices = @transform_2, window_bounds = array<i64: 1, 128>}, {pipeline_mode = #tpu.pipeline_mode<synchronous>, transform_indices = @transform_3, window_bounds = array<i64: 2, 128, 256>}, {pipeline_mode = #tpu.pipeline_mode<synchronous>, transform_indices = @transform_4, window_bounds = array<i64: 1, 256>}, {pipeline_mode = #tpu.pipeline_mode<synchronous>, transform_indices = @transform_5, window_bounds = array<i64: 2, 256, 48>}, {pipeline_mode = #tpu.pipeline_mode<synchronous>, transform_indices = @transform_6, window_bounds = array<i64: 1, 48>}, {transform_indices = @transform_7, window_bounds = array<i64: 1, 161, 48>}]} {
    %cst = arith.constant 0.000000e+00 : f32
    %0 = vector.broadcast %cst : f32 to vector<1x192xf32>
    %c0 = arith.constant 0 : index
    %c0_0 = arith.constant 0 : index
    %1 = vector.load %arg9[%c0, %c0_0] : memref<163x192xf32, #tpu.memory_space<vmem>>, vector<1x192xf32>
    tpu.vector_store %arg9[%c0, %c0_0], %0 {strides = array<i32>} : memref<163x192xf32, #tpu.memory_space<vmem>>, vector<1x192xf32>,
    %c0_1 = arith.constant 0 : index
    %c0_2 = arith.constant 0 : index
    %c0_3 = arith.constant 0 : index
    %2 = vector.load %arg1[%c0_1, %c0_2, %c0_3] : memref<1x168x192xbf16, #tpu.memory_space<vmem>>, vector<1x162x192xbf16>
    %3 = vector.shape_cast %2 : vector<1x162x192xbf16> to vector<162x192xbf16>
    %4 = arith.extf %3 : vector<162x192xbf16> to vector<162x192xf32>
    %c1 = arith.constant 1 : index
    %c0_4 = arith.constant 0 : index
    %5 = vector.load %arg9[%c1, %c0_4] : memref<163x192xf32, #tpu.memory_space<vmem>>, vector<162x192xf32>
    tpu.vector_store %arg9[%c1, %c0_4], %4 {strides = array<i32>} : memref<163x192xf32, #tpu.memory_space<vmem>>, vector<162x192xf32>,
    %c2 = arith.constant 2 : index
    %c0_5 = arith.constant 0 : index
    %6 = vector.load %arg9[%c2, %c0_5] : memref<163x192xf32, #tpu.memory_space<vmem>>, vector<161x192xf32>
    %c0_6 = arith.constant 0 : index
    %c0_7 = arith.constant 0 : index
    %c0_8 = arith.constant 0 : index
    %7 = vector.load %arg2[%c0_6, %c0_7, %c0_8] : memref<3x192x128xf32, #tpu.memory_space<vmem>>, vector<1x192x128xf32>
    %8 = vector.shape_cast %7 : vector<1x192x128xf32> to vector<192x128xf32>
    %cst_9 = arith.constant dense<0.000000e+00> : vector<161x128xf32>
    %9 = tpu.matmul %6, %8, %cst_9 {dimension_numbers = #tpu.dot_dimension_numbers<[1], [0], [0], [1], [0, 0, 1, 1], [], []>} : vector<161x192xf32>, vector<192x128xf32>, vector<161x128xf32> -> vector<161x128xf32>
    %c1_10 = arith.constant 1 : index
    %c0_11 = arith.constant 0 : index
    %10 = vector.load %arg9[%c1_10, %c0_11] : memref<163x192xf32, #tpu.memory_space<vmem>>, vector<161x192xf32>
    %c1_12 = arith.constant 1 : index
    %c0_13 = arith.constant 0 : index
    %c0_14 = arith.constant 0 : index
    %11 = vector.load %arg2[%c1_12, %c0_13, %c0_14] : memref<3x192x128xf32, #tpu.memory_space<vmem>>, vector<1x192x128xf32>
    %12 = vector.shape_cast %11 : vector<1x192x128xf32> to vector<192x128xf32>
    %cst_15 = arith.constant dense<0.000000e+00> : vector<161x128xf32>
    %13 = tpu.matmul %10, %12, %cst_15 {dimension_numbers = #tpu.dot_dimension_numbers<[1], [0], [0], [1], [0, 0, 1, 1], [], []>} : vector<161x192xf32>, vector<192x128xf32>, vector<161x128xf32> -> vector<161x128xf32>
    %14 = arith.addf %9, %13 : vector<161x128xf32>
    %c0_16 = arith.constant 0 : index
    %c0_17 = arith.constant 0 : index
    %15 = vector.load %arg9[%c0_16, %c0_17] : memref<163x192xf32, #tpu.memory_space<vmem>>, vector<161x192xf32>
    %c2_18 = arith.constant 2 : index
    %c0_19 = arith.constant 0 : index
    %c0_20 = arith.constant 0 : index
    %16 = vector.load %arg2[%c2_18, %c0_19, %c0_20] : memref<3x192x128xf32, #tpu.memory_space<vmem>>, vector<1x192x128xf32>
    %17 = vector.shape_cast %16 : vector<1x192x128xf32> to vector<192x128xf32>
    %cst_21 = arith.constant dense<0.000000e+00> : vector<161x128xf32>
    %18 = tpu.matmul %15, %17, %cst_21 {dimension_numbers = #tpu.dot_dimension_numbers<[1], [0], [0], [1], [0, 0, 1, 1], [], []>} : vector<161x192xf32>, vector<192x128xf32>, vector<161x128xf32> -> vector<161x128xf32>
    %19 = arith.addf %14, %18 : vector<161x128xf32>
    %c0_22 = arith.constant 0 : index
    %c0_23 = arith.constant 0 : index
    %20 = vector.load %arg3[%c0_22, %c0_23] : memref<1x128xf32, #tpu.memory_space<vmem>>, vector<1x128xf32>
    %21 = vector.broadcast %20 : vector<1x128xf32> to vector<161x128xf32>
    %22 = arith.addf %19, %21 : vector<161x128xf32>
    %cst_24 = arith.constant 0.000000e+00 : f32
    %23 = vector.broadcast %cst_24 : f32 to vector<161x128xf32>
    %24 = arith.maximumf %22, %23 : vector<161x128xf32>
    %c0_25 = arith.constant 0 : index
    %c0_26 = arith.constant 0 : index
    %25 = vector.load %arg10[%c0_25, %c0_26] : memref<162x128xf32, #tpu.memory_space<vmem>>, vector<161x128xf32>
    tpu.vector_store %arg10[%c0_25, %c0_26], %24 {strides = array<i32>} : memref<162x128xf32, #tpu.memory_space<vmem>>, vector<161x128xf32>,
    %cst_27 = arith.constant 0.000000e+00 : f32
    %26 = vector.broadcast %cst_27 : f32 to vector<1x128xf32>
    %c161 = arith.constant 161 : index
    %c0_28 = arith.constant 0 : index
    %27 = vector.load %arg10[%c161, %c0_28] : memref<162x128xf32, #tpu.memory_space<vmem>>, vector<1x128xf32>
    tpu.vector_store %arg10[%c161, %c0_28], %26 {strides = array<i32>} : memref<162x128xf32, #tpu.memory_space<vmem>>, vector<1x128xf32>,
    %c0_29 = arith.constant 0 : index
    %c0_30 = arith.constant 0 : index
    %28 = vector.load %arg10[%c0_29, %c0_30] : memref<162x128xf32, #tpu.memory_space<vmem>>, vector<161x128xf32>
    %c0_31 = arith.constant 0 : index
    %c0_32 = arith.constant 0 : index
    %c0_33 = arith.constant 0 : index
    %29 = vector.load %arg4[%c0_31, %c0_32, %c0_33] : memref<2x128x256xf32, #tpu.memory_space<vmem>>, vector<1x128x256xf32>
    %30 = vector.shape_cast %29 : vector<1x128x256xf32> to vector<128x256xf32>
    %cst_34 = arith.constant dense<0.000000e+00> : vector<161x256xf32>
    %31 = tpu.matmul %28, %30, %cst_34 {dimension_numbers = #tpu.dot_dimension_numbers<[1], [0], [0], [1], [0, 0, 1, 1], [], []>} : vector<161x128xf32>, vector<128x256xf32>, vector<161x256xf32> -> vector<161x256xf32>
    %c1_35 = arith.constant 1 : index
    %c0_36 = arith.constant 0 : index
    %32 = vector.load %arg10[%c1_35, %c0_36] : memref<162x128xf32, #tpu.memory_space<vmem>>, vector<161x128xf32>
    %c1_37 = arith.constant 1 : index
    %c0_38 = arith.constant 0 : index
    %c0_39 = arith.constant 0 : index
    %33 = vector.load %arg4[%c1_37, %c0_38, %c0_39] : memref<2x128x256xf32, #tpu.memory_space<vmem>>, vector<1x128x256xf32>
    %34 = vector.shape_cast %33 : vector<1x128x256xf32> to vector<128x256xf32>
    %cst_40 = arith.constant dense<0.000000e+00> : vector<161x256xf32>
    %35 = tpu.matmul %32, %34, %cst_40 {dimension_numbers = #tpu.dot_dimension_numbers<[1], [0], [0], [1], [0, 0, 1, 1], [], []>} : vector<161x128xf32>, vector<128x256xf32>, vector<161x256xf32> -> vector<161x256xf32>
    %36 = arith.addf %31, %35 : vector<161x256xf32>
    %c0_41 = arith.constant 0 : index
    %c0_42 = arith.constant 0 : index
    %37 = vector.load %arg5[%c0_41, %c0_42] : memref<1x256xf32, #tpu.memory_space<vmem>>, vector<1x256xf32>
    %38 = vector.broadcast %37 : vector<1x256xf32> to vector<161x256xf32>
    %39 = arith.addf %36, %38 : vector<161x256xf32>
    %cst_43 = arith.constant 0.000000e+00 : f32
    %40 = vector.broadcast %cst_43 : f32 to vector<161x256xf32>
    %41 = arith.maximumf %39, %40 : vector<161x256xf32>
    %c0_44 = arith.constant 0 : index
    %c0_45 = arith.constant 0 : index
    %42 = vector.load %arg11[%c0_44, %c0_45] : memref<162x256xf32, #tpu.memory_space<vmem>>, vector<161x256xf32>
    tpu.vector_store %arg11[%c0_44, %c0_45], %41 {strides = array<i32>} : memref<162x256xf32, #tpu.memory_space<vmem>>, vector<161x256xf32>,
    %cst_46 = arith.constant 0.000000e+00 : f32
    %43 = vector.broadcast %cst_46 : f32 to vector<1x256xf32>
    %c161_47 = arith.constant 161 : index
    %c0_48 = arith.constant 0 : index
    %44 = vector.load %arg11[%c161_47, %c0_48] : memref<162x256xf32, #tpu.memory_space<vmem>>, vector<1x256xf32>
    tpu.vector_store %arg11[%c161_47, %c0_48], %43 {strides = array<i32>} : memref<162x256xf32, #tpu.memory_space<vmem>>, vector<1x256xf32>,
    %c0_49 = arith.constant 0 : index
    %c0_50 = arith.constant 0 : index
    %45 = vector.load %arg11[%c0_49, %c0_50] : memref<162x256xf32, #tpu.memory_space<vmem>>, vector<161x256xf32>
    %c0_51 = arith.constant 0 : index
    %c0_52 = arith.constant 0 : index
    %c0_53 = arith.constant 0 : index
    %46 = vector.load %arg6[%c0_51, %c0_52, %c0_53] : memref<2x256x48xf32, #tpu.memory_space<vmem>>, vector<1x256x48xf32>
    %47 = vector.shape_cast %46 : vector<1x256x48xf32> to vector<256x48xf32>
    %cst_54 = arith.constant dense<0.000000e+00> : vector<161x48xf32>
    %48 = tpu.matmul %45, %47, %cst_54 {dimension_numbers = #tpu.dot_dimension_numbers<[1], [0], [0], [1], [0, 0, 1, 1], [], []>} : vector<161x256xf32>, vector<256x48xf32>, vector<161x48xf32> -> vector<161x48xf32>
    %c1_55 = arith.constant 1 : index
    %c0_56 = arith.constant 0 : index
    %49 = vector.load %arg11[%c1_55, %c0_56] : memref<162x256xf32, #tpu.memory_space<vmem>>, vector<161x256xf32>
    %c1_57 = arith.constant 1 : index
    %c0_58 = arith.constant 0 : index
    %c0_59 = arith.constant 0 : index
    %50 = vector.load %arg6[%c1_57, %c0_58, %c0_59] : memref<2x256x48xf32, #tpu.memory_space<vmem>>, vector<1x256x48xf32>
    %51 = vector.shape_cast %50 : vector<1x256x48xf32> to vector<256x48xf32>
    %cst_60 = arith.constant dense<0.000000e+00> : vector<161x48xf32>
    %52 = tpu.matmul %49, %51, %cst_60 {dimension_numbers = #tpu.dot_dimension_numbers<[1], [0], [0], [1], [0, 0, 1, 1], [], []>} : vector<161x256xf32>, vector<256x48xf32>, vector<161x48xf32> -> vector<161x48xf32>
    %53 = arith.addf %48, %52 : vector<161x48xf32>
    %c0_61 = arith.constant 0 : index
    %c0_62 = arith.constant 0 : index
    %54 = vector.load %arg7[%c0_61, %c0_62] : memref<1x48xf32, #tpu.memory_space<vmem>>, vector<1x48xf32>
    %55 = vector.broadcast %54 : vector<1x48xf32> to vector<161x48xf32>
    %56 = arith.addf %53, %55 : vector<161x48xf32>
    %57 = math.tanh %56 : vector<161x48xf32>
    %c0_63 = arith.constant 0 : index
    %c0_64 = arith.constant 0 : index
    %c0_65 = arith.constant 0 : index
    %58 = vector.load %arg8[%c0_63, %c0_64, %c0_65] : memref<1x161x48xf32, #tpu.memory_space<vmem>>, vector<1x161x48xf32>
    %59 = vector.shape_cast %58 : vector<1x161x48xf32> to vector<161x48xf32>
    %60 = vector.shape_cast %57 : vector<161x48xf32> to vector<1x161x48xf32>
    tpu.vector_store %arg8[%c0_63, %c0_64, %c0_65], %60 {strides = array<i32>} : memref<1x161x48xf32, #tpu.memory_space<vmem>>, vector<1x161x48xf32>,
    return
  }
  func.func @transform_0(%arg0: i32) -> (i32, i32, i32) {
    %c0_i32 = arith.constant 0 : i32
    %c0_i32_0 = arith.constant 0 : i32
    %c0_i32_1 = arith.constant 0 : i32
    return %arg0, %c0_i32, %c0_i32_0 : i32, i32, i32
  }
  func.func @transform_1(%arg0: i32) -> (i32, i32, i32) {
    %c0_i32 = arith.constant 0 : i32
    %c0_i32_0 = arith.constant 0 : i32
    %c0_i32_1 = arith.constant 0 : i32
    %c0_i32_2 = arith.constant 0 : i32
    return %c0_i32, %c0_i32_0, %c0_i32_1 : i32, i32, i32
  }
  func.func @transform_2(%arg0: i32) -> (i32, i32) {
    %c0_i32 = arith.constant 0 : i32
    %c0_i32_0 = arith.constant 0 : i32
    %c0_i32_1 = arith.constant 0 : i32
    return %c0_i32, %c0_i32_0 : i32, i32
  }
  func.func @transform_3(%arg0: i32) -> (i32, i32, i32) {
    %c0_i32 = arith.constant 0 : i32
    %c0_i32_0 = arith.constant 0 : i32
    %c0_i32_1 = arith.constant 0 : i32
    %c0_i32_2 = arith.constant 0 : i32
    return %c0_i32, %c0_i32_0, %c0_i32_1 : i32, i32, i32
  }
  func.func @transform_4(%arg0: i32) -> (i32, i32) {
    %c0_i32 = arith.constant 0 : i32
    %c0_i32_0 = arith.constant 0 : i32
    %c0_i32_1 = arith.constant 0 : i32
    return %c0_i32, %c0_i32_0 : i32, i32
  }
  func.func @transform_5(%arg0: i32) -> (i32, i32, i32) {
    %c0_i32 = arith.constant 0 : i32
    %c0_i32_0 = arith.constant 0 : i32
    %c0_i32_1 = arith.constant 0 : i32
    %c0_i32_2 = arith.constant 0 : i32
    return %c0_i32, %c0_i32_0, %c0_i32_1 : i32, i32, i32
  }
  func.func @transform_6(%arg0: i32) -> (i32, i32) {
    %c0_i32 = arith.constant 0 : i32
    %c0_i32_0 = arith.constant 0 : i32
    %c0_i32_1 = arith.constant 0 : i32
    return %c0_i32, %c0_i32_0 : i32, i32
  }
  func.func @transform_7(%arg0: i32) -> (i32, i32, i32) {
    %c0_i32 = arith.constant 0 : i32
    %c0_i32_0 = arith.constant 0 : i32
    %c0_i32_1 = arith.constant 0 : i32
    return %arg0, %c0_i32, %c0_i32_0 : i32, i32, i32
  }
}

</mosaic_0001>

<llo_original>
// kernel: decoder_forward.3
$region0: #{decoder_forward.3}
  #allocation0 [shape = 'u32[]', space=smem, size = 0x4, offset = 0x4, fixed_abs, tag = 'smem constant byte address 0x4 - core index']
  #allocation1 [shape = 'u32[144,128]{1,0:T(1,128)}', space=vmem, size = 0x12000, scoped, tag = 'internal scratch']
  #allocation2 [shape = 'f32[163,192]{1,0:T(8,128)}', space=vmem, size = 0x2a000, scoped, tag = 'scratch operand']
  #allocation3 [shape = 'f32[162,128]{1,0:T(8,128)}', space=vmem, size = 0x15000, scoped, tag = 'scratch operand']
  #allocation4 [shape = 'f32[162,256]{1,0:T(8,128)}', space=vmem, size = 0x2a000, scoped, tag = 'scratch operand']
  %s0 = inlined_call_operand.vmem [shape: bf16[2,168,192], index: 0, kind: input, shape index: {}]
  %s1 = inlined_call_operand.vmem [shape: f32[3,192,128], index: 1, kind: input, shape index: {}]
  %s2 = inlined_call_operand.vmem [shape: f32[1,128], index: 2, kind: input, shape index: {}]
  %s3 = inlined_call_operand.vmem [shape: f32[2,128,256], index: 3, kind: input, shape index: {}]
  %s4 = inlined_call_operand.vmem [shape: f32[1,256], index: 4, kind: input, shape index: {}]
  %s5 = inlined_call_operand.vmem [shape: f32[2,256,48], index: 5, kind: input, shape index: {}]
  %s6 = inlined_call_operand.vmem [shape: f32[1,48], index: 6, kind: input, shape index: {}]
  %s7 = inlined_call_operand.vmem [shape: f32[2,161,48], index: 7, kind: output, shape index: {}]
  %s8 = sld [smem:[#allocation0]]
  $region61: #{decoder_forward.3} parent=0
    _
  %s10 = ssub.s32 1, %s8
  %s11 = scalar_select 0, %s10, %s8
  loop: start=0, step=1, limit=4
  $region2: #{decoder_forward.3} parent=0 // loop_pre_header
    _
  $region3: #{decoder_forward.3} parent=0 // loop_header
    %s13 = sphi 0, %s17
    %p14 = scmp.ge.s32.totalorder %s13, 4
    %s23 = sphi 0, %s25
    %s26 = sphi 0, %s23
    %s27 = sphi 0, %s26
    %s43 = sphi 0, %s27
    %s47 = sphi 0, %s47
    %s49 = sphi 0, %s47
    %s50 = sphi 0, %s49
    %s64 = sphi 0, %s50
    %s68 = sphi 0, %s68
    %s70 = sphi 0, %s68
    %s71 = sphi 0, %s70
    %s85 = sphi 0, %s71
    %s89 = sphi 0, %s89
    %s91 = sphi 0, %s89
    %s92 = sphi 0, %s91
    %s106 = sphi 0, %s92
    %s110 = sphi 0, %s110
    %s112 = sphi 0, %s110
    %s113 = sphi 0, %s112
    %s127 = sphi 0, %s113
    %s131 = sphi 0, %s131
    %s133 = sphi 0, %s131
    %s134 = sphi 0, %s133
    %s148 = sphi 0, %s134
    %s152 = sphi 0, %s152
    %s154 = sphi 0, %s152
    %s155 = sphi 0, %s154
    %s169 = sphi 0, %s155
    %s175 = sphi 0, %s177
    %s178 = sphi 0, %s175
    %s179 = sphi 0, %s178
    %s195 = sphi 0, %s179
  $region4: #{decoder_forward.3} parent=0 // loop_header_branch
    %16 = sbr.rel (%p14) target = $region8
  $region5: #{decoder_forward.3} parent=0 // loop_body
    %s18 = ssub.s32 %s13, 1
    %s19 = ssub.s32 %s13, 2
    %s20 = sadd.s32 %s13, 1
    %s21 = ssub.s32 %s13, %s20
    %p22 = scmp.eq.s32.totalorder %s21, 0
    %s24 = sadd.s32 %s23, 1
    %s25 = scalar_select %p22, %s23, %s24
    %p28 = pneg %p22
    %p29 = scmp.eq.s32.totalorder %s13, 1
    %p30 = por %p28, %p29
    %p31 = scmp.ne.s32.totalorder %s23, %s26
    %p32 = scmp.eq.s32.totalorder %s13, 0
    %p33 = por %p31, %p32
    %p34 = scmp.ne.s32.totalorder %s23, %s26
    %p35 = scmp.eq.s32.totalorder %s18, 1
    %p36 = por %p34, %p35
    %p37 = scmp.ne.s32.totalorder %s26, %s27
    %p38 = scmp.eq.s32.totalorder %s18, 0
    %p39 = por %p37, %p38
    %p40 = scmp.ne.s32.totalorder %s26, %s27
    %p41 = scmp.eq.s32.totalorder %s19, 1
    %p42 = por %p40, %p41
    %p44 = scmp.ne.s32.totalorder %s27, %s43
    %p45 = scmp.eq.s32.totalorder %s19, 0
    %p46 = por %p44, %p45
    %s48 = sadd.s32 %s47, 1
    %p51 = scmp.eq.s32.totalorder %s13, 1
    %p52 = scmp.ne.s32.totalorder %s47, %s49
    %p53 = scmp.eq.s32.totalorder %s13, 0
    %p54 = por %p52, %p53
    %p55 = scmp.ne.s32.totalorder %s47, %s49
    %p56 = scmp.eq.s32.totalorder %s18, 1
    %p57 = por %p55, %p56
    %p58 = scmp.ne.s32.totalorder %s49, %s50
    %p59 = scmp.eq.s32.totalorder %s18, 0
    %p60 = por %p58, %p59
    %p61 = scmp.ne.s32.totalorder %s49, %s50
    %p62 = scmp.eq.s32.totalorder %s19, 1
    %p63 = por %p61, %p62
    %p65 = scmp.ne.s32.totalorder %s50, %s64
    %p66 = scmp.eq.s32.totalorder %s19, 0
    %p67 = por %p65, %p66
    %s69 = sadd.s32 %s68, 1
    %p72 = scmp.eq.s32.totalorder %s13, 1
    %p73 = scmp.ne.s32.totalorder %s68, %s70
    %p74 = scmp.eq.s32.totalorder %s13, 0
    %p75 = por %p73, %p74
    %p76 = scmp.ne.s32.totalorder %s68, %s70
    %p77 = scmp.eq.s32.totalorder %s18, 1
    %p78 = por %p76, %p77
    %p79 = scmp.ne.s32.totalorder %s70, %s71
    %p80 = scmp.eq.s32.totalorder %s18, 0
    %p81 = por %p79, %p80
    %p82 = scmp.ne.s32.totalorder %s70, %s71
    %p83 = scmp.eq.s32.totalorder %s19, 1
    %p84 = por %p82, %p83
    %p86 = scmp.ne.s32.totalorder %s71, %s85
    %p87 = scmp.eq.s32.totalorder %s19, 0
    %p88 = por %p86, %p87
    %s90 = sadd.s32 %s89, 1
    %p93 = scmp.eq.s32.totalorder %s13, 1
    %p94 = scmp.ne.s32.totalorder %s89, %s91
    %p95 = scmp.eq.s32.totalorder %s13, 0
    %p96 = por %p94, %p95
    %p97 = scmp.ne.s32.totalorder %s89, %s91
    %p98 = scmp.eq.s32.totalorder %s18, 1
    %p99 = por %p97, %p98
    %p100 = scmp.ne.s32.totalorder %s91, %s92
    %p101 = scmp.eq.s32.totalorder %s18, 0
    %p102 = por %p100, %p101
    %p103 = scmp.ne.s32.totalorder %s91, %s92
    %p104 = scmp.eq.s32.totalorder %s19, 1
    %p105 = por %p103, %p104
    %p107 = scmp.ne.s32.totalorder %s92, %s106
    %p108 = scmp.eq.s32.totalorder %s19, 0
    %p109 = por %p107, %p108
    %s111 = sadd.s32 %s110, 1
    %p114 = scmp.eq.s32.totalorder %s13, 1
    %p115 = scmp.ne.s32.totalorder %s110, %s112
    %p116 = scmp.eq.s32.totalorder %s13, 0
    %p117 = por %p115, %p116
    %p118 = scmp.ne.s32.totalorder %s110, %s112
    %p119 = scmp.eq.s32.totalorder %s18, 1
    %p120 = por %p118, %p119
    %p121 = scmp.ne.s32.totalorder %s112, %s113
    %p122 = scmp.eq.s32.totalorder %s18, 0
    %p123 = por %p121, %p122
    %p124 = scmp.ne.s32.totalorder %s112, %s113
    %p125 = scmp.eq.s32.totalorder %s19, 1
    %p126 = por %p124, %p125
    %p128 = scmp.ne.s32.totalorder %s113, %s127
    %p129 = scmp.eq.s32.totalorder %s19, 0
    %p130 = por %p128, %p129
    %s132 = sadd.s32 %s131, 1
    %p135 = scmp.eq.s32.totalorder %s13, 1
    %p136 = scmp.ne.s32.totalorder %s131, %s133
    %p137 = scmp.eq.s32.totalorder %s13, 0
    %p138 = por %p136, %p137
    %p139 = scmp.ne.s32.totalorder %s131, %s133
    %p140 = scmp.eq.s32.totalorder %s18, 1
    %p141 = por %p139, %p140
    %p142 = scmp.ne.s32.totalorder %s133, %s134
    %p143 = scmp.eq.s32.totalorder %s18, 0
    %p144 = por %p142, %p143
    %p145 = scmp.ne.s32.totalorder %s133, %s134
    %p146 = scmp.eq.s32.totalorder %s19, 1
    %p147 = por %p145, %p146
    %p149 = scmp.ne.s32.totalorder %s134, %s148
    %p150 = scmp.eq.s32.totalorder %s19, 0
    %p151 = por %p149, %p150
    %s153 = sadd.s32 %s152, 1
    %p156 = scmp.eq.s32.totalorder %s13, 1
    %p157 = scmp.ne.s32.totalorder %s152, %s154
    %p158 = scmp.eq.s32.totalorder %s13, 0
    %p159 = por %p157, %p158
    %p160 = scmp.ne.s32.totalorder %s152, %s154
    %p161 = scmp.eq.s32.totalorder %s18, 1
    %p162 = por %p160, %p161
    %p163 = scmp.ne.s32.totalorder %s154, %s155
    %p164 = scmp.eq.s32.totalorder %s18, 0
    %p165 = por %p163, %p164
    %p166 = scmp.ne.s32.totalorder %s154, %s155
    %p167 = scmp.eq.s32.totalorder %s19, 1
    %p168 = por %p166, %p167
    %p170 = scmp.ne.s32.totalorder %s155, %s169
    %p171 = scmp.eq.s32.totalorder %s19, 0
    %p172 = por %p170, %p171
    %s173 = ssub.s32 %s13, %s20
    %p174 = scmp.eq.s32.totalorder %s173, 0
    %s176 = sadd.s32 %s175, 1
    %s177 = scalar_select %p174, %s175, %s176
    %p180 = pneg %p174
    %p181 = scmp.eq.s32.totalorder %s13, 1
    %p182 = por %p180, %p181
    %p183 = scmp.ne.s32.totalorder %s175, %s178
    %p184 = scmp.eq.s32.totalorder %s13, 0
    %p185 = por %p183, %p184
    %p186 = scmp.ne.s32.totalorder %s175, %s178
    %p187 = scmp.eq.s32.totalorder %s18, 1
    %p188 = por %p186, %p187
    %p189 = scmp.ne.s32.totalorder %s178, %s179
    %p190 = scmp.eq.s32.totalorder %s18, 0
    %p191 = por %p189, %p190
    %p192 = scmp.ne.s32.totalorder %s178, %s179
    %p193 = scmp.eq.s32.totalorder %s19, 1
    %p194 = por %p192, %p193
    %p196 = scmp.ne.s32.totalorder %s179, %s195
    %p197 = scmp.eq.s32.totalorder %s19, 0
    %p198 = por %p196, %p197
    %p199 = scmp.le.s32.totalorder 1, %s13
    %p200 = scmp.lt.s32.totalorder %s13, 3
    %p201 = pnand %p199, %p200
    %p202 = pneg %p201
    // Predicated region
    $region9: #{decoder_forward.3} parent=5 // pred_check
      _
    $region10: #{decoder_forward.3} parent=5 // pred_check_branch
      %204 = sbr.rel (%p201) target = $region12
    $region11: #{decoder_forward.3} parent=5 // pred_region
      %s205 = ssub.s32 %s13, 1
      // Predicated region
      $region13: #{decoder_forward.3} parent=11 // pred_check
        %p206 = pneg %p60
      $region14: #{decoder_forward.3} parent=11 // pred_check_branch
        %208 = sbr.rel (%p206) target = $region16
      $region15: #{decoder_forward.3} parent=11 // pred_region
        _
      $region16: #{decoder_forward.3} parent=11 // pred_fallthru
        _
      // Predicated region
      $region17: #{decoder_forward.3} parent=11 // pred_check
        %p209 = pneg %p81
      $region18: #{decoder_forward.3} parent=11 // pred_check_branch
        %211 = sbr.rel (%p209) target = $region20
      $region19: #{decoder_forward.3} parent=11 // pred_region
        _
      $region20: #{decoder_forward.3} parent=11 // pred_fallthru
        _
      // Predicated region
      $region21: #{decoder_forward.3} parent=11 // pred_check
        %p212 = pneg %p102
      $region22: #{decoder_forward.3} parent=11 // pred_check_branch
        %214 = sbr.rel (%p212) target = $region24
      $region23: #{decoder_forward.3} parent=11 // pred_region
        _
      $region24: #{decoder_forward.3} parent=11 // pred_fallthru
        _
      // Predicated region
      $region25: #{decoder_forward.3} parent=11 // pred_check
        %p215 = pneg %p123
      $region26: #{decoder_forward.3} parent=11 // pred_check_branch
        %217 = sbr.rel (%p215) target = $region28
      $region27: #{decoder_forward.3} parent=11 // pred_region
        _
      $region28: #{decoder_forward.3} parent=11 // pred_fallthru
        _
      // Predicated region
      $region29: #{decoder_forward.3} parent=11 // pred_check
        %p218 = pneg %p144
      $region30: #{decoder_forward.3} parent=11 // pred_check_branch
        %220 = sbr.rel (%p218) target = $region32
      $region31: #{decoder_forward.3} parent=11 // pred_region
        _
      $region32: #{decoder_forward.3} parent=11 // pred_fallthru
        _
      // Predicated region
      $region33: #{decoder_forward.3} parent=11 // pred_check
        %p221 = pneg %p165
      $region34: #{decoder_forward.3} parent=11 // pred_check_branch
        %223 = sbr.rel (%p221) target = $region36
      $region35: #{decoder_forward.3} parent=11 // pred_region
        _
      $region36: #{decoder_forward.3} parent=11 // pred_fallthru
        _
    $region12: #{decoder_forward.3} parent=5 // pred_fallthru
      _
    %p224 = scmp.lt.s32.totalorder %s13, 2
    // Predicated region
    $region37: #{decoder_forward.3} parent=5 // pred_check
      %p225 = pneg %p224
    $region38: #{decoder_forward.3} parent=5 // pred_check_branch
      %227 = sbr.rel (%p225) target = $region40
    $region39: #{decoder_forward.3} parent=5 // pred_region
      // Predicated region
      $region41: #{decoder_forward.3} parent=39 // pred_check
        %p228 = pneg %p33
      $region42: #{decoder_forward.3} parent=39 // pred_check_branch
        %230 = sbr.rel (%p228) target = $region44
      $region43: #{decoder_forward.3} parent=39 // pred_region
        %p231 = scmp.lt.s32.totalorder %s13, 1
        %s232 = scalar_select %p231, %s13, 1
        %s233 = smul.addr %s232, 42
        %s234 = smul.addr %s233, 4
        %s235 = scalar_lea.vmem %s0, %s234
      $region44: #{decoder_forward.3} parent=39 // pred_fallthru
        _
    $region40: #{decoder_forward.3} parent=5 // pred_fallthru
      _
    %p236 = scmp.le.s32.totalorder 1, %s13
    %p237 = scmp.lt.s32.totalorder %s13, 3
    %p238 = pnand %p236, %p237
    %p239 = pneg %p238
    // Predicated region
    $region45: #{decoder_forward.3} parent=5 // pred_check
      _
    $region46: #{decoder_forward.3} parent=5 // pred_check_branch
      %241 = sbr.rel (%p238) target = $region48
    $region47: #{decoder_forward.3} parent=5 // pred_region
      %s242 = ssub.s32 %s13, 1
      %p243 = scmp.lt.s32.totalorder %s18, 1
      %s244 = scalar_select %p243, %s18, 1
      %s245 = smul.addr %s244, 42
      %s246 = smul.addr %s245, 4
      %s247 = scalar_lea.vmem %s0, %s246
      %p248 = pneg %p39
      %p249 = pneg %p36
      %p250 = pneg %p60
      %p251 = pneg %p57
      %p252 = pneg %p81
      %p253 = pneg %p78
      %p254 = pneg %p102
      %p255 = pneg %p99
      %p256 = pneg %p123
      %p257 = pneg %p120
      %p258 = pneg %p144
      %p259 = pneg %p141
      %p260 = pneg %p165
      %p261 = pneg %p162
      %p262 = pneg %p191
      %p263 = pneg %p188
      %p264 = scmp.lt.s32.totalorder %s18, 1
      %s265 = scalar_select %p264, %s18, 1
      %s266 = smul.addr %s265, 21
      %s267 = smul.addr %s266, 8
      %s268 = scalar_lea.vmem %s7, %s267
      %p269 = scmp.lt.s32.totalorder %s18, 1
      %s270 = scalar_select %p269, %s18, 1
      %s271 = smul.addr %s270, 42
      %s272 = smul.addr %s271, 4
      %s273 = scalar_lea.vmem %s0, %s272
      %p274 = scmp.lt.s32.totalorder %s18, 1
      %s275 = scalar_select %p274, %s18, 1
      %s276 = smul.addr %s275, 21
      %s277 = smul.addr %s276, 8
      %s278 = scalar_lea.vmem %s7, %s277
      %v279 = vlaneseq
      %vm280 = vcmp.ge.s32.totalorder %v279, 0
      %vm281 = vcmp.lt.s32.totalorder %v279, 192
      %vm282 = vmand %vm280, %vm281
      %283 = vst.msk [vmem:[#allocation2] ss:$8 sm:$0x3] %vm282, 0.0
      %284 = vst.msk [vmem:[#allocation2] ss:$8 sm:$0x0] %vm282, 0.0
      %v285 = vld [vmem:[%s273] sm:$0xff]
      %v286 = vld [vmem:[%s273 + $0x8] sm:$0xff]
      %v287 = vld [vmem:[%s273 + $0x10] sm:$0xff]
      %v288 = vld [vmem:[%s273 + $0x18] sm:$0xff]
      %v289 = vld [vmem:[%s273 + $0x20] sm:$0xff]
      %v290 = vld [vmem:[%s273 + $0x28] sm:$0xff]
      %v291 = vld [vmem:[%s273 + $0x30] sm:$0xff]
      %v292 = vld [vmem:[%s273 + $0x38] sm:$0xff]
      %v293 = vld [vmem:[%s273 + $0x40] sm:$0xff]
      %v294 = vld [vmem:[%s273 + $0x48] sm:$0xff]
      %v295 = vld [vmem:[%s273 + $0x50] sm:$0xff]
      %v296 = vld [vmem:[%s273 + $0x58] sm:$0xff]
      %v297 = vld [vmem:[%s273 + $0x60] sm:$0xff]
      %v298 = vld [vmem:[%s273 + $0x68] sm:$0xff]
      %v299 = vld [vmem:[%s273 + $0x70] sm:$0xff]
      %v300 = vld [vmem:[%s273 + $0x78] sm:$0xff]
      %v301 = vld [vmem:[%s273 + $0x80] sm:$0xff]
      %v302 = vld [vmem:[%s273 + $0x88] sm:$0xff]
      %v303 = vld [vmem:[%s273 + $0x90] sm:$0xff]
      %v304 = vld [vmem:[%s273 + $0x98] sm:$0xff]
      %v305 = vld [vmem:[%s273 + $0xa0] sm:$0x11]
      %v306 = vunpack.c.l.bf16 %v285
      %v307 = vunpack.c.h.bf16 %v285
      %v308 = vunpack.c.l.bf16 %v286
      %v309 = vunpack.c.h.bf16 %v286
      %v310 = vunpack.c.l.bf16 %v287
      %v311 = vunpack.c.h.bf16 %v287
      %v312 = vunpack.c.l.bf16 %v288
      %v313 = vunpack.c.h.bf16 %v288
      %v314 = vunpack.c.l.bf16 %v289
      %v315 = vunpack.c.h.bf16 %v289
      %v316 = vunpack.c.l.bf16 %v290
      %v317 = vunpack.c.h.bf16 %v290
      %v318 = vunpack.c.l.bf16 %v291
      %v319 = vunpack.c.h.bf16 %v291
      %v320 = vunpack.c.l.bf16 %v292
      %v321 = vunpack.c.h.bf16 %v292
      %v322 = vunpack.c.l.bf16 %v293
      %v323 = vunpack.c.h.bf16 %v293
      %v324 = vunpack.c.l.bf16 %v294
      %v325 = vunpack.c.h.bf16 %v294
      %v326 = vunpack.c.l.bf16 %v295
      %v327 = vunpack.c.h.bf16 %v295
      %v328 = vunpack.c.l.bf16 %v296
      %v329 = vunpack.c.h.bf16 %v296
      %v330 = vunpack.c.l.bf16 %v297
      %v331 = vunpack.c.h.bf16 %v297
      %v332 = vunpack.c.l.bf16 %v298
      %v333 = vunpack.c.h.bf16 %v298
      %v334 = vunpack.c.l.bf16 %v299
      %v335 = vunpack.c.h.bf16 %v299
      %v336 = vunpack.c.l.bf16 %v300
      %v337 = vunpack.c.h.bf16 %v300
      %v338 = vunpack.c.l.bf16 %v301
      %v339 = vunpack.c.h.bf16 %v301
      %v340 = vunpack.c.l.bf16 %v302
      %v341 = vunpack.c.h.bf16 %v302
      %v342 = vunpack.c.l.bf16 %v303
      %v343 = vunpack.c.h.bf16 %v303
      %v344 = vunpack.c.l.bf16 %v304
      %v345 = vunpack.c.h.bf16 %v304
      %v346 = vunpack.c.l.bf16 %v305
      %v347 = vunpack.c.h.bf16 %v305
      %vm390 = vcmask 1040384
      %v391 = vrot.slane %v306, 7
      %v392 = vrot.slane %v307, 7
      %v393 = vrot.slane %v308, 7
      %v394 = vsel %vm390, %v391, %v393
      %v395 = vrot.slane %v309, 7
      %v396 = vsel %vm390, %v392, %v395
      %v397 = vrot.slane %v310, 7
      %v398 = vsel %vm390, %v393, %v397
      %v399 = vrot.slane %v311, 7
      %v400 = vsel %vm390, %v395, %v399
      %v401 = vrot.slane %v312, 7
      %v402 = vsel %vm390, %v397, %v401
      %v403 = vrot.slane %v313, 7
      %v404 = vsel %vm390, %v399, %v403
      %v405 = vrot.slane %v314, 7
      %v406 = vsel %vm390, %v401, %v405
      %v407 = vrot.slane %v315, 7
      %v408 = vsel %vm390, %v403, %v407
      %v409 = vrot.slane %v316, 7
      %v410 = vsel %vm390, %v405, %v409
      %v411 = vrot.slane %v317, 7
      %v412 = vsel %vm390, %v407, %v411
      %v413 = vrot.slane %v318, 7
      %v414 = vsel %vm390, %v409, %v413
      %v415 = vrot.slane %v319, 7
      %v416 = vsel %vm390, %v411, %v415
      %v417 = vrot.slane %v320, 7
      %v418 = vsel %vm390, %v413, %v417
      %v419 = vrot.slane %v321, 7
      %v420 = vsel %vm390, %v415, %v419
      %v421 = vrot.slane %v322, 7
      %v422 = vsel %vm390, %v417, %v421
      %v423 = vrot.slane %v323, 7
      %v424 = vsel %vm390, %v419, %v423
      %v425 = vrot.slane %v324, 7
      %v426 = vsel %vm390, %v421, %v425
      %v427 = vrot.slane %v325, 7
      %v428 = vsel %vm390, %v423, %v427
      %v429 = vrot.slane %v326, 7
      %v430 = vsel %vm390, %v425, %v429
      %v431 = vrot.slane %v327, 7
      %v432 = vsel %vm390, %v427, %v431
      %v433 = vrot.slane %v328, 7
      %v434 = vsel %vm390, %v429, %v433
      %v435 = vrot.slane %v329, 7
      %v436 = vsel %vm390, %v431, %v435
      %v437 = vrot.slane %v330, 7
      %v438 = vsel %vm390, %v433, %v437
      %v439 = vrot.slane %v331, 7
      %v440 = vsel %vm390, %v435, %v439
      %v441 = vrot.slane %v332, 7
      %v442 = vsel %vm390, %v437, %v441
      %v443 = vrot.slane %v333, 7
      %v444 = vsel %vm390, %v439, %v443
      %v445 = vrot.slane %v334, 7
      %v446 = vsel %vm390, %v441, %v445
      %v447 = vrot.slane %v335, 7
      %v448 = vsel %vm390, %v443, %v447
      %v449 = vrot.slane %v336, 7
      %v450 = vsel %vm390, %v445, %v449
      %v451 = vrot.slane %v337, 7
      %v452 = vsel %vm390, %v447, %v451
      %v453 = vrot.slane %v338, 7
      %v454 = vsel %vm390, %v449, %v453
      %v455 = vrot.slane %v339, 7
      %v456 = vsel %vm390, %v451, %v455
      %v457 = vrot.slane %v340, 7
      %v458 = vsel %vm390, %v453, %v457
      %v459 = vrot.slane %v341, 7
      %v460 = vsel %vm390, %v455, %v459
      %v461 = vrot.slane %v342, 7
      %v462 = vsel %vm390, %v457, %v461
      %v463 = vrot.slane %v343, 7
      %v464 = vsel %vm390, %v459, %v463
      %v465 = vrot.slane %v344, 7
      %v466 = vsel %vm390, %v461, %v465
      %v467 = vrot.slane %v345, 7
      %v468 = vsel %vm390, %v463, %v467
      %v469 = vrot.slane %v346, 7
      %v470 = vsel %vm390, %v465, %v469
      %v471 = vrot.slane %v347, 7
      %v472 = vsel %vm390, %v467, %v471
      %515 = vst [vmem:[#allocation2] sm:$0xfe] %v391
      %vm516 = vcmask 523265
      %517 = vst.msk [vmem:[#allocation2 + $0x8] sm:$0xfe] %vm516, %v392
      %518 = vst [vmem:[#allocation2 + $0x10] sm:$0xff] %v394
      %vm519 = vcmask 523264
      %520 = vst.msk [vmem:[#allocation2 + $0x18] sm:$0xff] %vm519, %v396
      %521 = vst [vmem:[#allocation2 + $0x20] sm:$0xff] %v398
      %522 = vst.msk [vmem:[#allocation2 + $0x28] sm:$0xff] %vm519, %v400
      %523 = vst [vmem:[#allocation2 + $0x30] sm:$0xff] %v402
      %524 = vst.msk [vmem:[#allocation2 + $0x38] sm:$0xff] %vm519, %v404
      %525 = vst [vmem:[#allocation2 + $0x40] sm:$0xff] %v406
      %526 = vst.msk [vmem:[#allocation2 + $0x48] sm:$0xff] %vm519, %v408
      %527 = vst [vmem:[#allocation2 + $0x50] sm:$0xff] %v410
      %528 = vst.msk [vmem:[#allocation2 + $0x58] sm:$0xff] %vm519, %v412
      %529 = vst [vmem:[#allocation2 + $0x60] sm:$0xff] %v414
      %530 = vst.msk [vmem:[#allocation2 + $0x68] sm:$0xff] %vm519, %v416
      %531 = vst [vmem:[#allocation2 + $0x70] sm:$0xff] %v418
      %532 = vst.msk [vmem:[#allocation2 + $0x78] sm:$0xff] %vm519, %v420
      %533 = vst [vmem:[#allocation2 + $0x80] sm:$0xff] %v422
      %534 = vst.msk [vmem:[#allocation2 + $0x88] sm:$0xff] %vm519, %v424
      %535 = vst [vmem:[#allocation2 + $0x90] sm:$0xff] %v426
      %536 = vst.msk [vmem:[#allocation2 + $0x98] sm:$0xff] %vm519, %v428
      %537 = vst [vmem:[#allocation2 + $0xa0] sm:$0xff] %v430
      %538 = vst.msk [vmem:[#allocation2 + $0xa8] sm:$0xff] %vm519, %v432
      %539 = vst [vmem:[#allocation2 + $0xb0] sm:$0xff] %v434
      %540 = vst.msk [vmem:[#allocation2 + $0xb8] sm:$0xff] %vm519, %v436
      %541 = vst [vmem:[#allocation2 + $0xc0] sm:$0xff] %v438
      %542 = vst.msk [vmem:[#allocation2 + $0xc8] sm:$0xff] %vm519, %v440
      %543 = vst [vmem:[#allocation2 + $0xd0] sm:$0xff] %v442
      %544 = vst.msk [vmem:[#allocation2 + $0xd8] sm:$0xff] %vm519, %v444
      %545 = vst [vmem:[#allocation2 + $0xe0] sm:$0xff] %v446
      %546 = vst.msk [vmem:[#allocation2 + $0xe8] sm:$0xff] %vm519, %v448
      %547 = vst [vmem:[#allocation2 + $0xf0] sm:$0xff] %v450
      %548 = vst.msk [vmem:[#allocation2 + $0xf8] sm:$0xff] %vm519, %v452
      %549 = vst [vmem:[#allocation2 + $0x100] sm:$0xff] %v454
      %550 = vst.msk [vmem:[#allocation2 + $0x108] sm:$0xff] %vm519, %v456
      %551 = vst [vmem:[#allocation2 + $0x110] sm:$0xff] %v458
      %552 = vst.msk [vmem:[#allocation2 + $0x118] sm:$0xff] %vm519, %v460
      %553 = vst [vmem:[#allocation2 + $0x120] sm:$0xff] %v462
      %554 = vst.msk [vmem:[#allocation2 + $0x128] sm:$0xff] %vm519, %v464
      %555 = vst [vmem:[#allocation2 + $0x130] sm:$0xff] %v466
      %556 = vst.msk [vmem:[#allocation2 + $0x138] sm:$0xff] %vm519, %v468
      %557 = vst [vmem:[#allocation2 + $0x140] sm:$0x7] %v470
      %vm558 = vcmask 518144
      %559 = vst.msk [vmem:[#allocation2 + $0x148] sm:$0x7] %vm558, %v472
      %v560 = vld [vmem:[#allocation2] sm:$0xfc]
      %v561 = vld [vmem:[#allocation2 + $0x8] sm:$0xfc]
      %v562 = vld [vmem:[#allocation2 + $0x10] sm:$0xff]
      %v563 = vld [vmem:[#allocation2 + $0x18] sm:$0xff]
      %v564 = vld [vmem:[#allocation2 + $0x20] sm:$0xff]
      %v565 = vld [vmem:[#allocation2 + $0x28] sm:$0xff]
      %v566 = vld [vmem:[#allocation2 + $0x30] sm:$0xff]
      %v567 = vld [vmem:[#allocation2 + $0x38] sm:$0xff]
      %v568 = vld [vmem:[#allocation2 + $0x40] sm:$0xff]
      %v569 = vld [vmem:[#allocation2 + $0x48] sm:$0xff]
      %v570 = vld [vmem:[#allocation2 + $0x50] sm:$0xff]
      %v571 = vld [vmem:[#allocation2 + $0x58] sm:$0xff]
      %v572 = vld [vmem:[#allocation2 + $0x60] sm:$0xff]
      %v573 = vld [vmem:[#allocation2 + $0x68] sm:$0xff]
      %v574 = vld [vmem:[#allocation2 + $0x70] sm:$0xff]
      %v575 = vld [vmem:[#allocation2 + $0x78] sm:$0xff]
      %v576 = vld [vmem:[#allocation2 + $0x80] sm:$0xff]
      %v577 = vld [vmem:[#allocation2 + $0x88] sm:$0xff]
      %v578 = vld [vmem:[#allocation2 + $0x90] sm:$0xff]
      %v579 = vld [vmem:[#allocation2 + $0x98] sm:$0xff]
      %v580 = vld [vmem:[#allocation2 + $0xa0] sm:$0xff]
      %v581 = vld [vmem:[#allocation2 + $0xa8] sm:$0xff]
      %v582 = vld [vmem:[#allocation2 + $0xb0] sm:$0xff]
      %v583 = vld [vmem:[#allocation2 + $0xb8] sm:$0xff]
      %v584 = vld [vmem:[#allocation2 + $0xc0] sm:$0xff]
      %v585 = vld [vmem:[#allocation2 + $0xc8] sm:$0xff]
      %v586 = vld [vmem:[#allocation2 + $0xd0] sm:$0xff]
      %v587 = vld [vmem:[#allocation2 + $0xd8] sm:$0xff]
      %v588 = vld [vmem:[#allocation2 + $0xe0] sm:$0xff]
      %v589 = vld [vmem:[#allocation2 + $0xe8] sm:$0xff]
      %v590 = vld [vmem:[#allocation2 + $0xf0] sm:$0xff]
      %v591 = vld [vmem:[#allocation2 + $0xf8] sm:$0xff]
      %v592 = vld [vmem:[#allocation2 + $0x100] sm:$0xff]
      %v593 = vld [vmem:[#allocation2 + $0x108] sm:$0xff]
      %v594 = vld [vmem:[#allocation2 + $0x110] sm:$0xff]
      %v595 = vld [vmem:[#allocation2 + $0x118] sm:$0xff]
      %v596 = vld [vmem:[#allocation2 + $0x120] sm:$0xff]
      %v597 = vld [vmem:[#allocation2 + $0x128] sm:$0xff]
      %v598 = vld [vmem:[#allocation2 + $0x130] sm:$0xff]
      %v599 = vld [vmem:[#allocation2 + $0x138] sm:$0xff]
      %v600 = vld [vmem:[#allocation2 + $0x140] sm:$0x7]
      %v601 = vld [vmem:[#allocation2 + $0x148] sm:$0x7]
      %v602 = vld [vmem:[%s1] sm:$0xff]
      %v603 = vld [vmem:[%s1 + $0x8] sm:$0xff]
      %v604 = vld [vmem:[%s1 + $0x10] sm:$0xff]
      %v605 = vld [vmem:[%s1 + $0x18] sm:$0xff]
      %v606 = vld [vmem:[%s1 + $0x20] sm:$0xff]
      %v607 = vld [vmem:[%s1 + $0x28] sm:$0xff]
      %v608 = vld [vmem:[%s1 + $0x30] sm:$0xff]
      %v609 = vld [vmem:[%s1 + $0x38] sm:$0xff]
      %v610 = vld [vmem:[%s1 + $0x40] sm:$0xff]
      %v611 = vld [vmem:[%s1 + $0x48] sm:$0xff]
      %v612 = vld [vmem:[%s1 + $0x50] sm:$0xff]
      %v613 = vld [vmem:[%s1 + $0x58] sm:$0xff]
      %v614 = vld [vmem:[%s1 + $0x60] sm:$0xff]
      %v615 = vld [vmem:[%s1 + $0x68] sm:$0xff]
      %v616 = vld [vmem:[%s1 + $0x70] sm:$0xff]
      %v617 = vld [vmem:[%s1 + $0x78] sm:$0xff]
      %v618 = vld [vmem:[%s1 + $0x80] sm:$0xff]
      %v619 = vld [vmem:[%s1 + $0x88] sm:$0xff]
      %v620 = vld [vmem:[%s1 + $0x90] sm:$0xff]
      %v621 = vld [vmem:[%s1 + $0x98] sm:$0xff]
      %v622 = vld [vmem:[%s1 + $0xa0] sm:$0xff]
      %v623 = vld [vmem:[%s1 + $0xa8] sm:$0xff]
      %v624 = vld [vmem:[%s1 + $0xb0] sm:$0xff]
      %v625 = vld [vmem:[%s1 + $0xb8] sm:$0xff]
      %v626 = vld [vmem:[#allocation2] sm:$0xfe]
      %v627 = vld [vmem:[#allocation2 + $0x8] sm:$0xfe]
      %v628 = vld [vmem:[#allocation2 + $0x140] sm:$0x3]
      %v629 = vld [vmem:[#allocation2 + $0x148] sm:$0x3]
      %s630 = scalar_lea.vmem %s1, 192
      %v631 = vld [vmem:[%s630] sm:$0xff]
      %v632 = vld [vmem:[%s630 + $0x8] sm:$0xff]
      %v633 = vld [vmem:[%s630 + $0x10] sm:$0xff]
      %v634 = vld [vmem:[%s630 + $0x18] sm:$0xff]
      %v635 = vld [vmem:[%s630 + $0x20] sm:$0xff]
      %v636 = vld [vmem:[%s630 + $0x28] sm:$0xff]
      %v637 = vld [vmem:[%s630 + $0x30] sm:$0xff]
      %v638 = vld [vmem:[%s630 + $0x38] sm:$0xff]
      %v639 = vld [vmem:[%s630 + $0x40] sm:$0xff]
      %v640 = vld [vmem:[%s630 + $0x48] sm:$0xff]
      %v641 = vld [vmem:[%s630 + $0x50] sm:$0xff]
      %v642 = vld [vmem:[%s630 + $0x58] sm:$0xff]
      %v643 = vld [vmem:[%s630 + $0x60] sm:$0xff]
      %v644 = vld [vmem:[%s630 + $0x68] sm:$0xff]
      %v645 = vld [vmem:[%s630 + $0x70] sm:$0xff]
      %v646 = vld [vmem:[%s630 + $0x78] sm:$0xff]
      %v647 = vld [vmem:[%s630 + $0x80] sm:$0xff]
      %v648 = vld [vmem:[%s630 + $0x88] sm:$0xff]
      %v649 = vld [vmem:[%s630 + $0x90] sm:$0xff]
      %v650 = vld [vmem:[%s630 + $0x98] sm:$0xff]
      %v651 = vld [vmem:[%s630 + $0xa0] sm:$0xff]
      %v652 = vld [vmem:[%s630 + $0xa8] sm:$0xff]
      %v653 = vld [vmem:[%s630 + $0xb0] sm:$0xff]
      %v654 = vld [vmem:[%s630 + $0xb8] sm:$0xff]
      %vm697 = vcmask 1046528
      %v698 = vrot.slane %v626, 1
      %v699 = vrot.slane %v562, 1
      %v700 = vsel %vm697, %v698, %v699
      %v701 = vrot.slane %v627, 1
      %v702 = vrot.slane %v563, 1
      %v703 = vsel %vm697, %v701, %v702
      %v704 = vrot.slane %v564, 1
      %v705 = vsel %vm697, %v699, %v704
      %v706 = vrot.slane %v565, 1
      %v707 = vsel %vm697, %v702, %v706
      %v708 = vrot.slane %v566, 1
      %v709 = vsel %vm697, %v704, %v708
      %v710 = vrot.slane %v567, 1
      %v711 = vsel %vm697, %v706, %v710
      %v712 = vrot.slane %v568, 1
      %v713 = vsel %vm697, %v708, %v712
      %v714 = vrot.slane %v569, 1
      %v715 = vsel %vm697, %v710, %v714
      %v716 = vrot.slane %v570, 1
      %v717 = vsel %vm697, %v712, %v716
      %v718 = vrot.slane %v571, 1
      %v719 = vsel %vm697, %v714, %v718
      %v720 = vrot.slane %v572, 1
      %v721 = vsel %vm697, %v716, %v720
      %v722 = vrot.slane %v573, 1
      %v723 = vsel %vm697, %v718, %v722
      %v724 = vrot.slane %v574, 1
      %v725 = vsel %vm697, %v720, %v724
      %v726 = vrot.slane %v575, 1
      %v727 = vsel %vm697, %v722, %v726
      %v728 = vrot.slane %v576, 1
      %v729 = vsel %vm697, %v724, %v728
      %v730 = vrot.slane %v577, 1
      %v731 = vsel %vm697, %v726, %v730
      %v732 = vrot.slane %v578, 1
      %v733 = vsel %vm697, %v728, %v732
      %v734 = vrot.slane %v579, 1
      %v735 = vsel %vm697, %v730, %v734
      %v736 = vrot.slane %v580, 1
      %v737 = vsel %vm697, %v732, %v736
      %v738 = vrot.slane %v581, 1
      %v739 = vsel %vm697, %v734, %v738
      %v740 = vrot.slane %v582, 1
      %v741 = vsel %vm697, %v736, %v740
      %v742 = vrot.slane %v583, 1
      %v743 = vsel %vm697, %v738, %v742
      %v744 = vrot.slane %v584, 1
      %v745 = vsel %vm697, %v740, %v744
      %v746 = vrot.slane %v585, 1
      %v747 = vsel %vm697, %v742, %v746
      %v748 = vrot.slane %v586, 1
      %v749 = vsel %vm697, %v744, %v748
      %v750 = vrot.slane %v587, 1
      %v751 = vsel %vm697, %v746, %v750
      %v752 = vrot.slane %v588, 1
      %v753 = vsel %vm697, %v748, %v752
      %v754 = vrot.slane %v589, 1
      %v755 = vsel %vm697, %v750, %v754
      %v756 = vrot.slane %v590, 1
      %v757 = vsel %vm697, %v752, %v756
      %v758 = vrot.slane %v591, 1
      %v759 = vsel %vm697, %v754, %v758
      %v760 = vrot.slane %v592, 1
      %v761 = vsel %vm697, %v756, %v760
      %v762 = vrot.slane %v593, 1
      %v763 = vsel %vm697, %v758, %v762
      %v764 = vrot.slane %v594, 1
      %v765 = vsel %vm697, %v760, %v764
      %v766 = vrot.slane %v595, 1
      %v767 = vsel %vm697, %v762, %v766
      %v768 = vrot.slane %v596, 1
      %v769 = vsel %vm697, %v764, %v768
      %v770 = vrot.slane %v597, 1
      %v771 = vsel %vm697, %v766, %v770
      %v772 = vrot.slane %v598, 1
      %v773 = vsel %vm697, %v768, %v772
      %v774 = vrot.slane %v599, 1
      %v775 = vsel %vm697, %v770, %v774
      %v776 = vrot.slane %v628, 1
      %v777 = vsel %vm697, %v772, %v776
      %v778 = vrot.slane %v629, 1
      %v779 = vsel %vm697, %v774, %v778
      %v801 = vsel %vm519, %v703, 0
      %v803 = vsel %vm519, %v707, 0
      %v805 = vsel %vm519, %v711, 0
      %v807 = vsel %vm519, %v715, 0
      %v809 = vsel %vm519, %v719, 0
      %v811 = vsel %vm519, %v723, 0
      %v813 = vsel %vm519, %v727, 0
      %v815 = vsel %vm519, %v731, 0
      %v817 = vsel %vm519, %v735, 0
      %v819 = vsel %vm519, %v739, 0
      %v821 = vsel %vm519, %v743, 0
      %v823 = vsel %vm519, %v747, 0
      %v825 = vsel %vm519, %v751, 0
      %v827 = vsel %vm519, %v755, 0
      %v829 = vsel %vm519, %v759, 0
      %v831 = vsel %vm519, %v763, 0
      %v833 = vsel %vm519, %v767, 0
      %v835 = vsel %vm519, %v771, 0
      %v837 = vsel %vm519, %v775, 0
      %v839 = vsel %vm519, %v779, 0
      %v841 = vsel %vm519, %v778, 0
      %843 = vmatprep.subr.mxu0 0.0
      %844 = vmatpush1.msra.mxu0 %v631
      %845 = vmatprep.subr.mxu0 0.0
      %846 = vmatpush1.msra.mxu0 %v632
      %847 = vmatprep.subr.mxu0 0.0
      %848 = vmatpush1.msra.mxu0 %v633
      %849 = vmatprep.subr.mxu0 0.0
      %850 = vmatpush1.msra.mxu0 %v634
      %851 = vmatprep.subr.mxu0 0.0
      %852 = vmatpush1.msra.mxu0 %v635
      %853 = vmatprep.subr.mxu0 0.0
      %854 = vmatpush1.msra.mxu0 %v636
      %855 = vmatprep.subr.mxu0 0.0
      %856 = vmatpush1.msra.mxu0 %v637
      %857 = vmatprep.subr.mxu0 0.0
      %858 = vmatpush1.msra.mxu0 %v638
      %859 = vmatprep.subr.mxu0 0.0
      %860 = vmatpush1.msra.mxu0 %v639
      %861 = vmatprep.subr.mxu0 0.0
      %862 = vmatpush1.msra.mxu0 %v640
      %863 = vmatprep.subr.mxu0 0.0
      %864 = vmatpush1.msra.mxu0 %v641
      %865 = vmatprep.subr.mxu0 0.0
      %866 = vmatpush1.msra.mxu0 %v642
      %867 = vmatprep.subr.mxu0 0.0
      %868 = vmatpush1.msra.mxu0 %v643
      %869 = vmatprep.subr.mxu0 0.0
      %870 = vmatpush1.msra.mxu0 %v644
      %871 = vmatprep.subr.mxu0 0.0
      %872 = vmatpush1.msra.mxu0 %v645
      %873 = vmatprep.subr.mxu0 0.0
      %874 = vmatpush1.msra.mxu0 %v646
      %875 = vmatprep.subr.mxu0 0.0
      %876 = vmatpush1.msra.mxu0 %v647
      %877 = vmatprep.subr.mxu0 0.0
      %878 = vmatpush1.msra.mxu0 %v648
      %879 = vmatprep.subr.mxu0 0.0
      %880 = vmatpush1.msra.mxu0 %v649
      %881 = vmatprep.subr.mxu0 0.0
      %882 = vmatpush1.msra.mxu0 %v650
      %883 = vmatprep.subr.mxu0 0.0
      %884 = vmatpush1.msra.mxu0 %v651
      %885 = vmatprep.subr.mxu0 0.0
      %886 = vmatpush1.msra.mxu0 %v652
      %887 = vmatprep.subr.mxu0 0.0
      %888 = vmatpush1.msra.mxu0 %v653
      %889 = vmatprep.subr.mxu0 0.0
      %890 = vmatpush1.msra.mxu0 %v654
      %891 = vmatprep.subr.mxu0 0.0
      %892 = vmatpush1.msra.mxu0 0.0
      %893 = vmatprep.subr.mxu0 0.0
      %894 = vmatpush1.msra.mxu0 0.0
      %895 = vmatprep.subr.mxu0 0.0
      %896 = vmatpush1.msra.mxu0 0.0
      %897 = vmatprep.subr.mxu0 0.0
      %898 = vmatpush1.msra.mxu0 0.0
      %899 = vmatprep.subr.mxu0 0.0
      %900 = vmatpush1.msra.mxu0 0.0
      %901 = vmatprep.subr.mxu0 0.0
      %902 = vmatpush1.msra.mxu0 0.0
      %903 = vmatprep.subr.mxu0 0.0
      %904 = vmatpush1.msra.mxu0 0.0
      %905 = vmatprep.subr.mxu0 0.0
      %906 = vmatpush1.msra.mxu0 0.0
      %907 = vmatprep.mubr.f32.mxu0 %v801
      %908 = vmatmul.mubr.f32.gmra.mrb[0].mxu0 %v700
      %v909 = vpop.f32.mrb[0].mxu0
      %v910 = vadd.f32 0.0, %v909
      %v911 = vpop.f32.mrb[0].mxu0
      %912 = vmatprep.mubr.f32.mxu0 %v803
      %913 = vmatmul.mubr.f32.gmra.mrb[0].mxu0 %v705
      %v914 = vpop.f32.mrb[0].mxu0
      %v915 = vadd.f32 0.0, %v914
      %v916 = vpop.f32.mrb[0].mxu0
      %917 = vmatprep.mubr.f32.mxu0 %v805
      %918 = vmatmul.mubr.f32.gmra.mrb[0].mxu0 %v709
      %v919 = vpop.f32.mrb[0].mxu0
      %v920 = vadd.f32 0.0, %v919
      %v921 = vpop.f32.mrb[0].mxu0
      %922 = vmatprep.mubr.f32.mxu0 %v807
      %923 = vmatmul.mubr.f32.gmra.mrb[0].mxu0 %v713
      %v924 = vpop.f32.mrb[0].mxu0
      %v925 = vadd.f32 0.0, %v924
      %v926 = vpop.f32.mrb[0].mxu0
      %927 = vmatprep.mubr.f32.mxu0 %v809
      %928 = vmatmul.mubr.f32.gmra.mrb[0].mxu0 %v717
      %v929 = vpop.f32.mrb[0].mxu0
      %v930 = vadd.f32 0.0, %v929
      %v931 = vpop.f32.mrb[0].mxu0
      %932 = vmatprep.mubr.f32.mxu0 %v811
      %933 = vmatmul.mubr.f32.gmra.mrb[0].mxu0 %v721
      %v934 = vpop.f32.mrb[0].mxu0
      %v935 = vadd.f32 0.0, %v934
      %v936 = vpop.f32.mrb[0].mxu0
      %937 = vmatprep.mubr.f32.mxu0 %v813
      %938 = vmatmul.mubr.f32.gmra.mrb[0].mxu0 %v725
      %v939 = vpop.f32.mrb[0].mxu0
      %v940 = vadd.f32 0.0, %v939
      %v941 = vpop.f32.mrb[0].mxu0
      %942 = vmatprep.mubr.f32.mxu0 %v815
      %943 = vmatmul.mubr.f32.gmra.mrb[0].mxu0 %v729
      %v944 = vpop.f32.mrb[0].mxu0
      %v945 = vadd.f32 0.0, %v944
      %v946 = vpop.f32.mrb[0].mxu0
      %947 = vmatprep.mubr.f32.mxu0 %v817
      %948 = vmatmul.mubr.f32.gmra.mrb[0].mxu0 %v733
      %v949 = vpop.f32.mrb[0].mxu0
      %v950 = vadd.f32 0.0, %v949
      %v951 = vpop.f32.mrb[0].mxu0
      %952 = vmatprep.mubr.f32.mxu0 %v819
      %953 = vmatmul.mubr.f32.gmra.mrb[0].mxu0 %v737
      %v954 = vpop.f32.mrb[0].mxu0
      %v955 = vadd.f32 0.0, %v954
      %v956 = vpop.f32.mrb[0].mxu0
      %957 = vmatprep.mubr.f32.mxu0 %v821
      %958 = vmatmul.mubr.f32.gmra.mrb[0].mxu0 %v741
      %v959 = vpop.f32.mrb[0].mxu0
      %v960 = vadd.f32 0.0, %v959
      %v961 = vpop.f32.mrb[0].mxu0
      %962 = vmatprep.mubr.f32.mxu0 %v823
      %963 = vmatmul.mubr.f32.gmra.mrb[0].mxu0 %v745
      %v964 = vpop.f32.mrb[0].mxu0
      %v965 = vadd.f32 0.0, %v964
      %v966 = vpop.f32.mrb[0].mxu0
      %967 = vmatprep.mubr.f32.mxu0 %v825
      %968 = vmatmul.mubr.f32.gmra.mrb[0].mxu0 %v749
      %v969 = vpop.f32.mrb[0].mxu0
      %v970 = vadd.f32 0.0, %v969
      %v971 = vpop.f32.mrb[0].mxu0
      %972 = vmatprep.mubr.f32.mxu0 %v827
      %973 = vmatmul.mubr.f32.gmra.mrb[0].mxu0 %v753
      %v974 = vpop.f32.mrb[0].mxu0
      %v975 = vadd.f32 0.0, %v974
      %v976 = vpop.f32.mrb[0].mxu0
      %977 = vmatprep.mubr.f32.mxu0 %v829
      %978 = vmatmul.mubr.f32.gmra.mrb[0].mxu0 %v757
      %v979 = vpop.f32.mrb[0].mxu0
      %v980 = vadd.f32 0.0, %v979
      %v981 = vpop.f32.mrb[0].mxu0
      %982 = vmatprep.mubr.f32.mxu0 %v831
      %983 = vmatmul.mubr.f32.gmra.mrb[0].mxu0 %v761
      %v984 = vpop.f32.mrb[0].mxu0
      %v985 = vadd.f32 0.0, %v984
      %v986 = vpop.f32.mrb[0].mxu0
      %987 = vmatprep.mubr.f32.mxu0 %v833
      %988 = vmatmul.mubr.f32.gmra.mrb[0].mxu0 %v765
      %v989 = vpop.f32.mrb[0].mxu0
      %v990 = vadd.f32 0.0, %v989
      %v991 = vpop.f32.mrb[0].mxu0
      %992 = vmatprep.mubr.f32.mxu0 %v835
      %993 = vmatmul.mubr.f32.gmra.mrb[0].mxu0 %v769
      %v994 = vpop.f32.mrb[0].mxu0
      %v995 = vadd.f32 0.0, %v994
      %v996 = vpop.f32.mrb[0].mxu0
      %997 = vmatprep.mubr.f32.mxu0 %v837
      %998 = vmatmul.mubr.f32.gmra.mrb[0].mxu0 %v773
      %v999 = vpop.f32.mrb[0].mxu0
      %v1000 = vadd.f32 0.0, %v999
      %v1001 = vpop.f32.mrb[0].mxu0
      %1002 = vmatprep.mubr.f32.mxu0 %v839
      %1003 = vmatmul.mubr.f32.gmra.mrb[0].mxu0 %v777
      %v1004 = vpop.f32.mrb[0].mxu0
      %v1005 = vadd.f32 0.0, %v1004
      %v1006 = vpop.f32.mrb[0].mxu0
      %1007 = vmatprep.mubr.f32.mxu0 %v841
      %1008 = vmatmul.mubr.f32.gmra.mrb[0].mxu0 %v776
      %v1009 = vpop.f32.mrb[0].mxu0
      %v1010 = vadd.f32 0.0, %v1009
      %v1011 = vpop.f32.mrb[0].mxu0
      %1012 = vdwg.mxu0
      %vm1017 = vcmask 1045504
      %v1018 = vrot.slane %v560, 2
      %v1019 = vrot.slane %v562, 2
      %v1020 = vsel %vm1017, %v1018, %v1019
      %v1021 = vrot.slane %v561, 2
      %v1022 = vrot.slane %v563, 2
      %v1023 = vsel %vm1017, %v1021, %v1022
      %v1024 = vrot.slane %v564, 2
      %v1025 = vsel %vm1017, %v1019, %v1024
      %v1026 = vrot.slane %v565, 2
      %v1027 = vsel %vm1017, %v1022, %v1026
      %v1028 = vrot.slane %v566, 2
      %v1029 = vsel %vm1017, %v1024, %v1028
      %v1030 = vrot.slane %v567, 2
      %v1031 = vsel %vm1017, %v1026, %v1030
      %v1032 = vrot.slane %v568, 2
      %v1033 = vsel %vm1017, %v1028, %v1032
      %v1034 = vrot.slane %v569, 2
      %v1035 = vsel %vm1017, %v1030, %v1034
      %v1036 = vrot.slane %v570, 2
      %v1037 = vsel %vm1017, %v1032, %v1036
      %v1038 = vrot.slane %v571, 2
      %v1039 = vsel %vm1017, %v1034, %v1038
      %v1040 = vrot.slane %v572, 2
      %v1041 = vsel %vm1017, %v1036, %v1040
      %v1042 = vrot.slane %v573, 2
      %v1043 = vsel %vm1017, %v1038, %v1042
      %v1044 = vrot.slane %v574, 2
      %v1045 = vsel %vm1017, %v1040, %v1044
      %v1046 = vrot.slane %v575, 2
      %v1047 = vsel %vm1017, %v1042, %v1046
      %v1048 = vrot.slane %v576, 2
      %v1049 = vsel %vm1017, %v1044, %v1048
      %v1050 = vrot.slane %v577, 2
      %v1051 = vsel %vm1017, %v1046, %v1050
      %v1052 = vrot.slane %v578, 2
      %v1053 = vsel %vm1017, %v1048, %v1052
      %v1054 = vrot.slane %v579, 2
      %v1055 = vsel %vm1017, %v1050, %v1054
      %v1056 = vrot.slane %v580, 2
      %v1057 = vsel %vm1017, %v1052, %v1056
      %v1058 = vrot.slane %v581, 2
      %v1059 = vsel %vm1017, %v1054, %v1058
      %v1060 = vrot.slane %v582, 2
      %v1061 = vsel %vm1017, %v1056, %v1060
      %v1062 = vrot.slane %v583, 2
      %v1063 = vsel %vm1017, %v1058, %v1062
      %v1064 = vrot.slane %v584, 2
      %v1065 = vsel %vm1017, %v1060, %v1064
      %v1066 = vrot.slane %v585, 2
      %v1067 = vsel %vm1017, %v1062, %v1066
      %v1068 = vrot.slane %v586, 2
      %v1069 = vsel %vm1017, %v1064, %v1068
      %v1070 = vrot.slane %v587, 2
      %v1071 = vsel %vm1017, %v1066, %v1070
      %v1072 = vrot.slane %v588, 2
      %v1073 = vsel %vm1017, %v1068, %v1072
      %v1074 = vrot.slane %v589, 2
      %v1075 = vsel %vm1017, %v1070, %v1074
      %v1076 = vrot.slane %v590, 2
      %v1077 = vsel %vm1017, %v1072, %v1076
      %v1078 = vrot.slane %v591, 2
      %v1079 = vsel %vm1017, %v1074, %v1078
      %v1080 = vrot.slane %v592, 2
      %v1081 = vsel %vm1017, %v1076, %v1080
      %v1082 = vrot.slane %v593, 2
      %v1083 = vsel %vm1017, %v1078, %v1082
      %v1084 = vrot.slane %v594, 2
      %v1085 = vsel %vm1017, %v1080, %v1084
      %v1086 = vrot.slane %v595, 2
      %v1087 = vsel %vm1017, %v1082, %v1086
      %v1088 = vrot.slane %v596, 2
      %v1089 = vsel %vm1017, %v1084, %v1088
      %v1090 = vrot.slane %v597, 2
      %v1091 = vsel %vm1017, %v1086, %v1090
      %v1092 = vrot.slane %v598, 2
      %v1093 = vsel %vm1017, %v1088, %v1092
      %v1094 = vrot.slane %v599, 2
      %v1095 = vsel %vm1017, %v1090, %v1094
      %v1096 = vrot.slane %v600, 2
      %v1097 = vsel %vm1017, %v1092, %v1096
      %v1098 = vrot.slane %v601, 2
      %v1099 = vsel %vm1017, %v1094, %v1098
      %v1121 = vsel %vm519, %v1023, 0
      %v1123 = vsel %vm519, %v1027, 0
      %v1125 = vsel %vm519, %v1031, 0
      %v1127 = vsel %vm519, %v1035, 0
      %v1129 = vsel %vm519, %v1039, 0
      %v1131 = vsel %vm519, %v1043, 0
      %v1133 = vsel %vm519, %v1047, 0
      %v1135 = vsel %vm519, %v1051, 0
      %v1137 = vsel %vm519, %v1055, 0
      %v1139 = vsel %vm519, %v1059, 0
      %v1141 = vsel %vm519, %v1063, 0
      %v1143 = vsel %vm519, %v1067, 0
      %v1145 = vsel %vm519, %v1071, 0
      %v1147 = vsel %vm519, %v1075, 0
      %v1149 = vsel %vm519, %v1079, 0
      %v1151 = vsel %vm519, %v1083, 0
      %v1153 = vsel %vm519, %v1087, 0
      %v1155 = vsel %vm519, %v1091, 0
      %v1157 = vsel %vm519, %v1095, 0
      %v1159 = vsel %vm519, %v1099, 0
      %v1161 = vsel %vm519, %v1098, 0
      %1163 = vmatprep.subr.mxu0 0.0
      %1164 = vmatpush1.msra.mxu0 %v602
      %1165 = vmatprep.subr.mxu0 0.0
      %1166 = vmatpush1.msra.mxu0 %v603
      %1167 = vmatprep.subr.mxu0 0.0
      %1168 = vmatpush1.msra.mxu0 %v604
      %1169 = vmatprep.subr.mxu0 0.0
      %1170 = vmatpush1.msra.mxu0 %v605
      %1171 = vmatprep.subr.mxu0 0.0
      %1172 = vmatpush1.msra.mxu0 %v606
      %1173 = vmatprep.subr.mxu0 0.0
      %1174 = vmatpush1.msra.mxu0 %v607
      %1175 = vmatprep.subr.mxu0 0.0
      %1176 = vmatpush1.msra.mxu0 %v608
      %1177 = vmatprep.subr.mxu0 0.0
      %1178 = vmatpush1.msra.mxu0 %v609
      %1179 = vmatprep.subr.mxu0 0.0
      %1180 = vmatpush1.msra.mxu0 %v610
      %1181 = vmatprep.subr.mxu0 0.0
      %1182 = vmatpush1.msra.mxu0 %v611
      %1183 = vmatprep.subr.mxu0 0.0
      %1184 = vmatpush1.msra.mxu0 %v612
      %1185 = vmatprep.subr.mxu0 0.0
      %1186 = vmatpush1.msra.mxu0 %v613
      %1187 = vmatprep.subr.mxu0 0.0
      %1188 = vmatpush1.msra.mxu0 %v614
      %1189 = vmatprep.subr.mxu0 0.0
      %1190 = vmatpush1.msra.mxu0 %v615
      %1191 = vmatprep.subr.mxu0 0.0
      %1192 = vmatpush1.msra.mxu0 %v616
      %1193 = vmatprep.subr.mxu0 0.0
      %1194 = vmatpush1.msra.mxu0 %v617
      %1195 = vmatprep.subr.mxu0 0.0
      %1196 = vmatpush1.msra.mxu0 %v618
      %1197 = vmatprep.subr.mxu0 0.0
      %1198 = vmatpush1.msra.mxu0 %v619
      %1199 = vmatprep.subr.mxu0 0.0
      %1200 = vmatpush1.msra.mxu0 %v620
      %1201 = vmatprep.subr.mxu0 0.0
      %1202 = vmatpush1.msra.mxu0 %v621
      %1203 = vmatprep.subr.mxu0 0.0
      %1204 = vmatpush1.msra.mxu0 %v622
      %1205 = vmatprep.subr.mxu0 0.0
      %1206 = vmatpush1.msra.mxu0 %v623
      %1207 = vmatprep.subr.mxu0 0.0
      %1208 = vmatpush1.msra.mxu0 %v624
      %1209 = vmatprep.subr.mxu0 0.0
      %1210 = vmatpush1.msra.mxu0 %v625
      %1211 = vmatprep.subr.mxu0 0.0
      %1212 = vmatpush1.msra.mxu0 0.0
      %1213 = vmatprep.subr.mxu0 0.0
      %1214 = vmatpush1.msra.mxu0 0.0
      %1215 = vmatprep.subr.mxu0 0.0
      %1216 = vmatpush1.msra.mxu0 0.0
      %1217 = vmatprep.subr.mxu0 0.0
      %1218 = vmatpush1.msra.mxu0 0.0
      %1219 = vmatprep.subr.mxu0 0.0
      %1220 = vmatpush1.msra.mxu0 0.0
      %1221 = vmatprep.subr.mxu0 0.0
      %1222 = vmatpush1.msra.mxu0 0.0
      %1223 = vmatprep.subr.mxu0 0.0
      %1224 = vmatpush1.msra.mxu0 0.0
      %1225 = vmatprep.subr.mxu0 0.0
      %1226 = vmatpush1.msra.mxu0 0.0
      %1227 = vmatprep.mubr.f32.mxu0 %v1121
      %1228 = vmatmul.mubr.f32.gmra.mrb[0].mxu0 %v1020
      %v1229 = vpop.f32.mrb[0].mxu0
      %v1230 = vadd.f32 %v910, %v1229
      %v1231 = vpop.f32.mrb[0].mxu0
      %1232 = vmatprep.mubr.f32.mxu0 %v1123
      %1233 = vmatmul.mubr.f32.gmra.mrb[0].mxu0 %v1025
      %v1234 = vpop.f32.mrb[0].mxu0
      %v1235 = vadd.f32 %v915, %v1234
      %v1236 = vpop.f32.mrb[0].mxu0
      %1237 = vmatprep.mubr.f32.mxu0 %v1125
      %1238 = vmatmul.mubr.f32.gmra.mrb[0].mxu0 %v1029
      %v1239 = vpop.f32.mrb[0].mxu0
      %v1240 = vadd.f32 %v920, %v1239
      %v1241 = vpop.f32.mrb[0].mxu0
      %1242 = vmatprep.mubr.f32.mxu0 %v1127
      %1243 = vmatmul.mubr.f32.gmra.mrb[0].mxu0 %v1033
      %v1244 = vpop.f32.mrb[0].mxu0
      %v1245 = vadd.f32 %v925, %v1244
      %v1246 = vpop.f32.mrb[0].mxu0
      %1247 = vmatprep.mubr.f32.mxu0 %v1129
      %1248 = vmatmul.mubr.f32.gmra.mrb[0].mxu0 %v1037
      %v1249 = vpop.f32.mrb[0].mxu0
      %v1250 = vadd.f32 %v930, %v1249
      %v1251 = vpop.f32.mrb[0].mxu0
      %1252 = vmatprep.mubr.f32.mxu0 %v1131
      %1253 = vmatmul.mubr.f32.gmra.mrb[0].mxu0 %v1041
      %v1254 = vpop.f32.mrb[0].mxu0
      %v1255 = vadd.f32 %v935, %v1254
      %v1256 = vpop.f32.mrb[0].mxu0
      %1257 = vmatprep.mubr.f32.mxu0 %v1133
      %1258 = vmatmul.mubr.f32.gmra.mrb[0].mxu0 %v1045
      %v1259 = vpop.f32.mrb[0].mxu0
      %v1260 = vadd.f32 %v940, %v1259
      %v1261 = vpop.f32.mrb[0].mxu0
      %1262 = vmatprep.mubr.f32.mxu0 %v1135
      %1263 = vmatmul.mubr.f32.gmra.mrb[0].mxu0 %v1049
      %v1264 = vpop.f32.mrb[0].mxu0
      %v1265 = vadd.f32 %v945, %v1264
      %v1266 = vpop.f32.mrb[0].mxu0
      %1267 = vmatprep.mubr.f32.mxu0 %v1137
      %1268 = vmatmul.mubr.f32.gmra.mrb[0].mxu0 %v1053
      %v1269 = vpop.f32.mrb[0].mxu0
      %v1270 = vadd.f32 %v950, %v1269
      %v1271 = vpop.f32.mrb[0].mxu0
      %1272 = vmatprep.mubr.f32.mxu0 %v1139
      %1273 = vmatmul.mubr.f32.gmra.mrb[0].mxu0 %v1057
      %v1274 = vpop.f32.mrb[0].mxu0
      %v1275 = vadd.f32 %v955, %v1274
      %v1276 = vpop.f32.mrb[0].mxu0
      %1277 = vmatprep.mubr.f32.mxu0 %v1141
      %1278 = vmatmul.mubr.f32.gmra.mrb[0].mxu0 %v1061
      %v1279 = vpop.f32.mrb[0].mxu0
      %v1280 = vadd.f32 %v960, %v1279
      %v1281 = vpop.f32.mrb[0].mxu0
      %1282 = vmatprep.mubr.f32.mxu0 %v1143
      %1283 = vmatmul.mubr.f32.gmra.mrb[0].mxu0 %v1065
      %v1284 = vpop.f32.mrb[0].mxu0
      %v1285 = vadd.f32 %v965, %v1284
      %v1286 = vpop.f32.mrb[0].mxu0
      %1287 = vmatprep.mubr.f32.mxu0 %v1145
      %1288 = vmatmul.mubr.f32.gmra.mrb[0].mxu0 %v1069
      %v1289 = vpop.f32.mrb[0].mxu0
      %v1290 = vadd.f32 %v970, %v1289
      %v1291 = vpop.f32.mrb[0].mxu0
      %1292 = vmatprep.mubr.f32.mxu0 %v1147
      %1293 = vmatmul.mubr.f32.gmra.mrb[0].mxu0 %v1073
      %v1294 = vpop.f32.mrb[0].mxu0
      %v1295 = vadd.f32 %v975, %v1294
      %v1296 = vpop.f32.mrb[0].mxu0
      %1297 = vmatprep.mubr.f32.mxu0 %v1149
      %1298 = vmatmul.mubr.f32.gmra.mrb[0].mxu0 %v1077
      %v1299 = vpop.f32.mrb[0].mxu0
      %v1300 = vadd.f32 %v980, %v1299
      %v1301 = vpop.f32.mrb[0].mxu0
      %1302 = vmatprep.mubr.f32.mxu0 %v1151
      %1303 = vmatmul.mubr.f32.gmra.mrb[0].mxu0 %v1081
      %v1304 = vpop.f32.mrb[0].mxu0
      %v1305 = vadd.f32 %v985, %v1304
      %v1306 = vpop.f32.mrb[0].mxu0
      %1307 = vmatprep.mubr.f32.mxu0 %v1153
      %1308 = vmatmul.mubr.f32.gmra.mrb[0].mxu0 %v1085
      %v1309 = vpop.f32.mrb[0].mxu0
      %v1310 = vadd.f32 %v990, %v1309
      %v1311 = vpop.f32.mrb[0].mxu0
      %1312 = vmatprep.mubr.f32.mxu0 %v1155
      %1313 = vmatmul.mubr.f32.gmra.mrb[0].mxu0 %v1089
      %v1314 = vpop.f32.mrb[0].mxu0
      %v1315 = vadd.f32 %v995, %v1314
      %v1316 = vpop.f32.mrb[0].mxu0
      %1317 = vmatprep.mubr.f32.mxu0 %v1157
      %1318 = vmatmul.mubr.f32.gmra.mrb[0].mxu0 %v1093
      %v1319 = vpop.f32.mrb[0].mxu0
      %v1320 = vadd.f32 %v1000, %v1319
      %v1321 = vpop.f32.mrb[0].mxu0
      %1322 = vmatprep.mubr.f32.mxu0 %v1159
      %1323 = vmatmul.mubr.f32.gmra.mrb[0].mxu0 %v1097
      %v1324 = vpop.f32.mrb[0].mxu0
      %v1325 = vadd.f32 %v1005, %v1324
      %v1326 = vpop.f32.mrb[0].mxu0
      %1327 = vmatprep.mubr.f32.mxu0 %v1161
      %1328 = vmatmul.mubr.f32.gmra.mrb[0].mxu0 %v1096
      %v1329 = vpop.f32.mrb[0].mxu0
      %v1330 = vadd.f32 %v1010, %v1329
      %v1331 = vpop.f32.mrb[0].mxu0
      %1332 = vdwg.mxu0
      %v1333 = vld [vmem:[#allocation2] sm:$0xff]
      %v1334 = vld [vmem:[#allocation2 + $0x8] sm:$0xff]
      %v1335 = vld [vmem:[#allocation2 + $0x140] sm:$0x1]
      %v1336 = vld [vmem:[#allocation2 + $0x148] sm:$0x1]
      %s1337 = scalar_lea.vmem %s1, 384
      %v1338 = vld [vmem:[%s1337] sm:$0xff]
      %v1339 = vld [vmem:[%s1337 + $0x8] sm:$0xff]
      %v1340 = vld [vmem:[%s1337 + $0x10] sm:$0xff]
      %v1341 = vld [vmem:[%s1337 + $0x18] sm:$0xff]
      %v1342 = vld [vmem:[%s1337 + $0x20] sm:$0xff]
      %v1343 = vld [vmem:[%s1337 + $0x28] sm:$0xff]
      %v1344 = vld [vmem:[%s1337 + $0x30] sm:$0xff]
      %v1345 = vld [vmem:[%s1337 + $0x38] sm:$0xff]
      %v1346 = vld [vmem:[%s1337 + $0x40] sm:$0xff]
      %v1347 = vld [vmem:[%s1337 + $0x48] sm:$0xff]
      %v1348 = vld [vmem:[%s1337 + $0x50] sm:$0xff]
      %v1349 = vld [vmem:[%s1337 + $0x58] sm:$0xff]
      %v1350 = vld [vmem:[%s1337 + $0x60] sm:$0xff]
      %v1351 = vld [vmem:[%s1337 + $0x68] sm:$0xff]
      %v1352 = vld [vmem:[%s1337 + $0x70] sm:$0xff]
      %v1353 = vld [vmem:[%s1337 + $0x78] sm:$0xff]
      %v1354 = vld [vmem:[%s1337 + $0x80] sm:$0xff]
      %v1355 = vld [vmem:[%s1337 + $0x88] sm:$0xff]
      %v1356 = vld [vmem:[%s1337 + $0x90] sm:$0xff]
      %v1357 = vld [vmem:[%s1337 + $0x98] sm:$0xff]
      %v1358 = vld [vmem:[%s1337 + $0xa0] sm:$0xff]
      %v1359 = vld [vmem:[%s1337 + $0xa8] sm:$0xff]
      %v1360 = vld [vmem:[%s1337 + $0xb0] sm:$0xff]
      %v1361 = vld [vmem:[%s1337 + $0xb8] sm:$0xff]
      %v1363 = vsel %vm519, %v1334, 0
      %v1365 = vsel %vm519, %v563, 0
      %v1367 = vsel %vm519, %v565, 0
      %v1369 = vsel %vm519, %v567, 0
      %v1371 = vsel %vm519, %v569, 0
      %v1373 = vsel %vm519, %v571, 0
      %v1375 = vsel %vm519, %v573, 0
      %v1377 = vsel %vm519, %v575, 0
      %v1379 = vsel %vm519, %v577, 0
      %v1381 = vsel %vm519, %v579, 0
      %v1383 = vsel %vm519, %v581, 0
      %v1385 = vsel %vm519, %v583, 0
      %v1387 = vsel %vm519, %v585, 0
      %v1389 = vsel %vm519, %v587, 0
      %v1391 = vsel %vm519, %v589, 0
      %v1393 = vsel %vm519, %v591, 0
      %v1395 = vsel %vm519, %v593, 0
      %v1397 = vsel %vm519, %v595, 0
      %v1399 = vsel %vm519, %v597, 0
      %v1401 = vsel %vm519, %v599, 0
      %v1404 = vsel %vm519, %v1336, 0
      %1406 = vmatprep.subr.mxu0 0.0
      %1407 = vmatpush1.msra.mxu0 %v1338
      %1408 = vmatprep.subr.mxu0 0.0
      %1409 = vmatpush1.msra.mxu0 %v1339
      %1410 = vmatprep.subr.mxu0 0.0
      %1411 = vmatpush1.msra.mxu0 %v1340
      %1412 = vmatprep.subr.mxu0 0.0
      %1413 = vmatpush1.msra.mxu0 %v1341
      %1414 = vmatprep.subr.mxu0 0.0
      %1415 = vmatpush1.msra.mxu0 %v1342
      %1416 = vmatprep.subr.mxu0 0.0
      %1417 = vmatpush1.msra.mxu0 %v1343
      %1418 = vmatprep.subr.mxu0 0.0
      %1419 = vmatpush1.msra.mxu0 %v1344
      %1420 = vmatprep.subr.mxu0 0.0
      %1421 = vmatpush1.msra.mxu0 %v1345
      %1422 = vmatprep.subr.mxu0 0.0
      %1423 = vmatpush1.msra.mxu0 %v1346
      %1424 = vmatprep.subr.mxu0 0.0
      %1425 = vmatpush1.msra.mxu0 %v1347
      %1426 = vmatprep.subr.mxu0 0.0
      %1427 = vmatpush1.msra.mxu0 %v1348
      %1428 = vmatprep.subr.mxu0 0.0
      %1429 = vmatpush1.msra.mxu0 %v1349
      %1430 = vmatprep.subr.mxu0 0.0
      %1431 = vmatpush1.msra.mxu0 %v1350
      %1432 = vmatprep.subr.mxu0 0.0
      %1433 = vmatpush1.msra.mxu0 %v1351
      %1434 = vmatprep.subr.mxu0 0.0
      %1435 = vmatpush1.msra.mxu0 %v1352
      %1436 = vmatprep.subr.mxu0 0.0
      %1437 = vmatpush1.msra.mxu0 %v1353
      %1438 = vmatprep.subr.mxu0 0.0
      %1439 = vmatpush1.msra.mxu0 %v1354
      %1440 = vmatprep.subr.mxu0 0.0
      %1441 = vmatpush1.msra.mxu0 %v1355
      %1442 = vmatprep.subr.mxu0 0.0
      %1443 = vmatpush1.msra.mxu0 %v1356
      %1444 = vmatprep.subr.mxu0 0.0
      %1445 = vmatpush1.msra.mxu0 %v1357
      %1446 = vmatprep.subr.mxu0 0.0
      %1447 = vmatpush1.msra.mxu0 %v1358
      %1448 = vmatprep.subr.mxu0 0.0
      %1449 = vmatpush1.msra.mxu0 %v1359
      %1450 = vmatprep.subr.mxu0 0.0
      %1451 = vmatpush1.msra.mxu0 %v1360
      %1452 = vmatprep.subr.mxu0 0.0
      %1453 = vmatpush1.msra.mxu0 %v1361
      %1454 = vmatprep.subr.mxu0 0.0
      %1455 = vmatpush1.msra.mxu0 0.0
      %1456 = vmatprep.subr.mxu0 0.0
      %1457 = vmatpush1.msra.mxu0 0.0
      %1458 = vmatprep.subr.mxu0 0.0
      %1459 = vmatpush1.msra.mxu0 0.0
      %1460 = vmatprep.subr.mxu0 0.0
      %1461 = vmatpush1.msra.mxu0 0.0
      %1462 = vmatprep.subr.mxu0 0.0
      %1463 = vmatpush1.msra.mxu0 0.0
      %1464 = vmatprep.subr.mxu0 0.0
      %1465 = vmatpush1.msra.mxu0 0.0
      %1466 = vmatprep.subr.mxu0 0.0
      %1467 = vmatpush1.msra.mxu0 0.0
      %1468 = vmatprep.subr.mxu0 0.0
      %1469 = vmatpush1.msra.mxu0 0.0
      %1470 = vmatprep.mubr.f32.mxu0 %v1363
      %1471 = vmatmul.mubr.f32.gmra.mrb[0].mxu0 %v1333
      %v1472 = vpop.f32.mrb[0].mxu0
      %v1473 = vadd.f32 0.0, %v1472
      %v1474 = vpop.f32.mrb[0].mxu0
      %1475 = vmatprep.mubr.f32.mxu0 %v1365
      %1476 = vmatmul.mubr.f32.gmra.mrb[0].mxu0 %v562
      %v1477 = vpop.f32.mrb[0].mxu0
      %v1478 = vadd.f32 0.0, %v1477
      %v1479 = vpop.f32.mrb[0].mxu0
      %1480 = vmatprep.mubr.f32.mxu0 %v1367
      %1481 = vmatmul.mubr.f32.gmra.mrb[0].mxu0 %v564
      %v1482 = vpop.f32.mrb[0].mxu0
      %v1483 = vadd.f32 0.0, %v1482
      %v1484 = vpop.f32.mrb[0].mxu0
      %1485 = vmatprep.mubr.f32.mxu0 %v1369
      %1486 = vmatmul.mubr.f32.gmra.mrb[0].mxu0 %v566
      %v1487 = vpop.f32.mrb[0].mxu0
      %v1488 = vadd.f32 0.0, %v1487
      %v1489 = vpop.f32.mrb[0].mxu0
      %1490 = vmatprep.mubr.f32.mxu0 %v1371
      %1491 = vmatmul.mubr.f32.gmra.mrb[0].mxu0 %v568
      %v1492 = vpop.f32.mrb[0].mxu0
      %v1493 = vadd.f32 0.0, %v1492
      %v1494 = vpop.f32.mrb[0].mxu0
      %1495 = vmatprep.mubr.f32.mxu0 %v1373
      %1496 = vmatmul.mubr.f32.gmra.mrb[0].mxu0 %v570
      %v1497 = vpop.f32.mrb[0].mxu0
      %v1498 = vadd.f32 0.0, %v1497
      %v1499 = vpop.f32.mrb[0].mxu0
      %1500 = vmatprep.mubr.f32.mxu0 %v1375
      %1501 = vmatmul.mubr.f32.gmra.mrb[0].mxu0 %v572
      %v1502 = vpop.f32.mrb[0].mxu0
      %v1503 = vadd.f32 0.0, %v1502
      %v1504 = vpop.f32.mrb[0].mxu0
      %1505 = vmatprep.mubr.f32.mxu0 %v1377
      %1506 = vmatmul.mubr.f32.gmra.mrb[0].mxu0 %v574
      %v1507 = vpop.f32.mrb[0].mxu0
      %v1508 = vadd.f32 0.0, %v1507
      %v1509 = vpop.f32.mrb[0].mxu0
      %1510 = vmatprep.mubr.f32.mxu0 %v1379
      %1511 = vmatmul.mubr.f32.gmra.mrb[0].mxu0 %v576
      %v1512 = vpop.f32.mrb[0].mxu0
      %v1513 = vadd.f32 0.0, %v1512
      %v1514 = vpop.f32.mrb[0].mxu0
      %1515 = vmatprep.mubr.f32.mxu0 %v1381
      %1516 = vmatmul.mubr.f32.gmra.mrb[0].mxu0 %v578
      %v1517 = vpop.f32.mrb[0].mxu0
      %v1518 = vadd.f32 0.0, %v1517
      %v1519 = vpop.f32.mrb[0].mxu0
      %1520 = vmatprep.mubr.f32.mxu0 %v1383
      %1521 = vmatmul.mubr.f32.gmra.mrb[0].mxu0 %v580
      %v1522 = vpop.f32.mrb[0].mxu0
      %v1523 = vadd.f32 0.0, %v1522
      %v1524 = vpop.f32.mrb[0].mxu0
      %1525 = vmatprep.mubr.f32.mxu0 %v1385
      %1526 = vmatmul.mubr.f32.gmra.mrb[0].mxu0 %v582
      %v1527 = vpop.f32.mrb[0].mxu0
      %v1528 = vadd.f32 0.0, %v1527
      %v1529 = vpop.f32.mrb[0].mxu0
      %1530 = vmatprep.mubr.f32.mxu0 %v1387
      %1531 = vmatmul.mubr.f32.gmra.mrb[0].mxu0 %v584
      %v1532 = vpop.f32.mrb[0].mxu0
      %v1533 = vadd.f32 0.0, %v1532
      %v1534 = vpop.f32.mrb[0].mxu0
      %1535 = vmatprep.mubr.f32.mxu0 %v1389
      %1536 = vmatmul.mubr.f32.gmra.mrb[0].mxu0 %v586
      %v1537 = vpop.f32.mrb[0].mxu0
      %v1538 = vadd.f32 0.0, %v1537
      %v1539 = vpop.f32.mrb[0].mxu0
      %1540 = vmatprep.mubr.f32.mxu0 %v1391
      %1541 = vmatmul.mubr.f32.gmra.mrb[0].mxu0 %v588
      %v1542 = vpop.f32.mrb[0].mxu0
      %v1543 = vadd.f32 0.0, %v1542
      %v1544 = vpop.f32.mrb[0].mxu0
      %1545 = vmatprep.mubr.f32.mxu0 %v1393
      %1546 = vmatmul.mubr.f32.gmra.mrb[0].mxu0 %v590
      %v1547 = vpop.f32.mrb[0].mxu0
      %v1548 = vadd.f32 0.0, %v1547
      %v1549 = vpop.f32.mrb[0].mxu0
      %1550 = vmatprep.mubr.f32.mxu0 %v1395
      %1551 = vmatmul.mubr.f32.gmra.mrb[0].mxu0 %v592
      %v1552 = vpop.f32.mrb[0].mxu0
      %v1553 = vadd.f32 0.0, %v1552
      %v1554 = vpop.f32.mrb[0].mxu0
      %1555 = vmatprep.mubr.f32.mxu0 %v1397
      %1556 = vmatmul.mubr.f32.gmra.mrb[0].mxu0 %v594
      %v1557 = vpop.f32.mrb[0].mxu0
      %v1558 = vadd.f32 0.0, %v1557
      %v1559 = vpop.f32.mrb[0].mxu0
      %1560 = vmatprep.mubr.f32.mxu0 %v1399
      %1561 = vmatmul.mubr.f32.gmra.mrb[0].mxu0 %v596
      %v1562 = vpop.f32.mrb[0].mxu0
      %v1563 = vadd.f32 0.0, %v1562
      %v1564 = vpop.f32.mrb[0].mxu0
      %1565 = vmatprep.mubr.f32.mxu0 %v1401
      %1566 = vmatmul.mubr.f32.gmra.mrb[0].mxu0 %v598
      %v1567 = vpop.f32.mrb[0].mxu0
      %v1568 = vadd.f32 0.0, %v1567
      %v1569 = vpop.f32.mrb[0].mxu0
      %1570 = vmatprep.mubr.f32.mxu0 %v1404
      %1571 = vmatmul.mubr.f32.gmra.mrb[0].mxu0 %v1335
      %v1572 = vpop.f32.mrb[0].mxu0
      %v1573 = vadd.f32 0.0, %v1572
      %v1574 = vpop.f32.mrb[0].mxu0
      %1575 = vdwg.mxu0
      %v1576 = vadd.f32 %v1230, %v1473
      %v1577 = vadd.f32 %v1235, %v1478
      %v1578 = vadd.f32 %v1240, %v1483
      %v1579 = vadd.f32 %v1245, %v1488
      %v1580 = vadd.f32 %v1250, %v1493
      %v1581 = vadd.f32 %v1255, %v1498
      %v1582 = vadd.f32 %v1260, %v1503
      %v1583 = vadd.f32 %v1265, %v1508
      %v1584 = vadd.f32 %v1270, %v1513
      %v1585 = vadd.f32 %v1275, %v1518
      %v1586 = vadd.f32 %v1280, %v1523
      %v1587 = vadd.f32 %v1285, %v1528
      %v1588 = vadd.f32 %v1290, %v1533
      %v1589 = vadd.f32 %v1295, %v1538
      %v1590 = vadd.f32 %v1300, %v1543
      %v1591 = vadd.f32 %v1305, %v1548
      %v1592 = vadd.f32 %v1310, %v1553
      %v1593 = vadd.f32 %v1315, %v1558
      %v1594 = vadd.f32 %v1320, %v1563
      %v1595 = vadd.f32 %v1325, %v1568
      %v1596 = vadd.f32 %v1330, %v1573
      %v1597 = vld [vmem:[%s2] sm:$0x1]
      %v1599 = vlaneseq
      %v1600 = vshrl.u32 %v1599, 7
      %v1601 = vsub.s32 0, %v1600
      %v1602 = vrot.slane %v1597, %v1601
      %v1604 = vadd.f32 %v1576, %v1602
      %v1605 = vadd.f32 %v1577, %v1602
      %v1606 = vadd.f32 %v1578, %v1602
      %v1607 = vadd.f32 %v1579, %v1602
      %v1608 = vadd.f32 %v1580, %v1602
      %v1609 = vadd.f32 %v1581, %v1602
      %v1610 = vadd.f32 %v1582, %v1602
      %v1611 = vadd.f32 %v1583, %v1602
      %v1612 = vadd.f32 %v1584, %v1602
      %v1613 = vadd.f32 %v1585, %v1602
      %v1614 = vadd.f32 %v1586, %v1602
      %v1615 = vadd.f32 %v1587, %v1602
      %v1616 = vadd.f32 %v1588, %v1602
      %v1617 = vadd.f32 %v1589, %v1602
      %v1618 = vadd.f32 %v1590, %v1602
      %v1619 = vadd.f32 %v1591, %v1602
      %v1620 = vadd.f32 %v1592, %v1602
      %v1621 = vadd.f32 %v1593, %v1602
      %v1622 = vadd.f32 %v1594, %v1602
      %v1623 = vadd.f32 %v1595, %v1602
      %v1624 = vadd.f32 %v1596, %v1602
      %v1625 = vmax.f32 %v1604, 0.0
      %v1626 = vmax.f32 %v1605, 0.0
      %v1627 = vmax.f32 %v1606, 0.0
      %v1628 = vmax.f32 %v1607, 0.0
      %v1629 = vmax.f32 %v1608, 0.0
      %v1630 = vmax.f32 %v1609, 0.0
      %v1631 = vmax.f32 %v1610, 0.0
      %v1632 = vmax.f32 %v1611, 0.0
      %v1633 = vmax.f32 %v1612, 0.0
      %v1634 = vmax.f32 %v1613, 0.0
      %v1635 = vmax.f32 %v1614, 0.0
      %v1636 = vmax.f32 %v1615, 0.0
      %v1637 = vmax.f32 %v1616, 0.0
      %v1638 = vmax.f32 %v1617, 0.0
      %v1639 = vmax.f32 %v1618, 0.0
      %v1640 = vmax.f32 %v1619, 0.0
      %v1641 = vmax.f32 %v1620, 0.0
      %v1642 = vmax.f32 %v1621, 0.0
      %v1643 = vmax.f32 %v1622, 0.0
      %v1644 = vmax.f32 %v1623, 0.0
      %v1645 = vmax.f32 %v1624, 0.0
      %1646 = vst [vmem:[#allocation3] sm:$0xff] %v1625
      %1647 = vst [vmem:[#allocation3 + $0x8] sm:$0xff] %v1626
      %1648 = vst [vmem:[#allocation3 + $0x10] sm:$0xff] %v1627
      %1649 = vst [vmem:[#allocation3 + $0x18] sm:$0xff] %v1628
      %1650 = vst [vmem:[#allocation3 + $0x20] sm:$0xff] %v1629
      %1651 = vst [vmem:[#allocation3 + $0x28] sm:$0xff] %v1630
      %1652 = vst [vmem:[#allocation3 + $0x30] sm:$0xff] %v1631
      %1653 = vst [vmem:[#allocation3 + $0x38] sm:$0xff] %v1632
      %1654 = vst [vmem:[#allocation3 + $0x40] sm:$0xff] %v1633
      %1655 = vst [vmem:[#allocation3 + $0x48] sm:$0xff] %v1634
      %1656 = vst [vmem:[#allocation3 + $0x50] sm:$0xff] %v1635
      %1657 = vst [vmem:[#allocation3 + $0x58] sm:$0xff] %v1636
      %1658 = vst [vmem:[#allocation3 + $0x60] sm:$0xff] %v1637
      %1659 = vst [vmem:[#allocation3 + $0x68] sm:$0xff] %v1638
      %1660 = vst [vmem:[#allocation3 + $0x70] sm:$0xff] %v1639
      %1661 = vst [vmem:[#allocation3 + $0x78] sm:$0xff] %v1640
      %1662 = vst [vmem:[#allocation3 + $0x80] sm:$0xff] %v1641
      %1663 = vst [vmem:[#allocation3 + $0x88] sm:$0xff] %v1642
      %1664 = vst [vmem:[#allocation3 + $0x90] sm:$0xff] %v1643
      %1665 = vst [vmem:[#allocation3 + $0x98] sm:$0xff] %v1644
      %1666 = vst [vmem:[#allocation3 + $0xa0] sm:$0x1] %v1645
      %1667 = vst [vmem:[#allocation3 + $0xa1] sm:$0x1] 0.0
      %v1668 = vld [vmem:[#allocation3] sm:$0xff]
      %v1669 = vld [vmem:[#allocation3 + $0x8] sm:$0xff]
      %v1670 = vld [vmem:[#allocation3 + $0x10] sm:$0xff]
      %v1671 = vld [vmem:[#allocation3 + $0x18] sm:$0xff]
      %v1672 = vld [vmem:[#allocation3 + $0x20] sm:$0xff]
      %v1673 = vld [vmem:[#allocation3 + $0x28] sm:$0xff]
      %v1674 = vld [vmem:[#allocation3 + $0x30] sm:$0xff]
      %v1675 = vld [vmem:[#allocation3 + $0x38] sm:$0xff]
      %v1676 = vld [vmem:[#allocation3 + $0x40] sm:$0xff]
      %v1677 = vld [vmem:[#allocation3 + $0x48] sm:$0xff]
      %v1678 = vld [vmem:[#allocation3 + $0x50] sm:$0xff]
      %v1679 = vld [vmem:[#allocation3 + $0x58] sm:$0xff]
      %v1680 = vld [vmem:[#allocation3 + $0x60] sm:$0xff]
      %v1681 = vld [vmem:[#allocation3 + $0x68] sm:$0xff]
      %v1682 = vld [vmem:[#allocation3 + $0x70] sm:$0xff]
      %v1683 = vld [vmem:[#allocation3 + $0x78] sm:$0xff]
      %v1684 = vld [vmem:[#allocation3 + $0x80] sm:$0xff]
      %v1685 = vld [vmem:[#allocation3 + $0x88] sm:$0xff]
      %v1686 = vld [vmem:[#allocation3 + $0x90] sm:$0xff]
      %v1687 = vld [vmem:[#allocation3 + $0x98] sm:$0xff]
      %v1688 = vld [vmem:[#allocation3 + $0xa0] sm:$0x1]
      %v1689 = vld [vmem:[%s3] sm:$0xff]
      %v1690 = vld [vmem:[%s3 + $0x8] sm:$0xff]
      %v1691 = vld [vmem:[%s3 + $0x10] sm:$0xff]
      %v1692 = vld [vmem:[%s3 + $0x18] sm:$0xff]
      %v1693 = vld [vmem:[%s3 + $0x20] sm:$0xff]
      %v1694 = vld [vmem:[%s3 + $0x28] sm:$0xff]
      %v1695 = vld [vmem:[%s3 + $0x30] sm:$0xff]
      %v1696 = vld [vmem:[%s3 + $0x38] sm:$0xff]
      %v1697 = vld [vmem:[%s3 + $0x40] sm:$0xff]
      %v1698 = vld [vmem:[%s3 + $0x48] sm:$0xff]
      %v1699 = vld [vmem:[%s3 + $0x50] sm:$0xff]
      %v1700 = vld [vmem:[%s3 + $0x58] sm:$0xff]
      %v1701 = vld [vmem:[%s3 + $0x60] sm:$0xff]
      %v1702 = vld [vmem:[%s3 + $0x68] sm:$0xff]
      %v1703 = vld [vmem:[%s3 + $0x70] sm:$0xff]
      %v1704 = vld [vmem:[%s3 + $0x78] sm:$0xff]
      %v1705 = vld [vmem:[%s3 + $0x80] sm:$0xff]
      %v1706 = vld [vmem:[%s3 + $0x88] sm:$0xff]
      %v1707 = vld [vmem:[%s3 + $0x90] sm:$0xff]
      %v1708 = vld [vmem:[%s3 + $0x98] sm:$0xff]
      %v1709 = vld [vmem:[%s3 + $0xa0] sm:$0xff]
      %v1710 = vld [vmem:[%s3 + $0xa8] sm:$0xff]
      %v1711 = vld [vmem:[%s3 + $0xb0] sm:$0xff]
      %v1712 = vld [vmem:[%s3 + $0xb8] sm:$0xff]
      %v1713 = vld [vmem:[%s3 + $0xc0] sm:$0xff]
      %v1714 = vld [vmem:[%s3 + $0xc8] sm:$0xff]
      %v1715 = vld [vmem:[%s3 + $0xd0] sm:$0xff]
      %v1716 = vld [vmem:[%s3 + $0xd8] sm:$0xff]
      %v1717 = vld [vmem:[%s3 + $0xe0] sm:$0xff]
      %v1718 = vld [vmem:[%s3 + $0xe8] sm:$0xff]
      %v1719 = vld [vmem:[%s3 + $0xf0] sm:$0xff]
      %v1720 = vld [vmem:[%s3 + $0xf8] sm:$0xff]
      %v1721 = vld [vmem:[#allocation3 + $0x1] sm:$0xff]
      %v1722 = vld [vmem:[#allocation3 + $0x9] sm:$0xff]
      %v1723 = vld [vmem:[#allocation3 + $0x11] sm:$0xff]
      %v1724 = vld [vmem:[#allocation3 + $0x19] sm:$0xff]
      %v1725 = vld [vmem:[#allocation3 + $0x21] sm:$0xff]
      %v1726 = vld [vmem:[#allocation3 + $0x29] sm:$0xff]
      %v1727 = vld [vmem:[#allocation3 + $0x31] sm:$0xff]
      %v1728 = vld [vmem:[#allocation3 + $0x39] sm:$0xff]
      %v1729 = vld [vmem:[#allocation3 + $0x41] sm:$0xff]
      %v1730 = vld [vmem:[#allocation3 + $0x49] sm:$0xff]
      %v1731 = vld [vmem:[#allocation3 + $0x51] sm:$0xff]
      %v1732 = vld [vmem:[#allocation3 + $0x59] sm:$0xff]
      %v1733 = vld [vmem:[#allocation3 + $0x61] sm:$0xff]
      %v1734 = vld [vmem:[#allocation3 + $0x69] sm:$0xff]
      %v1735 = vld [vmem:[#allocation3 + $0x71] sm:$0xff]
      %v1736 = vld [vmem:[#allocation3 + $0x79] sm:$0xff]
      %v1737 = vld [vmem:[#allocation3 + $0x81] sm:$0xff]
      %v1738 = vld [vmem:[#allocation3 + $0x89] sm:$0xff]
      %v1739 = vld [vmem:[#allocation3 + $0x91] sm:$0xff]
      %v1740 = vld [vmem:[#allocation3 + $0x99] sm:$0xff]
      %v1741 = vld [vmem:[#allocation3 + $0xa1] sm:$0x1]
      %s1742 = scalar_lea.vmem %s3, 256
      %v1743 = vld [vmem:[%s1742] sm:$0xff]
      %v1744 = vld [vmem:[%s1742 + $0x8] sm:$0xff]
      %v1745 = vld [vmem:[%s1742 + $0x10] sm:$0xff]
      %v1746 = vld [vmem:[%s1742 + $0x18] sm:$0xff]
      %v1747 = vld [vmem:[%s1742 + $0x20] sm:$0xff]
      %v1748 = vld [vmem:[%s1742 + $0x28] sm:$0xff]
      %v1749 = vld [vmem:[%s1742 + $0x30] sm:$0xff]
      %v1750 = vld [vmem:[%s1742 + $0x38] sm:$0xff]
      %v1751 = vld [vmem:[%s1742 + $0x40] sm:$0xff]
      %v1752 = vld [vmem:[%s1742 + $0x48] sm:$0xff]
      %v1753 = vld [vmem:[%s1742 + $0x50] sm:$0xff]
      %v1754 = vld [vmem:[%s1742 + $0x58] sm:$0xff]
      %v1755 = vld [vmem:[%s1742 + $0x60] sm:$0xff]
      %v1756 = vld [vmem:[%s1742 + $0x68] sm:$0xff]
      %v1757 = vld [vmem:[%s1742 + $0x70] sm:$0xff]
      %v1758 = vld [vmem:[%s1742 + $0x78] sm:$0xff]
      %v1759 = vld [vmem:[%s1742 + $0x80] sm:$0xff]
      %v1760 = vld [vmem:[%s1742 + $0x88] sm:$0xff]
      %v1761 = vld [vmem:[%s1742 + $0x90] sm:$0xff]
      %v1762 = vld [vmem:[%s1742 + $0x98] sm:$0xff]
      %v1763 = vld [vmem:[%s1742 + $0xa0] sm:$0xff]
      %v1764 = vld [vmem:[%s1742 + $0xa8] sm:$0xff]
      %v1765 = vld [vmem:[%s1742 + $0xb0] sm:$0xff]
      %v1766 = vld [vmem:[%s1742 + $0xb8] sm:$0xff]
      %v1767 = vld [vmem:[%s1742 + $0xc0] sm:$0xff]
      %v1768 = vld [vmem:[%s1742 + $0xc8] sm:$0xff]
      %v1769 = vld [vmem:[%s1742 + $0xd0] sm:$0xff]
      %v1770 = vld [vmem:[%s1742 + $0xd8] sm:$0xff]
      %v1771 = vld [vmem:[%s1742 + $0xe0] sm:$0xff]
      %v1772 = vld [vmem:[%s1742 + $0xe8] sm:$0xff]
      %v1773 = vld [vmem:[%s1742 + $0xf0] sm:$0xff]
      %v1774 = vld [vmem:[%s1742 + $0xf8] sm:$0xff]
      %1775 = vmatprep.subr.mxu0 %v1744
      %1776 = vmatpush1.msra.mxu0 %v1743
      %1777 = vmatprep.subr.mxu0 %v1746
      %1778 = vmatpush1.msra.mxu0 %v1745
      %1779 = vmatprep.subr.mxu0 %v1748
      %1780 = vmatpush1.msra.mxu0 %v1747
      %1781 = vmatprep.subr.mxu0 %v1750
      %1782 = vmatpush1.msra.mxu0 %v1749
      %1783 = vmatprep.subr.mxu0 %v1752
      %1784 = vmatpush1.msra.mxu0 %v1751
      %1785 = vmatprep.subr.mxu0 %v1754
      %1786 = vmatpush1.msra.mxu0 %v1753
      %1787 = vmatprep.subr.mxu0 %v1756
      %1788 = vmatpush1.msra.mxu0 %v1755
      %1789 = vmatprep.subr.mxu0 %v1758
      %1790 = vmatpush1.msra.mxu0 %v1757
      %1791 = vmatprep.subr.mxu0 %v1760
      %1792 = vmatpush1.msra.mxu0 %v1759
      %1793 = vmatprep.subr.mxu0 %v1762
      %1794 = vmatpush1.msra.mxu0 %v1761
      %1795 = vmatprep.subr.mxu0 %v1764
      %1796 = vmatpush1.msra.mxu0 %v1763
      %1797 = vmatprep.subr.mxu0 %v1766
      %1798 = vmatpush1.msra.mxu0 %v1765
      %1799 = vmatprep.subr.mxu0 %v1768
      %1800 = vmatpush1.msra.mxu0 %v1767
      %1801 = vmatprep.subr.mxu0 %v1770
      %1802 = vmatpush1.msra.mxu0 %v1769
      %1803 = vmatprep.subr.mxu0 %v1772
      %1804 = vmatpush1.msra.mxu0 %v1771
      %1805 = vmatprep.subr.mxu0 %v1774
      %1806 = vmatpush1.msra.mxu0 %v1773
      %1807 = vmatprep.subr.mxu0 0.0
      %1808 = vmatpush1.msra.mxu0 0.0
      %1809 = vmatprep.subr.mxu0 0.0
      %1810 = vmatpush1.msra.mxu0 0.0
      %1811 = vmatprep.subr.mxu0 0.0
      %1812 = vmatpush1.msra.mxu0 0.0
      %1813 = vmatprep.subr.mxu0 0.0
      %1814 = vmatpush1.msra.mxu0 0.0
      %1815 = vmatprep.subr.mxu0 0.0
      %1816 = vmatpush1.msra.mxu0 0.0
      %1817 = vmatprep.subr.mxu0 0.0
      %1818 = vmatpush1.msra.mxu0 0.0
      %1819 = vmatprep.subr.mxu0 0.0
      %1820 = vmatpush1.msra.mxu0 0.0
      %1821 = vmatprep.subr.mxu0 0.0
      %1822 = vmatpush1.msra.mxu0 0.0
      %1823 = vmatprep.subr.mxu0 0.0
      %1824 = vmatpush1.msra.mxu0 0.0
      %1825 = vmatprep.subr.mxu0 0.0
      %1826 = vmatpush1.msra.mxu0 0.0
      %1827 = vmatprep.subr.mxu0 0.0
      %1828 = vmatpush1.msra.mxu0 0.0
      %1829 = vmatprep.subr.mxu0 0.0
      %1830 = vmatpush1.msra.mxu0 0.0
      %1831 = vmatprep.subr.mxu0 0.0
      %1832 = vmatpush1.msra.mxu0 0.0
      %1833 = vmatprep.subr.mxu0 0.0
      %1834 = vmatpush1.msra.mxu0 0.0
      %1835 = vmatprep.subr.mxu0 0.0
      %1836 = vmatpush1.msra.mxu0 0.0
      %1837 = vmatprep.subr.mxu0 0.0
      %1838 = vmatpush1.msra.mxu0 0.0
      %1839 = vmatprep.mubr.f32.mxu0 0.0
      %1840 = vmatmul.mubr.f32.gmra.mrb[0].mxu0 %v1721
      %v1841 = vpop.f32.mrb[0].mxu0
      %v1842 = vadd.f32 0.0, %v1841
      %v1843 = vpop.f32.mrb[0].mxu0
      %v1844 = vadd.f32 0.0, %v1843
      %1845 = vmatprep.mubr.f32.mxu0 0.0
      %1846 = vmatmul.mubr.f32.gmra.mrb[0].mxu0 %v1722
      %v1847 = vpop.f32.mrb[0].mxu0
      %v1848 = vadd.f32 0.0, %v1847
      %v1849 = vpop.f32.mrb[0].mxu0
      %v1850 = vadd.f32 0.0, %v1849
      %1851 = vmatprep.mubr.f32.mxu0 0.0
      %1852 = vmatmul.mubr.f32.gmra.mrb[0].mxu0 %v1723
      %v1853 = vpop.f32.mrb[0].mxu0
      %v1854 = vadd.f32 0.0, %v1853
      %v1855 = vpop.f32.mrb[0].mxu0
      %v1856 = vadd.f32 0.0, %v1855
      %1857 = vmatprep.mubr.f32.mxu0 0.0
      %1858 = vmatmul.mubr.f32.gmra.mrb[0].mxu0 %v1724
      %v1859 = vpop.f32.mrb[0].mxu0
      %v1860 = vadd.f32 0.0, %v1859
      %v1861 = vpop.f32.mrb[0].mxu0
      %v1862 = vadd.f32 0.0, %v1861
      %1863 = vmatprep.mubr.f32.mxu0 0.0
      %1864 = vmatmul.mubr.f32.gmra.mrb[0].mxu0 %v1725
      %v1865 = vpop.f32.mrb[0].mxu0
      %v1866 = vadd.f32 0.0, %v1865
      %v1867 = vpop.f32.mrb[0].mxu0
      %v1868 = vadd.f32 0.0, %v1867
      %1869 = vmatprep.mubr.f32.mxu0 0.0
      %1870 = vmatmul.mubr.f32.gmra.mrb[0].mxu0 %v1726
      %v1871 = vpop.f32.mrb[0].mxu0
      %v1872 = vadd.f32 0.0, %v1871
      %v1873 = vpop.f32.mrb[0].mxu0
      %v1874 = vadd.f32 0.0, %v1873
      %1875 = vmatprep.mubr.f32.mxu0 0.0
      %1876 = vmatmul.mubr.f32.gmra.mrb[0].mxu0 %v1727
      %v1877 = vpop.f32.mrb[0].mxu0
      %v1878 = vadd.f32 0.0, %v1877
      %v1879 = vpop.f32.mrb[0].mxu0
      %v1880 = vadd.f32 0.0, %v1879
      %1881 = vmatprep.mubr.f32.mxu0 0.0
      %1882 = vmatmul.mubr.f32.gmra.mrb[0].mxu0 %v1728
      %v1883 = vpop.f32.mrb[0].mxu0
      %v1884 = vadd.f32 0.0, %v1883
      %v1885 = vpop.f32.mrb[0].mxu0
      %v1886 = vadd.f32 0.0, %v1885
      %1887 = vmatprep.mubr.f32.mxu0 0.0
      %1888 = vmatmul.mubr.f32.gmra.mrb[0].mxu0 %v1729
      %v1889 = vpop.f32.mrb[0].mxu0
      %v1890 = vadd.f32 0.0, %v1889
      %v1891 = vpop.f32.mrb[0].mxu0
      %v1892 = vadd.f32 0.0, %v1891
      %1893 = vmatprep.mubr.f32.mxu0 0.0
      %1894 = vmatmul.mubr.f32.gmra.mrb[0].mxu0 %v1730
      %v1895 = vpop.f32.mrb[0].mxu0
      %v1896 = vadd.f32 0.0, %v1895
      %v1897 = vpop.f32.mrb[0].mxu0
      %v1898 = vadd.f32 0.0, %v1897
      %1899 = vmatprep.mubr.f32.mxu0 0.0
      %1900 = vmatmul.mubr.f32.gmra.mrb[0].mxu0 %v1731
      %v1901 = vpop.f32.mrb[0].mxu0
      %v1902 = vadd.f32 0.0, %v1901
      %v1903 = vpop.f32.mrb[0].mxu0
      %v1904 = vadd.f32 0.0, %v1903
      %1905 = vmatprep.mubr.f32.mxu0 0.0
      %1906 = vmatmul.mubr.f32.gmra.mrb[0].mxu0 %v1732
      %v1907 = vpop.f32.mrb[0].mxu0
      %v1908 = vadd.f32 0.0, %v1907
      %v1909 = vpop.f32.mrb[0].mxu0
      %v1910 = vadd.f32 0.0, %v1909
      %1911 = vmatprep.mubr.f32.mxu0 0.0
      %1912 = vmatmul.mubr.f32.gmra.mrb[0].mxu0 %v1733
      %v1913 = vpop.f32.mrb[0].mxu0
      %v1914 = vadd.f32 0.0, %v1913
      %v1915 = vpop.f32.mrb[0].mxu0
      %v1916 = vadd.f32 0.0, %v1915
      %1917 = vmatprep.mubr.f32.mxu0 0.0
      %1918 = vmatmul.mubr.f32.gmra.mrb[0].mxu0 %v1734
      %v1919 = vpop.f32.mrb[0].mxu0
      %v1920 = vadd.f32 0.0, %v1919
      %v1921 = vpop.f32.mrb[0].mxu0
      %v1922 = vadd.f32 0.0, %v1921
      %1923 = vmatprep.mubr.f32.mxu0 0.0
      %1924 = vmatmul.mubr.f32.gmra.mrb[0].mxu0 %v1735
      %v1925 = vpop.f32.mrb[0].mxu0
      %v1926 = vadd.f32 0.0, %v1925
      %v1927 = vpop.f32.mrb[0].mxu0
      %v1928 = vadd.f32 0.0, %v1927
      %1929 = vmatprep.mubr.f32.mxu0 0.0
      %1930 = vmatmul.mubr.f32.gmra.mrb[0].mxu0 %v1736
      %v1931 = vpop.f32.mrb[0].mxu0
      %v1932 = vadd.f32 0.0, %v1931
      %v1933 = vpop.f32.mrb[0].mxu0
      %v1934 = vadd.f32 0.0, %v1933
      %1935 = vmatprep.mubr.f32.mxu0 0.0
      %1936 = vmatmul.mubr.f32.gmra.mrb[0].mxu0 %v1737
      %v1937 = vpop.f32.mrb[0].mxu0
      %v1938 = vadd.f32 0.0, %v1937
      %v1939 = vpop.f32.mrb[0].mxu0
      %v1940 = vadd.f32 0.0, %v1939
      %1941 = vmatprep.mubr.f32.mxu0 0.0
      %1942 = vmatmul.mubr.f32.gmra.mrb[0].mxu0 %v1738
      %v1943 = vpop.f32.mrb[0].mxu0
      %v1944 = vadd.f32 0.0, %v1943
      %v1945 = vpop.f32.mrb[0].mxu0
      %v1946 = vadd.f32 0.0, %v1945
      %1947 = vmatprep.mubr.f32.mxu0 0.0
      %1948 = vmatmul.mubr.f32.gmra.mrb[0].mxu0 %v1739
      %v1949 = vpop.f32.mrb[0].mxu0
      %v1950 = vadd.f32 0.0, %v1949
      %v1951 = vpop.f32.mrb[0].mxu0
      %v1952 = vadd.f32 0.0, %v1951
      %1953 = vmatprep.mubr.f32.mxu0 0.0
      %1954 = vmatmul.mubr.f32.gmra.mrb[0].mxu0 %v1740
      %v1955 = vpop.f32.mrb[0].mxu0
      %v1956 = vadd.f32 0.0, %v1955
      %v1957 = vpop.f32.mrb[0].mxu0
      %v1958 = vadd.f32 0.0, %v1957
      %1959 = vmatprep.mubr.f32.mxu0 0.0
      %1960 = vmatmul.mubr.f32.gmra.mrb[0].mxu0 %v1741
      %v1961 = vpop.f32.mrb[0].mxu0
      %v1962 = vadd.f32 0.0, %v1961
      %v1963 = vpop.f32.mrb[0].mxu0
      %v1964 = vadd.f32 0.0, %v1963
      %1965 = vdwg.mxu0
      %1966 = vmatprep.subr.mxu0 %v1690
      %1967 = vmatpush1.msra.mxu0 %v1689
      %1968 = vmatprep.subr.mxu0 %v1692
      %1969 = vmatpush1.msra.mxu0 %v1691
      %1970 = vmatprep.subr.mxu0 %v1694
      %1971 = vmatpush1.msra.mxu0 %v1693
      %1972 = vmatprep.subr.mxu0 %v1696
      %1973 = vmatpush1.msra.mxu0 %v1695
      %1974 = vmatprep.subr.mxu0 %v1698
      %1975 = vmatpush1.msra.mxu0 %v1697
      %1976 = vmatprep.subr.mxu0 %v1700
      %1977 = vmatpush1.msra.mxu0 %v1699
      %1978 = vmatprep.subr.mxu0 %v1702
      %1979 = vmatpush1.msra.mxu0 %v1701
      %1980 = vmatprep.subr.mxu0 %v1704
      %1981 = vmatpush1.msra.mxu0 %v1703
      %1982 = vmatprep.subr.mxu0 %v1706
      %1983 = vmatpush1.msra.mxu0 %v1705
      %1984 = vmatprep.subr.mxu0 %v1708
      %1985 = vmatpush1.msra.mxu0 %v1707
      %1986 = vmatprep.subr.mxu0 %v1710
      %1987 = vmatpush1.msra.mxu0 %v1709
      %1988 = vmatprep.subr.mxu0 %v1712
      %1989 = vmatpush1.msra.mxu0 %v1711
      %1990 = vmatprep.subr.mxu0 %v1714
      %1991 = vmatpush1.msra.mxu0 %v1713
      %1992 = vmatprep.subr.mxu0 %v1716
      %1993 = vmatpush1.msra.mxu0 %v1715
      %1994 = vmatprep.subr.mxu0 %v1718
      %1995 = vmatpush1.msra.mxu0 %v1717
      %1996 = vmatprep.subr.mxu0 %v1720
      %1997 = vmatpush1.msra.mxu0 %v1719
      %1998 = vmatprep.subr.mxu0 0.0
      %1999 = vmatpush1.msra.mxu0 0.0
      %2000 = vmatprep.subr.mxu0 0.0
      %2001 = vmatpush1.msra.mxu0 0.0
      %2002 = vmatprep.subr.mxu0 0.0
      %2003 = vmatpush1.msra.mxu0 0.0
      %2004 = vmatprep.subr.mxu0 0.0
      %2005 = vmatpush1.msra.mxu0 0.0
      %2006 = vmatprep.subr.mxu0 0.0
      %2007 = vmatpush1.msra.mxu0 0.0
      %2008 = vmatprep.subr.mxu0 0.0
      %2009 = vmatpush1.msra.mxu0 0.0
      %2010 = vmatprep.subr.mxu0 0.0
      %2011 = vmatpush1.msra.mxu0 0.0
      %2012 = vmatprep.subr.mxu0 0.0
      %2013 = vmatpush1.msra.mxu0 0.0
      %2014 = vmatprep.subr.mxu0 0.0
      %2015 = vmatpush1.msra.mxu0 0.0
      %2016 = vmatprep.subr.mxu0 0.0
      %2017 = vmatpush1.msra.mxu0 0.0
      %2018 = vmatprep.subr.mxu0 0.0
      %2019 = vmatpush1.msra.mxu0 0.0
      %2020 = vmatprep.subr.mxu0 0.0
      %2021 = vmatpush1.msra.mxu0 0.0
      %2022 = vmatprep.subr.mxu0 0.0
      %2023 = vmatpush1.msra.mxu0 0.0
      %2024 = vmatprep.subr.mxu0 0.0
      %2025 = vmatpush1.msra.mxu0 0.0
      %2026 = vmatprep.subr.mxu0 0.0
      %2027 = vmatpush1.msra.mxu0 0.0
      %2028 = vmatprep.subr.mxu0 0.0
      %2029 = vmatpush1.msra.mxu0 0.0
      %2030 = vmatprep.mubr.f32.mxu0 0.0
      %2031 = vmatmul.mubr.f32.gmra.mrb[0].mxu0 %v1668
      %v2032 = vpop.f32.mrb[0].mxu0
      %v2033 = vadd.f32 %v1842, %v2032
      %v2034 = vpop.f32.mrb[0].mxu0
      %v2035 = vadd.f32 %v1844, %v2034
      %2036 = vmatprep.mubr.f32.mxu0 0.0
      %2037 = vmatmul.mubr.f32.gmra.mrb[0].mxu0 %v1669
      %v2038 = vpop.f32.mrb[0].mxu0
      %v2039 = vadd.f32 %v1848, %v2038
      %v2040 = vpop.f32.mrb[0].mxu0
      %v2041 = vadd.f32 %v1850, %v2040
      %2042 = vmatprep.mubr.f32.mxu0 0.0
      %2043 = vmatmul.mubr.f32.gmra.mrb[0].mxu0 %v1670
      %v2044 = vpop.f32.mrb[0].mxu0
      %v2045 = vadd.f32 %v1854, %v2044
      %v2046 = vpop.f32.mrb[0].mxu0
      %v2047 = vadd.f32 %v1856, %v2046
      %2048 = vmatprep.mubr.f32.mxu0 0.0
      %2049 = vmatmul.mubr.f32.gmra.mrb[0].mxu0 %v1671
      %v2050 = vpop.f32.mrb[0].mxu0
      %v2051 = vadd.f32 %v1860, %v2050
      %v2052 = vpop.f32.mrb[0].mxu0
      %v2053 = vadd.f32 %v1862, %v2052
      %2054 = vmatprep.mubr.f32.mxu0 0.0
      %2055 = vmatmul.mubr.f32.gmra.mrb[0].mxu0 %v1672
      %v2056 = vpop.f32.mrb[0].mxu0
      %v2057 = vadd.f32 %v1866, %v2056
      %v2058 = vpop.f32.mrb[0].mxu0
      %v2059 = vadd.f32 %v1868, %v2058
      %2060 = vmatprep.mubr.f32.mxu0 0.0
      %2061 = vmatmul.mubr.f32.gmra.mrb[0].mxu0 %v1673
      %v2062 = vpop.f32.mrb[0].mxu0
      %v2063 = vadd.f32 %v1872, %v2062
      %v2064 = vpop.f32.mrb[0].mxu0
      %v2065 = vadd.f32 %v1874, %v2064
      %2066 = vmatprep.mubr.f32.mxu0 0.0
      %2067 = vmatmul.mubr.f32.gmra.mrb[0].mxu0 %v1674
      %v2068 = vpop.f32.mrb[0].mxu0
      %v2069 = vadd.f32 %v1878, %v2068
      %v2070 = vpop.f32.mrb[0].mxu0
      %v2071 = vadd.f32 %v1880, %v2070
      %2072 = vmatprep.mubr.f32.mxu0 0.0
      %2073 = vmatmul.mubr.f32.gmra.mrb[0].mxu0 %v1675
      %v2074 = vpop.f32.mrb[0].mxu0
      %v2075 = vadd.f32 %v1884, %v2074
      %v2076 = vpop.f32.mrb[0].mxu0
      %v2077 = vadd.f32 %v1886, %v2076
      %2078 = vmatprep.mubr.f32.mxu0 0.0
      %2079 = vmatmul.mubr.f32.gmra.mrb[0].mxu0 %v1676
      %v2080 = vpop.f32.mrb[0].mxu0
      %v2081 = vadd.f32 %v1890, %v2080
      %v2082 = vpop.f32.mrb[0].mxu0
      %v2083 = vadd.f32 %v1892, %v2082
      %2084 = vmatprep.mubr.f32.mxu0 0.0
      %2085 = vmatmul.mubr.f32.gmra.mrb[0].mxu0 %v1677
      %v2086 = vpop.f32.mrb[0].mxu0
      %v2087 = vadd.f32 %v1896, %v2086
      %v2088 = vpop.f32.mrb[0].mxu0
      %v2089 = vadd.f32 %v1898, %v2088
      %2090 = vmatprep.mubr.f32.mxu0 0.0
      %2091 = vmatmul.mubr.f32.gmra.mrb[0].mxu0 %v1678
      %v2092 = vpop.f32.mrb[0].mxu0
      %v2093 = vadd.f32 %v1902, %v2092
      %v2094 = vpop.f32.mrb[0].mxu0
      %v2095 = vadd.f32 %v1904, %v2094
      %2096 = vmatprep.mubr.f32.mxu0 0.0
      %2097 = vmatmul.mubr.f32.gmra.mrb[0].mxu0 %v1679
      %v2098 = vpop.f32.mrb[0].mxu0
      %v2099 = vadd.f32 %v1908, %v2098
      %v2100 = vpop.f32.mrb[0].mxu0
      %v2101 = vadd.f32 %v1910, %v2100
      %2102 = vmatprep.mubr.f32.mxu0 0.0
      %2103 = vmatmul.mubr.f32.gmra.mrb[0].mxu0 %v1680
      %v2104 = vpop.f32.mrb[0].mxu0
      %v2105 = vadd.f32 %v1914, %v2104
      %v2106 = vpop.f32.mrb[0].mxu0
      %v2107 = vadd.f32 %v1916, %v2106
      %2108 = vmatprep.mubr.f32.mxu0 0.0
      %2109 = vmatmul.mubr.f32.gmra.mrb[0].mxu0 %v1681
      %v2110 = vpop.f32.mrb[0].mxu0
      %v2111 = vadd.f32 %v1920, %v2110
      %v2112 = vpop.f32.mrb[0].mxu0
      %v2113 = vadd.f32 %v1922, %v2112
      %2114 = vmatprep.mubr.f32.mxu0 0.0
      %2115 = vmatmul.mubr.f32.gmra.mrb[0].mxu0 %v1682
      %v2116 = vpop.f32.mrb[0].mxu0
      %v2117 = vadd.f32 %v1926, %v2116
      %v2118 = vpop.f32.mrb[0].mxu0
      %v2119 = vadd.f32 %v1928, %v2118
      %2120 = vmatprep.mubr.f32.mxu0 0.0
      %2121 = vmatmul.mubr.f32.gmra.mrb[0].mxu0 %v1683
      %v2122 = vpop.f32.mrb[0].mxu0
      %v2123 = vadd.f32 %v1932, %v2122
      %v2124 = vpop.f32.mrb[0].mxu0
      %v2125 = vadd.f32 %v1934, %v2124
      %2126 = vmatprep.mubr.f32.mxu0 0.0
      %2127 = vmatmul.mubr.f32.gmra.mrb[0].mxu0 %v1684
      %v2128 = vpop.f32.mrb[0].mxu0
      %v2129 = vadd.f32 %v1938, %v2128
      %v2130 = vpop.f32.mrb[0].mxu0
      %v2131 = vadd.f32 %v1940, %v2130
      %2132 = vmatprep.mubr.f32.mxu0 0.0
      %2133 = vmatmul.mubr.f32.gmra.mrb[0].mxu0 %v1685
      %v2134 = vpop.f32.mrb[0].mxu0
      %v2135 = vadd.f32 %v1944, %v2134
      %v2136 = vpop.f32.mrb[0].mxu0
      %v2137 = vadd.f32 %v1946, %v2136
      %2138 = vmatprep.mubr.f32.mxu0 0.0
      %2139 = vmatmul.mubr.f32.gmra.mrb[0].mxu0 %v1686
      %v2140 = vpop.f32.mrb[0].mxu0
      %v2141 = vadd.f32 %v1950, %v2140
      %v2142 = vpop.f32.mrb[0].mxu0
      %v2143 = vadd.f32 %v1952, %v2142
      %2144 = vmatprep.mubr.f32.mxu0 0.0
      %2145 = vmatmul.mubr.f32.gmra.mrb[0].mxu0 %v1687
      %v2146 = vpop.f32.mrb[0].mxu0
      %v2147 = vadd.f32 %v1956, %v2146
      %v2148 = vpop.f32.mrb[0].mxu0
      %v2149 = vadd.f32 %v1958, %v2148
      %2150 = vmatprep.mubr.f32.mxu0 0.0
      %2151 = vmatmul.mubr.f32.gmra.mrb[0].mxu0 %v1688
      %v2152 = vpop.f32.mrb[0].mxu0
      %v2153 = vadd.f32 %v1962, %v2152
      %v2154 = vpop.f32.mrb[0].mxu0
      %v2155 = vadd.f32 %v1964, %v2154
      %2156 = vdwg.mxu0
      %v2157 = vld [vmem:[%s4] sm:$0x3]
      %v2159 = vlaneseq
      %v2160 = vshrl.u32 %v2159, 7
      %v2161 = vsub.s32 0, %v2160
      %v2162 = vrot.slane %v2157, %v2161
      %v2163 = vlaneseq
      %v2164 = vshrl.u32 %v2163, 7
      %v2165 = vsub.s32 1, %v2164
      %v2166 = vrot.slane %v2157, %v2165
      %v2169 = vadd.f32 %v2033, %v2162
      %v2170 = vadd.f32 %v2035, %v2166
      %v2171 = vadd.f32 %v2039, %v2162
      %v2172 = vadd.f32 %v2041, %v2166
      %v2173 = vadd.f32 %v2045, %v2162
      %v2174 = vadd.f32 %v2047, %v2166
      %v2175 = vadd.f32 %v2051, %v2162
      %v2176 = vadd.f32 %v2053, %v2166
      %v2177 = vadd.f32 %v2057, %v2162
      %v2178 = vadd.f32 %v2059, %v2166
      %v2179 = vadd.f32 %v2063, %v2162
      %v2180 = vadd.f32 %v2065, %v2166
      %v2181 = vadd.f32 %v2069, %v2162
      %v2182 = vadd.f32 %v2071, %v2166
      %v2183 = vadd.f32 %v2075, %v2162
      %v2184 = vadd.f32 %v2077, %v2166
      %v2185 = vadd.f32 %v2081, %v2162
      %v2186 = vadd.f32 %v2083, %v2166
      %v2187 = vadd.f32 %v2087, %v2162
      %v2188 = vadd.f32 %v2089, %v2166
      %v2189 = vadd.f32 %v2093, %v2162
      %v2190 = vadd.f32 %v2095, %v2166
      %v2191 = vadd.f32 %v2099, %v2162
      %v2192 = vadd.f32 %v2101, %v2166
      %v2193 = vadd.f32 %v2105, %v2162
      %v2194 = vadd.f32 %v2107, %v2166
      %v2195 = vadd.f32 %v2111, %v2162
      %v2196 = vadd.f32 %v2113, %v2166
      %v2197 = vadd.f32 %v2117, %v2162
      %v2198 = vadd.f32 %v2119, %v2166
      %v2199 = vadd.f32 %v2123, %v2162
      %v2200 = vadd.f32 %v2125, %v2166
      %v2201 = vadd.f32 %v2129, %v2162
      %v2202 = vadd.f32 %v2131, %v2166
      %v2203 = vadd.f32 %v2135, %v2162
      %v2204 = vadd.f32 %v2137, %v2166
      %v2205 = vadd.f32 %v2141, %v2162
      %v2206 = vadd.f32 %v2143, %v2166
      %v2207 = vadd.f32 %v2147, %v2162
      %v2208 = vadd.f32 %v2149, %v2166
      %v2209 = vadd.f32 %v2153, %v2162
      %v2210 = vadd.f32 %v2155, %v2166
      %v2211 = vmax.f32 %v2169, 0.0
      %v2212 = vmax.f32 %v2170, 0.0
      %v2213 = vmax.f32 %v2171, 0.0
      %v2214 = vmax.f32 %v2172, 0.0
      %v2215 = vmax.f32 %v2173, 0.0
      %v2216 = vmax.f32 %v2174, 0.0
      %v2217 = vmax.f32 %v2175, 0.0
      %v2218 = vmax.f32 %v2176, 0.0
      %v2219 = vmax.f32 %v2177, 0.0
      %v2220 = vmax.f32 %v2178, 0.0
      %v2221 = vmax.f32 %v2179, 0.0
      %v2222 = vmax.f32 %v2180, 0.0
      %v2223 = vmax.f32 %v2181, 0.0
      %v2224 = vmax.f32 %v2182, 0.0
      %v2225 = vmax.f32 %v2183, 0.0
      %v2226 = vmax.f32 %v2184, 0.0
      %v2227 = vmax.f32 %v2185, 0.0
      %v2228 = vmax.f32 %v2186, 0.0
      %v2229 = vmax.f32 %v2187, 0.0
      %v2230 = vmax.f32 %v2188, 0.0
      %v2231 = vmax.f32 %v2189, 0.0
      %v2232 = vmax.f32 %v2190, 0.0
      %v2233 = vmax.f32 %v2191, 0.0
      %v2234 = vmax.f32 %v2192, 0.0
      %v2235 = vmax.f32 %v2193, 0.0
      %v2236 = vmax.f32 %v2194, 0.0
      %v2237 = vmax.f32 %v2195, 0.0
      %v2238 = vmax.f32 %v2196, 0.0
      %v2239 = vmax.f32 %v2197, 0.0
      %v2240 = vmax.f32 %v2198, 0.0
      %v2241 = vmax.f32 %v2199, 0.0
      %v2242 = vmax.f32 %v2200, 0.0
      %v2243 = vmax.f32 %v2201, 0.0
      %v2244 = vmax.f32 %v2202, 0.0
      %v2245 = vmax.f32 %v2203, 0.0
      %v2246 = vmax.f32 %v2204, 0.0
      %v2247 = vmax.f32 %v2205, 0.0
      %v2248 = vmax.f32 %v2206, 0.0
      %v2249 = vmax.f32 %v2207, 0.0
      %v2250 = vmax.f32 %v2208, 0.0
      %v2251 = vmax.f32 %v2209, 0.0
      %v2252 = vmax.f32 %v2210, 0.0
      %2253 = vst [vmem:[#allocation4] sm:$0xff] %v2211
      %2254 = vst [vmem:[#allocation4 + $0x8] sm:$0xff] %v2212
      %2255 = vst [vmem:[#allocation4 + $0x10] sm:$0xff] %v2213
      %2256 = vst [vmem:[#allocation4 + $0x18] sm:$0xff] %v2214
      %2257 = vst [vmem:[#allocation4 + $0x20] sm:$0xff] %v2215
      %2258 = vst [vmem:[#allocation4 + $0x28] sm:$0xff] %v2216
      %2259 = vst [vmem:[#allocation4 + $0x30] sm:$0xff] %v2217
      %2260 = vst [vmem:[#allocation4 + $0x38] sm:$0xff] %v2218
      %2261 = vst [vmem:[#allocation4 + $0x40] sm:$0xff] %v2219
      %2262 = vst [vmem:[#allocation4 + $0x48] sm:$0xff] %v2220
      %2263 = vst [vmem:[#allocation4 + $0x50] sm:$0xff] %v2221
      %2264 = vst [vmem:[#allocation4 + $0x58] sm:$0xff] %v2222
      %2265 = vst [vmem:[#allocation4 + $0x60] sm:$0xff] %v2223
      %2266 = vst [vmem:[#allocation4 + $0x68] sm:$0xff] %v2224
      %2267 = vst [vmem:[#allocation4 + $0x70] sm:$0xff] %v2225
      %2268 = vst [vmem:[#allocation4 + $0x78] sm:$0xff] %v2226
      %2269 = vst [vmem:[#allocation4 + $0x80] sm:$0xff] %v2227
      %2270 = vst [vmem:[#allocation4 + $0x88] sm:$0xff] %v2228
      %2271 = vst [vmem:[#allocation4 + $0x90] sm:$0xff] %v2229
      %2272 = vst [vmem:[#allocation4 + $0x98] sm:$0xff] %v2230
      %2273 = vst [vmem:[#allocation4 + $0xa0] sm:$0xff] %v2231
      %2274 = vst [vmem:[#allocation4 + $0xa8] sm:$0xff] %v2232
      %2275 = vst [vmem:[#allocation4 + $0xb0] sm:$0xff] %v2233
      %2276 = vst [vmem:[#allocation4 + $0xb8] sm:$0xff] %v2234
      %2277 = vst [vmem:[#allocation4 + $0xc0] sm:$0xff] %v2235
      %2278 = vst [vmem:[#allocation4 + $0xc8] sm:$0xff] %v2236
      %2279 = vst [vmem:[#allocation4 + $0xd0] sm:$0xff] %v2237
      %2280 = vst [vmem:[#allocation4 + $0xd8] sm:$0xff] %v2238
      %2281 = vst [vmem:[#allocation4 + $0xe0] sm:$0xff] %v2239
      %2282 = vst [vmem:[#allocation4 + $0xe8] sm:$0xff] %v2240
      %2283 = vst [vmem:[#allocation4 + $0xf0] sm:$0xff] %v2241
      %2284 = vst [vmem:[#allocation4 + $0xf8] sm:$0xff] %v2242
      %2285 = vst [vmem:[#allocation4 + $0x100] sm:$0xff] %v2243
      %2286 = vst [vmem:[#allocation4 + $0x108] sm:$0xff] %v2244
      %2287 = vst [vmem:[#allocation4 + $0x110] sm:$0xff] %v2245
      %2288 = vst [vmem:[#allocation4 + $0x118] sm:$0xff] %v2246
      %2289 = vst [vmem:[#allocation4 + $0x120] sm:$0xff] %v2247
      %2290 = vst [vmem:[#allocation4 + $0x128] sm:$0xff] %v2248
      %2291 = vst [vmem:[#allocation4 + $0x130] sm:$0xff] %v2249
      %2292 = vst [vmem:[#allocation4 + $0x138] sm:$0xff] %v2250
      %2293 = vst [vmem:[#allocation4 + $0x140] sm:$0x1] %v2251
      %2294 = vst [vmem:[#allocation4 + $0x148] sm:$0x1] %v2252
      %vm2295 = vcmp.lt.s32.totalorder %v279, 256
      %vm2296 = vmand %vm280, %vm2295
      %s2297 = scalar_lea.vmem [#allocation4], 321
      %2298 = vst.msk [vmem:[%s2297] ss:$8 sm:$0x3] %vm2296, 0.0
      %2299 = vst.msk [vmem:[%s2297] ss:$8 sm:$0x0] %vm2296, 0.0
      %v2300 = vld [vmem:[#allocation4] sm:$0xff]
      %v2301 = vld [vmem:[#allocation4 + $0x8] sm:$0xff]
      %v2302 = vld [vmem:[#allocation4 + $0x10] sm:$0xff]
      %v2303 = vld [vmem:[#allocation4 + $0x18] sm:$0xff]
      %v2304 = vld [vmem:[#allocation4 + $0x20] sm:$0xff]
      %v2305 = vld [vmem:[#allocation4 + $0x28] sm:$0xff]
      %v2306 = vld [vmem:[#allocation4 + $0x30] sm:$0xff]
      %v2307 = vld [vmem:[#allocation4 + $0x38] sm:$0xff]
      %v2308 = vld [vmem:[#allocation4 + $0x40] sm:$0xff]
      %v2309 = vld [vmem:[#allocation4 + $0x48] sm:$0xff]
      %v2310 = vld [vmem:[#allocation4 + $0x50] sm:$0xff]
      %v2311 = vld [vmem:[#allocation4 + $0x58] sm:$0xff]
      %v2312 = vld [vmem:[#allocation4 + $0x60] sm:$0xff]
      %v2313 = vld [vmem:[#allocation4 + $0x68] sm:$0xff]
      %v2314 = vld [vmem:[#allocation4 + $0x70] sm:$0xff]
      %v2315 = vld [vmem:[#allocation4 + $0x78] sm:$0xff]
      %v2316 = vld [vmem:[#allocation4 + $0x80] sm:$0xff]
      %v2317 = vld [vmem:[#allocation4 + $0x88] sm:$0xff]
      %v2318 = vld [vmem:[#allocation4 + $0x90] sm:$0xff]
      %v2319 = vld [vmem:[#allocation4 + $0x98] sm:$0xff]
      %v2320 = vld [vmem:[#allocation4 + $0xa0] sm:$0xff]
      %v2321 = vld [vmem:[#allocation4 + $0xa8] sm:$0xff]
      %v2322 = vld [vmem:[#allocation4 + $0xb0] sm:$0xff]
      %v2323 = vld [vmem:[#allocation4 + $0xb8] sm:$0xff]
      %v2324 = vld [vmem:[#allocation4 + $0xc0] sm:$0xff]
      %v2325 = vld [vmem:[#allocation4 + $0xc8] sm:$0xff]
      %v2326 = vld [vmem:[#allocation4 + $0xd0] sm:$0xff]
      %v2327 = vld [vmem:[#allocation4 + $0xd8] sm:$0xff]
      %v2328 = vld [vmem:[#allocation4 + $0xe0] sm:$0xff]
      %v2329 = vld [vmem:[#allocation4 + $0xe8] sm:$0xff]
      %v2330 = vld [vmem:[#allocation4 + $0xf0] sm:$0xff]
      %v2331 = vld [vmem:[#allocation4 + $0xf8] sm:$0xff]
      %v2332 = vld [vmem:[#allocation4 + $0x100] sm:$0xff]
      %v2333 = vld [vmem:[#allocation4 + $0x108] sm:$0xff]
      %v2334 = vld [vmem:[#allocation4 + $0x110] sm:$0xff]
      %v2335 = vld [vmem:[#allocation4 + $0x118] sm:$0xff]
      %v2336 = vld [vmem:[#allocation4 + $0x120] sm:$0xff]
      %v2337 = vld [vmem:[#allocation4 + $0x128] sm:$0xff]
      %v2338 = vld [vmem:[#allocation4 + $0x130] sm:$0xff]
      %v2339 = vld [vmem:[#allocation4 + $0x138] sm:$0xff]
      %v2340 = vld [vmem:[#allocation4 + $0x140] sm:$0x1]
      %v2341 = vld [vmem:[#allocation4 + $0x148] sm:$0x1]
      %v2342 = vld [vmem:[%s5] sm:$0xff]
      %v2343 = vld [vmem:[%s5 + $0x8] sm:$0xff]
      %v2344 = vld [vmem:[%s5 + $0x10] sm:$0xff]
      %v2345 = vld [vmem:[%s5 + $0x18] sm:$0xff]
      %v2346 = vld [vmem:[%s5 + $0x20] sm:$0xff]
      %v2347 = vld [vmem:[%s5 + $0x28] sm:$0xff]
      %v2348 = vld [vmem:[%s5 + $0x30] sm:$0xff]
      %v2349 = vld [vmem:[%s5 + $0x38] sm:$0xff]
      %v2350 = vld [vmem:[%s5 + $0x40] sm:$0xff]
      %v2351 = vld [vmem:[%s5 + $0x48] sm:$0xff]
      %v2352 = vld [vmem:[%s5 + $0x50] sm:$0xff]
      %v2353 = vld [vmem:[%s5 + $0x58] sm:$0xff]
      %v2354 = vld [vmem:[%s5 + $0x60] sm:$0xff]
      %v2355 = vld [vmem:[%s5 + $0x68] sm:$0xff]
      %v2356 = vld [vmem:[%s5 + $0x70] sm:$0xff]
      %v2357 = vld [vmem:[%s5 + $0x78] sm:$0xff]
      %v2358 = vld [vmem:[%s5 + $0x80] sm:$0xff]
      %v2359 = vld [vmem:[%s5 + $0x88] sm:$0xff]
      %v2360 = vld [vmem:[%s5 + $0x90] sm:$0xff]
      %v2361 = vld [vmem:[%s5 + $0x98] sm:$0xff]
      %v2362 = vld [vmem:[%s5 + $0xa0] sm:$0xff]
      %v2363 = vld [vmem:[%s5 + $0xa8] sm:$0xff]
      %v2364 = vld [vmem:[%s5 + $0xb0] sm:$0xff]
      %v2365 = vld [vmem:[%s5 + $0xb8] sm:$0xff]
      %v2366 = vld [vmem:[%s5 + $0xc0] sm:$0xff]
      %v2367 = vld [vmem:[%s5 + $0xc8] sm:$0xff]
      %v2368 = vld [vmem:[%s5 + $0xd0] sm:$0xff]
      %v2369 = vld [vmem:[%s5 + $0xd8] sm:$0xff]
      %v2370 = vld [vmem:[%s5 + $0xe0] sm:$0xff]
      %v2371 = vld [vmem:[%s5 + $0xe8] sm:$0xff]
      %v2372 = vld [vmem:[%s5 + $0xf0] sm:$0xff]
      %v2373 = vld [vmem:[%s5 + $0xf8] sm:$0xff]
      %v2374 = vld [vmem:[#allocation4] sm:$0xfe]
      %v2375 = vld [vmem:[#allocation4 + $0x8] sm:$0xfe]
      %v2376 = vld [vmem:[#allocation4 + $0x140] sm:$0x3]
      %v2377 = vld [vmem:[#allocation4 + $0x148] sm:$0x3]
      %s2378 = scalar_lea.vmem %s5, 256
      %v2379 = vld [vmem:[%s2378] sm:$0xff]
      %v2380 = vld [vmem:[%s2378 + $0x8] sm:$0xff]
      %v2381 = vld [vmem:[%s2378 + $0x10] sm:$0xff]
      %v2382 = vld [vmem:[%s2378 + $0x18] sm:$0xff]
      %v2383 = vld [vmem:[%s2378 + $0x20] sm:$0xff]
      %v2384 = vld [vmem:[%s2378 + $0x28] sm:$0xff]
      %v2385 = vld [vmem:[%s2378 + $0x30] sm:$0xff]
      %v2386 = vld [vmem:[%s2378 + $0x38] sm:$0xff]
      %v2387 = vld [vmem:[%s2378 + $0x40] sm:$0xff]
      %v2388 = vld [vmem:[%s2378 + $0x48] sm:$0xff]
      %v2389 = vld [vmem:[%s2378 + $0x50] sm:$0xff]
      %v2390 = vld [vmem:[%s2378 + $0x58] sm:$0xff]
      %v2391 = vld [vmem:[%s2378 + $0x60] sm:$0xff]
      %v2392 = vld [vmem:[%s2378 + $0x68] sm:$0xff]
      %v2393 = vld [vmem:[%s2378 + $0x70] sm:$0xff]
      %v2394 = vld [vmem:[%s2378 + $0x78] sm:$0xff]
      %v2395 = vld [vmem:[%s2378 + $0x80] sm:$0xff]
      %v2396 = vld [vmem:[%s2378 + $0x88] sm:$0xff]
      %v2397 = vld [vmem:[%s2378 + $0x90] sm:$0xff]
      %v2398 = vld [vmem:[%s2378 + $0x98] sm:$0xff]
      %v2399 = vld [vmem:[%s2378 + $0xa0] sm:$0xff]
      %v2400 = vld [vmem:[%s2378 + $0xa8] sm:$0xff]
      %v2401 = vld [vmem:[%s2378 + $0xb0] sm:$0xff]
      %v2402 = vld [vmem:[%s2378 + $0xb8] sm:$0xff]
      %v2403 = vld [vmem:[%s2378 + $0xc0] sm:$0xff]
      %v2404 = vld [vmem:[%s2378 + $0xc8] sm:$0xff]
      %v2405 = vld [vmem:[%s2378 + $0xd0] sm:$0xff]
      %v2406 = vld [vmem:[%s2378 + $0xd8] sm:$0xff]
      %v2407 = vld [vmem:[%s2378 + $0xe0] sm:$0xff]
      %v2408 = vld [vmem:[%s2378 + $0xe8] sm:$0xff]
      %v2409 = vld [vmem:[%s2378 + $0xf0] sm:$0xff]
      %v2410 = vld [vmem:[%s2378 + $0xf8] sm:$0xff]
      %v2453 = vrot.slane %v2374, 1
      %v2454 = vrot.slane %v2302, 1
      %v2455 = vsel %vm697, %v2453, %v2454
      %v2456 = vrot.slane %v2375, 1
      %v2457 = vrot.slane %v2303, 1
      %v2458 = vsel %vm697, %v2456, %v2457
      %v2459 = vrot.slane %v2304, 1
      %v2460 = vsel %vm697, %v2454, %v2459
      %v2461 = vrot.slane %v2305, 1
      %v2462 = vsel %vm697, %v2457, %v2461
      %v2463 = vrot.slane %v2306, 1
      %v2464 = vsel %vm697, %v2459, %v2463
      %v2465 = vrot.slane %v2307, 1
      %v2466 = vsel %vm697, %v2461, %v2465
      %v2467 = vrot.slane %v2308, 1
      %v2468 = vsel %vm697, %v2463, %v2467
      %v2469 = vrot.slane %v2309, 1
      %v2470 = vsel %vm697, %v2465, %v2469
      %v2471 = vrot.slane %v2310, 1
      %v2472 = vsel %vm697, %v2467, %v2471
      %v2473 = vrot.slane %v2311, 1
      %v2474 = vsel %vm697, %v2469, %v2473
      %v2475 = vrot.slane %v2312, 1
      %v2476 = vsel %vm697, %v2471, %v2475
      %v2477 = vrot.slane %v2313, 1
      %v2478 = vsel %vm697, %v2473, %v2477
      %v2479 = vrot.slane %v2314, 1
      %v2480 = vsel %vm697, %v2475, %v2479
      %v2481 = vrot.slane %v2315, 1
      %v2482 = vsel %vm697, %v2477, %v2481
      %v2483 = vrot.slane %v2316, 1
      %v2484 = vsel %vm697, %v2479, %v2483
      %v2485 = vrot.slane %v2317, 1
      %v2486 = vsel %vm697, %v2481, %v2485
      %v2487 = vrot.slane %v2318, 1
      %v2488 = vsel %vm697, %v2483, %v2487
      %v2489 = vrot.slane %v2319, 1
      %v2490 = vsel %vm697, %v2485, %v2489
      %v2491 = vrot.slane %v2320, 1
      %v2492 = vsel %vm697, %v2487, %v2491
      %v2493 = vrot.slane %v2321, 1
      %v2494 = vsel %vm697, %v2489, %v2493
      %v2495 = vrot.slane %v2322, 1
      %v2496 = vsel %vm697, %v2491, %v2495
      %v2497 = vrot.slane %v2323, 1
      %v2498 = vsel %vm697, %v2493, %v2497
      %v2499 = vrot.slane %v2324, 1
      %v2500 = vsel %vm697, %v2495, %v2499
      %v2501 = vrot.slane %v2325, 1
      %v2502 = vsel %vm697, %v2497, %v2501
      %v2503 = vrot.slane %v2326, 1
      %v2504 = vsel %vm697, %v2499, %v2503
      %v2505 = vrot.slane %v2327, 1
      %v2506 = vsel %vm697, %v2501, %v2505
      %v2507 = vrot.slane %v2328, 1
      %v2508 = vsel %vm697, %v2503, %v2507
      %v2509 = vrot.slane %v2329, 1
      %v2510 = vsel %vm697, %v2505, %v2509
      %v2511 = vrot.slane %v2330, 1
      %v2512 = vsel %vm697, %v2507, %v2511
      %v2513 = vrot.slane %v2331, 1
      %v2514 = vsel %vm697, %v2509, %v2513
      %v2515 = vrot.slane %v2332, 1
      %v2516 = vsel %vm697, %v2511, %v2515
      %v2517 = vrot.slane %v2333, 1
      %v2518 = vsel %vm697, %v2513, %v2517
      %v2519 = vrot.slane %v2334, 1
      %v2520 = vsel %vm697, %v2515, %v2519
      %v2521 = vrot.slane %v2335, 1
      %v2522 = vsel %vm697, %v2517, %v2521
      %v2523 = vrot.slane %v2336, 1
      %v2524 = vsel %vm697, %v2519, %v2523
      %v2525 = vrot.slane %v2337, 1
      %v2526 = vsel %vm697, %v2521, %v2525
      %v2527 = vrot.slane %v2338, 1
      %v2528 = vsel %vm697, %v2523, %v2527
      %v2529 = vrot.slane %v2339, 1
      %v2530 = vsel %vm697, %v2525, %v2529
      %v2531 = vrot.slane %v2376, 1
      %v2532 = vsel %vm697, %v2527, %v2531
      %v2533 = vrot.slane %v2377, 1
      %v2534 = vsel %vm697, %v2529, %v2533
      %2577 = vmatprep.subr.mxu0 0.0
      %2578 = vmatpush1.msra.mxu0 %v2379
      %2579 = vmatprep.subr.mxu0 0.0
      %2580 = vmatpush1.msra.mxu0 %v2380
      %2581 = vmatprep.subr.mxu0 0.0
      %2582 = vmatpush1.msra.mxu0 %v2381
      %2583 = vmatprep.subr.mxu0 0.0
      %2584 = vmatpush1.msra.mxu0 %v2382
      %2585 = vmatprep.subr.mxu0 0.0
      %2586 = vmatpush1.msra.mxu0 %v2383
      %2587 = vmatprep.subr.mxu0 0.0
      %2588 = vmatpush1.msra.mxu0 %v2384
      %2589 = vmatprep.subr.mxu0 0.0
      %2590 = vmatpush1.msra.mxu0 %v2385
      %2591 = vmatprep.subr.mxu0 0.0
      %2592 = vmatpush1.msra.mxu0 %v2386
      %2593 = vmatprep.subr.mxu0 0.0
      %2594 = vmatpush1.msra.mxu0 %v2387
      %2595 = vmatprep.subr.mxu0 0.0
      %2596 = vmatpush1.msra.mxu0 %v2388
      %2597 = vmatprep.subr.mxu0 0.0
      %2598 = vmatpush1.msra.mxu0 %v2389
      %2599 = vmatprep.subr.mxu0 0.0
      %2600 = vmatpush1.msra.mxu0 %v2390
      %2601 = vmatprep.subr.mxu0 0.0
      %2602 = vmatpush1.msra.mxu0 %v2391
      %2603 = vmatprep.subr.mxu0 0.0
      %2604 = vmatpush1.msra.mxu0 %v2392
      %2605 = vmatprep.subr.mxu0 0.0
      %2606 = vmatpush1.msra.mxu0 %v2393
      %2607 = vmatprep.subr.mxu0 0.0
      %2608 = vmatpush1.msra.mxu0 %v2394
      %2609 = vmatprep.subr.mxu0 0.0
      %2610 = vmatpush1.msra.mxu0 %v2395
      %2611 = vmatprep.subr.mxu0 0.0
      %2612 = vmatpush1.msra.mxu0 %v2396
      %2613 = vmatprep.subr.mxu0 0.0
      %2614 = vmatpush1.msra.mxu0 %v2397
      %2615 = vmatprep.subr.mxu0 0.0
      %2616 = vmatpush1.msra.mxu0 %v2398
      %2617 = vmatprep.subr.mxu0 0.0
      %2618 = vmatpush1.msra.mxu0 %v2399
      %2619 = vmatprep.subr.mxu0 0.0
      %2620 = vmatpush1.msra.mxu0 %v2400
      %2621 = vmatprep.subr.mxu0 0.0
      %2622 = vmatpush1.msra.mxu0 %v2401
      %2623 = vmatprep.subr.mxu0 0.0
      %2624 = vmatpush1.msra.mxu0 %v2402
      %2625 = vmatprep.subr.mxu0 0.0
      %2626 = vmatpush1.msra.mxu0 %v2403
      %2627 = vmatprep.subr.mxu0 0.0
      %2628 = vmatpush1.msra.mxu0 %v2404
      %2629 = vmatprep.subr.mxu0 0.0
      %2630 = vmatpush1.msra.mxu0 %v2405
      %2631 = vmatprep.subr.mxu0 0.0
      %2632 = vmatpush1.msra.mxu0 %v2406
      %2633 = vmatprep.subr.mxu0 0.0
      %2634 = vmatpush1.msra.mxu0 %v2407
      %2635 = vmatprep.subr.mxu0 0.0
      %2636 = vmatpush1.msra.mxu0 %v2408
      %2637 = vmatprep.subr.mxu0 0.0
      %2638 = vmatpush1.msra.mxu0 %v2409
      %2639 = vmatprep.subr.mxu0 0.0
      %2640 = vmatpush1.msra.mxu0 %v2410
      %2641 = vmatprep.mubr.f32.mxu0 %v2458
      %2642 = vmatmul.mubr.f32.gmra.mrb[0].mxu0 %v2455
      %v2643 = vpop.f32.mrb[0].mxu0
      %v2644 = vadd.f32 0.0, %v2643
      %v2645 = vpop.f32.mrb[0].mxu0
      %2646 = vmatprep.mubr.f32.mxu0 %v2462
      %2647 = vmatmul.mubr.f32.gmra.mrb[0].mxu0 %v2460
      %v2648 = vpop.f32.mrb[0].mxu0
      %v2649 = vadd.f32 0.0, %v2648
      %v2650 = vpop.f32.mrb[0].mxu0
      %2651 = vmatprep.mubr.f32.mxu0 %v2466
      %2652 = vmatmul.mubr.f32.gmra.mrb[0].mxu0 %v2464
      %v2653 = vpop.f32.mrb[0].mxu0
      %v2654 = vadd.f32 0.0, %v2653
      %v2655 = vpop.f32.mrb[0].mxu0
      %2656 = vmatprep.mubr.f32.mxu0 %v2470
      %2657 = vmatmul.mubr.f32.gmra.mrb[0].mxu0 %v2468
      %v2658 = vpop.f32.mrb[0].mxu0
      %v2659 = vadd.f32 0.0, %v2658
      %v2660 = vpop.f32.mrb[0].mxu0
      %2661 = vmatprep.mubr.f32.mxu0 %v2474
      %2662 = vmatmul.mubr.f32.gmra.mrb[0].mxu0 %v2472
      %v2663 = vpop.f32.mrb[0].mxu0
      %v2664 = vadd.f32 0.0, %v2663
      %v2665 = vpop.f32.mrb[0].mxu0
      %2666 = vmatprep.mubr.f32.mxu0 %v2478
      %2667 = vmatmul.mubr.f32.gmra.mrb[0].mxu0 %v2476
      %v2668 = vpop.f32.mrb[0].mxu0
      %v2669 = vadd.f32 0.0, %v2668
      %v2670 = vpop.f32.mrb[0].mxu0
      %2671 = vmatprep.mubr.f32.mxu0 %v2482
      %2672 = vmatmul.mubr.f32.gmra.mrb[0].mxu0 %v2480
      %v2673 = vpop.f32.mrb[0].mxu0
      %v2674 = vadd.f32 0.0, %v2673
      %v2675 = vpop.f32.mrb[0].mxu0
      %2676 = vmatprep.mubr.f32.mxu0 %v2486
      %2677 = vmatmul.mubr.f32.gmra.mrb[0].mxu0 %v2484
      %v2678 = vpop.f32.mrb[0].mxu0
      %v2679 = vadd.f32 0.0, %v2678
      %v2680 = vpop.f32.mrb[0].mxu0
      %2681 = vmatprep.mubr.f32.mxu0 %v2490
      %2682 = vmatmul.mubr.f32.gmra.mrb[0].mxu0 %v2488
      %v2683 = vpop.f32.mrb[0].mxu0
      %v2684 = vadd.f32 0.0, %v2683
      %v2685 = vpop.f32.mrb[0].mxu0
      %2686 = vmatprep.mubr.f32.mxu0 %v2494
      %2687 = vmatmul.mubr.f32.gmra.mrb[0].mxu0 %v2492
      %v2688 = vpop.f32.mrb[0].mxu0
      %v2689 = vadd.f32 0.0, %v2688
      %v2690 = vpop.f32.mrb[0].mxu0
      %2691 = vmatprep.mubr.f32.mxu0 %v2498
      %2692 = vmatmul.mubr.f32.gmra.mrb[0].mxu0 %v2496
      %v2693 = vpop.f32.mrb[0].mxu0
      %v2694 = vadd.f32 0.0, %v2693
      %v2695 = vpop.f32.mrb[0].mxu0
      %2696 = vmatprep.mubr.f32.mxu0 %v2502
      %2697 = vmatmul.mubr.f32.gmra.mrb[0].mxu0 %v2500
      %v2698 = vpop.f32.mrb[0].mxu0
      %v2699 = vadd.f32 0.0, %v2698
      %v2700 = vpop.f32.mrb[0].mxu0
      %2701 = vmatprep.mubr.f32.mxu0 %v2506
      %2702 = vmatmul.mubr.f32.gmra.mrb[0].mxu0 %v2504
      %v2703 = vpop.f32.mrb[0].mxu0
      %v2704 = vadd.f32 0.0, %v2703
      %v2705 = vpop.f32.mrb[0].mxu0
      %2706 = vmatprep.mubr.f32.mxu0 %v2510
      %2707 = vmatmul.mubr.f32.gmra.mrb[0].mxu0 %v2508
      %v2708 = vpop.f32.mrb[0].mxu0
      %v2709 = vadd.f32 0.0, %v2708
      %v2710 = vpop.f32.mrb[0].mxu0
      %2711 = vmatprep.mubr.f32.mxu0 %v2514
      %2712 = vmatmul.mubr.f32.gmra.mrb[0].mxu0 %v2512
      %v2713 = vpop.f32.mrb[0].mxu0
      %v2714 = vadd.f32 0.0, %v2713
      %v2715 = vpop.f32.mrb[0].mxu0
      %2716 = vmatprep.mubr.f32.mxu0 %v2518
      %2717 = vmatmul.mubr.f32.gmra.mrb[0].mxu0 %v2516
      %v2718 = vpop.f32.mrb[0].mxu0
      %v2719 = vadd.f32 0.0, %v2718
      %v2720 = vpop.f32.mrb[0].mxu0
      %2721 = vmatprep.mubr.f32.mxu0 %v2522
      %2722 = vmatmul.mubr.f32.gmra.mrb[0].mxu0 %v2520
      %v2723 = vpop.f32.mrb[0].mxu0
      %v2724 = vadd.f32 0.0, %v2723
      %v2725 = vpop.f32.mrb[0].mxu0
      %2726 = vmatprep.mubr.f32.mxu0 %v2526
      %2727 = vmatmul.mubr.f32.gmra.mrb[0].mxu0 %v2524
      %v2728 = vpop.f32.mrb[0].mxu0
      %v2729 = vadd.f32 0.0, %v2728
      %v2730 = vpop.f32.mrb[0].mxu0
      %2731 = vmatprep.mubr.f32.mxu0 %v2530
      %2732 = vmatmul.mubr.f32.gmra.mrb[0].mxu0 %v2528
      %v2733 = vpop.f32.mrb[0].mxu0
      %v2734 = vadd.f32 0.0, %v2733
      %v2735 = vpop.f32.mrb[0].mxu0
      %2736 = vmatprep.mubr.f32.mxu0 %v2534
      %2737 = vmatmul.mubr.f32.gmra.mrb[0].mxu0 %v2532
      %v2738 = vpop.f32.mrb[0].mxu0
      %v2739 = vadd.f32 0.0, %v2738
      %v2740 = vpop.f32.mrb[0].mxu0
      %2741 = vmatprep.mubr.f32.mxu0 %v2533
      %2742 = vmatmul.mubr.f32.gmra.mrb[0].mxu0 %v2531
      %v2743 = vpop.f32.mrb[0].mxu0
      %v2744 = vadd.f32 0.0, %v2743
      %v2745 = vpop.f32.mrb[0].mxu0
      %2746 = vdwg.mxu0
      %2747 = vmatprep.subr.mxu0 0.0
      %2748 = vmatpush1.msra.mxu0 %v2342
      %2749 = vmatprep.subr.mxu0 0.0
      %2750 = vmatpush1.msra.mxu0 %v2343
      %2751 = vmatprep.subr.mxu0 0.0
      %2752 = vmatpush1.msra.mxu0 %v2344
      %2753 = vmatprep.subr.mxu0 0.0
      %2754 = vmatpush1.msra.mxu0 %v2345
      %2755 = vmatprep.subr.mxu0 0.0
      %2756 = vmatpush1.msra.mxu0 %v2346
      %2757 = vmatprep.subr.mxu0 0.0
      %2758 = vmatpush1.msra.mxu0 %v2347
      %2759 = vmatprep.subr.mxu0 0.0
      %2760 = vmatpush1.msra.mxu0 %v2348
      %2761 = vmatprep.subr.mxu0 0.0
      %2762 = vmatpush1.msra.mxu0 %v2349
      %2763 = vmatprep.subr.mxu0 0.0
      %2764 = vmatpush1.msra.mxu0 %v2350
      %2765 = vmatprep.subr.mxu0 0.0
      %2766 = vmatpush1.msra.mxu0 %v2351
      %2767 = vmatprep.subr.mxu0 0.0
      %2768 = vmatpush1.msra.mxu0 %v2352
      %2769 = vmatprep.subr.mxu0 0.0
      %2770 = vmatpush1.msra.mxu0 %v2353
      %2771 = vmatprep.subr.mxu0 0.0
      %2772 = vmatpush1.msra.mxu0 %v2354
      %2773 = vmatprep.subr.mxu0 0.0
      %2774 = vmatpush1.msra.mxu0 %v2355
      %2775 = vmatprep.subr.mxu0 0.0
      %2776 = vmatpush1.msra.mxu0 %v2356
      %2777 = vmatprep.subr.mxu0 0.0
      %2778 = vmatpush1.msra.mxu0 %v2357
      %2779 = vmatprep.subr.mxu0 0.0
      %2780 = vmatpush1.msra.mxu0 %v2358
      %2781 = vmatprep.subr.mxu0 0.0
      %2782 = vmatpush1.msra.mxu0 %v2359
      %2783 = vmatprep.subr.mxu0 0.0
      %2784 = vmatpush1.msra.mxu0 %v2360
      %2785 = vmatprep.subr.mxu0 0.0
      %2786 = vmatpush1.msra.mxu0 %v2361
      %2787 = vmatprep.subr.mxu0 0.0
      %2788 = vmatpush1.msra.mxu0 %v2362
      %2789 = vmatprep.subr.mxu0 0.0
      %2790 = vmatpush1.msra.mxu0 %v2363
      %2791 = vmatprep.subr.mxu0 0.0
      %2792 = vmatpush1.msra.mxu0 %v2364
      %2793 = vmatprep.subr.mxu0 0.0
      %2794 = vmatpush1.msra.mxu0 %v2365
      %2795 = vmatprep.subr.mxu0 0.0
      %2796 = vmatpush1.msra.mxu0 %v2366
      %2797 = vmatprep.subr.mxu0 0.0
      %2798 = vmatpush1.msra.mxu0 %v2367
      %2799 = vmatprep.subr.mxu0 0.0
      %2800 = vmatpush1.msra.mxu0 %v2368
      %2801 = vmatprep.subr.mxu0 0.0
      %2802 = vmatpush1.msra.mxu0 %v2369
      %2803 = vmatprep.subr.mxu0 0.0
      %2804 = vmatpush1.msra.mxu0 %v2370
      %2805 = vmatprep.subr.mxu0 0.0
      %2806 = vmatpush1.msra.mxu0 %v2371
      %2807 = vmatprep.subr.mxu0 0.0
      %2808 = vmatpush1.msra.mxu0 %v2372
      %2809 = vmatprep.subr.mxu0 0.0
      %2810 = vmatpush1.msra.mxu0 %v2373
      %2811 = vmatprep.mubr.f32.mxu0 %v2301
      %2812 = vmatmul.mubr.f32.gmra.mrb[0].mxu0 %v2300
      %v2813 = vpop.f32.mrb[0].mxu0
      %v2814 = vadd.f32 %v2644, %v2813
      %v2815 = vpop.f32.mrb[0].mxu0
      %2816 = vmatprep.mubr.f32.mxu0 %v2303
      %2817 = vmatmul.mubr.f32.gmra.mrb[0].mxu0 %v2302
      %v2818 = vpop.f32.mrb[0].mxu0
      %v2819 = vadd.f32 %v2649, %v2818
      %v2820 = vpop.f32.mrb[0].mxu0
      %2821 = vmatprep.mubr.f32.mxu0 %v2305
      %2822 = vmatmul.mubr.f32.gmra.mrb[0].mxu0 %v2304
      %v2823 = vpop.f32.mrb[0].mxu0
      %v2824 = vadd.f32 %v2654, %v2823
      %v2825 = vpop.f32.mrb[0].mxu0
      %2826 = vmatprep.mubr.f32.mxu0 %v2307
      %2827 = vmatmul.mubr.f32.gmra.mrb[0].mxu0 %v2306
      %v2828 = vpop.f32.mrb[0].mxu0
      %v2829 = vadd.f32 %v2659, %v2828
      %v2830 = vpop.f32.mrb[0].mxu0
      %2831 = vmatprep.mubr.f32.mxu0 %v2309
      %2832 = vmatmul.mubr.f32.gmra.mrb[0].mxu0 %v2308
      %v2833 = vpop.f32.mrb[0].mxu0
      %v2834 = vadd.f32 %v2664, %v2833
      %v2835 = vpop.f32.mrb[0].mxu0
      %2836 = vmatprep.mubr.f32.mxu0 %v2311
      %2837 = vmatmul.mubr.f32.gmra.mrb[0].mxu0 %v2310
      %v2838 = vpop.f32.mrb[0].mxu0
      %v2839 = vadd.f32 %v2669, %v2838
      %v2840 = vpop.f32.mrb[0].mxu0
      %2841 = vmatprep.mubr.f32.mxu0 %v2313
      %2842 = vmatmul.mubr.f32.gmra.mrb[0].mxu0 %v2312
      %v2843 = vpop.f32.mrb[0].mxu0
      %v2844 = vadd.f32 %v2674, %v2843
      %v2845 = vpop.f32.mrb[0].mxu0
      %2846 = vmatprep.mubr.f32.mxu0 %v2315
      %2847 = vmatmul.mubr.f32.gmra.mrb[0].mxu0 %v2314
      %v2848 = vpop.f32.mrb[0].mxu0
      %v2849 = vadd.f32 %v2679, %v2848
      %v2850 = vpop.f32.mrb[0].mxu0
      %2851 = vmatprep.mubr.f32.mxu0 %v2317
      %2852 = vmatmul.mubr.f32.gmra.mrb[0].mxu0 %v2316
      %v2853 = vpop.f32.mrb[0].mxu0
      %v2854 = vadd.f32 %v2684, %v2853
      %v2855 = vpop.f32.mrb[0].mxu0
      %2856 = vmatprep.mubr.f32.mxu0 %v2319
      %2857 = vmatmul.mubr.f32.gmra.mrb[0].mxu0 %v2318
      %v2858 = vpop.f32.mrb[0].mxu0
      %v2859 = vadd.f32 %v2689, %v2858
      %v2860 = vpop.f32.mrb[0].mxu0
      %2861 = vmatprep.mubr.f32.mxu0 %v2321
      %2862 = vmatmul.mubr.f32.gmra.mrb[0].mxu0 %v2320
      %v2863 = vpop.f32.mrb[0].mxu0
      %v2864 = vadd.f32 %v2694, %v2863
      %v2865 = vpop.f32.mrb[0].mxu0
      %2866 = vmatprep.mubr.f32.mxu0 %v2323
      %2867 = vmatmul.mubr.f32.gmra.mrb[0].mxu0 %v2322
      %v2868 = vpop.f32.mrb[0].mxu0
      %v2869 = vadd.f32 %v2699, %v2868
      %v2870 = vpop.f32.mrb[0].mxu0
      %2871 = vmatprep.mubr.f32.mxu0 %v2325
      %2872 = vmatmul.mubr.f32.gmra.mrb[0].mxu0 %v2324
      %v2873 = vpop.f32.mrb[0].mxu0
      %v2874 = vadd.f32 %v2704, %v2873
      %v2875 = vpop.f32.mrb[0].mxu0
      %2876 = vmatprep.mubr.f32.mxu0 %v2327
      %2877 = vmatmul.mubr.f32.gmra.mrb[0].mxu0 %v2326
      %v2878 = vpop.f32.mrb[0].mxu0
      %v2879 = vadd.f32 %v2709, %v2878
      %v2880 = vpop.f32.mrb[0].mxu0
      %2881 = vmatprep.mubr.f32.mxu0 %v2329
      %2882 = vmatmul.mubr.f32.gmra.mrb[0].mxu0 %v2328
      %v2883 = vpop.f32.mrb[0].mxu0
      %v2884 = vadd.f32 %v2714, %v2883
      %v2885 = vpop.f32.mrb[0].mxu0
      %2886 = vmatprep.mubr.f32.mxu0 %v2331
      %2887 = vmatmul.mubr.f32.gmra.mrb[0].mxu0 %v2330
      %v2888 = vpop.f32.mrb[0].mxu0
      %v2889 = vadd.f32 %v2719, %v2888
      %v2890 = vpop.f32.mrb[0].mxu0
      %2891 = vmatprep.mubr.f32.mxu0 %v2333
      %2892 = vmatmul.mubr.f32.gmra.mrb[0].mxu0 %v2332
      %v2893 = vpop.f32.mrb[0].mxu0
      %v2894 = vadd.f32 %v2724, %v2893
      %v2895 = vpop.f32.mrb[0].mxu0
      %2896 = vmatprep.mubr.f32.mxu0 %v2335
      %2897 = vmatmul.mubr.f32.gmra.mrb[0].mxu0 %v2334
      %v2898 = vpop.f32.mrb[0].mxu0
      %v2899 = vadd.f32 %v2729, %v2898
      %v2900 = vpop.f32.mrb[0].mxu0
      %2901 = vmatprep.mubr.f32.mxu0 %v2337
      %2902 = vmatmul.mubr.f32.gmra.mrb[0].mxu0 %v2336
      %v2903 = vpop.f32.mrb[0].mxu0
      %v2904 = vadd.f32 %v2734, %v2903
      %v2905 = vpop.f32.mrb[0].mxu0
      %2906 = vmatprep.mubr.f32.mxu0 %v2339
      %2907 = vmatmul.mubr.f32.gmra.mrb[0].mxu0 %v2338
      %v2908 = vpop.f32.mrb[0].mxu0
      %v2909 = vadd.f32 %v2739, %v2908
      %v2910 = vpop.f32.mrb[0].mxu0
      %2911 = vmatprep.mubr.f32.mxu0 %v2341
      %2912 = vmatmul.mubr.f32.gmra.mrb[0].mxu0 %v2340
      %v2913 = vpop.f32.mrb[0].mxu0
      %v2914 = vadd.f32 %v2744, %v2913
      %v2915 = vpop.f32.mrb[0].mxu0
      %2916 = vdwg.mxu0
      %v2917 = vld [vmem:[%s6] sm:$0x1]
      %v2919 = vlaneseq
      %v2920 = vshrl.u32 %v2919, 7
      %v2921 = vsub.s32 0, %v2920
      %v2922 = vrot.slane %v2917, %v2921
      %v2924 = vadd.f32 %v2814, %v2922
      %v2925 = vadd.f32 %v2819, %v2922
      %v2926 = vadd.f32 %v2824, %v2922
      %v2927 = vadd.f32 %v2829, %v2922
      %v2928 = vadd.f32 %v2834, %v2922
      %v2929 = vadd.f32 %v2839, %v2922
      %v2930 = vadd.f32 %v2844, %v2922
      %v2931 = vadd.f32 %v2849, %v2922
      %v2932 = vadd.f32 %v2854, %v2922
      %v2933 = vadd.f32 %v2859, %v2922
      %v2934 = vadd.f32 %v2864, %v2922
      %v2935 = vadd.f32 %v2869, %v2922
      %v2936 = vadd.f32 %v2874, %v2922
      %v2937 = vadd.f32 %v2879, %v2922
      %v2938 = vadd.f32 %v2884, %v2922
      %v2939 = vadd.f32 %v2889, %v2922
      %v2940 = vadd.f32 %v2894, %v2922
      %v2941 = vadd.f32 %v2899, %v2922
      %v2942 = vadd.f32 %v2904, %v2922
      %v2943 = vadd.f32 %v2909, %v2922
      %v2944 = vadd.f32 %v2914, %v2922
      %v2945 = vtanh.pop %v2924
      %v2946 = vtanh.pop %v2925
      %v2947 = vtanh.pop %v2926
      %v2948 = vtanh.pop %v2927
      %v2949 = vtanh.pop %v2928
      %v2950 = vtanh.pop %v2929
      %v2951 = vtanh.pop %v2930
      %v2952 = vtanh.pop %v2931
      %v2953 = vtanh.pop %v2932
      %v2954 = vtanh.pop %v2933
      %v2955 = vtanh.pop %v2934
      %v2956 = vtanh.pop %v2935
      %v2957 = vtanh.pop %v2936
      %v2958 = vtanh.pop %v2937
      %v2959 = vtanh.pop %v2938
      %v2960 = vtanh.pop %v2939
      %v2961 = vtanh.pop %v2940
      %v2962 = vtanh.pop %v2941
      %v2963 = vtanh.pop %v2942
      %v2964 = vtanh.pop %v2943
      %v2965 = vtanh.pop %v2944
      %vm2966 = vcmask 392192
      %2967 = vst.msk [vmem:[%s278] sm:$0xff] %vm2966, %v2945
      %2968 = vst.msk [vmem:[%s278 + $0x8] sm:$0xff] %vm2966, %v2946
      %2969 = vst.msk [vmem:[%s278 + $0x10] sm:$0xff] %vm2966, %v2947
      %2970 = vst.msk [vmem:[%s278 + $0x18] sm:$0xff] %vm2966, %v2948
      %2971 = vst.msk [vmem:[%s278 + $0x20] sm:$0xff] %vm2966, %v2949
      %2972 = vst.msk [vmem:[%s278 + $0x28] sm:$0xff] %vm2966, %v2950
      %2973 = vst.msk [vmem:[%s278 + $0x30] sm:$0xff] %vm2966, %v2951
      %2974 = vst.msk [vmem:[%s278 + $0x38] sm:$0xff] %vm2966, %v2952
      %2975 = vst.msk [vmem:[%s278 + $0x40] sm:$0xff] %vm2966, %v2953
      %2976 = vst.msk [vmem:[%s278 + $0x48] sm:$0xff] %vm2966, %v2954
      %2977 = vst.msk [vmem:[%s278 + $0x50] sm:$0xff] %vm2966, %v2955
      %2978 = vst.msk [vmem:[%s278 + $0x58] sm:$0xff] %vm2966, %v2956
      %2979 = vst.msk [vmem:[%s278 + $0x60] sm:$0xff] %vm2966, %v2957
      %2980 = vst.msk [vmem:[%s278 + $0x68] sm:$0xff] %vm2966, %v2958
      %2981 = vst.msk [vmem:[%s278 + $0x70] sm:$0xff] %vm2966, %v2959
      %2982 = vst.msk [vmem:[%s278 + $0x78] sm:$0xff] %vm2966, %v2960
      %2983 = vst.msk [vmem:[%s278 + $0x80] sm:$0xff] %vm2966, %v2961
      %2984 = vst.msk [vmem:[%s278 + $0x88] sm:$0xff] %vm2966, %v2962
      %2985 = vst.msk [vmem:[%s278 + $0x90] sm:$0xff] %vm2966, %v2963
      %2986 = vst.msk [vmem:[%s278 + $0x98] sm:$0xff] %vm2966, %v2964
      %vm2987 = vcmask 385024
      %2988 = vst.msk [vmem:[%s278 + $0xa0] sm:$0x1] %vm2987, %v2965
      %p2989 = scmp.lt.s32.totalorder %s18, 1
      %s2990 = scalar_select %p2989, %s18, 1
      %s2991 = smul.addr %s2990, 21
      %s2992 = smul.addr %s2991, 8
      %s2993 = scalar_lea.vmem %s7, %s2992
      // Predicated region
      $region49: #{decoder_forward.3} parent=47 // pred_check
        %p2994 = pneg %p188
      $region50: #{decoder_forward.3} parent=47 // pred_check_branch
        %2996 = sbr.rel (%p2994) target = $region52
      $region51: #{decoder_forward.3} parent=47 // pred_region
        _
      $region52: #{decoder_forward.3} parent=47 // pred_fallthru
        _
    $region48: #{decoder_forward.3} parent=5 // pred_fallthru
      _
    %p2997 = scmp.le.s32.totalorder 2, %s13
    // Predicated region
    $region53: #{decoder_forward.3} parent=5 // pred_check
      %p2998 = pneg %p2997
    $region54: #{decoder_forward.3} parent=5 // pred_check_branch
      %3000 = sbr.rel (%p2998) target = $region56
    $region55: #{decoder_forward.3} parent=5 // pred_region
      %s3001 = ssub.s32 %s13, 2
      // Predicated region
      $region57: #{decoder_forward.3} parent=55 // pred_check
        %p3002 = pneg %p194
      $region58: #{decoder_forward.3} parent=55 // pred_check_branch
        %3004 = sbr.rel (%p3002) target = $region60
      $region59: #{decoder_forward.3} parent=55 // pred_region
        %p3005 = scmp.lt.s32.totalorder %s19, 1
        %s3006 = scalar_select %p3005, %s19, 1
        %s3007 = smul.addr %s3006, 21
        %s3008 = smul.addr %s3007, 8
        %s3009 = scalar_lea.vmem %s7, %s3008
      $region60: #{decoder_forward.3} parent=55 // pred_fallthru
        _
    $region56: #{decoder_forward.3} parent=5 // pred_fallthru
      _
  $region6: #{decoder_forward.3} parent=0 // loop_footer
    %s17 = sadd.s32 1, %s13
  $region7: #{decoder_forward.3} parent=0 // loop_footer_branch
    %12 = sbr.rel target = $region3
  $region8: #{decoder_forward.3} parent=0 // loop_exit
    _

// kernel: decoder_forward.2
$region0: #{decoder_forward.2}
  #allocation0 [shape = 'u32[]', space=smem, size = 0x4, offset = 0x4, fixed_abs, tag = 'smem constant byte address 0x4 - core index']
  #allocation1 [shape = 'u32[144,128]{1,0:T(1,128)}', space=vmem, size = 0x12000, scoped, tag = 'internal scratch']
  %s0 = inlined_call_operand.hbm [shape: f32[2,32], index: 0, kind: input, shape index: {}]
  %s1 = inlined_call_operand.hbm [shape: f32[32,128], index: 1, kind: input, shape index: {}]
  %s2 = inlined_call_operand.hbm [shape: f32[1,128], index: 2, kind: input, shape index: {}]
  %s3 = inlined_call_operand.hbm [shape: s8[128,32256], index: 3, kind: input, shape index: {}]
  %s4 = inlined_call_operand.hbm [shape: f32[1,32256], index: 4, kind: input, shape index: {}]
  %s5 = inlined_call_operand.hbm [shape: f32[1,32256], index: 5, kind: input, shape index: {}]
  %s6 = inlined_call_operand.vmem [shape: bf16[2,32256], index: 6, kind: output, shape index: {}]
  %s7 = sld [smem:[#allocation0]]
  $region81: #{decoder_forward.2} parent=0
    _
  %s9 = ssub.s32 1, %s7
  %s10 = scalar_select 0, %s9, %s7
  $region1: #{decoder_forward.2} parent=0
    #allocation2 [shape = 'u8[1024]{0}', space=vmem, size = 0x400, scoped, tag = 'input window, operand 0, single buffered']
    #allocation3 [shape = 's32[2]{0}', space=sflag, size = 0x8, scoped, tag = 'scoped memory for decoder_forward.2']
    #allocation4 [shape = 'u8[16384]{0}', space=vmem, size = 0x4000, scoped, tag = 'input window, operand 1, single buffered']
    #allocation5 [shape = 's32[1]{0}', space=sflag, size = 0x4, scoped, tag = 'scoped memory for decoder_forward.2']
    #allocation6 [shape = 'u8[512]{0}', space=vmem, size = 0x400, scoped, tag = 'input window, operand 2, single buffered']
    #allocation7 [shape = 'u8[4128768]{0}', space=vmem, size = 0x3f0000, scoped, tag = 'input window, operand 3']
    #allocation8 [shape = 's32[2]{0}', space=sflag, size = 0x8, scoped, tag = 'scoped memory for decoder_forward.2']
    #allocation9 [shape = 'u8[129024]{0}', space=vmem, size = 0x1f800, scoped, tag = 'input window, operand 4']
    #allocation10 [shape = 'u8[129024]{0}', space=vmem, size = 0x1f800, scoped, tag = 'input window, operand 5']
    #allocation11 [shape = 's32[2]{0}', space=sflag, size = 0x8, scoped, tag = 'scoped memory for decoder_forward.2']
    %11 = vsyncpa [#allocation3], 0
    %12 = vsyncpa [#allocation5], 0
    %13 = vsyncpa [#allocation8], 0
    %s14 = scalar_lea.sflag [#allocation8], 1
    %15 = vsyncpa %s14, 0
    %16 = vsyncpa [#allocation11], 0
    %s17 = scalar_lea.sflag [#allocation11], 1
    %18 = vsyncpa %s17, 0
    loop: start=0, step=1, limit=4
    $region2: #{decoder_forward.2} parent=1 // loop_pre_header
      _
    $region3: #{decoder_forward.2} parent=1 // loop_header
      %s20 = sphi 0, %s24
      %p21 = scmp.ge.s32.totalorder %s20, 4
      %s28 = sphi 0, %s28
      %s30 = sphi 0, %s28
      %s31 = sphi 0, %s30
      %s45 = sphi 0, %s31
      %s49 = sphi 0, %s49
      %s51 = sphi 0, %s49
      %s52 = sphi 0, %s51
      %s66 = sphi 0, %s52
      %s70 = sphi 0, %s70
      %s72 = sphi 0, %s70
      %s73 = sphi 0, %s72
      %s87 = sphi 0, %s73
      %s93 = sphi 0, %s95
      %s96 = sphi 0, %s93
      %s97 = sphi 0, %s96
      %s113 = sphi 0, %s97
      %s119 = sphi 0, %s121
      %s122 = sphi 0, %s119
      %s123 = sphi 0, %s122
      %s139 = sphi 0, %s123
      %s145 = sphi 0, %s147
      %s148 = sphi 0, %s145
      %s149 = sphi 0, %s148
      %s165 = sphi 0, %s149
      %s171 = sphi 0, %s173
      %s174 = sphi 0, %s171
      %s175 = sphi 0, %s174
      %s191 = sphi 0, %s175
    $region4: #{decoder_forward.2} parent=1 // loop_header_branch
      %23 = sbr.rel (%p21) target = $region8
    $region5: #{decoder_forward.2} parent=1 // loop_body
      %s25 = ssub.s32 %s20, 1
      %s26 = ssub.s32 %s20, 2
      %s27 = sadd.s32 %s20, 1
      %s29 = sadd.s32 %s28, 1
      %p32 = scmp.eq.s32.totalorder %s20, 1
      %p33 = scmp.ne.s32.totalorder %s28, %s30
      %p34 = scmp.eq.s32.totalorder %s20, 0
      %p35 = por %p33, %p34
      %p36 = scmp.ne.s32.totalorder %s28, %s30
      %p37 = scmp.eq.s32.totalorder %s25, 1
      %p38 = por %p36, %p37
      %p39 = scmp.ne.s32.totalorder %s30, %s31
      %p40 = scmp.eq.s32.totalorder %s25, 0
      %p41 = por %p39, %p40
      %p42 = scmp.ne.s32.totalorder %s30, %s31
      %p43 = scmp.eq.s32.totalorder %s26, 1
      %p44 = por %p42, %p43
      %p46 = scmp.ne.s32.totalorder %s31, %s45
      %p47 = scmp.eq.s32.totalorder %s26, 0
      %p48 = por %p46, %p47
      %s50 = sadd.s32 %s49, 1
      %p53 = scmp.eq.s32.totalorder %s20, 1
      %p54 = scmp.ne.s32.totalorder %s49, %s51
      %p55 = scmp.eq.s32.totalorder %s20, 0
      %p56 = por %p54, %p55
      %p57 = scmp.ne.s32.totalorder %s49, %s51
      %p58 = scmp.eq.s32.totalorder %s25, 1
      %p59 = por %p57, %p58
      %p60 = scmp.ne.s32.totalorder %s51, %s52
      %p61 = scmp.eq.s32.totalorder %s25, 0
      %p62 = por %p60, %p61
      %p63 = scmp.ne.s32.totalorder %s51, %s52
      %p64 = scmp.eq.s32.totalorder %s26, 1
      %p65 = por %p63, %p64
      %p67 = scmp.ne.s32.totalorder %s52, %s66
      %p68 = scmp.eq.s32.totalorder %s26, 0
      %p69 = por %p67, %p68
      %s71 = sadd.s32 %s70, 1
      %p74 = scmp.eq.s32.totalorder %s20, 1
      %p75 = scmp.ne.s32.totalorder %s70, %s72
      %p76 = scmp.eq.s32.totalorder %s20, 0
      %p77 = por %p75, %p76
      %p78 = scmp.ne.s32.totalorder %s70, %s72
      %p79 = scmp.eq.s32.totalorder %s25, 1
      %p80 = por %p78, %p79
      %p81 = scmp.ne.s32.totalorder %s72, %s73
      %p82 = scmp.eq.s32.totalorder %s25, 0
      %p83 = por %p81, %p82
      %p84 = scmp.ne.s32.totalorder %s72, %s73
      %p85 = scmp.eq.s32.totalorder %s26, 1
      %p86 = por %p84, %p85
      %p88 = scmp.ne.s32.totalorder %s73, %s87
      %p89 = scmp.eq.s32.totalorder %s26, 0
      %p90 = por %p88, %p89
      %s91 = ssub.s32 %s20, %s27
      %p92 = scmp.eq.s32.totalorder %s91, 0
      %s94 = sadd.s32 %s93, 1
      %s95 = scalar_select %p92, %s93, %s94
      %p98 = pneg %p92
      %p99 = scmp.eq.s32.totalorder %s20, 1
      %p100 = por %p98, %p99
      %p101 = scmp.ne.s32.totalorder %s93, %s96
      %p102 = scmp.eq.s32.totalorder %s20, 0
      %p103 = por %p101, %p102
      %p104 = scmp.ne.s32.totalorder %s93, %s96
      %p105 = scmp.eq.s32.totalorder %s25, 1
      %p106 = por %p104, %p105
      %p107 = scmp.ne.s32.totalorder %s96, %s97
      %p108 = scmp.eq.s32.totalorder %s25, 0
      %p109 = por %p107, %p108
      %p110 = scmp.ne.s32.totalorder %s96, %s97
      %p111 = scmp.eq.s32.totalorder %s26, 1
      %p112 = por %p110, %p111
      %p114 = scmp.ne.s32.totalorder %s97, %s113
      %p115 = scmp.eq.s32.totalorder %s26, 0
      %p116 = por %p114, %p115
      %s117 = ssub.s32 %s20, %s27
      %p118 = scmp.eq.s32.totalorder %s117, 0
      %s120 = sadd.s32 %s119, 1
      %s121 = scalar_select %p118, %s119, %s120
      %p124 = pneg %p118
      %p125 = scmp.eq.s32.totalorder %s20, 1
      %p126 = por %p124, %p125
      %p127 = scmp.ne.s32.totalorder %s119, %s122
      %p128 = scmp.eq.s32.totalorder %s20, 0
      %p129 = por %p127, %p128
      %p130 = scmp.ne.s32.totalorder %s119, %s122
      %p131 = scmp.eq.s32.totalorder %s25, 1
      %p132 = por %p130, %p131
      %p133 = scmp.ne.s32.totalorder %s122, %s123
      %p134 = scmp.eq.s32.totalorder %s25, 0
      %p135 = por %p133, %p134
      %p136 = scmp.ne.s32.totalorder %s122, %s123
      %p137 = scmp.eq.s32.totalorder %s26, 1
      %p138 = por %p136, %p137
      %p140 = scmp.ne.s32.totalorder %s123, %s139
      %p141 = scmp.eq.s32.totalorder %s26, 0
      %p142 = por %p140, %p141
      %s143 = ssub.s32 %s20, %s27
      %p144 = scmp.eq.s32.totalorder %s143, 0
      %s146 = sadd.s32 %s145, 1
      %s147 = scalar_select %p144, %s145, %s146
      %p150 = pneg %p144
      %p151 = scmp.eq.s32.totalorder %s20, 1
      %p152 = por %p150, %p151
      %p153 = scmp.ne.s32.totalorder %s145, %s148
      %p154 = scmp.eq.s32.totalorder %s20, 0
      %p155 = por %p153, %p154
      %p156 = scmp.ne.s32.totalorder %s145, %s148
      %p157 = scmp.eq.s32.totalorder %s25, 1
      %p158 = por %p156, %p157
      %p159 = scmp.ne.s32.totalorder %s148, %s149
      %p160 = scmp.eq.s32.totalorder %s25, 0
      %p161 = por %p159, %p160
      %p162 = scmp.ne.s32.totalorder %s148, %s149
      %p163 = scmp.eq.s32.totalorder %s26, 1
      %p164 = por %p162, %p163
      %p166 = scmp.ne.s32.totalorder %s149, %s165
      %p167 = scmp.eq.s32.totalorder %s26, 0
      %p168 = por %p166, %p167
      %s169 = ssub.s32 %s20, %s27
      %p170 = scmp.eq.s32.totalorder %s169, 0
      %s172 = sadd.s32 %s171, 1
      %s173 = scalar_select %p170, %s171, %s172
      %p176 = pneg %p170
      %p177 = scmp.eq.s32.totalorder %s20, 1
      %p178 = por %p176, %p177
      %p179 = scmp.ne.s32.totalorder %s171, %s174
      %p180 = scmp.eq.s32.totalorder %s20, 0
      %p181 = por %p179, %p180
      %p182 = scmp.ne.s32.totalorder %s171, %s174
      %p183 = scmp.eq.s32.totalorder %s25, 1
      %p184 = por %p182, %p183
      %p185 = scmp.ne.s32.totalorder %s174, %s175
      %p186 = scmp.eq.s32.totalorder %s25, 0
      %p187 = por %p185, %p186
      %p188 = scmp.ne.s32.totalorder %s174, %s175
      %p189 = scmp.eq.s32.totalorder %s26, 1
      %p190 = por %p188, %p189
      %p192 = scmp.ne.s32.totalorder %s175, %s191
      %p193 = scmp.eq.s32.totalorder %s26, 0
      %p194 = por %p192, %p193
      %p195 = scmp.le.s32.totalorder 1, %s20
      %p196 = scmp.lt.s32.totalorder %s20, 3
      %p197 = pnand %p195, %p196
      %p198 = pneg %p197
      // Predicated region
      $region9: #{decoder_forward.2} parent=5 // pred_check
        _
      $region10: #{decoder_forward.2} parent=5 // pred_check_branch
        %200 = sbr.rel (%p197) target = $region12
      $region11: #{decoder_forward.2} parent=5 // pred_region
        %s201 = ssub.s32 %s20, 1
        // Predicated region
        $region13: #{decoder_forward.2} parent=11 // pred_check
          %p202 = pneg %p41
        $region14: #{decoder_forward.2} parent=11 // pred_check_branch
          %204 = sbr.rel (%p202) target = $region16
        $region15: #{decoder_forward.2} parent=11 // pred_region
          %s206 = ssub.s32 32, 32
          %207 = vsyncadd [#allocation3], %s206
          %s209 = sshll.u32 [#allocation2], 4
          %s210 = int_to_ptr.vmem [resolvable:$true] %s209
          %212 = dma.hbm_to_vmem [thread:$0]  %s0, 32, %s210, [#allocation3]
        $region16: #{decoder_forward.2} parent=11 // pred_fallthru
          _
        // Predicated region
        $region17: #{decoder_forward.2} parent=11 // pred_check
          %p213 = pneg %p62
        $region18: #{decoder_forward.2} parent=11 // pred_check_branch
          %215 = sbr.rel (%p213) target = $region20
        $region19: #{decoder_forward.2} parent=11 // pred_region
          %s217 = ssub.s32 512, 512
          %218 = vsyncadd [#allocation5], %s217
          %s219 = sshll.u32 [#allocation4], 4
          %s220 = int_to_ptr.vmem [resolvable:$true] %s219
          %225 = dma.hbm_to_vmem [thread:$0]  %s1, 512, %s220, [#allocation5], 128, 128, 8
        $region20: #{decoder_forward.2} parent=11 // pred_fallthru
          _
        // Predicated region
        $region21: #{decoder_forward.2} parent=11 // pred_check
          %p226 = pneg %p83
        $region22: #{decoder_forward.2} parent=11 // pred_check_branch
          %228 = sbr.rel (%p226) target = $region24
        $region23: #{decoder_forward.2} parent=11 // pred_region
          %s230 = ssub.s32 16, 16
          %231 = vsyncadd [#allocation5], %s230
          %s233 = sshll.u32 [#allocation6], 4
          %s234 = int_to_ptr.vmem [resolvable:$true] %s233
          %236 = dma.hbm_to_vmem [thread:$0]  %s2, 16, %s234, [#allocation5]
        $region24: #{decoder_forward.2} parent=11 // pred_fallthru
          _
      $region12: #{decoder_forward.2} parent=5 // pred_fallthru
        _
      %p237 = scmp.lt.s32.totalorder %s20, 2
      // Predicated region
      $region25: #{decoder_forward.2} parent=5 // pred_check
        %p238 = pneg %p237
      $region26: #{decoder_forward.2} parent=5 // pred_check_branch
        %240 = sbr.rel (%p238) target = $region28
      $region27: #{decoder_forward.2} parent=5 // pred_region
        // Predicated region
        $region29: #{decoder_forward.2} parent=27 // pred_check
          %p241 = pneg %p103
        $region30: #{decoder_forward.2} parent=27 // pred_check_branch
          %243 = sbr.rel (%p241) target = $region32
        $region31: #{decoder_forward.2} parent=27 // pred_region
          %s244 = sand.u32 %s20, 1
          %s245 = scalar_lea.sflag [#allocation8], %s244
          %s246 = sand.u32 %s93, 1
          %s247 = smul.addr %s246, 4032
          %s248 = scalar_lea.vmem [#allocation7], %s247
          %s249 = smul.u32 126, %s20
          %s251 = ssub.s32 64512, 64512
          %252 = vsyncadd %s245, %s251
          %s253 = smul.addr %s249, 128
          %s254 = scalar_lea.hbm %s3, %s253
          %s255 = sshll.u32 %s248, 4
          %s256 = int_to_ptr.vmem [resolvable:$true] %s255
          %261 = dma.hbm_to_vmem [thread:$0]  %s254, 64512, %s256, %s245, 32256, 16128, 1008
        $region32: #{decoder_forward.2} parent=27 // pred_fallthru
          _
        // Predicated region
        $region33: #{decoder_forward.2} parent=27 // pred_check
          %p262 = pneg %p129
        $region34: #{decoder_forward.2} parent=27 // pred_check_branch
          %264 = sbr.rel (%p262) target = $region36
        $region35: #{decoder_forward.2} parent=27 // pred_region
          %s265 = sand.u32 %s20, 1
          %s266 = scalar_lea.sflag [#allocation8], %s265
          %s267 = sand.u32 %s119, 1
          %s268 = smul.addr %s267, 126
          %s269 = scalar_lea.vmem [#allocation9], %s268
          %s270 = smul.u32 126, %s20
          %s272 = ssub.s32 2016, 2016
          %273 = vsyncadd %s266, %s272
          %s274 = smul.addr %s270, 16
          %s275 = scalar_lea.hbm %s4, %s274
          %s277 = sshll.u32 %s269, 4
          %s278 = int_to_ptr.vmem [resolvable:$true] %s277
          %280 = dma.hbm_to_vmem [thread:$0]  %s275, 2016, %s278, %s266
        $region36: #{decoder_forward.2} parent=27 // pred_fallthru
          _
        // Predicated region
        $region37: #{decoder_forward.2} parent=27 // pred_check
          %p281 = pneg %p155
        $region38: #{decoder_forward.2} parent=27 // pred_check_branch
          %283 = sbr.rel (%p281) target = $region40
        $region39: #{decoder_forward.2} parent=27 // pred_region
          %s284 = sand.u32 %s145, 1
          %s285 = scalar_lea.sflag [#allocation11], %s284
          %s286 = sand.u32 %s145, 1
          %s287 = smul.addr %s286, 126
          %s288 = scalar_lea.vmem [#allocation10], %s287
          %s289 = smul.u32 126, %s20
          %s291 = ssub.s32 2016, 2016
          %292 = vsyncadd %s285, %s291
          %s293 = smul.addr %s289, 16
          %s294 = scalar_lea.hbm %s5, %s293
          %s296 = sshll.u32 %s288, 4
          %s297 = int_to_ptr.vmem [resolvable:$true] %s296
          %299 = dma.hbm_to_vmem [thread:$0]  %s294, 2016, %s297, %s285
        $region40: #{decoder_forward.2} parent=27 // pred_fallthru
          _
      $region28: #{decoder_forward.2} parent=5 // pred_fallthru
        _
      %p300 = scmp.le.s32.totalorder 1, %s20
      %p301 = scmp.lt.s32.totalorder %s20, 3
      %p302 = pnand %p300, %p301
      %p303 = pneg %p302
      // Predicated region
      $region41: #{decoder_forward.2} parent=5 // pred_check
        _
      $region42: #{decoder_forward.2} parent=5 // pred_check_branch
        %305 = sbr.rel (%p302) target = $region44
      $region43: #{decoder_forward.2} parent=5 // pred_region
        %s306 = ssub.s32 %s20, 1
        // Predicated region
        $region45: #{decoder_forward.2} parent=43 // pred_check
          %p307 = pneg %p41
        $region46: #{decoder_forward.2} parent=43 // pred_check_branch
          %309 = sbr.rel (%p307) target = $region48
        $region47: #{decoder_forward.2} parent=43 // pred_region
          %310 = dma.done [#allocation3], 32
        $region48: #{decoder_forward.2} parent=43 // pred_fallthru
          _
        // Predicated region
        $region49: #{decoder_forward.2} parent=43 // pred_check
          %p311 = pneg %p62
        $region50: #{decoder_forward.2} parent=43 // pred_check_branch
          %313 = sbr.rel (%p311) target = $region52
        $region51: #{decoder_forward.2} parent=43 // pred_region
          %314 = dma.done [#allocation5], 512
        $region52: #{decoder_forward.2} parent=43 // pred_fallthru
          _
        // Predicated region
        $region53: #{decoder_forward.2} parent=43 // pred_check
          %p315 = pneg %p83
        $region54: #{decoder_forward.2} parent=43 // pred_check_branch
          %317 = sbr.rel (%p315) target = $region56
        $region55: #{decoder_forward.2} parent=43 // pred_region
          %318 = dma.done [#allocation5], 16
        $region56: #{decoder_forward.2} parent=43 // pred_fallthru
          _
        %s319 = sand.u32 %s25, 1
        %s320 = scalar_lea.sflag [#allocation8], %s319
        %s321 = sand.u32 %s96, 1
        %s322 = smul.addr %s321, 4032
        %s323 = scalar_lea.vmem [#allocation7], %s322
        // Predicated region
        $region57: #{decoder_forward.2} parent=43 // pred_check
          %p324 = pneg %p109
        $region58: #{decoder_forward.2} parent=43 // pred_check_branch
          %326 = sbr.rel (%p324) target = $region60
        $region59: #{decoder_forward.2} parent=43 // pred_region
          %327 = dma.done %s320, 64512
        $region60: #{decoder_forward.2} parent=43 // pred_fallthru
          _
        %s328 = sand.u32 %s25, 1
        %s329 = scalar_lea.sflag [#allocation8], %s328
        %s330 = sand.u32 %s122, 1
        %s331 = smul.addr %s330, 126
        %s332 = scalar_lea.vmem [#allocation9], %s331
        // Predicated region
        $region61: #{decoder_forward.2} parent=43 // pred_check
          %p333 = pneg %p135
        $region62: #{decoder_forward.2} parent=43 // pred_check_branch
          %335 = sbr.rel (%p333) target = $region64
        $region63: #{decoder_forward.2} parent=43 // pred_region
          %336 = dma.done %s329, 2016
        $region64: #{decoder_forward.2} parent=43 // pred_fallthru
          _
        %s337 = sand.u32 %s148, 1
        %s338 = scalar_lea.sflag [#allocation11], %s337
        %s339 = sand.u32 %s148, 1
        %s340 = smul.addr %s339, 126
        %s341 = scalar_lea.vmem [#allocation10], %s340
        // Predicated region
        $region65: #{decoder_forward.2} parent=43 // pred_check
          %p342 = pneg %p161
        $region66: #{decoder_forward.2} parent=43 // pred_check_branch
          %344 = sbr.rel (%p342) target = $region68
        $region67: #{decoder_forward.2} parent=43 // pred_region
          %345 = dma.done %s338, 2016
        $region68: #{decoder_forward.2} parent=43 // pred_fallthru
          _
        %p346 = pneg %p41
        %p347 = pneg %p38
        %p348 = pneg %p62
        %p349 = pneg %p59
        %p350 = pneg %p83
        %p351 = pneg %p80
        %s352 = sand.u32 %s25, 1
        %s353 = scalar_lea.sflag [#allocation8], %s352
        %s354 = sand.u32 %s96, 1
        %s355 = smul.addr %s354, 4032
        %s356 = scalar_lea.vmem [#allocation7], %s355
        %p357 = pneg %p109
        %p358 = pneg %p106
        %s359 = sand.u32 %s25, 1
        %s360 = scalar_lea.sflag [#allocation8], %s359
        %s361 = sand.u32 %s122, 1
        %s362 = smul.addr %s361, 126
        %s363 = scalar_lea.vmem [#allocation9], %s362
        %p364 = pneg %p135
        %p365 = pneg %p132
        %s366 = sand.u32 %s148, 1
        %s367 = scalar_lea.sflag [#allocation11], %s366
        %s368 = sand.u32 %s148, 1
        %s369 = smul.addr %s368, 126
        %s370 = scalar_lea.vmem [#allocation10], %s369
        %p371 = pneg %p161
        %p372 = pneg %p158
        %p373 = pneg %p187
        %p374 = pneg %p184
        %s375 = smul.u32 126, %s25
        %p376 = scmp.lt.s32.totalorder %s375, 251
        %s377 = scalar_select %p376, %s375, 251
        %s378 = scalar_lea.vmem %s6, %s377
        %s379 = smul.u32 126, %s25
        %s380 = smul.u32 126, %s25
        %s381 = smul.u32 126, %s25
        %s382 = smul.u32 126, %s25
        %p383 = scmp.lt.s32.totalorder %s382, 251
        %s384 = scalar_select %p383, %s382, 251
        %s385 = scalar_lea.vmem %s6, %s384
        %s386 = smul.u32 126, %s25
        %v388 = vld [vmem:[#allocation2] sm:$0x3]
        %v389 = vld [vmem:[#allocation4] sm:$0xff]
        %v390 = vld [vmem:[#allocation4 + $0x8] sm:$0xff]
        %v391 = vld [vmem:[#allocation4 + $0x10] sm:$0xff]
        %v392 = vld [vmem:[#allocation4 + $0x18] sm:$0xff]
        %v393 = vld [vmem:[#allocation6] sm:$0x1]
        %v395 = vlaneseq
        %v396 = vshrl.u32 %v395, 7
        %v397 = vsub.s32 0, %v396
        %v398 = vrot.slane %v393, %v397
        %vm400 = vcmask 261120
        %v402 = vsel %vm400, %v388, 0
        %404 = vmatprep.subr.mxu0 0.0
        %405 = vmatpush1.msra.mxu0 %v389
        %406 = vmatprep.subr.mxu0 0.0
        %407 = vmatpush1.msra.mxu0 %v390
        %408 = vmatprep.subr.mxu0 0.0
        %409 = vmatpush1.msra.mxu0 %v391
        %410 = vmatprep.subr.mxu0 0.0
        %411 = vmatpush1.msra.mxu0 %v392
        %412 = vmatprep.subr.mxu0 0.0
        %413 = vmatpush1.msra.mxu0 0.0
        %414 = vmatprep.subr.mxu0 0.0
        %415 = vmatpush1.msra.mxu0 0.0
        %416 = vmatprep.subr.mxu0 0.0
        %417 = vmatpush1.msra.mxu0 0.0
        %418 = vmatprep.subr.mxu0 0.0
        %419 = vmatpush1.msra.mxu0 0.0
        %420 = vmatprep.subr.mxu0 0.0
        %421 = vmatpush1.msra.mxu0 0.0
        %422 = vmatprep.subr.mxu0 0.0
        %423 = vmatpush1.msra.mxu0 0.0
        %424 = vmatprep.subr.mxu0 0.0
        %425 = vmatpush1.msra.mxu0 0.0
        %426 = vmatprep.subr.mxu0 0.0
        %427 = vmatpush1.msra.mxu0 0.0
        %428 = vmatprep.subr.mxu0 0.0
        %429 = vmatpush1.msra.mxu0 0.0
        %430 = vmatprep.subr.mxu0 0.0
        %431 = vmatpush1.msra.mxu0 0.0
        %432 = vmatprep.subr.mxu0 0.0
        %433 = vmatpush1.msra.mxu0 0.0
        %434 = vmatprep.subr.mxu0 0.0
        %435 = vmatpush1.msra.mxu0 0.0
        %436 = vmatprep.subr.mxu0 0.0
        %437 = vmatpush1.msra.mxu0 0.0
        %438 = vmatprep.subr.mxu0 0.0
        %439 = vmatpush1.msra.mxu0 0.0
        %440 = vmatprep.subr.mxu0 0.0
        %441 = vmatpush1.msra.mxu0 0.0
        %442 = vmatprep.subr.mxu0 0.0
        %443 = vmatpush1.msra.mxu0 0.0
        %444 = vmatprep.subr.mxu0 0.0
        %445 = vmatpush1.msra.mxu0 0.0
        %446 = vmatprep.subr.mxu0 0.0
        %447 = vmatpush1.msra.mxu0 0.0
        %448 = vmatprep.subr.mxu0 0.0
        %449 = vmatpush1.msra.mxu0 0.0
        %450 = vmatprep.subr.mxu0 0.0
        %451 = vmatpush1.msra.mxu0 0.0
        %452 = vmatprep.subr.mxu0 0.0
        %453 = vmatpush1.msra.mxu0 0.0
        %454 = vmatprep.subr.mxu0 0.0
        %455 = vmatpush1.msra.mxu0 0.0
        %456 = vmatprep.subr.mxu0 0.0
        %457 = vmatpush1.msra.mxu0 0.0
        %458 = vmatprep.subr.mxu0 0.0
        %459 = vmatpush1.msra.mxu0 0.0
        %460 = vmatprep.subr.mxu0 0.0
        %461 = vmatpush1.msra.mxu0 0.0
        %462 = vmatprep.subr.mxu0 0.0
        %463 = vmatpush1.msra.mxu0 0.0
        %464 = vmatprep.subr.mxu0 0.0
        %465 = vmatpush1.msra.mxu0 0.0
        %466 = vmatprep.subr.mxu0 0.0
        %467 = vmatpush1.msra.mxu0 0.0
        %468 = vmatprep.mubr.f32.mxu0 0.0
        %469 = vmatmul.mubr.f32.gmra.mrb[0].mxu0 %v402
        %v470 = vpop.f32.mrb[0].mxu0
        %v471 = vadd.f32 %v398, %v470
        %v472 = vpop.f32.mrb[0].mxu0
        %473 = vdwg.mxu0
        %v474 = vmax.f32 %v471, 0.0
        %v475 = vpack.c.bf16 %v474, %v474
        %v476 = vld [vmem:[%s323] sm:$0xff]
        %v477 = vld [vmem:[%s323 + $0x8] sm:$0xff]
        %v478 = vld [vmem:[%s323 + $0x10] sm:$0xff]
        %v479 = vld [vmem:[%s323 + $0x18] sm:$0xff]
        %v480 = vld [vmem:[%s323 + $0x20] sm:$0xff]
        %v481 = vld [vmem:[%s323 + $0x28] sm:$0xff]
        %v482 = vld [vmem:[%s323 + $0x30] sm:$0xff]
        %v483 = vld [vmem:[%s323 + $0x38] sm:$0xff]
        %v484 = vld [vmem:[%s323 + $0x40] sm:$0xff]
        %v485 = vld [vmem:[%s323 + $0x48] sm:$0xff]
        %v486 = vld [vmem:[%s323 + $0x50] sm:$0xff]
        %v487 = vld [vmem:[%s323 + $0x58] sm:$0xff]
        %v488 = vld [vmem:[%s323 + $0x60] sm:$0xff]
        %v489 = vld [vmem:[%s323 + $0x68] sm:$0xff]
        %v490 = vld [vmem:[%s323 + $0x70] sm:$0xff]
        %v491 = vld [vmem:[%s323 + $0x78] sm:$0xff]
        %v492 = vld [vmem:[%s323 + $0x80] sm:$0xff]
        %v493 = vld [vmem:[%s323 + $0x88] sm:$0xff]
        %v494 = vld [vmem:[%s323 + $0x90] sm:$0xff]
        %v495 = vld [vmem:[%s323 + $0x98] sm:$0xff]
        %v496 = vld [vmem:[%s323 + $0xa0] sm:$0xff]
        %v497 = vld [vmem:[%s323 + $0xa8] sm:$0xff]
        %v498 = vld [vmem:[%s323 + $0xb0] sm:$0xff]
        %v499 = vld [vmem:[%s323 + $0xb8] sm:$0xff]
        %v500 = vld [vmem:[%s323 + $0xc0] sm:$0xff]
        %v501 = vld [vmem:[%s323 + $0xc8] sm:$0xff]
        %v502 = vld [vmem:[%s323 + $0xd0] sm:$0xff]
        %v503 = vld [vmem:[%s323 + $0xd8] sm:$0xff]
        %v504 = vld [vmem:[%s323 + $0xe0] sm:$0xff]
        %v505 = vld [vmem:[%s323 + $0xe8] sm:$0xff]
        %v506 = vld [vmem:[%s323 + $0xf0] sm:$0xff]
        %v507 = vld [vmem:[%s323 + $0xf8] sm:$0xff]
        %v508 = vld [vmem:[%s323 + $0x100] sm:$0xff]
        %v509 = vld [vmem:[%s323 + $0x108] sm:$0xff]
        %v510 = vld [vmem:[%s323 + $0x110] sm:$0xff]
        %v511 = vld [vmem:[%s323 + $0x118] sm:$0xff]
        %v512 = vld [vmem:[%s323 + $0x120] sm:$0xff]
        %v513 = vld [vmem:[%s323 + $0x128] sm:$0xff]
        %v514 = vld [vmem:[%s323 + $0x130] sm:$0xff]
        %v515 = vld [vmem:[%s323 + $0x138] sm:$0xff]
        %v516 = vld [vmem:[%s323 + $0x140] sm:$0xff]
        %v517 = vld [vmem:[%s323 + $0x148] sm:$0xff]
        %v518 = vld [vmem:[%s323 + $0x150] sm:$0xff]
        %v519 = vld [vmem:[%s323 + $0x158] sm:$0xff]
        %v520 = vld [vmem:[%s323 + $0x160] sm:$0xff]
        %v521 = vld [vmem:[%s323 + $0x168] sm:$0xff]
        %v522 = vld [vmem:[%s323 + $0x170] sm:$0xff]
        %v523 = vld [vmem:[%s323 + $0x178] sm:$0xff]
        %v524 = vld [vmem:[%s323 + $0x180] sm:$0xff]
        %v525 = vld [vmem:[%s323 + $0x188] sm:$0xff]
        %v526 = vld [vmem:[%s323 + $0x190] sm:$0xff]
        %v527 = vld [vmem:[%s323 + $0x198] sm:$0xff]
        %v528 = vld [vmem:[%s323 + $0x1a0] sm:$0xff]
        %v529 = vld [vmem:[%s323 + $0x1a8] sm:$0xff]
        %v530 = vld [vmem:[%s323 + $0x1b0] sm:$0xff]
        %v531 = vld [vmem:[%s323 + $0x1b8] sm:$0xff]
        %v532 = vld [vmem:[%s323 + $0x1c0] sm:$0xff]
        %v533 = vld [vmem:[%s323 + $0x1c8] sm:$0xff]
        %v534 = vld [vmem:[%s323 + $0x1d0] sm:$0xff]
        %v535 = vld [vmem:[%s323 + $0x1d8] sm:$0xff]
        %v536 = vld [vmem:[%s323 + $0x1e0] sm:$0xff]
        %v537 = vld [vmem:[%s323 + $0x1e8] sm:$0xff]
        %v538 = vld [vmem:[%s323 + $0x1f0] sm:$0xff]
        %v539 = vld [vmem:[%s323 + $0x1f8] sm:$0xff]
        %v540 = vld [vmem:[%s323 + $0x200] sm:$0xff]
        %v541 = vld [vmem:[%s323 + $0x208] sm:$0xff]
        %v542 = vld [vmem:[%s323 + $0x210] sm:$0xff]
        %v543 = vld [vmem:[%s323 + $0x218] sm:$0xff]
        %v544 = vld [vmem:[%s323 + $0x220] sm:$0xff]
        %v545 = vld [vmem:[%s323 + $0x228] sm:$0xff]
        %v546 = vld [vmem:[%s323 + $0x230] sm:$0xff]
        %v547 = vld [vmem:[%s323 + $0x238] sm:$0xff]
        %v548 = vld [vmem:[%s323 + $0x240] sm:$0xff]
        %v549 = vld [vmem:[%s323 + $0x248] sm:$0xff]
        %v550 = vld [vmem:[%s323 + $0x250] sm:$0xff]
        %v551 = vld [vmem:[%s323 + $0x258] sm:$0xff]
        %v552 = vld [vmem:[%s323 + $0x260] sm:$0xff]
        %v553 = vld [vmem:[%s323 + $0x268] sm:$0xff]
        %v554 = vld [vmem:[%s323 + $0x270] sm:$0xff]
        %v555 = vld [vmem:[%s323 + $0x278] sm:$0xff]
        %v556 = vld [vmem:[%s323 + $0x280] sm:$0xff]
        %v557 = vld [vmem:[%s323 + $0x288] sm:$0xff]
        %v558 = vld [vmem:[%s323 + $0x290] sm:$0xff]
        %v559 = vld [vmem:[%s323 + $0x298] sm:$0xff]
        %v560 = vld [vmem:[%s323 + $0x2a0] sm:$0xff]
        %v561 = vld [vmem:[%s323 + $0x2a8] sm:$0xff]
        %v562 = vld [vmem:[%s323 + $0x2b0] sm:$0xff]
        %v563 = vld [vmem:[%s323 + $0x2b8] sm:$0xff]
        %v564 = vld [vmem:[%s323 + $0x2c0] sm:$0xff]
        %v565 = vld [vmem:[%s323 + $0x2c8] sm:$0xff]
        %v566 = vld [vmem:[%s323 + $0x2d0] sm:$0xff]
        %v567 = vld [vmem:[%s323 + $0x2d8] sm:$0xff]
        %v568 = vld [vmem:[%s323 + $0x2e0] sm:$0xff]
        %v569 = vld [vmem:[%s323 + $0x2e8] sm:$0xff]
        %v570 = vld [vmem:[%s323 + $0x2f0] sm:$0xff]
        %v571 = vld [vmem:[%s323 + $0x2f8] sm:$0xff]
        %v572 = vld [vmem:[%s323 + $0x300] sm:$0xff]
        %v573 = vld [vmem:[%s323 + $0x308] sm:$0xff]
        %v574 = vld [vmem:[%s323 + $0x310] sm:$0xff]
        %v575 = vld [vmem:[%s323 + $0x318] sm:$0xff]
        %v576 = vld [vmem:[%s323 + $0x320] sm:$0xff]
        %v577 = vld [vmem:[%s323 + $0x328] sm:$0xff]
        %v578 = vld [vmem:[%s323 + $0x330] sm:$0xff]
        %v579 = vld [vmem:[%s323 + $0x338] sm:$0xff]
        %v580 = vld [vmem:[%s323 + $0x340] sm:$0xff]
        %v581 = vld [vmem:[%s323 + $0x348] sm:$0xff]
        %v582 = vld [vmem:[%s323 + $0x350] sm:$0xff]
        %v583 = vld [vmem:[%s323 + $0x358] sm:$0xff]
        %v584 = vld [vmem:[%s323 + $0x360] sm:$0xff]
        %v585 = vld [vmem:[%s323 + $0x368] sm:$0xff]
        %v586 = vld [vmem:[%s323 + $0x370] sm:$0xff]
        %v587 = vld [vmem:[%s323 + $0x378] sm:$0xff]
        %v588 = vld [vmem:[%s323 + $0x380] sm:$0xff]
        %v589 = vld [vmem:[%s323 + $0x388] sm:$0xff]
        %v590 = vld [vmem:[%s323 + $0x390] sm:$0xff]
        %v591 = vld [vmem:[%s323 + $0x398] sm:$0xff]
        %v592 = vld [vmem:[%s323 + $0x3a0] sm:$0xff]
        %v593 = vld [vmem:[%s323 + $0x3a8] sm:$0xff]
        %v594 = vld [vmem:[%s323 + $0x3b0] sm:$0xff]
        %v595 = vld [vmem:[%s323 + $0x3b8] sm:$0xff]
        %v596 = vld [vmem:[%s323 + $0x3c0] sm:$0xff]
        %v597 = vld [vmem:[%s323 + $0x3c8] sm:$0xff]
        %v598 = vld [vmem:[%s323 + $0x3d0] sm:$0xff]
        %v599 = vld [vmem:[%s323 + $0x3d8] sm:$0xff]
        %v600 = vld [vmem:[%s323 + $0x3e0] sm:$0xff]
        %v601 = vld [vmem:[%s323 + $0x3e8] sm:$0xff]
        %v602 = vld [vmem:[%s323 + $0x3f0] sm:$0xff]
        %v603 = vld [vmem:[%s323 + $0x3f8] sm:$0xff]
        %v604 = vld [vmem:[%s323 + $0x400] sm:$0xff]
        %v605 = vld [vmem:[%s323 + $0x408] sm:$0xff]
        %v606 = vld [vmem:[%s323 + $0x410] sm:$0xff]
        %v607 = vld [vmem:[%s323 + $0x418] sm:$0xff]
        %v608 = vld [vmem:[%s323 + $0x420] sm:$0xff]
        %v609 = vld [vmem:[%s323 + $0x428] sm:$0xff]
        %v610 = vld [vmem:[%s323 + $0x430] sm:$0xff]
        %v611 = vld [vmem:[%s323 + $0x438] sm:$0xff]
        %v612 = vld [vmem:[%s323 + $0x440] sm:$0xff]
        %v613 = vld [vmem:[%s323 + $0x448] sm:$0xff]
        %v614 = vld [vmem:[%s323 + $0x450] sm:$0xff]
        %v615 = vld [vmem:[%s323 + $0x458] sm:$0xff]
        %v616 = vld [vmem:[%s323 + $0x460] sm:$0xff]
        %v617 = vld [vmem:[%s323 + $0x468] sm:$0xff]
        %v618 = vld [vmem:[%s323 + $0x470] sm:$0xff]
        %v619 = vld [vmem:[%s323 + $0x478] sm:$0xff]
        %v620 = vld [vmem:[%s323 + $0x480] sm:$0xff]
        %v621 = vld [vmem:[%s323 + $0x488] sm:$0xff]
        %v622 = vld [vmem:[%s323 + $0x490] sm:$0xff]
        %v623 = vld [vmem:[%s323 + $0x498] sm:$0xff]
        %v624 = vld [vmem:[%s323 + $0x4a0] sm:$0xff]
        %v625 = vld [vmem:[%s323 + $0x4a8] sm:$0xff]
        %v626 = vld [vmem:[%s323 + $0x4b0] sm:$0xff]
        %v627 = vld [vmem:[%s323 + $0x4b8] sm:$0xff]
        %v628 = vld [vmem:[%s323 + $0x4c0] sm:$0xff]
        %v629 = vld [vmem:[%s323 + $0x4c8] sm:$0xff]
        %v630 = vld [vmem:[%s323 + $0x4d0] sm:$0xff]
        %v631 = vld [vmem:[%s323 + $0x4d8] sm:$0xff]
        %v632 = vld [vmem:[%s323 + $0x4e0] sm:$0xff]
        %v633 = vld [vmem:[%s323 + $0x4e8] sm:$0xff]
        %v634 = vld [vmem:[%s323 + $0x4f0] sm:$0xff]
        %v635 = vld [vmem:[%s323 + $0x4f8] sm:$0xff]
        %v636 = vld [vmem:[%s323 + $0x500] sm:$0xff]
        %v637 = vld [vmem:[%s323 + $0x508] sm:$0xff]
        %v638 = vld [vmem:[%s323 + $0x510] sm:$0xff]
        %v639 = vld [vmem:[%s323 + $0x518] sm:$0xff]
        %v640 = vld [vmem:[%s323 + $0x520] sm:$0xff]
        %v641 = vld [vmem:[%s323 + $0x528] sm:$0xff]
        %v642 = vld [vmem:[%s323 + $0x530] sm:$0xff]
        %v643 = vld [vmem:[%s323 + $0x538] sm:$0xff]
        %v644 = vld [vmem:[%s323 + $0x540] sm:$0xff]
        %v645 = vld [vmem:[%s323 + $0x548] sm:$0xff]
        %v646 = vld [vmem:[%s323 + $0x550] sm:$0xff]
        %v647 = vld [vmem:[%s323 + $0x558] sm:$0xff]
        %v648 = vld [vmem:[%s323 + $0x560] sm:$0xff]
        %v649 = vld [vmem:[%s323 + $0x568] sm:$0xff]
        %v650 = vld [vmem:[%s323 + $0x570] sm:$0xff]
        %v651 = vld [vmem:[%s323 + $0x578] sm:$0xff]
        %v652 = vld [vmem:[%s323 + $0x580] sm:$0xff]
        %v653 = vld [vmem:[%s323 + $0x588] sm:$0xff]
        %v654 = vld [vmem:[%s323 + $0x590] sm:$0xff]
        %v655 = vld [vmem:[%s323 + $0x598] sm:$0xff]
        %v656 = vld [vmem:[%s323 + $0x5a0] sm:$0xff]
        %v657 = vld [vmem:[%s323 + $0x5a8] sm:$0xff]
        %v658 = vld [vmem:[%s323 + $0x5b0] sm:$0xff]
        %v659 = vld [vmem:[%s323 + $0x5b8] sm:$0xff]
        %v660 = vld [vmem:[%s323 + $0x5c0] sm:$0xff]
        %v661 = vld [vmem:[%s323 + $0x5c8] sm:$0xff]
        %v662 = vld [vmem:[%s323 + $0x5d0] sm:$0xff]
        %v663 = vld [vmem:[%s323 + $0x5d8] sm:$0xff]
        %v664 = vld [vmem:[%s323 + $0x5e0] sm:$0xff]
        %v665 = vld [vmem:[%s323 + $0x5e8] sm:$0xff]
        %v666 = vld [vmem:[%s323 + $0x5f0] sm:$0xff]
        %v667 = vld [vmem:[%s323 + $0x5f8] sm:$0xff]
        %v668 = vld [vmem:[%s323 + $0x600] sm:$0xff]
        %v669 = vld [vmem:[%s323 + $0x608] sm:$0xff]
        %v670 = vld [vmem:[%s323 + $0x610] sm:$0xff]
        %v671 = vld [vmem:[%s323 + $0x618] sm:$0xff]
        %v672 = vld [vmem:[%s323 + $0x620] sm:$0xff]
        %v673 = vld [vmem:[%s323 + $0x628] sm:$0xff]
        %v674 = vld [vmem:[%s323 + $0x630] sm:$0xff]
        %v675 = vld [vmem:[%s323 + $0x638] sm:$0xff]
        %v676 = vld [vmem:[%s323 + $0x640] sm:$0xff]
        %v677 = vld [vmem:[%s323 + $0x648] sm:$0xff]
        %v678 = vld [vmem:[%s323 + $0x650] sm:$0xff]
        %v679 = vld [vmem:[%s323 + $0x658] sm:$0xff]
        %v680 = vld [vmem:[%s323 + $0x660] sm:$0xff]
        %v681 = vld [vmem:[%s323 + $0x668] sm:$0xff]
        %v682 = vld [vmem:[%s323 + $0x670] sm:$0xff]
        %v683 = vld [vmem:[%s323 + $0x678] sm:$0xff]
        %v684 = vld [vmem:[%s323 + $0x680] sm:$0xff]
        %v685 = vld [vmem:[%s323 + $0x688] sm:$0xff]
        %v686 = vld [vmem:[%s323 + $0x690] sm:$0xff]
        %v687 = vld [vmem:[%s323 + $0x698] sm:$0xff]
        %v688 = vld [vmem:[%s323 + $0x6a0] sm:$0xff]
        %v689 = vld [vmem:[%s323 + $0x6a8] sm:$0xff]
        %v690 = vld [vmem:[%s323 + $0x6b0] sm:$0xff]
        %v691 = vld [vmem:[%s323 + $0x6b8] sm:$0xff]
        %v692 = vld [vmem:[%s323 + $0x6c0] sm:$0xff]
        %v693 = vld [vmem:[%s323 + $0x6c8] sm:$0xff]
        %v694 = vld [vmem:[%s323 + $0x6d0] sm:$0xff]
        %v695 = vld [vmem:[%s323 + $0x6d8] sm:$0xff]
        %v696 = vld [vmem:[%s323 + $0x6e0] sm:$0xff]
        %v697 = vld [vmem:[%s323 + $0x6e8] sm:$0xff]
        %v698 = vld [vmem:[%s323 + $0x6f0] sm:$0xff]
        %v699 = vld [vmem:[%s323 + $0x6f8] sm:$0xff]
        %v700 = vld [vmem:[%s323 + $0x700] sm:$0xff]
        %v701 = vld [vmem:[%s323 + $0x708] sm:$0xff]
        %v702 = vld [vmem:[%s323 + $0x710] sm:$0xff]
        %v703 = vld [vmem:[%s323 + $0x718] sm:$0xff]
        %v704 = vld [vmem:[%s323 + $0x720] sm:$0xff]
        %v705 = vld [vmem:[%s323 + $0x728] sm:$0xff]
        %v706 = vld [vmem:[%s323 + $0x730] sm:$0xff]
        %v707 = vld [vmem:[%s323 + $0x738] sm:$0xff]
        %v708 = vld [vmem:[%s323 + $0x740] sm:$0xff]
        %v709 = vld [vmem:[%s323 + $0x748] sm:$0xff]
        %v710 = vld [vmem:[%s323 + $0x750] sm:$0xff]
        %v711 = vld [vmem:[%s323 + $0x758] sm:$0xff]
        %v712 = vld [vmem:[%s323 + $0x760] sm:$0xff]
        %v713 = vld [vmem:[%s323 + $0x768] sm:$0xff]
        %v714 = vld [vmem:[%s323 + $0x770] sm:$0xff]
        %v715 = vld [vmem:[%s323 + $0x778] sm:$0xff]
        %v716 = vld [vmem:[%s323 + $0x780] sm:$0xff]
        %v717 = vld [vmem:[%s323 + $0x788] sm:$0xff]
        %v718 = vld [vmem:[%s323 + $0x790] sm:$0xff]
        %v719 = vld [vmem:[%s323 + $0x798] sm:$0xff]
        %v720 = vld [vmem:[%s323 + $0x7a0] sm:$0xff]
        %v721 = vld [vmem:[%s323 + $0x7a8] sm:$0xff]
        %v722 = vld [vmem:[%s323 + $0x7b0] sm:$0xff]
        %v723 = vld [vmem:[%s323 + $0x7b8] sm:$0xff]
        %v724 = vld [vmem:[%s323 + $0x7c0] sm:$0xff]
        %v725 = vld [vmem:[%s323 + $0x7c8] sm:$0xff]
        %v726 = vld [vmem:[%s323 + $0x7d0] sm:$0xff]
        %v727 = vld [vmem:[%s323 + $0x7d8] sm:$0xff]
        %v728 = vld [vmem:[%s323 + $0x7e0] sm:$0xff]
        %v729 = vld [vmem:[%s323 + $0x7e8] sm:$0xff]
        %v730 = vld [vmem:[%s323 + $0x7f0] sm:$0xff]
        %v731 = vld [vmem:[%s323 + $0x7f8] sm:$0xff]
        %v732 = vld [vmem:[%s323 + $0x800] sm:$0xff]
        %v733 = vld [vmem:[%s323 + $0x808] sm:$0xff]
        %v734 = vld [vmem:[%s323 + $0x810] sm:$0xff]
        %v735 = vld [vmem:[%s323 + $0x818] sm:$0xff]
        %v736 = vld [vmem:[%s323 + $0x820] sm:$0xff]
        %v737 = vld [vmem:[%s323 + $0x828] sm:$0xff]
        %v738 = vld [vmem:[%s323 + $0x830] sm:$0xff]
        %v739 = vld [vmem:[%s323 + $0x838] sm:$0xff]
        %v740 = vld [vmem:[%s323 + $0x840] sm:$0xff]
        %v741 = vld [vmem:[%s323 + $0x848] sm:$0xff]
        %v742 = vld [vmem:[%s323 + $0x850] sm:$0xff]
        %v743 = vld [vmem:[%s323 + $0x858] sm:$0xff]
        %v744 = vld [vmem:[%s323 + $0x860] sm:$0xff]
        %v745 = vld [vmem:[%s323 + $0x868] sm:$0xff]
        %v746 = vld [vmem:[%s323 + $0x870] sm:$0xff]
        %v747 = vld [vmem:[%s323 + $0x878] sm:$0xff]
        %v748 = vld [vmem:[%s323 + $0x880] sm:$0xff]
        %v749 = vld [vmem:[%s323 + $0x888] sm:$0xff]
        %v750 = vld [vmem:[%s323 + $0x890] sm:$0xff]
        %v751 = vld [vmem:[%s323 + $0x898] sm:$0xff]
        %v752 = vld [vmem:[%s323 + $0x8a0] sm:$0xff]
        %v753 = vld [vmem:[%s323 + $0x8a8] sm:$0xff]
        %v754 = vld [vmem:[%s323 + $0x8b0] sm:$0xff]
        %v755 = vld [vmem:[%s323 + $0x8b8] sm:$0xff]
        %v756 = vld [vmem:[%s323 + $0x8c0] sm:$0xff]
        %v757 = vld [vmem:[%s323 + $0x8c8] sm:$0xff]
        %v758 = vld [vmem:[%s323 + $0x8d0] sm:$0xff]
        %v759 = vld [vmem:[%s323 + $0x8d8] sm:$0xff]
        %v760 = vld [vmem:[%s323 + $0x8e0] sm:$0xff]
        %v761 = vld [vmem:[%s323 + $0x8e8] sm:$0xff]
        %v762 = vld [vmem:[%s323 + $0x8f0] sm:$0xff]
        %v763 = vld [vmem:[%s323 + $0x8f8] sm:$0xff]
        %v764 = vld [vmem:[%s323 + $0x900] sm:$0xff]
        %v765 = vld [vmem:[%s323 + $0x908] sm:$0xff]
        %v766 = vld [vmem:[%s323 + $0x910] sm:$0xff]
        %v767 = vld [vmem:[%s323 + $0x918] sm:$0xff]
        %v768 = vld [vmem:[%s323 + $0x920] sm:$0xff]
        %v769 = vld [vmem:[%s323 + $0x928] sm:$0xff]
        %v770 = vld [vmem:[%s323 + $0x930] sm:$0xff]
        %v771 = vld [vmem:[%s323 + $0x938] sm:$0xff]
        %v772 = vld [vmem:[%s323 + $0x940] sm:$0xff]
        %v773 = vld [vmem:[%s323 + $0x948] sm:$0xff]
        %v774 = vld [vmem:[%s323 + $0x950] sm:$0xff]
        %v775 = vld [vmem:[%s323 + $0x958] sm:$0xff]
        %v776 = vld [vmem:[%s323 + $0x960] sm:$0xff]
        %v777 = vld [vmem:[%s323 + $0x968] sm:$0xff]
        %v778 = vld [vmem:[%s323 + $0x970] sm:$0xff]
        %v779 = vld [vmem:[%s323 + $0x978] sm:$0xff]
        %v780 = vld [vmem:[%s323 + $0x980] sm:$0xff]
        %v781 = vld [vmem:[%s323 + $0x988] sm:$0xff]
        %v782 = vld [vmem:[%s323 + $0x990] sm:$0xff]
        %v783 = vld [vmem:[%s323 + $0x998] sm:$0xff]
        %v784 = vld [vmem:[%s323 + $0x9a0] sm:$0xff]
        %v785 = vld [vmem:[%s323 + $0x9a8] sm:$0xff]
        %v786 = vld [vmem:[%s323 + $0x9b0] sm:$0xff]
        %v787 = vld [vmem:[%s323 + $0x9b8] sm:$0xff]
        %v788 = vld [vmem:[%s323 + $0x9c0] sm:$0xff]
        %v789 = vld [vmem:[%s323 + $0x9c8] sm:$0xff]
        %v790 = vld [vmem:[%s323 + $0x9d0] sm:$0xff]
        %v791 = vld [vmem:[%s323 + $0x9d8] sm:$0xff]
        %v792 = vld [vmem:[%s323 + $0x9e0] sm:$0xff]
        %v793 = vld [vmem:[%s323 + $0x9e8] sm:$0xff]
        %v794 = vld [vmem:[%s323 + $0x9f0] sm:$0xff]
        %v795 = vld [vmem:[%s323 + $0x9f8] sm:$0xff]
        %v796 = vld [vmem:[%s323 + $0xa00] sm:$0xff]
        %v797 = vld [vmem:[%s323 + $0xa08] sm:$0xff]
        %v798 = vld [vmem:[%s323 + $0xa10] sm:$0xff]
        %v799 = vld [vmem:[%s323 + $0xa18] sm:$0xff]
        %v800 = vld [vmem:[%s323 + $0xa20] sm:$0xff]
        %v801 = vld [vmem:[%s323 + $0xa28] sm:$0xff]
        %v802 = vld [vmem:[%s323 + $0xa30] sm:$0xff]
        %v803 = vld [vmem:[%s323 + $0xa38] sm:$0xff]
        %v804 = vld [vmem:[%s323 + $0xa40] sm:$0xff]
        %v805 = vld [vmem:[%s323 + $0xa48] sm:$0xff]
        %v806 = vld [vmem:[%s323 + $0xa50] sm:$0xff]
        %v807 = vld [vmem:[%s323 + $0xa58] sm:$0xff]
        %v808 = vld [vmem:[%s323 + $0xa60] sm:$0xff]
        %v809 = vld [vmem:[%s323 + $0xa68] sm:$0xff]
        %v810 = vld [vmem:[%s323 + $0xa70] sm:$0xff]
        %v811 = vld [vmem:[%s323 + $0xa78] sm:$0xff]
        %v812 = vld [vmem:[%s323 + $0xa80] sm:$0xff]
        %v813 = vld [vmem:[%s323 + $0xa88] sm:$0xff]
        %v814 = vld [vmem:[%s323 + $0xa90] sm:$0xff]
        %v815 = vld [vmem:[%s323 + $0xa98] sm:$0xff]
        %v816 = vld [vmem:[%s323 + $0xaa0] sm:$0xff]
        %v817 = vld [vmem:[%s323 + $0xaa8] sm:$0xff]
        %v818 = vld [vmem:[%s323 + $0xab0] sm:$0xff]
        %v819 = vld [vmem:[%s323 + $0xab8] sm:$0xff]
        %v820 = vld [vmem:[%s323 + $0xac0] sm:$0xff]
        %v821 = vld [vmem:[%s323 + $0xac8] sm:$0xff]
        %v822 = vld [vmem:[%s323 + $0xad0] sm:$0xff]
        %v823 = vld [vmem:[%s323 + $0xad8] sm:$0xff]
        %v824 = vld [vmem:[%s323 + $0xae0] sm:$0xff]
        %v825 = vld [vmem:[%s323 + $0xae8] sm:$0xff]
        %v826 = vld [vmem:[%s323 + $0xaf0] sm:$0xff]
        %v827 = vld [vmem:[%s323 + $0xaf8] sm:$0xff]
        %v828 = vld [vmem:[%s323 + $0xb00] sm:$0xff]
        %v829 = vld [vmem:[%s323 + $0xb08] sm:$0xff]
        %v830 = vld [vmem:[%s323 + $0xb10] sm:$0xff]
        %v831 = vld [vmem:[%s323 + $0xb18] sm:$0xff]
        %v832 = vld [vmem:[%s323 + $0xb20] sm:$0xff]
        %v833 = vld [vmem:[%s323 + $0xb28] sm:$0xff]
        %v834 = vld [vmem:[%s323 + $0xb30] sm:$0xff]
        %v835 = vld [vmem:[%s323 + $0xb38] sm:$0xff]
        %v836 = vld [vmem:[%s323 + $0xb40] sm:$0xff]
        %v837 = vld [vmem:[%s323 + $0xb48] sm:$0xff]
        %v838 = vld [vmem:[%s323 + $0xb50] sm:$0xff]
        %v839 = vld [vmem:[%s323 + $0xb58] sm:$0xff]
        %v840 = vld [vmem:[%s323 + $0xb60] sm:$0xff]
        %v841 = vld [vmem:[%s323 + $0xb68] sm:$0xff]
        %v842 = vld [vmem:[%s323 + $0xb70] sm:$0xff]
        %v843 = vld [vmem:[%s323 + $0xb78] sm:$0xff]
        %v844 = vld [vmem:[%s323 + $0xb80] sm:$0xff]
        %v845 = vld [vmem:[%s323 + $0xb88] sm:$0xff]
        %v846 = vld [vmem:[%s323 + $0xb90] sm:$0xff]
        %v847 = vld [vmem:[%s323 + $0xb98] sm:$0xff]
        %v848 = vld [vmem:[%s323 + $0xba0] sm:$0xff]
        %v849 = vld [vmem:[%s323 + $0xba8] sm:$0xff]
        %v850 = vld [vmem:[%s323 + $0xbb0] sm:$0xff]
        %v851 = vld [vmem:[%s323 + $0xbb8] sm:$0xff]
        %v852 = vld [vmem:[%s323 + $0xbc0] sm:$0xff]
        %v853 = vld [vmem:[%s323 + $0xbc8] sm:$0xff]
        %v854 = vld [vmem:[%s323 + $0xbd0] sm:$0xff]
        %v855 = vld [vmem:[%s323 + $0xbd8] sm:$0xff]
        %v856 = vld [vmem:[%s323 + $0xbe0] sm:$0xff]
        %v857 = vld [vmem:[%s323 + $0xbe8] sm:$0xff]
        %v858 = vld [vmem:[%s323 + $0xbf0] sm:$0xff]
        %v859 = vld [vmem:[%s323 + $0xbf8] sm:$0xff]
        %v860 = vld [vmem:[%s323 + $0xc00] sm:$0xff]
        %v861 = vld [vmem:[%s323 + $0xc08] sm:$0xff]
        %v862 = vld [vmem:[%s323 + $0xc10] sm:$0xff]
        %v863 = vld [vmem:[%s323 + $0xc18] sm:$0xff]
        %v864 = vld [vmem:[%s323 + $0xc20] sm:$0xff]
        %v865 = vld [vmem:[%s323 + $0xc28] sm:$0xff]
        %v866 = vld [vmem:[%s323 + $0xc30] sm:$0xff]
        %v867 = vld [vmem:[%s323 + $0xc38] sm:$0xff]
        %v868 = vld [vmem:[%s323 + $0xc40] sm:$0xff]
        %v869 = vld [vmem:[%s323 + $0xc48] sm:$0xff]
        %v870 = vld [vmem:[%s323 + $0xc50] sm:$0xff]
        %v871 = vld [vmem:[%s323 + $0xc58] sm:$0xff]
        %v872 = vld [vmem:[%s323 + $0xc60] sm:$0xff]
        %v873 = vld [vmem:[%s323 + $0xc68] sm:$0xff]
        %v874 = vld [vmem:[%s323 + $0xc70] sm:$0xff]
        %v875 = vld [vmem:[%s323 + $0xc78] sm:$0xff]
        %v876 = vld [vmem:[%s323 + $0xc80] sm:$0xff]
        %v877 = vld [vmem:[%s323 + $0xc88] sm:$0xff]
        %v878 = vld [vmem:[%s323 + $0xc90] sm:$0xff]
        %v879 = vld [vmem:[%s323 + $0xc98] sm:$0xff]
        %v880 = vld [vmem:[%s323 + $0xca0] sm:$0xff]
        %v881 = vld [vmem:[%s323 + $0xca8] sm:$0xff]
        %v882 = vld [vmem:[%s323 + $0xcb0] sm:$0xff]
        %v883 = vld [vmem:[%s323 + $0xcb8] sm:$0xff]
        %v884 = vld [vmem:[%s323 + $0xcc0] sm:$0xff]
        %v885 = vld [vmem:[%s323 + $0xcc8] sm:$0xff]
        %v886 = vld [vmem:[%s323 + $0xcd0] sm:$0xff]
        %v887 = vld [vmem:[%s323 + $0xcd8] sm:$0xff]
        %v888 = vld [vmem:[%s323 + $0xce0] sm:$0xff]
        %v889 = vld [vmem:[%s323 + $0xce8] sm:$0xff]
        %v890 = vld [vmem:[%s323 + $0xcf0] sm:$0xff]
        %v891 = vld [vmem:[%s323 + $0xcf8] sm:$0xff]
        %v892 = vld [vmem:[%s323 + $0xd00] sm:$0xff]
        %v893 = vld [vmem:[%s323 + $0xd08] sm:$0xff]
        %v894 = vld [vmem:[%s323 + $0xd10] sm:$0xff]
        %v895 = vld [vmem:[%s323 + $0xd18] sm:$0xff]
        %v896 = vld [vmem:[%s323 + $0xd20] sm:$0xff]
        %v897 = vld [vmem:[%s323 + $0xd28] sm:$0xff]
        %v898 = vld [vmem:[%s323 + $0xd30] sm:$0xff]
        %v899 = vld [vmem:[%s323 + $0xd38] sm:$0xff]
        %v900 = vld [vmem:[%s323 + $0xd40] sm:$0xff]
        %v901 = vld [vmem:[%s323 + $0xd48] sm:$0xff]
        %v902 = vld [vmem:[%s323 + $0xd50] sm:$0xff]
        %v903 = vld [vmem:[%s323 + $0xd58] sm:$0xff]
        %v904 = vld [vmem:[%s323 + $0xd60] sm:$0xff]
        %v905 = vld [vmem:[%s323 + $0xd68] sm:$0xff]
        %v906 = vld [vmem:[%s323 + $0xd70] sm:$0xff]
        %v907 = vld [vmem:[%s323 + $0xd78] sm:$0xff]
        %v908 = vld [vmem:[%s323 + $0xd80] sm:$0xff]
        %v909 = vld [vmem:[%s323 + $0xd88] sm:$0xff]
        %v910 = vld [vmem:[%s323 + $0xd90] sm:$0xff]
        %v911 = vld [vmem:[%s323 + $0xd98] sm:$0xff]
        %v912 = vld [vmem:[%s323 + $0xda0] sm:$0xff]
        %v913 = vld [vmem:[%s323 + $0xda8] sm:$0xff]
        %v914 = vld [vmem:[%s323 + $0xdb0] sm:$0xff]
        %v915 = vld [vmem:[%s323 + $0xdb8] sm:$0xff]
        %v916 = vld [vmem:[%s323 + $0xdc0] sm:$0xff]
        %v917 = vld [vmem:[%s323 + $0xdc8] sm:$0xff]
        %v918 = vld [vmem:[%s323 + $0xdd0] sm:$0xff]
        %v919 = vld [vmem:[%s323 + $0xdd8] sm:$0xff]
        %v920 = vld [vmem:[%s323 + $0xde0] sm:$0xff]
        %v921 = vld [vmem:[%s323 + $0xde8] sm:$0xff]
        %v922 = vld [vmem:[%s323 + $0xdf0] sm:$0xff]
        %v923 = vld [vmem:[%s323 + $0xdf8] sm:$0xff]
        %v924 = vld [vmem:[%s323 + $0xe00] sm:$0xff]
        %v925 = vld [vmem:[%s323 + $0xe08] sm:$0xff]
        %v926 = vld [vmem:[%s323 + $0xe10] sm:$0xff]
        %v927 = vld [vmem:[%s323 + $0xe18] sm:$0xff]
        %v928 = vld [vmem:[%s323 + $0xe20] sm:$0xff]
        %v929 = vld [vmem:[%s323 + $0xe28] sm:$0xff]
        %v930 = vld [vmem:[%s323 + $0xe30] sm:$0xff]
        %v931 = vld [vmem:[%s323 + $0xe38] sm:$0xff]
        %v932 = vld [vmem:[%s323 + $0xe40] sm:$0xff]
        %v933 = vld [vmem:[%s323 + $0xe48] sm:$0xff]
        %v934 = vld [vmem:[%s323 + $0xe50] sm:$0xff]
        %v935 = vld [vmem:[%s323 + $0xe58] sm:$0xff]
        %v936 = vld [vmem:[%s323 + $0xe60] sm:$0xff]
        %v937 = vld [vmem:[%s323 + $0xe68] sm:$0xff]
        %v938 = vld [vmem:[%s323 + $0xe70] sm:$0xff]
        %v939 = vld [vmem:[%s323 + $0xe78] sm:$0xff]
        %v940 = vld [vmem:[%s323 + $0xe80] sm:$0xff]
        %v941 = vld [vmem:[%s323 + $0xe88] sm:$0xff]
        %v942 = vld [vmem:[%s323 + $0xe90] sm:$0xff]
        %v943 = vld [vmem:[%s323 + $0xe98] sm:$0xff]
        %v944 = vld [vmem:[%s323 + $0xea0] sm:$0xff]
        %v945 = vld [vmem:[%s323 + $0xea8] sm:$0xff]
        %v946 = vld [vmem:[%s323 + $0xeb0] sm:$0xff]
        %v947 = vld [vmem:[%s323 + $0xeb8] sm:$0xff]
        %v948 = vld [vmem:[%s323 + $0xec0] sm:$0xff]
        %v949 = vld [vmem:[%s323 + $0xec8] sm:$0xff]
        %v950 = vld [vmem:[%s323 + $0xed0] sm:$0xff]
        %v951 = vld [vmem:[%s323 + $0xed8] sm:$0xff]
        %v952 = vld [vmem:[%s323 + $0xee0] sm:$0xff]
        %v953 = vld [vmem:[%s323 + $0xee8] sm:$0xff]
        %v954 = vld [vmem:[%s323 + $0xef0] sm:$0xff]
        %v955 = vld [vmem:[%s323 + $0xef8] sm:$0xff]
        %v956 = vld [vmem:[%s323 + $0xf00] sm:$0xff]
        %v957 = vld [vmem:[%s323 + $0xf08] sm:$0xff]
        %v958 = vld [vmem:[%s323 + $0xf10] sm:$0xff]
        %v959 = vld [vmem:[%s323 + $0xf18] sm:$0xff]
        %v960 = vld [vmem:[%s323 + $0xf20] sm:$0xff]
        %v961 = vld [vmem:[%s323 + $0xf28] sm:$0xff]
        %v962 = vld [vmem:[%s323 + $0xf30] sm:$0xff]
        %v963 = vld [vmem:[%s323 + $0xf38] sm:$0xff]
        %v964 = vld [vmem:[%s323 + $0xf40] sm:$0xff]
        %v965 = vld [vmem:[%s323 + $0xf48] sm:$0xff]
        %v966 = vld [vmem:[%s323 + $0xf50] sm:$0xff]
        %v967 = vld [vmem:[%s323 + $0xf58] sm:$0xff]
        %v968 = vld [vmem:[%s323 + $0xf60] sm:$0xff]
        %v969 = vld [vmem:[%s323 + $0xf68] sm:$0xff]
        %v970 = vld [vmem:[%s323 + $0xf70] sm:$0xff]
        %v971 = vld [vmem:[%s323 + $0xf78] sm:$0xff]
        %v972 = vld [vmem:[%s323 + $0xf80] sm:$0xff]
        %v973 = vld [vmem:[%s323 + $0xf88] sm:$0xff]
        %v974 = vld [vmem:[%s323 + $0xf90] sm:$0xff]
        %v975 = vld [vmem:[%s323 + $0xf98] sm:$0xff]
        %v976 = vld [vmem:[%s323 + $0xfa0] sm:$0xff]
        %v977 = vld [vmem:[%s323 + $0xfa8] sm:$0xff]
        %v978 = vld [vmem:[%s323 + $0xfb0] sm:$0xff]
        %v979 = vld [vmem:[%s323 + $0xfb8] sm:$0xff]
        %v980 = vunpack.c.l.s8.bf16 %v476
        %v981 = vunpack.c.l.s8.bf16 %v477
        %v982 = vunpack.c.l.s8.bf16 %v478
        %v983 = vunpack.c.l.s8.bf16 %v479
        %v984 = vunpack.c.l.s8.bf16 %v480
        %v985 = vunpack.c.l.s8.bf16 %v481
        %v986 = vunpack.c.l.s8.bf16 %v482
        %v987 = vunpack.c.l.s8.bf16 %v483
        %v988 = vunpack.c.l.s8.bf16 %v484
        %v989 = vunpack.c.l.s8.bf16 %v485
        %v990 = vunpack.c.l.s8.bf16 %v486
        %v991 = vunpack.c.l.s8.bf16 %v487
        %v992 = vunpack.c.l.s8.bf16 %v488
        %v993 = vunpack.c.l.s8.bf16 %v489
        %v994 = vunpack.c.l.s8.bf16 %v490
        %v995 = vunpack.c.l.s8.bf16 %v491
        %v996 = vunpack.c.l.s8.bf16 %v492
        %v997 = vunpack.c.l.s8.bf16 %v493
        %v998 = vunpack.c.l.s8.bf16 %v494
        %v999 = vunpack.c.l.s8.bf16 %v495
        %v1000 = vunpack.c.l.s8.bf16 %v496
        %v1001 = vunpack.c.l.s8.bf16 %v497
        %v1002 = vunpack.c.l.s8.bf16 %v498
        %v1003 = vunpack.c.l.s8.bf16 %v499
        %v1004 = vunpack.c.l.s8.bf16 %v500
        %v1005 = vunpack.c.l.s8.bf16 %v501
        %v1006 = vunpack.c.l.s8.bf16 %v502
        %v1007 = vunpack.c.l.s8.bf16 %v503
        %v1008 = vunpack.c.l.s8.bf16 %v504
        %v1009 = vunpack.c.l.s8.bf16 %v505
        %v1010 = vunpack.c.l.s8.bf16 %v506
        %v1011 = vunpack.c.l.s8.bf16 %v507
        %v1012 = vunpack.c.l.s8.bf16 %v508
        %v1013 = vunpack.c.l.s8.bf16 %v509
        %v1014 = vunpack.c.l.s8.bf16 %v510
        %v1015 = vunpack.c.l.s8.bf16 %v511
        %v1016 = vunpack.c.l.s8.bf16 %v512
        %v1017 = vunpack.c.l.s8.bf16 %v513
        %v1018 = vunpack.c.l.s8.bf16 %v514
        %v1019 = vunpack.c.l.s8.bf16 %v515
        %v1020 = vunpack.c.l.s8.bf16 %v516
        %v1021 = vunpack.c.l.s8.bf16 %v517
        %v1022 = vunpack.c.l.s8.bf16 %v518
        %v1023 = vunpack.c.l.s8.bf16 %v519
        %v1024 = vunpack.c.l.s8.bf16 %v520
        %v1025 = vunpack.c.l.s8.bf16 %v521
        %v1026 = vunpack.c.l.s8.bf16 %v522
        %v1027 = vunpack.c.l.s8.bf16 %v523
        %v1028 = vunpack.c.l.s8.bf16 %v524
        %v1029 = vunpack.c.l.s8.bf16 %v525
        %v1030 = vunpack.c.l.s8.bf16 %v526
        %v1031 = vunpack.c.l.s8.bf16 %v527
        %v1032 = vunpack.c.l.s8.bf16 %v528
        %v1033 = vunpack.c.l.s8.bf16 %v529
        %v1034 = vunpack.c.l.s8.bf16 %v530
        %v1035 = vunpack.c.l.s8.bf16 %v531
        %v1036 = vunpack.c.l.s8.bf16 %v532
        %v1037 = vunpack.c.l.s8.bf16 %v533
        %v1038 = vunpack.c.l.s8.bf16 %v534
        %v1039 = vunpack.c.l.s8.bf16 %v535
        %v1040 = vunpack.c.l.s8.bf16 %v536
        %v1041 = vunpack.c.l.s8.bf16 %v537
        %v1042 = vunpack.c.l.s8.bf16 %v538
        %v1043 = vunpack.c.l.s8.bf16 %v539
        %v1044 = vunpack.c.l.s8.bf16 %v540
        %v1045 = vunpack.c.l.s8.bf16 %v541
        %v1046 = vunpack.c.l.s8.bf16 %v542
        %v1047 = vunpack.c.l.s8.bf16 %v543
        %v1048 = vunpack.c.l.s8.bf16 %v544
        %v1049 = vunpack.c.l.s8.bf16 %v545
        %v1050 = vunpack.c.l.s8.bf16 %v546
        %v1051 = vunpack.c.l.s8.bf16 %v547
        %v1052 = vunpack.c.l.s8.bf16 %v548
        %v1053 = vunpack.c.l.s8.bf16 %v549
        %v1054 = vunpack.c.l.s8.bf16 %v550
        %v1055 = vunpack.c.l.s8.bf16 %v551
        %v1056 = vunpack.c.l.s8.bf16 %v552
        %v1057 = vunpack.c.l.s8.bf16 %v553
        %v1058 = vunpack.c.l.s8.bf16 %v554
        %v1059 = vunpack.c.l.s8.bf16 %v555
        %v1060 = vunpack.c.l.s8.bf16 %v556
        %v1061 = vunpack.c.l.s8.bf16 %v557
        %v1062 = vunpack.c.l.s8.bf16 %v558
        %v1063 = vunpack.c.l.s8.bf16 %v559
        %v1064 = vunpack.c.l.s8.bf16 %v560
        %v1065 = vunpack.c.l.s8.bf16 %v561
        %v1066 = vunpack.c.l.s8.bf16 %v562
        %v1067 = vunpack.c.l.s8.bf16 %v563
        %v1068 = vunpack.c.l.s8.bf16 %v564
        %v1069 = vunpack.c.l.s8.bf16 %v565
        %v1070 = vunpack.c.l.s8.bf16 %v566
        %v1071 = vunpack.c.l.s8.bf16 %v567
        %v1072 = vunpack.c.l.s8.bf16 %v568
        %v1073 = vunpack.c.l.s8.bf16 %v569
        %v1074 = vunpack.c.l.s8.bf16 %v570
        %v1075 = vunpack.c.l.s8.bf16 %v571
        %v1076 = vunpack.c.l.s8.bf16 %v572
        %v1077 = vunpack.c.l.s8.bf16 %v573
        %v1078 = vunpack.c.l.s8.bf16 %v574
        %v1079 = vunpack.c.l.s8.bf16 %v575
        %v1080 = vunpack.c.l.s8.bf16 %v576
        %v1081 = vunpack.c.l.s8.bf16 %v577
        %v1082 = vunpack.c.l.s8.bf16 %v578
        %v1083 = vunpack.c.l.s8.bf16 %v579
        %v1084 = vunpack.c.l.s8.bf16 %v580
        %v1085 = vunpack.c.l.s8.bf16 %v581
        %v1086 = vunpack.c.l.s8.bf16 %v582
        %v1087 = vunpack.c.l.s8.bf16 %v583
        %v1088 = vunpack.c.l.s8.bf16 %v584
        %v1089 = vunpack.c.l.s8.bf16 %v585
        %v1090 = vunpack.c.l.s8.bf16 %v586
        %v1091 = vunpack.c.l.s8.bf16 %v587
        %v1092 = vunpack.c.l.s8.bf16 %v588
        %v1093 = vunpack.c.l.s8.bf16 %v589
        %v1094 = vunpack.c.l.s8.bf16 %v590
        %v1095 = vunpack.c.l.s8.bf16 %v591
        %v1096 = vunpack.c.l.s8.bf16 %v592
        %v1097 = vunpack.c.l.s8.bf16 %v593
        %v1098 = vunpack.c.l.s8.bf16 %v594
        %v1099 = vunpack.c.l.s8.bf16 %v595
        %v1100 = vunpack.c.l.s8.bf16 %v596
        %v1101 = vunpack.c.l.s8.bf16 %v597
        %v1102 = vunpack.c.l.s8.bf16 %v598
        %v1103 = vunpack.c.l.s8.bf16 %v599
        %v1104 = vunpack.c.l.s8.bf16 %v600
        %v1105 = vunpack.c.l.s8.bf16 %v601
        %v1106 = vunpack.c.h.s8.bf16 %v476
        %v1107 = vunpack.c.h.s8.bf16 %v477
        %v1108 = vunpack.c.h.s8.bf16 %v478
        %v1109 = vunpack.c.h.s8.bf16 %v479
        %v1110 = vunpack.c.h.s8.bf16 %v480
        %v1111 = vunpack.c.h.s8.bf16 %v481
        %v1112 = vunpack.c.h.s8.bf16 %v482
        %v1113 = vunpack.c.h.s8.bf16 %v483
        %v1114 = vunpack.c.h.s8.bf16 %v484
        %v1115 = vunpack.c.h.s8.bf16 %v485
        %v1116 = vunpack.c.h.s8.bf16 %v486
        %v1117 = vunpack.c.h.s8.bf16 %v487
        %v1118 = vunpack.c.h.s8.bf16 %v488
        %v1119 = vunpack.c.h.s8.bf16 %v489
        %v1120 = vunpack.c.h.s8.bf16 %v490
        %v1121 = vunpack.c.h.s8.bf16 %v491
        %v1122 = vunpack.c.h.s8.bf16 %v492
        %v1123 = vunpack.c.h.s8.bf16 %v493
        %v1124 = vunpack.c.h.s8.bf16 %v494
        %v1125 = vunpack.c.h.s8.bf16 %v495
        %v1126 = vunpack.c.h.s8.bf16 %v496
        %v1127 = vunpack.c.h.s8.bf16 %v497
        %v1128 = vunpack.c.h.s8.bf16 %v498
        %v1129 = vunpack.c.h.s8.bf16 %v499
        %v1130 = vunpack.c.h.s8.bf16 %v500
        %v1131 = vunpack.c.h.s8.bf16 %v501
        %v1132 = vunpack.c.h.s8.bf16 %v502
        %v1133 = vunpack.c.h.s8.bf16 %v503
        %v1134 = vunpack.c.h.s8.bf16 %v504
        %v1135 = vunpack.c.h.s8.bf16 %v505
        %v1136 = vunpack.c.h.s8.bf16 %v506
        %v1137 = vunpack.c.h.s8.bf16 %v507
        %v1138 = vunpack.c.h.s8.bf16 %v508
        %v1139 = vunpack.c.h.s8.bf16 %v509
        %v1140 = vunpack.c.h.s8.bf16 %v510
        %v1141 = vunpack.c.h.s8.bf16 %v511
        %v1142 = vunpack.c.h.s8.bf16 %v512
        %v1143 = vunpack.c.h.s8.bf16 %v513
        %v1144 = vunpack.c.h.s8.bf16 %v514
        %v1145 = vunpack.c.h.s8.bf16 %v515
        %v1146 = vunpack.c.h.s8.bf16 %v516
        %v1147 = vunpack.c.h.s8.bf16 %v517
        %v1148 = vunpack.c.h.s8.bf16 %v518
        %v1149 = vunpack.c.h.s8.bf16 %v519
        %v1150 = vunpack.c.h.s8.bf16 %v520
        %v1151 = vunpack.c.h.s8.bf16 %v521
        %v1152 = vunpack.c.h.s8.bf16 %v522
        %v1153 = vunpack.c.h.s8.bf16 %v523
        %v1154 = vunpack.c.h.s8.bf16 %v524
        %v1155 = vunpack.c.h.s8.bf16 %v525
        %v1156 = vunpack.c.h.s8.bf16 %v526
        %v1157 = vunpack.c.h.s8.bf16 %v527
        %v1158 = vunpack.c.h.s8.bf16 %v528
        %v1159 = vunpack.c.h.s8.bf16 %v529
        %v1160 = vunpack.c.h.s8.bf16 %v530
        %v1161 = vunpack.c.h.s8.bf16 %v531
        %v1162 = vunpack.c.h.s8.bf16 %v532
        %v1163 = vunpack.c.h.s8.bf16 %v533
        %v1164 = vunpack.c.h.s8.bf16 %v534
        %v1165 = vunpack.c.h.s8.bf16 %v535
        %v1166 = vunpack.c.h.s8.bf16 %v536
        %v1167 = vunpack.c.h.s8.bf16 %v537
        %v1168 = vunpack.c.h.s8.bf16 %v538
        %v1169 = vunpack.c.h.s8.bf16 %v539
        %v1170 = vunpack.c.h.s8.bf16 %v540
        %v1171 = vunpack.c.h.s8.bf16 %v541
        %v1172 = vunpack.c.h.s8.bf16 %v542
        %v1173 = vunpack.c.h.s8.bf16 %v543
        %v1174 = vunpack.c.h.s8.bf16 %v544
        %v1175 = vunpack.c.h.s8.bf16 %v545
        %v1176 = vunpack.c.h.s8.bf16 %v546
        %v1177 = vunpack.c.h.s8.bf16 %v547
        %v1178 = vunpack.c.h.s8.bf16 %v548
        %v1179 = vunpack.c.h.s8.bf16 %v549
        %v1180 = vunpack.c.h.s8.bf16 %v550
        %v1181 = vunpack.c.h.s8.bf16 %v551
        %v1182 = vunpack.c.h.s8.bf16 %v552
        %v1183 = vunpack.c.h.s8.bf16 %v553
        %v1184 = vunpack.c.h.s8.bf16 %v554
        %v1185 = vunpack.c.h.s8.bf16 %v555
        %v1186 = vunpack.c.h.s8.bf16 %v556
        %v1187 = vunpack.c.h.s8.bf16 %v557
        %v1188 = vunpack.c.h.s8.bf16 %v558
        %v1189 = vunpack.c.h.s8.bf16 %v559
        %v1190 = vunpack.c.h.s8.bf16 %v560
        %v1191 = vunpack.c.h.s8.bf16 %v561
        %v1192 = vunpack.c.h.s8.bf16 %v562
        %v1193 = vunpack.c.h.s8.bf16 %v563
        %v1194 = vunpack.c.h.s8.bf16 %v564
        %v1195 = vunpack.c.h.s8.bf16 %v565
        %v1196 = vunpack.c.h.s8.bf16 %v566
        %v1197 = vunpack.c.h.s8.bf16 %v567
        %v1198 = vunpack.c.h.s8.bf16 %v568
        %v1199 = vunpack.c.h.s8.bf16 %v569
        %v1200 = vunpack.c.h.s8.bf16 %v570
        %v1201 = vunpack.c.h.s8.bf16 %v571
        %v1202 = vunpack.c.h.s8.bf16 %v572
        %v1203 = vunpack.c.h.s8.bf16 %v573
        %v1204 = vunpack.c.h.s8.bf16 %v574
        %v1205 = vunpack.c.h.s8.bf16 %v575
        %v1206 = vunpack.c.h.s8.bf16 %v576
        %v1207 = vunpack.c.h.s8.bf16 %v577
        %v1208 = vunpack.c.h.s8.bf16 %v578
        %v1209 = vunpack.c.h.s8.bf16 %v579
        %v1210 = vunpack.c.h.s8.bf16 %v580
        %v1211 = vunpack.c.h.s8.bf16 %v581
        %v1212 = vunpack.c.h.s8.bf16 %v582
        %v1213 = vunpack.c.h.s8.bf16 %v583
        %v1214 = vunpack.c.h.s8.bf16 %v584
        %v1215 = vunpack.c.h.s8.bf16 %v585
        %v1216 = vunpack.c.h.s8.bf16 %v586
        %v1217 = vunpack.c.h.s8.bf16 %v587
        %v1218 = vunpack.c.h.s8.bf16 %v588
        %v1219 = vunpack.c.h.s8.bf16 %v589
        %v1220 = vunpack.c.h.s8.bf16 %v590
        %v1221 = vunpack.c.h.s8.bf16 %v591
        %v1222 = vunpack.c.h.s8.bf16 %v592
        %v1223 = vunpack.c.h.s8.bf16 %v593
        %v1224 = vunpack.c.h.s8.bf16 %v594
        %v1225 = vunpack.c.h.s8.bf16 %v595
        %v1226 = vunpack.c.h.s8.bf16 %v596
        %v1227 = vunpack.c.h.s8.bf16 %v597
        %v1228 = vunpack.c.h.s8.bf16 %v598
        %v1229 = vunpack.c.h.s8.bf16 %v599
        %v1230 = vunpack.c.h.s8.bf16 %v600
        %v1231 = vunpack.c.h.s8.bf16 %v601
        %v1232 = vunpack.c.l.s8.bf16 %v602
        %v1233 = vunpack.c.l.s8.bf16 %v603
        %v1234 = vunpack.c.l.s8.bf16 %v604
        %v1235 = vunpack.c.l.s8.bf16 %v605
        %v1236 = vunpack.c.l.s8.bf16 %v606
        %v1237 = vunpack.c.l.s8.bf16 %v607
        %v1238 = vunpack.c.l.s8.bf16 %v608
        %v1239 = vunpack.c.l.s8.bf16 %v609
        %v1240 = vunpack.c.l.s8.bf16 %v610
        %v1241 = vunpack.c.l.s8.bf16 %v611
        %v1242 = vunpack.c.l.s8.bf16 %v612
        %v1243 = vunpack.c.l.s8.bf16 %v613
        %v1244 = vunpack.c.l.s8.bf16 %v614
        %v1245 = vunpack.c.l.s8.bf16 %v615
        %v1246 = vunpack.c.l.s8.bf16 %v616
        %v1247 = vunpack.c.l.s8.bf16 %v617
        %v1248 = vunpack.c.l.s8.bf16 %v618
        %v1249 = vunpack.c.l.s8.bf16 %v619
        %v1250 = vunpack.c.l.s8.bf16 %v620
        %v1251 = vunpack.c.l.s8.bf16 %v621
        %v1252 = vunpack.c.l.s8.bf16 %v622
        %v1253 = vunpack.c.l.s8.bf16 %v623
        %v1254 = vunpack.c.l.s8.bf16 %v624
        %v1255 = vunpack.c.l.s8.bf16 %v625
        %v1256 = vunpack.c.l.s8.bf16 %v626
        %v1257 = vunpack.c.l.s8.bf16 %v627
        %v1258 = vunpack.c.l.s8.bf16 %v628
        %v1259 = vunpack.c.l.s8.bf16 %v629
        %v1260 = vunpack.c.l.s8.bf16 %v630
        %v1261 = vunpack.c.l.s8.bf16 %v631
        %v1262 = vunpack.c.l.s8.bf16 %v632
        %v1263 = vunpack.c.l.s8.bf16 %v633
        %v1264 = vunpack.c.l.s8.bf16 %v634
        %v1265 = vunpack.c.l.s8.bf16 %v635
        %v1266 = vunpack.c.l.s8.bf16 %v636
        %v1267 = vunpack.c.l.s8.bf16 %v637
        %v1268 = vunpack.c.l.s8.bf16 %v638
        %v1269 = vunpack.c.l.s8.bf16 %v639
        %v1270 = vunpack.c.l.s8.bf16 %v640
        %v1271 = vunpack.c.l.s8.bf16 %v641
        %v1272 = vunpack.c.l.s8.bf16 %v642
        %v1273 = vunpack.c.l.s8.bf16 %v643
        %v1274 = vunpack.c.l.s8.bf16 %v644
        %v1275 = vunpack.c.l.s8.bf16 %v645
        %v1276 = vunpack.c.l.s8.bf16 %v646
        %v1277 = vunpack.c.l.s8.bf16 %v647
        %v1278 = vunpack.c.l.s8.bf16 %v648
        %v1279 = vunpack.c.l.s8.bf16 %v649
        %v1280 = vunpack.c.l.s8.bf16 %v650
        %v1281 = vunpack.c.l.s8.bf16 %v651
        %v1282 = vunpack.c.l.s8.bf16 %v652
        %v1283 = vunpack.c.l.s8.bf16 %v653
        %v1284 = vunpack.c.l.s8.bf16 %v654
        %v1285 = vunpack.c.l.s8.bf16 %v655
        %v1286 = vunpack.c.l.s8.bf16 %v656
        %v1287 = vunpack.c.l.s8.bf16 %v657
        %v1288 = vunpack.c.l.s8.bf16 %v658
        %v1289 = vunpack.c.l.s8.bf16 %v659
        %v1290 = vunpack.c.l.s8.bf16 %v660
        %v1291 = vunpack.c.l.s8.bf16 %v661
        %v1292 = vunpack.c.l.s8.bf16 %v662
        %v1293 = vunpack.c.l.s8.bf16 %v663
        %v1294 = vunpack.c.l.s8.bf16 %v664
        %v1295 = vunpack.c.l.s8.bf16 %v665
        %v1296 = vunpack.c.l.s8.bf16 %v666
        %v1297 = vunpack.c.l.s8.bf16 %v667
        %v1298 = vunpack.c.l.s8.bf16 %v668
        %v1299 = vunpack.c.l.s8.bf16 %v669
        %v1300 = vunpack.c.l.s8.bf16 %v670
        %v1301 = vunpack.c.l.s8.bf16 %v671
        %v1302 = vunpack.c.l.s8.bf16 %v672
        %v1303 = vunpack.c.l.s8.bf16 %v673
        %v1304 = vunpack.c.l.s8.bf16 %v674
        %v1305 = vunpack.c.l.s8.bf16 %v675
        %v1306 = vunpack.c.l.s8.bf16 %v676
        %v1307 = vunpack.c.l.s8.bf16 %v677
        %v1308 = vunpack.c.l.s8.bf16 %v678
        %v1309 = vunpack.c.l.s8.bf16 %v679
        %v1310 = vunpack.c.l.s8.bf16 %v680
        %v1311 = vunpack.c.l.s8.bf16 %v681
        %v1312 = vunpack.c.l.s8.bf16 %v682
        %v1313 = vunpack.c.l.s8.bf16 %v683
        %v1314 = vunpack.c.l.s8.bf16 %v684
        %v1315 = vunpack.c.l.s8.bf16 %v685
        %v1316 = vunpack.c.l.s8.bf16 %v686
        %v1317 = vunpack.c.l.s8.bf16 %v687
        %v1318 = vunpack.c.l.s8.bf16 %v688
        %v1319 = vunpack.c.l.s8.bf16 %v689
        %v1320 = vunpack.c.l.s8.bf16 %v690
        %v1321 = vunpack.c.l.s8.bf16 %v691
        %v1322 = vunpack.c.l.s8.bf16 %v692
        %v1323 = vunpack.c.l.s8.bf16 %v693
        %v1324 = vunpack.c.l.s8.bf16 %v694
        %v1325 = vunpack.c.l.s8.bf16 %v695
        %v1326 = vunpack.c.l.s8.bf16 %v696
        %v1327 = vunpack.c.l.s8.bf16 %v697
        %v1328 = vunpack.c.l.s8.bf16 %v698
        %v1329 = vunpack.c.l.s8.bf16 %v699
        %v1330 = vunpack.c.l.s8.bf16 %v700
        %v1331 = vunpack.c.l.s8.bf16 %v701
        %v1332 = vunpack.c.l.s8.bf16 %v702
        %v1333 = vunpack.c.l.s8.bf16 %v703
        %v1334 = vunpack.c.l.s8.bf16 %v704
        %v1335 = vunpack.c.l.s8.bf16 %v705
        %v1336 = vunpack.c.l.s8.bf16 %v706
        %v1337 = vunpack.c.l.s8.bf16 %v707
        %v1338 = vunpack.c.l.s8.bf16 %v708
        %v1339 = vunpack.c.l.s8.bf16 %v709
        %v1340 = vunpack.c.l.s8.bf16 %v710
        %v1341 = vunpack.c.l.s8.bf16 %v711
        %v1342 = vunpack.c.l.s8.bf16 %v712
        %v1343 = vunpack.c.l.s8.bf16 %v713
        %v1344 = vunpack.c.l.s8.bf16 %v714
        %v1345 = vunpack.c.l.s8.bf16 %v715
        %v1346 = vunpack.c.l.s8.bf16 %v716
        %v1347 = vunpack.c.l.s8.bf16 %v717
        %v1348 = vunpack.c.l.s8.bf16 %v718
        %v1349 = vunpack.c.l.s8.bf16 %v719
        %v1350 = vunpack.c.l.s8.bf16 %v720
        %v1351 = vunpack.c.l.s8.bf16 %v721
        %v1352 = vunpack.c.l.s8.bf16 %v722
        %v1353 = vunpack.c.l.s8.bf16 %v723
        %v1354 = vunpack.c.l.s8.bf16 %v724
        %v1355 = vunpack.c.l.s8.bf16 %v725
        %v1356 = vunpack.c.l.s8.bf16 %v726
        %v1357 = vunpack.c.l.s8.bf16 %v727
        %v1358 = vunpack.c.h.s8.bf16 %v602
        %v1359 = vunpack.c.h.s8.bf16 %v603
        %v1360 = vunpack.c.h.s8.bf16 %v604
        %v1361 = vunpack.c.h.s8.bf16 %v605
        %v1362 = vunpack.c.h.s8.bf16 %v606
        %v1363 = vunpack.c.h.s8.bf16 %v607
        %v1364 = vunpack.c.h.s8.bf16 %v608
        %v1365 = vunpack.c.h.s8.bf16 %v609
        %v1366 = vunpack.c.h.s8.bf16 %v610
        %v1367 = vunpack.c.h.s8.bf16 %v611
        %v1368 = vunpack.c.h.s8.bf16 %v612
        %v1369 = vunpack.c.h.s8.bf16 %v613
        %v1370 = vunpack.c.h.s8.bf16 %v614
        %v1371 = vunpack.c.h.s8.bf16 %v615
        %v1372 = vunpack.c.h.s8.bf16 %v616
        %v1373 = vunpack.c.h.s8.bf16 %v617
        %v1374 = vunpack.c.h.s8.bf16 %v618
        %v1375 = vunpack.c.h.s8.bf16 %v619
        %v1376 = vunpack.c.h.s8.bf16 %v620
        %v1377 = vunpack.c.h.s8.bf16 %v621
        %v1378 = vunpack.c.h.s8.bf16 %v622
        %v1379 = vunpack.c.h.s8.bf16 %v623
        %v1380 = vunpack.c.h.s8.bf16 %v624
        %v1381 = vunpack.c.h.s8.bf16 %v625
        %v1382 = vunpack.c.h.s8.bf16 %v626
        %v1383 = vunpack.c.h.s8.bf16 %v627
        %v1384 = vunpack.c.h.s8.bf16 %v628
        %v1385 = vunpack.c.h.s8.bf16 %v629
        %v1386 = vunpack.c.h.s8.bf16 %v630
        %v1387 = vunpack.c.h.s8.bf16 %v631
        %v1388 = vunpack.c.h.s8.bf16 %v632
        %v1389 = vunpack.c.h.s8.bf16 %v633
        %v1390 = vunpack.c.h.s8.bf16 %v634
        %v1391 = vunpack.c.h.s8.bf16 %v635
        %v1392 = vunpack.c.h.s8.bf16 %v636
        %v1393 = vunpack.c.h.s8.bf16 %v637
        %v1394 = vunpack.c.h.s8.bf16 %v638
        %v1395 = vunpack.c.h.s8.bf16 %v639
        %v1396 = vunpack.c.h.s8.bf16 %v640
        %v1397 = vunpack.c.h.s8.bf16 %v641
        %v1398 = vunpack.c.h.s8.bf16 %v642
        %v1399 = vunpack.c.h.s8.bf16 %v643
        %v1400 = vunpack.c.h.s8.bf16 %v644
        %v1401 = vunpack.c.h.s8.bf16 %v645
        %v1402 = vunpack.c.h.s8.bf16 %v646
        %v1403 = vunpack.c.h.s8.bf16 %v647
        %v1404 = vunpack.c.h.s8.bf16 %v648
        %v1405 = vunpack.c.h.s8.bf16 %v649
        %v1406 = vunpack.c.h.s8.bf16 %v650
        %v1407 = vunpack.c.h.s8.bf16 %v651
        %v1408 = vunpack.c.h.s8.bf16 %v652
        %v1409 = vunpack.c.h.s8.bf16 %v653
        %v1410 = vunpack.c.h.s8.bf16 %v654
        %v1411 = vunpack.c.h.s8.bf16 %v655
        %v1412 = vunpack.c.h.s8.bf16 %v656
        %v1413 = vunpack.c.h.s8.bf16 %v657
        %v1414 = vunpack.c.h.s8.bf16 %v658
        %v1415 = vunpack.c.h.s8.bf16 %v659
        %v1416 = vunpack.c.h.s8.bf16 %v660
        %v1417 = vunpack.c.h.s8.bf16 %v661
        %v1418 = vunpack.c.h.s8.bf16 %v662
        %v1419 = vunpack.c.h.s8.bf16 %v663
        %v1420 = vunpack.c.h.s8.bf16 %v664
        %v1421 = vunpack.c.h.s8.bf16 %v665
        %v1422 = vunpack.c.h.s8.bf16 %v666
        %v1423 = vunpack.c.h.s8.bf16 %v667
        %v1424 = vunpack.c.h.s8.bf16 %v668
        %v1425 = vunpack.c.h.s8.bf16 %v669
        %v1426 = vunpack.c.h.s8.bf16 %v670
        %v1427 = vunpack.c.h.s8.bf16 %v671
        %v1428 = vunpack.c.h.s8.bf16 %v672
        %v1429 = vunpack.c.h.s8.bf16 %v673
        %v1430 = vunpack.c.h.s8.bf16 %v674
        %v1431 = vunpack.c.h.s8.bf16 %v675
        %v1432 = vunpack.c.h.s8.bf16 %v676
        %v1433 = vunpack.c.h.s8.bf16 %v677
        %v1434 = vunpack.c.h.s8.bf16 %v678
        %v1435 = vunpack.c.h.s8.bf16 %v679
        %v1436 = vunpack.c.h.s8.bf16 %v680
        %v1437 = vunpack.c.h.s8.bf16 %v681
        %v1438 = vunpack.c.h.s8.bf16 %v682
        %v1439 = vunpack.c.h.s8.bf16 %v683
        %v1440 = vunpack.c.h.s8.bf16 %v684
        %v1441 = vunpack.c.h.s8.bf16 %v685
        %v1442 = vunpack.c.h.s8.bf16 %v686
        %v1443 = vunpack.c.h.s8.bf16 %v687
        %v1444 = vunpack.c.h.s8.bf16 %v688
        %v1445 = vunpack.c.h.s8.bf16 %v689
        %v1446 = vunpack.c.h.s8.bf16 %v690
        %v1447 = vunpack.c.h.s8.bf16 %v691
        %v1448 = vunpack.c.h.s8.bf16 %v692
        %v1449 = vunpack.c.h.s8.bf16 %v693
        %v1450 = vunpack.c.h.s8.bf16 %v694
        %v1451 = vunpack.c.h.s8.bf16 %v695
        %v1452 = vunpack.c.h.s8.bf16 %v696
        %v1453 = vunpack.c.h.s8.bf16 %v697
        %v1454 = vunpack.c.h.s8.bf16 %v698
        %v1455 = vunpack.c.h.s8.bf16 %v699
        %v1456 = vunpack.c.h.s8.bf16 %v700
        %v1457 = vunpack.c.h.s8.bf16 %v701
        %v1458 = vunpack.c.h.s8.bf16 %v702
        %v1459 = vunpack.c.h.s8.bf16 %v703
        %v1460 = vunpack.c.h.s8.bf16 %v704
        %v1461 = vunpack.c.h.s8.bf16 %v705
        %v1462 = vunpack.c.h.s8.bf16 %v706
        %v1463 = vunpack.c.h.s8.bf16 %v707
        %v1464 = vunpack.c.h.s8.bf16 %v708
        %v1465 = vunpack.c.h.s8.bf16 %v709
        %v1466 = vunpack.c.h.s8.bf16 %v710
        %v1467 = vunpack.c.h.s8.bf16 %v711
        %v1468 = vunpack.c.h.s8.bf16 %v712
        %v1469 = vunpack.c.h.s8.bf16 %v713
        %v1470 = vunpack.c.h.s8.bf16 %v714
        %v1471 = vunpack.c.h.s8.bf16 %v715
        %v1472 = vunpack.c.h.s8.bf16 %v716
        %v1473 = vunpack.c.h.s8.bf16 %v717
        %v1474 = vunpack.c.h.s8.bf16 %v718
        %v1475 = vunpack.c.h.s8.bf16 %v719
        %v1476 = vunpack.c.h.s8.bf16 %v720
        %v1477 = vunpack.c.h.s8.bf16 %v721
        %v1478 = vunpack.c.h.s8.bf16 %v722
        %v1479 = vunpack.c.h.s8.bf16 %v723
        %v1480 = vunpack.c.h.s8.bf16 %v724
        %v1481 = vunpack.c.h.s8.bf16 %v725
        %v1482 = vunpack.c.h.s8.bf16 %v726
        %v1483 = vunpack.c.h.s8.bf16 %v727
        %v1484 = vunpack.c.l.s8.bf16 %v728
        %v1485 = vunpack.c.l.s8.bf16 %v729
        %v1486 = vunpack.c.l.s8.bf16 %v730
        %v1487 = vunpack.c.l.s8.bf16 %v731
        %v1488 = vunpack.c.l.s8.bf16 %v732
        %v1489 = vunpack.c.l.s8.bf16 %v733
        %v1490 = vunpack.c.l.s8.bf16 %v734
        %v1491 = vunpack.c.l.s8.bf16 %v735
        %v1492 = vunpack.c.l.s8.bf16 %v736
        %v1493 = vunpack.c.l.s8.bf16 %v737
        %v1494 = vunpack.c.l.s8.bf16 %v738
        %v1495 = vunpack.c.l.s8.bf16 %v739
        %v1496 = vunpack.c.l.s8.bf16 %v740
        %v1497 = vunpack.c.l.s8.bf16 %v741
        %v1498 = vunpack.c.l.s8.bf16 %v742
        %v1499 = vunpack.c.l.s8.bf16 %v743
        %v1500 = vunpack.c.l.s8.bf16 %v744
        %v1501 = vunpack.c.l.s8.bf16 %v745
        %v1502 = vunpack.c.l.s8.bf16 %v746
        %v1503 = vunpack.c.l.s8.bf16 %v747
        %v1504 = vunpack.c.l.s8.bf16 %v748
        %v1505 = vunpack.c.l.s8.bf16 %v749
        %v1506 = vunpack.c.l.s8.bf16 %v750
        %v1507 = vunpack.c.l.s8.bf16 %v751
        %v1508 = vunpack.c.l.s8.bf16 %v752
        %v1509 = vunpack.c.l.s8.bf16 %v753
        %v1510 = vunpack.c.l.s8.bf16 %v754
        %v1511 = vunpack.c.l.s8.bf16 %v755
        %v1512 = vunpack.c.l.s8.bf16 %v756
        %v1513 = vunpack.c.l.s8.bf16 %v757
        %v1514 = vunpack.c.l.s8.bf16 %v758
        %v1515 = vunpack.c.l.s8.bf16 %v759
        %v1516 = vunpack.c.l.s8.bf16 %v760
        %v1517 = vunpack.c.l.s8.bf16 %v761
        %v1518 = vunpack.c.l.s8.bf16 %v762
        %v1519 = vunpack.c.l.s8.bf16 %v763
        %v1520 = vunpack.c.l.s8.bf16 %v764
        %v1521 = vunpack.c.l.s8.bf16 %v765
        %v1522 = vunpack.c.l.s8.bf16 %v766
        %v1523 = vunpack.c.l.s8.bf16 %v767
        %v1524 = vunpack.c.l.s8.bf16 %v768
        %v1525 = vunpack.c.l.s8.bf16 %v769
        %v1526 = vunpack.c.l.s8.bf16 %v770
        %v1527 = vunpack.c.l.s8.bf16 %v771
        %v1528 = vunpack.c.l.s8.bf16 %v772
        %v1529 = vunpack.c.l.s8.bf16 %v773
        %v1530 = vunpack.c.l.s8.bf16 %v774
        %v1531 = vunpack.c.l.s8.bf16 %v775
        %v1532 = vunpack.c.l.s8.bf16 %v776
        %v1533 = vunpack.c.l.s8.bf16 %v777
        %v1534 = vunpack.c.l.s8.bf16 %v778
        %v1535 = vunpack.c.l.s8.bf16 %v779
        %v1536 = vunpack.c.l.s8.bf16 %v780
        %v1537 = vunpack.c.l.s8.bf16 %v781
        %v1538 = vunpack.c.l.s8.bf16 %v782
        %v1539 = vunpack.c.l.s8.bf16 %v783
        %v1540 = vunpack.c.l.s8.bf16 %v784
        %v1541 = vunpack.c.l.s8.bf16 %v785
        %v1542 = vunpack.c.l.s8.bf16 %v786
        %v1543 = vunpack.c.l.s8.bf16 %v787
        %v1544 = vunpack.c.l.s8.bf16 %v788
        %v1545 = vunpack.c.l.s8.bf16 %v789
        %v1546 = vunpack.c.l.s8.bf16 %v790
        %v1547 = vunpack.c.l.s8.bf16 %v791
        %v1548 = vunpack.c.l.s8.bf16 %v792
        %v1549 = vunpack.c.l.s8.bf16 %v793
        %v1550 = vunpack.c.l.s8.bf16 %v794
        %v1551 = vunpack.c.l.s8.bf16 %v795
        %v1552 = vunpack.c.l.s8.bf16 %v796
        %v1553 = vunpack.c.l.s8.bf16 %v797
        %v1554 = vunpack.c.l.s8.bf16 %v798
        %v1555 = vunpack.c.l.s8.bf16 %v799
        %v1556 = vunpack.c.l.s8.bf16 %v800
        %v1557 = vunpack.c.l.s8.bf16 %v801
        %v1558 = vunpack.c.l.s8.bf16 %v802
        %v1559 = vunpack.c.l.s8.bf16 %v803
        %v1560 = vunpack.c.l.s8.bf16 %v804
        %v1561 = vunpack.c.l.s8.bf16 %v805
        %v1562 = vunpack.c.l.s8.bf16 %v806
        %v1563 = vunpack.c.l.s8.bf16 %v807
        %v1564 = vunpack.c.l.s8.bf16 %v808
        %v1565 = vunpack.c.l.s8.bf16 %v809
        %v1566 = vunpack.c.l.s8.bf16 %v810
        %v1567 = vunpack.c.l.s8.bf16 %v811
        %v1568 = vunpack.c.l.s8.bf16 %v812
        %v1569 = vunpack.c.l.s8.bf16 %v813
        %v1570 = vunpack.c.l.s8.bf16 %v814
        %v1571 = vunpack.c.l.s8.bf16 %v815
        %v1572 = vunpack.c.l.s8.bf16 %v816
        %v1573 = vunpack.c.l.s8.bf16 %v817
        %v1574 = vunpack.c.l.s8.bf16 %v818
        %v1575 = vunpack.c.l.s8.bf16 %v819
        %v1576 = vunpack.c.l.s8.bf16 %v820
        %v1577 = vunpack.c.l.s8.bf16 %v821
        %v1578 = vunpack.c.l.s8.bf16 %v822
        %v1579 = vunpack.c.l.s8.bf16 %v823
        %v1580 = vunpack.c.l.s8.bf16 %v824
        %v1581 = vunpack.c.l.s8.bf16 %v825
        %v1582 = vunpack.c.l.s8.bf16 %v826
        %v1583 = vunpack.c.l.s8.bf16 %v827
        %v1584 = vunpack.c.l.s8.bf16 %v828
        %v1585 = vunpack.c.l.s8.bf16 %v829
        %v1586 = vunpack.c.l.s8.bf16 %v830
        %v1587 = vunpack.c.l.s8.bf16 %v831
        %v1588 = vunpack.c.l.s8.bf16 %v832
        %v1589 = vunpack.c.l.s8.bf16 %v833
        %v1590 = vunpack.c.l.s8.bf16 %v834
        %v1591 = vunpack.c.l.s8.bf16 %v835
        %v1592 = vunpack.c.l.s8.bf16 %v836
        %v1593 = vunpack.c.l.s8.bf16 %v837
        %v1594 = vunpack.c.l.s8.bf16 %v838
        %v1595 = vunpack.c.l.s8.bf16 %v839
        %v1596 = vunpack.c.l.s8.bf16 %v840
        %v1597 = vunpack.c.l.s8.bf16 %v841
        %v1598 = vunpack.c.l.s8.bf16 %v842
        %v1599 = vunpack.c.l.s8.bf16 %v843
        %v1600 = vunpack.c.l.s8.bf16 %v844
        %v1601 = vunpack.c.l.s8.bf16 %v845
        %v1602 = vunpack.c.l.s8.bf16 %v846
        %v1603 = vunpack.c.l.s8.bf16 %v847
        %v1604 = vunpack.c.l.s8.bf16 %v848
        %v1605 = vunpack.c.l.s8.bf16 %v849
        %v1606 = vunpack.c.l.s8.bf16 %v850
        %v1607 = vunpack.c.l.s8.bf16 %v851
        %v1608 = vunpack.c.l.s8.bf16 %v852
        %v1609 = vunpack.c.l.s8.bf16 %v853
        %v1610 = vunpack.c.h.s8.bf16 %v728
        %v1611 = vunpack.c.h.s8.bf16 %v729
        %v1612 = vunpack.c.h.s8.bf16 %v730
        %v1613 = vunpack.c.h.s8.bf16 %v731
        %v1614 = vunpack.c.h.s8.bf16 %v732
        %v1615 = vunpack.c.h.s8.bf16 %v733
        %v1616 = vunpack.c.h.s8.bf16 %v734
        %v1617 = vunpack.c.h.s8.bf16 %v735
        %v1618 = vunpack.c.h.s8.bf16 %v736
        %v1619 = vunpack.c.h.s8.bf16 %v737
        %v1620 = vunpack.c.h.s8.bf16 %v738
        %v1621 = vunpack.c.h.s8.bf16 %v739
        %v1622 = vunpack.c.h.s8.bf16 %v740
        %v1623 = vunpack.c.h.s8.bf16 %v741
        %v1624 = vunpack.c.h.s8.bf16 %v742
        %v1625 = vunpack.c.h.s8.bf16 %v743
        %v1626 = vunpack.c.h.s8.bf16 %v744
        %v1627 = vunpack.c.h.s8.bf16 %v745
        %v1628 = vunpack.c.h.s8.bf16 %v746
        %v1629 = vunpack.c.h.s8.bf16 %v747
        %v1630 = vunpack.c.h.s8.bf16 %v748
        %v1631 = vunpack.c.h.s8.bf16 %v749
        %v1632 = vunpack.c.h.s8.bf16 %v750
        %v1633 = vunpack.c.h.s8.bf16 %v751
        %v1634 = vunpack.c.h.s8.bf16 %v752
        %v1635 = vunpack.c.h.s8.bf16 %v753
        %v1636 = vunpack.c.h.s8.bf16 %v754
        %v1637 = vunpack.c.h.s8.bf16 %v755
        %v1638 = vunpack.c.h.s8.bf16 %v756
        %v1639 = vunpack.c.h.s8.bf16 %v757
        %v1640 = vunpack.c.h.s8.bf16 %v758
        %v1641 = vunpack.c.h.s8.bf16 %v759
        %v1642 = vunpack.c.h.s8.bf16 %v760
        %v1643 = vunpack.c.h.s8.bf16 %v761
        %v1644 = vunpack.c.h.s8.bf16 %v762
        %v1645 = vunpack.c.h.s8.bf16 %v763
        %v1646 = vunpack.c.h.s8.bf16 %v764
        %v1647 = vunpack.c.h.s8.bf16 %v765
        %v1648 = vunpack.c.h.s8.bf16 %v766
        %v1649 = vunpack.c.h.s8.bf16 %v767
        %v1650 = vunpack.c.h.s8.bf16 %v768
        %v1651 = vunpack.c.h.s8.bf16 %v769
        %v1652 = vunpack.c.h.s8.bf16 %v770
        %v1653 = vunpack.c.h.s8.bf16 %v771
        %v1654 = vunpack.c.h.s8.bf16 %v772
        %v1655 = vunpack.c.h.s8.bf16 %v773
        %v1656 = vunpack.c.h.s8.bf16 %v774
        %v1657 = vunpack.c.h.s8.bf16 %v775
        %v1658 = vunpack.c.h.s8.bf16 %v776
        %v1659 = vunpack.c.h.s8.bf16 %v777
        %v1660 = vunpack.c.h.s8.bf16 %v778
        %v1661 = vunpack.c.h.s8.bf16 %v779
        %v1662 = vunpack.c.h.s8.bf16 %v780
        %v1663 = vunpack.c.h.s8.bf16 %v781
        %v1664 = vunpack.c.h.s8.bf16 %v782
        %v1665 = vunpack.c.h.s8.bf16 %v783
        %v1666 = vunpack.c.h.s8.bf16 %v784
        %v1667 = vunpack.c.h.s8.bf16 %v785
        %v1668 = vunpack.c.h.s8.bf16 %v786
        %v1669 = vunpack.c.h.s8.bf16 %v787
        %v1670 = vunpack.c.h.s8.bf16 %v788
        %v1671 = vunpack.c.h.s8.bf16 %v789
        %v1672 = vunpack.c.h.s8.bf16 %v790
        %v1673 = vunpack.c.h.s8.bf16 %v791
        %v1674 = vunpack.c.h.s8.bf16 %v792
        %v1675 = vunpack.c.h.s8.bf16 %v793
        %v1676 = vunpack.c.h.s8.bf16 %v794
        %v1677 = vunpack.c.h.s8.bf16 %v795
        %v1678 = vunpack.c.h.s8.bf16 %v796
        %v1679 = vunpack.c.h.s8.bf16 %v797
        %v1680 = vunpack.c.h.s8.bf16 %v798
        %v1681 = vunpack.c.h.s8.bf16 %v799
        %v1682 = vunpack.c.h.s8.bf16 %v800
        %v1683 = vunpack.c.h.s8.bf16 %v801
        %v1684 = vunpack.c.h.s8.bf16 %v802
        %v1685 = vunpack.c.h.s8.bf16 %v803
        %v1686 = vunpack.c.h.s8.bf16 %v804
        %v1687 = vunpack.c.h.s8.bf16 %v805
        %v1688 = vunpack.c.h.s8.bf16 %v806
        %v1689 = vunpack.c.h.s8.bf16 %v807
        %v1690 = vunpack.c.h.s8.bf16 %v808
        %v1691 = vunpack.c.h.s8.bf16 %v809
        %v1692 = vunpack.c.h.s8.bf16 %v810
        %v1693 = vunpack.c.h.s8.bf16 %v811
        %v1694 = vunpack.c.h.s8.bf16 %v812
        %v1695 = vunpack.c.h.s8.bf16 %v813
        %v1696 = vunpack.c.h.s8.bf16 %v814
        %v1697 = vunpack.c.h.s8.bf16 %v815
        %v1698 = vunpack.c.h.s8.bf16 %v816
        %v1699 = vunpack.c.h.s8.bf16 %v817
        %v1700 = vunpack.c.h.s8.bf16 %v818
        %v1701 = vunpack.c.h.s8.bf16 %v819
        %v1702 = vunpack.c.h.s8.bf16 %v820
        %v1703 = vunpack.c.h.s8.bf16 %v821
        %v1704 = vunpack.c.h.s8.bf16 %v822
        %v1705 = vunpack.c.h.s8.bf16 %v823
        %v1706 = vunpack.c.h.s8.bf16 %v824
        %v1707 = vunpack.c.h.s8.bf16 %v825
        %v1708 = vunpack.c.h.s8.bf16 %v826
        %v1709 = vunpack.c.h.s8.bf16 %v827
        %v1710 = vunpack.c.h.s8.bf16 %v828
        %v1711 = vunpack.c.h.s8.bf16 %v829
        %v1712 = vunpack.c.h.s8.bf16 %v830
        %v1713 = vunpack.c.h.s8.bf16 %v831
        %v1714 = vunpack.c.h.s8.bf16 %v832
        %v1715 = vunpack.c.h.s8.bf16 %v833
        %v1716 = vunpack.c.h.s8.bf16 %v834
        %v1717 = vunpack.c.h.s8.bf16 %v835
        %v1718 = vunpack.c.h.s8.bf16 %v836
        %v1719 = vunpack.c.h.s8.bf16 %v837
        %v1720 = vunpack.c.h.s8.bf16 %v838
        %v1721 = vunpack.c.h.s8.bf16 %v839
        %v1722 = vunpack.c.h.s8.bf16 %v840
        %v1723 = vunpack.c.h.s8.bf16 %v841
        %v1724 = vunpack.c.h.s8.bf16 %v842
        %v1725 = vunpack.c.h.s8.bf16 %v843
        %v1726 = vunpack.c.h.s8.bf16 %v844
        %v1727 = vunpack.c.h.s8.bf16 %v845
        %v1728 = vunpack.c.h.s8.bf16 %v846
        %v1729 = vunpack.c.h.s8.bf16 %v847
        %v1730 = vunpack.c.h.s8.bf16 %v848
        %v1731 = vunpack.c.h.s8.bf16 %v849
        %v1732 = vunpack.c.h.s8.bf16 %v850
        %v1733 = vunpack.c.h.s8.bf16 %v851
        %v1734 = vunpack.c.h.s8.bf16 %v852
        %v1735 = vunpack.c.h.s8.bf16 %v853
        %v1736 = vunpack.c.l.s8.bf16 %v854
        %v1737 = vunpack.c.l.s8.bf16 %v855
        %v1738 = vunpack.c.l.s8.bf16 %v856
        %v1739 = vunpack.c.l.s8.bf16 %v857
        %v1740 = vunpack.c.l.s8.bf16 %v858
        %v1741 = vunpack.c.l.s8.bf16 %v859
        %v1742 = vunpack.c.l.s8.bf16 %v860
        %v1743 = vunpack.c.l.s8.bf16 %v861
        %v1744 = vunpack.c.l.s8.bf16 %v862
        %v1745 = vunpack.c.l.s8.bf16 %v863
        %v1746 = vunpack.c.l.s8.bf16 %v864
        %v1747 = vunpack.c.l.s8.bf16 %v865
        %v1748 = vunpack.c.l.s8.bf16 %v866
        %v1749 = vunpack.c.l.s8.bf16 %v867
        %v1750 = vunpack.c.l.s8.bf16 %v868
        %v1751 = vunpack.c.l.s8.bf16 %v869
        %v1752 = vunpack.c.l.s8.bf16 %v870
        %v1753 = vunpack.c.l.s8.bf16 %v871
        %v1754 = vunpack.c.l.s8.bf16 %v872
        %v1755 = vunpack.c.l.s8.bf16 %v873
        %v1756 = vunpack.c.l.s8.bf16 %v874
        %v1757 = vunpack.c.l.s8.bf16 %v875
        %v1758 = vunpack.c.l.s8.bf16 %v876
        %v1759 = vunpack.c.l.s8.bf16 %v877
        %v1760 = vunpack.c.l.s8.bf16 %v878
        %v1761 = vunpack.c.l.s8.bf16 %v879
        %v1762 = vunpack.c.l.s8.bf16 %v880
        %v1763 = vunpack.c.l.s8.bf16 %v881
        %v1764 = vunpack.c.l.s8.bf16 %v882
        %v1765 = vunpack.c.l.s8.bf16 %v883
        %v1766 = vunpack.c.l.s8.bf16 %v884
        %v1767 = vunpack.c.l.s8.bf16 %v885
        %v1768 = vunpack.c.l.s8.bf16 %v886
        %v1769 = vunpack.c.l.s8.bf16 %v887
        %v1770 = vunpack.c.l.s8.bf16 %v888
        %v1771 = vunpack.c.l.s8.bf16 %v889
        %v1772 = vunpack.c.l.s8.bf16 %v890
        %v1773 = vunpack.c.l.s8.bf16 %v891
        %v1774 = vunpack.c.l.s8.bf16 %v892
        %v1775 = vunpack.c.l.s8.bf16 %v893
        %v1776 = vunpack.c.l.s8.bf16 %v894
        %v1777 = vunpack.c.l.s8.bf16 %v895
        %v1778 = vunpack.c.l.s8.bf16 %v896
        %v1779 = vunpack.c.l.s8.bf16 %v897
        %v1780 = vunpack.c.l.s8.bf16 %v898
        %v1781 = vunpack.c.l.s8.bf16 %v899
        %v1782 = vunpack.c.l.s8.bf16 %v900
        %v1783 = vunpack.c.l.s8.bf16 %v901
        %v1784 = vunpack.c.l.s8.bf16 %v902
        %v1785 = vunpack.c.l.s8.bf16 %v903
        %v1786 = vunpack.c.l.s8.bf16 %v904
        %v1787 = vunpack.c.l.s8.bf16 %v905
        %v1788 = vunpack.c.l.s8.bf16 %v906
        %v1789 = vunpack.c.l.s8.bf16 %v907
        %v1790 = vunpack.c.l.s8.bf16 %v908
        %v1791 = vunpack.c.l.s8.bf16 %v909
        %v1792 = vunpack.c.l.s8.bf16 %v910
        %v1793 = vunpack.c.l.s8.bf16 %v911
        %v1794 = vunpack.c.l.s8.bf16 %v912
        %v1795 = vunpack.c.l.s8.bf16 %v913
        %v1796 = vunpack.c.l.s8.bf16 %v914
        %v1797 = vunpack.c.l.s8.bf16 %v915
        %v1798 = vunpack.c.l.s8.bf16 %v916
        %v1799 = vunpack.c.l.s8.bf16 %v917
        %v1800 = vunpack.c.l.s8.bf16 %v918
        %v1801 = vunpack.c.l.s8.bf16 %v919
        %v1802 = vunpack.c.l.s8.bf16 %v920
        %v1803 = vunpack.c.l.s8.bf16 %v921
        %v1804 = vunpack.c.l.s8.bf16 %v922
        %v1805 = vunpack.c.l.s8.bf16 %v923
        %v1806 = vunpack.c.l.s8.bf16 %v924
        %v1807 = vunpack.c.l.s8.bf16 %v925
        %v1808 = vunpack.c.l.s8.bf16 %v926
        %v1809 = vunpack.c.l.s8.bf16 %v927
        %v1810 = vunpack.c.l.s8.bf16 %v928
        %v1811 = vunpack.c.l.s8.bf16 %v929
        %v1812 = vunpack.c.l.s8.bf16 %v930
        %v1813 = vunpack.c.l.s8.bf16 %v931
        %v1814 = vunpack.c.l.s8.bf16 %v932
        %v1815 = vunpack.c.l.s8.bf16 %v933
        %v1816 = vunpack.c.l.s8.bf16 %v934
        %v1817 = vunpack.c.l.s8.bf16 %v935
        %v1818 = vunpack.c.l.s8.bf16 %v936
        %v1819 = vunpack.c.l.s8.bf16 %v937
        %v1820 = vunpack.c.l.s8.bf16 %v938
        %v1821 = vunpack.c.l.s8.bf16 %v939
        %v1822 = vunpack.c.l.s8.bf16 %v940
        %v1823 = vunpack.c.l.s8.bf16 %v941
        %v1824 = vunpack.c.l.s8.bf16 %v942
        %v1825 = vunpack.c.l.s8.bf16 %v943
        %v1826 = vunpack.c.l.s8.bf16 %v944
        %v1827 = vunpack.c.l.s8.bf16 %v945
        %v1828 = vunpack.c.l.s8.bf16 %v946
        %v1829 = vunpack.c.l.s8.bf16 %v947
        %v1830 = vunpack.c.l.s8.bf16 %v948
        %v1831 = vunpack.c.l.s8.bf16 %v949
        %v1832 = vunpack.c.l.s8.bf16 %v950
        %v1833 = vunpack.c.l.s8.bf16 %v951
        %v1834 = vunpack.c.l.s8.bf16 %v952
        %v1835 = vunpack.c.l.s8.bf16 %v953
        %v1836 = vunpack.c.l.s8.bf16 %v954
        %v1837 = vunpack.c.l.s8.bf16 %v955
        %v1838 = vunpack.c.l.s8.bf16 %v956
        %v1839 = vunpack.c.l.s8.bf16 %v957
        %v1840 = vunpack.c.l.s8.bf16 %v958
        %v1841 = vunpack.c.l.s8.bf16 %v959
        %v1842 = vunpack.c.l.s8.bf16 %v960
        %v1843 = vunpack.c.l.s8.bf16 %v961
        %v1844 = vunpack.c.l.s8.bf16 %v962
        %v1845 = vunpack.c.l.s8.bf16 %v963
        %v1846 = vunpack.c.l.s8.bf16 %v964
        %v1847 = vunpack.c.l.s8.bf16 %v965
        %v1848 = vunpack.c.l.s8.bf16 %v966
        %v1849 = vunpack.c.l.s8.bf16 %v967
        %v1850 = vunpack.c.l.s8.bf16 %v968
        %v1851 = vunpack.c.l.s8.bf16 %v969
        %v1852 = vunpack.c.l.s8.bf16 %v970
        %v1853 = vunpack.c.l.s8.bf16 %v971
        %v1854 = vunpack.c.l.s8.bf16 %v972
        %v1855 = vunpack.c.l.s8.bf16 %v973
        %v1856 = vunpack.c.l.s8.bf16 %v974
        %v1857 = vunpack.c.l.s8.bf16 %v975
        %v1858 = vunpack.c.l.s8.bf16 %v976
        %v1859 = vunpack.c.l.s8.bf16 %v977
        %v1860 = vunpack.c.l.s8.bf16 %v978
        %v1861 = vunpack.c.l.s8.bf16 %v979
        %v1862 = vunpack.c.h.s8.bf16 %v854
        %v1863 = vunpack.c.h.s8.bf16 %v855
        %v1864 = vunpack.c.h.s8.bf16 %v856
        %v1865 = vunpack.c.h.s8.bf16 %v857
        %v1866 = vunpack.c.h.s8.bf16 %v858
        %v1867 = vunpack.c.h.s8.bf16 %v859
        %v1868 = vunpack.c.h.s8.bf16 %v860
        %v1869 = vunpack.c.h.s8.bf16 %v861
        %v1870 = vunpack.c.h.s8.bf16 %v862
        %v1871 = vunpack.c.h.s8.bf16 %v863
        %v1872 = vunpack.c.h.s8.bf16 %v864
        %v1873 = vunpack.c.h.s8.bf16 %v865
        %v1874 = vunpack.c.h.s8.bf16 %v866
        %v1875 = vunpack.c.h.s8.bf16 %v867
        %v1876 = vunpack.c.h.s8.bf16 %v868
        %v1877 = vunpack.c.h.s8.bf16 %v869
        %v1878 = vunpack.c.h.s8.bf16 %v870
        %v1879 = vunpack.c.h.s8.bf16 %v871
        %v1880 = vunpack.c.h.s8.bf16 %v872
        %v1881 = vunpack.c.h.s8.bf16 %v873
        %v1882 = vunpack.c.h.s8.bf16 %v874
        %v1883 = vunpack.c.h.s8.bf16 %v875
        %v1884 = vunpack.c.h.s8.bf16 %v876
        %v1885 = vunpack.c.h.s8.bf16 %v877
        %v1886 = vunpack.c.h.s8.bf16 %v878
        %v1887 = vunpack.c.h.s8.bf16 %v879
        %v1888 = vunpack.c.h.s8.bf16 %v880
        %v1889 = vunpack.c.h.s8.bf16 %v881
        %v1890 = vunpack.c.h.s8.bf16 %v882
        %v1891 = vunpack.c.h.s8.bf16 %v883
        %v1892 = vunpack.c.h.s8.bf16 %v884
        %v1893 = vunpack.c.h.s8.bf16 %v885
        %v1894 = vunpack.c.h.s8.bf16 %v886
        %v1895 = vunpack.c.h.s8.bf16 %v887
        %v1896 = vunpack.c.h.s8.bf16 %v888
        %v1897 = vunpack.c.h.s8.bf16 %v889
        %v1898 = vunpack.c.h.s8.bf16 %v890
        %v1899 = vunpack.c.h.s8.bf16 %v891
        %v1900 = vunpack.c.h.s8.bf16 %v892
        %v1901 = vunpack.c.h.s8.bf16 %v893
        %v1902 = vunpack.c.h.s8.bf16 %v894
        %v1903 = vunpack.c.h.s8.bf16 %v895
        %v1904 = vunpack.c.h.s8.bf16 %v896
        %v1905 = vunpack.c.h.s8.bf16 %v897
        %v1906 = vunpack.c.h.s8.bf16 %v898
        %v1907 = vunpack.c.h.s8.bf16 %v899
        %v1908 = vunpack.c.h.s8.bf16 %v900
        %v1909 = vunpack.c.h.s8.bf16 %v901
        %v1910 = vunpack.c.h.s8.bf16 %v902
        %v1911 = vunpack.c.h.s8.bf16 %v903
        %v1912 = vunpack.c.h.s8.bf16 %v904
        %v1913 = vunpack.c.h.s8.bf16 %v905
        %v1914 = vunpack.c.h.s8.bf16 %v906
        %v1915 = vunpack.c.h.s8.bf16 %v907
        %v1916 = vunpack.c.h.s8.bf16 %v908
        %v1917 = vunpack.c.h.s8.bf16 %v909
        %v1918 = vunpack.c.h.s8.bf16 %v910
        %v1919 = vunpack.c.h.s8.bf16 %v911
        %v1920 = vunpack.c.h.s8.bf16 %v912
        %v1921 = vunpack.c.h.s8.bf16 %v913
        %v1922 = vunpack.c.h.s8.bf16 %v914
        %v1923 = vunpack.c.h.s8.bf16 %v915
        %v1924 = vunpack.c.h.s8.bf16 %v916
        %v1925 = vunpack.c.h.s8.bf16 %v917
        %v1926 = vunpack.c.h.s8.bf16 %v918
        %v1927 = vunpack.c.h.s8.bf16 %v919
        %v1928 = vunpack.c.h.s8.bf16 %v920
        %v1929 = vunpack.c.h.s8.bf16 %v921
        %v1930 = vunpack.c.h.s8.bf16 %v922
        %v1931 = vunpack.c.h.s8.bf16 %v923
        %v1932 = vunpack.c.h.s8.bf16 %v924
        %v1933 = vunpack.c.h.s8.bf16 %v925
        %v1934 = vunpack.c.h.s8.bf16 %v926
        %v1935 = vunpack.c.h.s8.bf16 %v927
        %v1936 = vunpack.c.h.s8.bf16 %v928
        %v1937 = vunpack.c.h.s8.bf16 %v929
        %v1938 = vunpack.c.h.s8.bf16 %v930
        %v1939 = vunpack.c.h.s8.bf16 %v931
        %v1940 = vunpack.c.h.s8.bf16 %v932
        %v1941 = vunpack.c.h.s8.bf16 %v933
        %v1942 = vunpack.c.h.s8.bf16 %v934
        %v1943 = vunpack.c.h.s8.bf16 %v935
        %v1944 = vunpack.c.h.s8.bf16 %v936
        %v1945 = vunpack.c.h.s8.bf16 %v937
        %v1946 = vunpack.c.h.s8.bf16 %v938
        %v1947 = vunpack.c.h.s8.bf16 %v939
        %v1948 = vunpack.c.h.s8.bf16 %v940
        %v1949 = vunpack.c.h.s8.bf16 %v941
        %v1950 = vunpack.c.h.s8.bf16 %v942
        %v1951 = vunpack.c.h.s8.bf16 %v943
        %v1952 = vunpack.c.h.s8.bf16 %v944
        %v1953 = vunpack.c.h.s8.bf16 %v945
        %v1954 = vunpack.c.h.s8.bf16 %v946
        %v1955 = vunpack.c.h.s8.bf16 %v947
        %v1956 = vunpack.c.h.s8.bf16 %v948
        %v1957 = vunpack.c.h.s8.bf16 %v949
        %v1958 = vunpack.c.h.s8.bf16 %v950
        %v1959 = vunpack.c.h.s8.bf16 %v951
        %v1960 = vunpack.c.h.s8.bf16 %v952
        %v1961 = vunpack.c.h.s8.bf16 %v953
        %v1962 = vunpack.c.h.s8.bf16 %v954
        %v1963 = vunpack.c.h.s8.bf16 %v955
        %v1964 = vunpack.c.h.s8.bf16 %v956
        %v1965 = vunpack.c.h.s8.bf16 %v957
        %v1966 = vunpack.c.h.s8.bf16 %v958
        %v1967 = vunpack.c.h.s8.bf16 %v959
        %v1968 = vunpack.c.h.s8.bf16 %v960
        %v1969 = vunpack.c.h.s8.bf16 %v961
        %v1970 = vunpack.c.h.s8.bf16 %v962
        %v1971 = vunpack.c.h.s8.bf16 %v963
        %v1972 = vunpack.c.h.s8.bf16 %v964
        %v1973 = vunpack.c.h.s8.bf16 %v965
        %v1974 = vunpack.c.h.s8.bf16 %v966
        %v1975 = vunpack.c.h.s8.bf16 %v967
        %v1976 = vunpack.c.h.s8.bf16 %v968
        %v1977 = vunpack.c.h.s8.bf16 %v969
        %v1978 = vunpack.c.h.s8.bf16 %v970
        %v1979 = vunpack.c.h.s8.bf16 %v971
        %v1980 = vunpack.c.h.s8.bf16 %v972
        %v1981 = vunpack.c.h.s8.bf16 %v973
        %v1982 = vunpack.c.h.s8.bf16 %v974
        %v1983 = vunpack.c.h.s8.bf16 %v975
        %v1984 = vunpack.c.h.s8.bf16 %v976
        %v1985 = vunpack.c.h.s8.bf16 %v977
        %v1986 = vunpack.c.h.s8.bf16 %v978
        %v1987 = vunpack.c.h.s8.bf16 %v979
        %1988 = vmatprep.subr.bf16.mxu0 %v981
        %1989 = vmatpush1.bf16.msra.mxu0 %v980
        %1990 = vmatprep.subr.bf16.mxu0 %v1107
        %1991 = vmatpush1.bf16.msra.mxu0 %v1106
        %1992 = vmatprep.subr.bf16.mxu0 %v1233
        %1993 = vmatpush1.bf16.msra.mxu0 %v1232
        %1994 = vmatprep.subr.bf16.mxu0 %v1359
        %1995 = vmatpush1.bf16.msra.mxu0 %v1358
        %1996 = vmatprep.subr.bf16.mxu0 %v1485
        %1997 = vmatpush1.bf16.msra.mxu0 %v1484
        %1998 = vmatprep.subr.bf16.mxu0 %v1611
        %1999 = vmatpush1.bf16.msra.mxu0 %v1610
        %2000 = vmatprep.subr.bf16.mxu0 %v1737
        %2001 = vmatpush1.bf16.msra.mxu0 %v1736
        %2002 = vmatprep.subr.bf16.mxu0 %v1863
        %2003 = vmatpush1.bf16.msra.mxu0 %v1862
        %2004 = vmatprep.subr.bf16.mxu0 0
        %2005 = vmatpush1.bf16.msra.mxu0 0
        %2006 = vmatprep.subr.bf16.mxu0 0
        %2007 = vmatpush1.bf16.msra.mxu0 0
        %2008 = vmatprep.subr.bf16.mxu0 0
        %2009 = vmatpush1.bf16.msra.mxu0 0
        %2010 = vmatprep.subr.bf16.mxu0 0
        %2011 = vmatpush1.bf16.msra.mxu0 0
        %2012 = vmatprep.subr.bf16.mxu0 0
        %2013 = vmatpush1.bf16.msra.mxu0 0
        %2014 = vmatprep.subr.bf16.mxu0 0
        %2015 = vmatpush1.bf16.msra.mxu0 0
        %2016 = vmatprep.subr.bf16.mxu0 0
        %2017 = vmatpush1.bf16.msra.mxu0 0
        %2018 = vmatprep.subr.bf16.mxu0 0
        %2019 = vmatpush1.bf16.msra.mxu0 0
        %2020 = vmatprep.mubr.bf16.mxu0 0
        %2021 = vmatmul.mubr.bf16.gmra.mrb[0].mxu0 %v475
        %v2022 = vpop.f32.mrb[0].mxu0
        %v2023 = vadd.f32 0.0, %v2022
        %v2024 = vpop.f32.mrb[0].mxu0
        %v2025 = vadd.f32 0.0, %v2024
        %v2026 = vpop.f32.mrb[0].mxu0
        %v2027 = vpop.f32.mrb[0].mxu0
        %2028 = vdwg.mxu0
        %2029 = vmatprep.subr.bf16.mxu0 %v983
        %2030 = vmatpush1.bf16.msra.mxu0 %v982
        %2031 = vmatprep.subr.bf16.mxu0 %v1109
        %2032 = vmatpush1.bf16.msra.mxu0 %v1108
        %2033 = vmatprep.subr.bf16.mxu0 %v1235
        %2034 = vmatpush1.bf16.msra.mxu0 %v1234
        %2035 = vmatprep.subr.bf16.mxu0 %v1361
        %2036 = vmatpush1.bf16.msra.mxu0 %v1360
        %2037 = vmatprep.subr.bf16.mxu0 %v1487
        %2038 = vmatpush1.bf16.msra.mxu0 %v1486
        %2039 = vmatprep.subr.bf16.mxu0 %v1613
        %2040 = vmatpush1.bf16.msra.mxu0 %v1612
        %2041 = vmatprep.subr.bf16.mxu0 %v1739
        %2042 = vmatpush1.bf16.msra.mxu0 %v1738
        %2043 = vmatprep.subr.bf16.mxu0 %v1865
        %2044 = vmatpush1.bf16.msra.mxu0 %v1864
        %2045 = vmatprep.subr.bf16.mxu0 0
        %2046 = vmatpush1.bf16.msra.mxu0 0
        %2047 = vmatprep.subr.bf16.mxu0 0
        %2048 = vmatpush1.bf16.msra.mxu0 0
        %2049 = vmatprep.subr.bf16.mxu0 0
        %2050 = vmatpush1.bf16.msra.mxu0 0
        %2051 = vmatprep.subr.bf16.mxu0 0
        %2052 = vmatpush1.bf16.msra.mxu0 0
        %2053 = vmatprep.subr.bf16.mxu0 0
        %2054 = vmatpush1.bf16.msra.mxu0 0
        %2055 = vmatprep.subr.bf16.mxu0 0
        %2056 = vmatpush1.bf16.msra.mxu0 0
        %2057 = vmatprep.subr.bf16.mxu0 0
        %2058 = vmatpush1.bf16.msra.mxu0 0
        %2059 = vmatprep.subr.bf16.mxu0 0
        %2060 = vmatpush1.bf16.msra.mxu0 0
        %2061 = vmatprep.mubr.bf16.mxu0 0
        %2062 = vmatmul.mubr.bf16.gmra.mrb[0].mxu0 %v475
        %v2063 = vpop.f32.mrb[0].mxu0
        %v2064 = vadd.f32 0.0, %v2063
        %v2065 = vpop.f32.mrb[0].mxu0
        %v2066 = vadd.f32 0.0, %v2065
        %v2067 = vpop.f32.mrb[0].mxu0
        %v2068 = vpop.f32.mrb[0].mxu0
        %2069 = vdwg.mxu0
        %2070 = vmatprep.subr.bf16.mxu0 %v985
        %2071 = vmatpush1.bf16.msra.mxu0 %v984
        %2072 = vmatprep.subr.bf16.mxu0 %v1111
        %2073 = vmatpush1.bf16.msra.mxu0 %v1110
        %2074 = vmatprep.subr.bf16.mxu0 %v1237
        %2075 = vmatpush1.bf16.msra.mxu0 %v1236
        %2076 = vmatprep.subr.bf16.mxu0 %v1363
        %2077 = vmatpush1.bf16.msra.mxu0 %v1362
        %2078 = vmatprep.subr.bf16.mxu0 %v1489
        %2079 = vmatpush1.bf16.msra.mxu0 %v1488
        %2080 = vmatprep.subr.bf16.mxu0 %v1615
        %2081 = vmatpush1.bf16.msra.mxu0 %v1614
        %2082 = vmatprep.subr.bf16.mxu0 %v1741
        %2083 = vmatpush1.bf16.msra.mxu0 %v1740
        %2084 = vmatprep.subr.bf16.mxu0 %v1867
        %2085 = vmatpush1.bf16.msra.mxu0 %v1866
        %2086 = vmatprep.subr.bf16.mxu0 0
        %2087 = vmatpush1.bf16.msra.mxu0 0
        %2088 = vmatprep.subr.bf16.mxu0 0
        %2089 = vmatpush1.bf16.msra.mxu0 0
        %2090 = vmatprep.subr.bf16.mxu0 0
        %2091 = vmatpush1.bf16.msra.mxu0 0
        %2092 = vmatprep.subr.bf16.mxu0 0
        %2093 = vmatpush1.bf16.msra.mxu0 0
        %2094 = vmatprep.subr.bf16.mxu0 0
        %2095 = vmatpush1.bf16.msra.mxu0 0
        %2096 = vmatprep.subr.bf16.mxu0 0
        %2097 = vmatpush1.bf16.msra.mxu0 0
        %2098 = vmatprep.subr.bf16.mxu0 0
        %2099 = vmatpush1.bf16.msra.mxu0 0
        %2100 = vmatprep.subr.bf16.mxu0 0
        %2101 = vmatpush1.bf16.msra.mxu0 0
        %2102 = vmatprep.mubr.bf16.mxu0 0
        %2103 = vmatmul.mubr.bf16.gmra.mrb[0].mxu0 %v475
        %v2104 = vpop.f32.mrb[0].mxu0
        %v2105 = vadd.f32 0.0, %v2104
        %v2106 = vpop.f32.mrb[0].mxu0
        %v2107 = vadd.f32 0.0, %v2106
        %v2108 = vpop.f32.mrb[0].mxu0
        %v2109 = vpop.f32.mrb[0].mxu0
        %2110 = vdwg.mxu0
        %2111 = vmatprep.subr.bf16.mxu0 %v987
        %2112 = vmatpush1.bf16.msra.mxu0 %v986
        %2113 = vmatprep.subr.bf16.mxu0 %v1113
        %2114 = vmatpush1.bf16.msra.mxu0 %v1112
        %2115 = vmatprep.subr.bf16.mxu0 %v1239
        %2116 = vmatpush1.bf16.msra.mxu0 %v1238
        %2117 = vmatprep.subr.bf16.mxu0 %v1365
        %2118 = vmatpush1.bf16.msra.mxu0 %v1364
        %2119 = vmatprep.subr.bf16.mxu0 %v1491
        %2120 = vmatpush1.bf16.msra.mxu0 %v1490
        %2121 = vmatprep.subr.bf16.mxu0 %v1617
        %2122 = vmatpush1.bf16.msra.mxu0 %v1616
        %2123 = vmatprep.subr.bf16.mxu0 %v1743
        %2124 = vmatpush1.bf16.msra.mxu0 %v1742
        %2125 = vmatprep.subr.bf16.mxu0 %v1869
        %2126 = vmatpush1.bf16.msra.mxu0 %v1868
        %2127 = vmatprep.subr.bf16.mxu0 0
        %2128 = vmatpush1.bf16.msra.mxu0 0
        %2129 = vmatprep.subr.bf16.mxu0 0
        %2130 = vmatpush1.bf16.msra.mxu0 0
        %2131 = vmatprep.subr.bf16.mxu0 0
        %2132 = vmatpush1.bf16.msra.mxu0 0
        %2133 = vmatprep.subr.bf16.mxu0 0
        %2134 = vmatpush1.bf16.msra.mxu0 0
        %2135 = vmatprep.subr.bf16.mxu0 0
        %2136 = vmatpush1.bf16.msra.mxu0 0
        %2137 = vmatprep.subr.bf16.mxu0 0
        %2138 = vmatpush1.bf16.msra.mxu0 0
        %2139 = vmatprep.subr.bf16.mxu0 0
        %2140 = vmatpush1.bf16.msra.mxu0 0
        %2141 = vmatprep.subr.bf16.mxu0 0
        %2142 = vmatpush1.bf16.msra.mxu0 0
        %2143 = vmatprep.mubr.bf16.mxu0 0
        %2144 = vmatmul.mubr.bf16.gmra.mrb[0].mxu0 %v475
        %v2145 = vpop.f32.mrb[0].mxu0
        %v2146 = vadd.f32 0.0, %v2145
        %v2147 = vpop.f32.mrb[0].mxu0
        %v2148 = vadd.f32 0.0, %v2147
        %v2149 = vpop.f32.mrb[0].mxu0
        %v2150 = vpop.f32.mrb[0].mxu0
        %2151 = vdwg.mxu0
        %2152 = vmatprep.subr.bf16.mxu0 %v989
        %2153 = vmatpush1.bf16.msra.mxu0 %v988
        %2154 = vmatprep.subr.bf16.mxu0 %v1115
        %2155 = vmatpush1.bf16.msra.mxu0 %v1114
        %2156 = vmatprep.subr.bf16.mxu0 %v1241
        %2157 = vmatpush1.bf16.msra.mxu0 %v1240
        %2158 = vmatprep.subr.bf16.mxu0 %v1367
        %2159 = vmatpush1.bf16.msra.mxu0 %v1366
        %2160 = vmatprep.subr.bf16.mxu0 %v1493
        %2161 = vmatpush1.bf16.msra.mxu0 %v1492
        %2162 = vmatprep.subr.bf16.mxu0 %v1619
        %2163 = vmatpush1.bf16.msra.mxu0 %v1618
        %2164 = vmatprep.subr.bf16.mxu0 %v1745
        %2165 = vmatpush1.bf16.msra.mxu0 %v1744
        %2166 = vmatprep.subr.bf16.mxu0 %v1871
        %2167 = vmatpush1.bf16.msra.mxu0 %v1870
        %2168 = vmatprep.subr.bf16.mxu0 0
        %2169 = vmatpush1.bf16.msra.mxu0 0
        %2170 = vmatprep.subr.bf16.mxu0 0
        %2171 = vmatpush1.bf16.msra.mxu0 0
        %2172 = vmatprep.subr.bf16.mxu0 0
        %2173 = vmatpush1.bf16.msra.mxu0 0
        %2174 = vmatprep.subr.bf16.mxu0 0
        %2175 = vmatpush1.bf16.msra.mxu0 0
        %2176 = vmatprep.subr.bf16.mxu0 0
        %2177 = vmatpush1.bf16.msra.mxu0 0
        %2178 = vmatprep.subr.bf16.mxu0 0
        %2179 = vmatpush1.bf16.msra.mxu0 0
        %2180 = vmatprep.subr.bf16.mxu0 0
        %2181 = vmatpush1.bf16.msra.mxu0 0
        %2182 = vmatprep.subr.bf16.mxu0 0
        %2183 = vmatpush1.bf16.msra.mxu0 0
        %2184 = vmatprep.mubr.bf16.mxu0 0
        %2185 = vmatmul.mubr.bf16.gmra.mrb[0].mxu0 %v475
        %v2186 = vpop.f32.mrb[0].mxu0
        %v2187 = vadd.f32 0.0, %v2186
        %v2188 = vpop.f32.mrb[0].mxu0
        %v2189 = vadd.f32 0.0, %v2188
        %v2190 = vpop.f32.mrb[0].mxu0
        %v2191 = vpop.f32.mrb[0].mxu0
        %2192 = vdwg.mxu0
        %2193 = vmatprep.subr.bf16.mxu0 %v991
        %2194 = vmatpush1.bf16.msra.mxu0 %v990
        %2195 = vmatprep.subr.bf16.mxu0 %v1117
        %2196 = vmatpush1.bf16.msra.mxu0 %v1116
        %2197 = vmatprep.subr.bf16.mxu0 %v1243
        %2198 = vmatpush1.bf16.msra.mxu0 %v1242
        %2199 = vmatprep.subr.bf16.mxu0 %v1369
        %2200 = vmatpush1.bf16.msra.mxu0 %v1368
        %2201 = vmatprep.subr.bf16.mxu0 %v1495
        %2202 = vmatpush1.bf16.msra.mxu0 %v1494
        %2203 = vmatprep.subr.bf16.mxu0 %v1621
        %2204 = vmatpush1.bf16.msra.mxu0 %v1620
        %2205 = vmatprep.subr.bf16.mxu0 %v1747
        %2206 = vmatpush1.bf16.msra.mxu0 %v1746
        %2207 = vmatprep.subr.bf16.mxu0 %v1873
        %2208 = vmatpush1.bf16.msra.mxu0 %v1872
        %2209 = vmatprep.subr.bf16.mxu0 0
        %2210 = vmatpush1.bf16.msra.mxu0 0
        %2211 = vmatprep.subr.bf16.mxu0 0
        %2212 = vmatpush1.bf16.msra.mxu0 0
        %2213 = vmatprep.subr.bf16.mxu0 0
        %2214 = vmatpush1.bf16.msra.mxu0 0
        %2215 = vmatprep.subr.bf16.mxu0 0
        %2216 = vmatpush1.bf16.msra.mxu0 0
        %2217 = vmatprep.subr.bf16.mxu0 0
        %2218 = vmatpush1.bf16.msra.mxu0 0
        %2219 = vmatprep.subr.bf16.mxu0 0
        %2220 = vmatpush1.bf16.msra.mxu0 0
        %2221 = vmatprep.subr.bf16.mxu0 0
        %2222 = vmatpush1.bf16.msra.mxu0 0
        %2223 = vmatprep.subr.bf16.mxu0 0
        %2224 = vmatpush1.bf16.msra.mxu0 0
        %2225 = vmatprep.mubr.bf16.mxu0 0
        %2226 = vmatmul.mubr.bf16.gmra.mrb[0].mxu0 %v475
        %v2227 = vpop.f32.mrb[0].mxu0
        %v2228 = vadd.f32 0.0, %v2227
        %v2229 = vpop.f32.mrb[0].mxu0
        %v2230 = vadd.f32 0.0, %v2229
        %v2231 = vpop.f32.mrb[0].mxu0
        %v2232 = vpop.f32.mrb[0].mxu0
        %2233 = vdwg.mxu0
        %2234 = vmatprep.subr.bf16.mxu0 %v993
        %2235 = vmatpush1.bf16.msra.mxu0 %v992
        %2236 = vmatprep.subr.bf16.mxu0 %v1119
        %2237 = vmatpush1.bf16.msra.mxu0 %v1118
        %2238 = vmatprep.subr.bf16.mxu0 %v1245
        %2239 = vmatpush1.bf16.msra.mxu0 %v1244
        %2240 = vmatprep.subr.bf16.mxu0 %v1371
        %2241 = vmatpush1.bf16.msra.mxu0 %v1370
        %2242 = vmatprep.subr.bf16.mxu0 %v1497
        %2243 = vmatpush1.bf16.msra.mxu0 %v1496
        %2244 = vmatprep.subr.bf16.mxu0 %v1623
        %2245 = vmatpush1.bf16.msra.mxu0 %v1622
        %2246 = vmatprep.subr.bf16.mxu0 %v1749
        %2247 = vmatpush1.bf16.msra.mxu0 %v1748
        %2248 = vmatprep.subr.bf16.mxu0 %v1875
        %2249 = vmatpush1.bf16.msra.mxu0 %v1874
        %2250 = vmatprep.subr.bf16.mxu0 0
        %2251 = vmatpush1.bf16.msra.mxu0 0
        %2252 = vmatprep.subr.bf16.mxu0 0
        %2253 = vmatpush1.bf16.msra.mxu0 0
        %2254 = vmatprep.subr.bf16.mxu0 0
        %2255 = vmatpush1.bf16.msra.mxu0 0
        %2256 = vmatprep.subr.bf16.mxu0 0
        %2257 = vmatpush1.bf16.msra.mxu0 0
        %2258 = vmatprep.subr.bf16.mxu0 0
        %2259 = vmatpush1.bf16.msra.mxu0 0
        %2260 = vmatprep.subr.bf16.mxu0 0
        %2261 = vmatpush1.bf16.msra.mxu0 0
        %2262 = vmatprep.subr.bf16.mxu0 0
        %2263 = vmatpush1.bf16.msra.mxu0 0
        %2264 = vmatprep.subr.bf16.mxu0 0
        %2265 = vmatpush1.bf16.msra.mxu0 0
        %2266 = vmatprep.mubr.bf16.mxu0 0
        %2267 = vmatmul.mubr.bf16.gmra.mrb[0].mxu0 %v475
        %v2268 = vpop.f32.mrb[0].mxu0
        %v2269 = vadd.f32 0.0, %v2268
        %v2270 = vpop.f32.mrb[0].mxu0
        %v2271 = vadd.f32 0.0, %v2270
        %v2272 = vpop.f32.mrb[0].mxu0
        %v2273 = vpop.f32.mrb[0].mxu0
        %2274 = vdwg.mxu0
        %2275 = vmatprep.subr.bf16.mxu0 %v995
        %2276 = vmatpush1.bf16.msra.mxu0 %v994
        %2277 = vmatprep.subr.bf16.mxu0 %v1121
        %2278 = vmatpush1.bf16.msra.mxu0 %v1120
        %2279 = vmatprep.subr.bf16.mxu0 %v1247
        %2280 = vmatpush1.bf16.msra.mxu0 %v1246
        %2281 = vmatprep.subr.bf16.mxu0 %v1373
        %2282 = vmatpush1.bf16.msra.mxu0 %v1372
        %2283 = vmatprep.subr.bf16.mxu0 %v1499
        %2284 = vmatpush1.bf16.msra.mxu0 %v1498
        %2285 = vmatprep.subr.bf16.mxu0 %v1625
        %2286 = vmatpush1.bf16.msra.mxu0 %v1624
        %2287 = vmatprep.subr.bf16.mxu0 %v1751
        %2288 = vmatpush1.bf16.msra.mxu0 %v1750
        %2289 = vmatprep.subr.bf16.mxu0 %v1877
        %2290 = vmatpush1.bf16.msra.mxu0 %v1876
        %2291 = vmatprep.subr.bf16.mxu0 0
        %2292 = vmatpush1.bf16.msra.mxu0 0
        %2293 = vmatprep.subr.bf16.mxu0 0
        %2294 = vmatpush1.bf16.msra.mxu0 0
        %2295 = vmatprep.subr.bf16.mxu0 0
        %2296 = vmatpush1.bf16.msra.mxu0 0
        %2297 = vmatprep.subr.bf16.mxu0 0
        %2298 = vmatpush1.bf16.msra.mxu0 0
        %2299 = vmatprep.subr.bf16.mxu0 0
        %2300 = vmatpush1.bf16.msra.mxu0 0
        %2301 = vmatprep.subr.bf16.mxu0 0
        %2302 = vmatpush1.bf16.msra.mxu0 0
        %2303 = vmatprep.subr.bf16.mxu0 0
        %2304 = vmatpush1.bf16.msra.mxu0 0
        %2305 = vmatprep.subr.bf16.mxu0 0
        %2306 = vmatpush1.bf16.msra.mxu0 0
        %2307 = vmatprep.mubr.bf16.mxu0 0
        %2308 = vmatmul.mubr.bf16.gmra.mrb[0].mxu0 %v475
        %v2309 = vpop.f32.mrb[0].mxu0
        %v2310 = vadd.f32 0.0, %v2309
        %v2311 = vpop.f32.mrb[0].mxu0
        %v2312 = vadd.f32 0.0, %v2311
        %v2313 = vpop.f32.mrb[0].mxu0
        %v2314 = vpop.f32.mrb[0].mxu0
        %2315 = vdwg.mxu0
        %2316 = vmatprep.subr.bf16.mxu0 %v997
        %2317 = vmatpush1.bf16.msra.mxu0 %v996
        %2318 = vmatprep.subr.bf16.mxu0 %v1123
        %2319 = vmatpush1.bf16.msra.mxu0 %v1122
        %2320 = vmatprep.subr.bf16.mxu0 %v1249
        %2321 = vmatpush1.bf16.msra.mxu0 %v1248
        %2322 = vmatprep.subr.bf16.mxu0 %v1375
        %2323 = vmatpush1.bf16.msra.mxu0 %v1374
        %2324 = vmatprep.subr.bf16.mxu0 %v1501
        %2325 = vmatpush1.bf16.msra.mxu0 %v1500
        %2326 = vmatprep.subr.bf16.mxu0 %v1627
        %2327 = vmatpush1.bf16.msra.mxu0 %v1626
        %2328 = vmatprep.subr.bf16.mxu0 %v1753
        %2329 = vmatpush1.bf16.msra.mxu0 %v1752
        %2330 = vmatprep.subr.bf16.mxu0 %v1879
        %2331 = vmatpush1.bf16.msra.mxu0 %v1878
        %2332 = vmatprep.subr.bf16.mxu0 0
        %2333 = vmatpush1.bf16.msra.mxu0 0
        %2334 = vmatprep.subr.bf16.mxu0 0
        %2335 = vmatpush1.bf16.msra.mxu0 0
        %2336 = vmatprep.subr.bf16.mxu0 0
        %2337 = vmatpush1.bf16.msra.mxu0 0
        %2338 = vmatprep.subr.bf16.mxu0 0
        %2339 = vmatpush1.bf16.msra.mxu0 0
        %2340 = vmatprep.subr.bf16.mxu0 0
        %2341 = vmatpush1.bf16.msra.mxu0 0
        %2342 = vmatprep.subr.bf16.mxu0 0
        %2343 = vmatpush1.bf16.msra.mxu0 0
        %2344 = vmatprep.subr.bf16.mxu0 0
        %2345 = vmatpush1.bf16.msra.mxu0 0
        %2346 = vmatprep.subr.bf16.mxu0 0
        %2347 = vmatpush1.bf16.msra.mxu0 0
        %2348 = vmatprep.mubr.bf16.mxu0 0
        %2349 = vmatmul.mubr.bf16.gmra.mrb[0].mxu0 %v475
        %v2350 = vpop.f32.mrb[0].mxu0
        %v2351 = vadd.f32 0.0, %v2350
        %v2352 = vpop.f32.mrb[0].mxu0
        %v2353 = vadd.f32 0.0, %v2352
        %v2354 = vpop.f32.mrb[0].mxu0
        %v2355 = vpop.f32.mrb[0].mxu0
        %2356 = vdwg.mxu0
        %2357 = vmatprep.subr.bf16.mxu0 %v999
        %2358 = vmatpush1.bf16.msra.mxu0 %v998
        %2359 = vmatprep.subr.bf16.mxu0 %v1125
        %2360 = vmatpush1.bf16.msra.mxu0 %v1124
        %2361 = vmatprep.subr.bf16.mxu0 %v1251
        %2362 = vmatpush1.bf16.msra.mxu0 %v1250
        %2363 = vmatprep.subr.bf16.mxu0 %v1377
        %2364 = vmatpush1.bf16.msra.mxu0 %v1376
        %2365 = vmatprep.subr.bf16.mxu0 %v1503
        %2366 = vmatpush1.bf16.msra.mxu0 %v1502
        %2367 = vmatprep.subr.bf16.mxu0 %v1629
        %2368 = vmatpush1.bf16.msra.mxu0 %v1628
        %2369 = vmatprep.subr.bf16.mxu0 %v1755
        %2370 = vmatpush1.bf16.msra.mxu0 %v1754
        %2371 = vmatprep.subr.bf16.mxu0 %v1881
        %2372 = vmatpush1.bf16.msra.mxu0 %v1880
        %2373 = vmatprep.subr.bf16.mxu0 0
        %2374 = vmatpush1.bf16.msra.mxu0 0
        %2375 = vmatprep.subr.bf16.mxu0 0
        %2376 = vmatpush1.bf16.msra.mxu0 0
        %2377 = vmatprep.subr.bf16.mxu0 0
        %2378 = vmatpush1.bf16.msra.mxu0 0
        %2379 = vmatprep.subr.bf16.mxu0 0
        %2380 = vmatpush1.bf16.msra.mxu0 0
        %2381 = vmatprep.subr.bf16.mxu0 0
        %2382 = vmatpush1.bf16.msra.mxu0 0
        %2383 = vmatprep.subr.bf16.mxu0 0
        %2384 = vmatpush1.bf16.msra.mxu0 0
        %2385 = vmatprep.subr.bf16.mxu0 0
        %2386 = vmatpush1.bf16.msra.mxu0 0
        %2387 = vmatprep.subr.bf16.mxu0 0
        %2388 = vmatpush1.bf16.msra.mxu0 0
        %2389 = vmatprep.mubr.bf16.mxu0 0
        %2390 = vmatmul.mubr.bf16.gmra.mrb[0].mxu0 %v475
        %v2391 = vpop.f32.mrb[0].mxu0
        %v2392 = vadd.f32 0.0, %v2391
        %v2393 = vpop.f32.mrb[0].mxu0
        %v2394 = vadd.f32 0.0, %v2393
        %v2395 = vpop.f32.mrb[0].mxu0
        %v2396 = vpop.f32.mrb[0].mxu0
        %2397 = vdwg.mxu0
        %2398 = vmatprep.subr.bf16.mxu0 %v1001
        %2399 = vmatpush1.bf16.msra.mxu0 %v1000
        %2400 = vmatprep.subr.bf16.mxu0 %v1127
        %2401 = vmatpush1.bf16.msra.mxu0 %v1126
        %2402 = vmatprep.subr.bf16.mxu0 %v1253
        %2403 = vmatpush1.bf16.msra.mxu0 %v1252
        %2404 = vmatprep.subr.bf16.mxu0 %v1379
        %2405 = vmatpush1.bf16.msra.mxu0 %v1378
        %2406 = vmatprep.subr.bf16.mxu0 %v1505
        %2407 = vmatpush1.bf16.msra.mxu0 %v1504
        %2408 = vmatprep.subr.bf16.mxu0 %v1631
        %2409 = vmatpush1.bf16.msra.mxu0 %v1630
        %2410 = vmatprep.subr.bf16.mxu0 %v1757
        %2411 = vmatpush1.bf16.msra.mxu0 %v1756
        %2412 = vmatprep.subr.bf16.mxu0 %v1883
        %2413 = vmatpush1.bf16.msra.mxu0 %v1882
        %2414 = vmatprep.subr.bf16.mxu0 0
        %2415 = vmatpush1.bf16.msra.mxu0 0
        %2416 = vmatprep.subr.bf16.mxu0 0
        %2417 = vmatpush1.bf16.msra.mxu0 0
        %2418 = vmatprep.subr.bf16.mxu0 0
        %2419 = vmatpush1.bf16.msra.mxu0 0
        %2420 = vmatprep.subr.bf16.mxu0 0
        %2421 = vmatpush1.bf16.msra.mxu0 0
        %2422 = vmatprep.subr.bf16.mxu0 0
        %2423 = vmatpush1.bf16.msra.mxu0 0
        %2424 = vmatprep.subr.bf16.mxu0 0
        %2425 = vmatpush1.bf16.msra.mxu0 0
        %2426 = vmatprep.subr.bf16.mxu0 0
        %2427 = vmatpush1.bf16.msra.mxu0 0
        %2428 = vmatprep.subr.bf16.mxu0 0
        %2429 = vmatpush1.bf16.msra.mxu0 0
        %2430 = vmatprep.mubr.bf16.mxu0 0
        %2431 = vmatmul.mubr.bf16.gmra.mrb[0].mxu0 %v475
        %v2432 = vpop.f32.mrb[0].mxu0
        %v2433 = vadd.f32 0.0, %v2432
        %v2434 = vpop.f32.mrb[0].mxu0
        %v2435 = vadd.f32 0.0, %v2434
        %v2436 = vpop.f32.mrb[0].mxu0
        %v2437 = vpop.f32.mrb[0].mxu0
        %2438 = vdwg.mxu0
        %2439 = vmatprep.subr.bf16.mxu0 %v1003
        %2440 = vmatpush1.bf16.msra.mxu0 %v1002
        %2441 = vmatprep.subr.bf16.mxu0 %v1129
        %2442 = vmatpush1.bf16.msra.mxu0 %v1128
        %2443 = vmatprep.subr.bf16.mxu0 %v1255
        %2444 = vmatpush1.bf16.msra.mxu0 %v1254
        %2445 = vmatprep.subr.bf16.mxu0 %v1381
        %2446 = vmatpush1.bf16.msra.mxu0 %v1380
        %2447 = vmatprep.subr.bf16.mxu0 %v1507
        %2448 = vmatpush1.bf16.msra.mxu0 %v1506
        %2449 = vmatprep.subr.bf16.mxu0 %v1633
        %2450 = vmatpush1.bf16.msra.mxu0 %v1632
        %2451 = vmatprep.subr.bf16.mxu0 %v1759
        %2452 = vmatpush1.bf16.msra.mxu0 %v1758
        %2453 = vmatprep.subr.bf16.mxu0 %v1885
        %2454 = vmatpush1.bf16.msra.mxu0 %v1884
        %2455 = vmatprep.subr.bf16.mxu0 0
        %2456 = vmatpush1.bf16.msra.mxu0 0
        %2457 = vmatprep.subr.bf16.mxu0 0
        %2458 = vmatpush1.bf16.msra.mxu0 0
        %2459 = vmatprep.subr.bf16.mxu0 0
        %2460 = vmatpush1.bf16.msra.mxu0 0
        %2461 = vmatprep.subr.bf16.mxu0 0
        %2462 = vmatpush1.bf16.msra.mxu0 0
        %2463 = vmatprep.subr.bf16.mxu0 0
        %2464 = vmatpush1.bf16.msra.mxu0 0
        %2465 = vmatprep.subr.bf16.mxu0 0
        %2466 = vmatpush1.bf16.msra.mxu0 0
        %2467 = vmatprep.subr.bf16.mxu0 0
        %2468 = vmatpush1.bf16.msra.mxu0 0
        %2469 = vmatprep.subr.bf16.mxu0 0
        %2470 = vmatpush1.bf16.msra.mxu0 0
        %2471 = vmatprep.mubr.bf16.mxu0 0
        %2472 = vmatmul.mubr.bf16.gmra.mrb[0].mxu0 %v475
        %v2473 = vpop.f32.mrb[0].mxu0
        %v2474 = vadd.f32 0.0, %v2473
        %v2475 = vpop.f32.mrb[0].mxu0
        %v2476 = vadd.f32 0.0, %v2475
        %v2477 = vpop.f32.mrb[0].mxu0
        %v2478 = vpop.f32.mrb[0].mxu0
        %2479 = vdwg.mxu0
        %2480 = vmatprep.subr.bf16.mxu0 %v1005
        %2481 = vmatpush1.bf16.msra.mxu0 %v1004
        %2482 = vmatprep.subr.bf16.mxu0 %v1131
        %2483 = vmatpush1.bf16.msra.mxu0 %v1130
        %2484 = vmatprep.subr.bf16.mxu0 %v1257
        %2485 = vmatpush1.bf16.msra.mxu0 %v1256
        %2486 = vmatprep.subr.bf16.mxu0 %v1383
        %2487 = vmatpush1.bf16.msra.mxu0 %v1382
        %2488 = vmatprep.subr.bf16.mxu0 %v1509
        %2489 = vmatpush1.bf16.msra.mxu0 %v1508
        %2490 = vmatprep.subr.bf16.mxu0 %v1635
        %2491 = vmatpush1.bf16.msra.mxu0 %v1634
        %2492 = vmatprep.subr.bf16.mxu0 %v1761
        %2493 = vmatpush1.bf16.msra.mxu0 %v1760
        %2494 = vmatprep.subr.bf16.mxu0 %v1887
        %2495 = vmatpush1.bf16.msra.mxu0 %v1886
        %2496 = vmatprep.subr.bf16.mxu0 0
        %2497 = vmatpush1.bf16.msra.mxu0 0
        %2498 = vmatprep.subr.bf16.mxu0 0
        %2499 = vmatpush1.bf16.msra.mxu0 0
        %2500 = vmatprep.subr.bf16.mxu0 0
        %2501 = vmatpush1.bf16.msra.mxu0 0
        %2502 = vmatprep.subr.bf16.mxu0 0
        %2503 = vmatpush1.bf16.msra.mxu0 0
        %2504 = vmatprep.subr.bf16.mxu0 0
        %2505 = vmatpush1.bf16.msra.mxu0 0
        %2506 = vmatprep.subr.bf16.mxu0 0
        %2507 = vmatpush1.bf16.msra.mxu0 0
        %2508 = vmatprep.subr.bf16.mxu0 0
        %2509 = vmatpush1.bf16.msra.mxu0 0
        %2510 = vmatprep.subr.bf16.mxu0 0
        %2511 = vmatpush1.bf16.msra.mxu0 0
        %2512 = vmatprep.mubr.bf16.mxu0 0
        %2513 = vmatmul.mubr.bf16.gmra.mrb[0].mxu0 %v475
        %v2514 = vpop.f32.mrb[0].mxu0
        %v2515 = vadd.f32 0.0, %v2514
        %v2516 = vpop.f32.mrb[0].mxu0
        %v2517 = vadd.f32 0.0, %v2516
        %v2518 = vpop.f32.mrb[0].mxu0
        %v2519 = vpop.f32.mrb[0].mxu0
        %2520 = vdwg.mxu0
        %2521 = vmatprep.subr.bf16.mxu0 %v1007
        %2522 = vmatpush1.bf16.msra.mxu0 %v1006
        %2523 = vmatprep.subr.bf16.mxu0 %v1133
        %2524 = vmatpush1.bf16.msra.mxu0 %v1132
        %2525 = vmatprep.subr.bf16.mxu0 %v1259
        %2526 = vmatpush1.bf16.msra.mxu0 %v1258
        %2527 = vmatprep.subr.bf16.mxu0 %v1385
        %2528 = vmatpush1.bf16.msra.mxu0 %v1384
        %2529 = vmatprep.subr.bf16.mxu0 %v1511
        %2530 = vmatpush1.bf16.msra.mxu0 %v1510
        %2531 = vmatprep.subr.bf16.mxu0 %v1637
        %2532 = vmatpush1.bf16.msra.mxu0 %v1636
        %2533 = vmatprep.subr.bf16.mxu0 %v1763
        %2534 = vmatpush1.bf16.msra.mxu0 %v1762
        %2535 = vmatprep.subr.bf16.mxu0 %v1889
        %2536 = vmatpush1.bf16.msra.mxu0 %v1888
        %2537 = vmatprep.subr.bf16.mxu0 0
        %2538 = vmatpush1.bf16.msra.mxu0 0
        %2539 = vmatprep.subr.bf16.mxu0 0
        %2540 = vmatpush1.bf16.msra.mxu0 0
        %2541 = vmatprep.subr.bf16.mxu0 0
        %2542 = vmatpush1.bf16.msra.mxu0 0
        %2543 = vmatprep.subr.bf16.mxu0 0
        %2544 = vmatpush1.bf16.msra.mxu0 0
        %2545 = vmatprep.subr.bf16.mxu0 0
        %2546 = vmatpush1.bf16.msra.mxu0 0
        %2547 = vmatprep.subr.bf16.mxu0 0
        %2548 = vmatpush1.bf16.msra.mxu0 0
        %2549 = vmatprep.subr.bf16.mxu0 0
        %2550 = vmatpush1.bf16.msra.mxu0 0
        %2551 = vmatprep.subr.bf16.mxu0 0
        %2552 = vmatpush1.bf16.msra.mxu0 0
        %2553 = vmatprep.mubr.bf16.mxu0 0
        %2554 = vmatmul.mubr.bf16.gmra.mrb[0].mxu0 %v475
        %v2555 = vpop.f32.mrb[0].mxu0
        %v2556 = vadd.f32 0.0, %v2555
        %v2557 = vpop.f32.mrb[0].mxu0
        %v2558 = vadd.f32 0.0, %v2557
        %v2559 = vpop.f32.mrb[0].mxu0
        %v2560 = vpop.f32.mrb[0].mxu0
        %2561 = vdwg.mxu0
        %2562 = vmatprep.subr.bf16.mxu0 %v1009
        %2563 = vmatpush1.bf16.msra.mxu0 %v1008
        %2564 = vmatprep.subr.bf16.mxu0 %v1135
        %2565 = vmatpush1.bf16.msra.mxu0 %v1134
        %2566 = vmatprep.subr.bf16.mxu0 %v1261
        %2567 = vmatpush1.bf16.msra.mxu0 %v1260
        %2568 = vmatprep.subr.bf16.mxu0 %v1387
        %2569 = vmatpush1.bf16.msra.mxu0 %v1386
        %2570 = vmatprep.subr.bf16.mxu0 %v1513
        %2571 = vmatpush1.bf16.msra.mxu0 %v1512
        %2572 = vmatprep.subr.bf16.mxu0 %v1639
        %2573 = vmatpush1.bf16.msra.mxu0 %v1638
        %2574 = vmatprep.subr.bf16.mxu0 %v1765
        %2575 = vmatpush1.bf16.msra.mxu0 %v1764
        %2576 = vmatprep.subr.bf16.mxu0 %v1891
        %2577 = vmatpush1.bf16.msra.mxu0 %v1890
        %2578 = vmatprep.subr.bf16.mxu0 0
        %2579 = vmatpush1.bf16.msra.mxu0 0
        %2580 = vmatprep.subr.bf16.mxu0 0
        %2581 = vmatpush1.bf16.msra.mxu0 0
        %2582 = vmatprep.subr.bf16.mxu0 0
        %2583 = vmatpush1.bf16.msra.mxu0 0
        %2584 = vmatprep.subr.bf16.mxu0 0
        %2585 = vmatpush1.bf16.msra.mxu0 0
        %2586 = vmatprep.subr.bf16.mxu0 0
        %2587 = vmatpush1.bf16.msra.mxu0 0
        %2588 = vmatprep.subr.bf16.mxu0 0
        %2589 = vmatpush1.bf16.msra.mxu0 0
        %2590 = vmatprep.subr.bf16.mxu0 0
        %2591 = vmatpush1.bf16.msra.mxu0 0
        %2592 = vmatprep.subr.bf16.mxu0 0
        %2593 = vmatpush1.bf16.msra.mxu0 0
        %2594 = vmatprep.mubr.bf16.mxu0 0
        %2595 = vmatmul.mubr.bf16.gmra.mrb[0].mxu0 %v475
        %v2596 = vpop.f32.mrb[0].mxu0
        %v2597 = vadd.f32 0.0, %v2596
        %v2598 = vpop.f32.mrb[0].mxu0
        %v2599 = vadd.f32 0.0, %v2598
        %v2600 = vpop.f32.mrb[0].mxu0
        %v2601 = vpop.f32.mrb[0].mxu0
        %2602 = vdwg.mxu0
        %2603 = vmatprep.subr.bf16.mxu0 %v1011
        %2604 = vmatpush1.bf16.msra.mxu0 %v1010
        %2605 = vmatprep.subr.bf16.mxu0 %v1137
        %2606 = vmatpush1.bf16.msra.mxu0 %v1136
        %2607 = vmatprep.subr.bf16.mxu0 %v1263
        %2608 = vmatpush1.bf16.msra.mxu0 %v1262
        %2609 = vmatprep.subr.bf16.mxu0 %v1389
        %2610 = vmatpush1.bf16.msra.mxu0 %v1388
        %2611 = vmatprep.subr.bf16.mxu0 %v1515
        %2612 = vmatpush1.bf16.msra.mxu0 %v1514
        %2613 = vmatprep.subr.bf16.mxu0 %v1641
        %2614 = vmatpush1.bf16.msra.mxu0 %v1640
        %2615 = vmatprep.subr.bf16.mxu0 %v1767
        %2616 = vmatpush1.bf16.msra.mxu0 %v1766
        %2617 = vmatprep.subr.bf16.mxu0 %v1893
        %2618 = vmatpush1.bf16.msra.mxu0 %v1892
        %2619 = vmatprep.subr.bf16.mxu0 0
        %2620 = vmatpush1.bf16.msra.mxu0 0
        %2621 = vmatprep.subr.bf16.mxu0 0
        %2622 = vmatpush1.bf16.msra.mxu0 0
        %2623 = vmatprep.subr.bf16.mxu0 0
        %2624 = vmatpush1.bf16.msra.mxu0 0
        %2625 = vmatprep.subr.bf16.mxu0 0
        %2626 = vmatpush1.bf16.msra.mxu0 0
        %2627 = vmatprep.subr.bf16.mxu0 0
        %2628 = vmatpush1.bf16.msra.mxu0 0
        %2629 = vmatprep.subr.bf16.mxu0 0
        %2630 = vmatpush1.bf16.msra.mxu0 0
        %2631 = vmatprep.subr.bf16.mxu0 0
        %2632 = vmatpush1.bf16.msra.mxu0 0
        %2633 = vmatprep.subr.bf16.mxu0 0
        %2634 = vmatpush1.bf16.msra.mxu0 0
        %2635 = vmatprep.mubr.bf16.mxu0 0
        %2636 = vmatmul.mubr.bf16.gmra.mrb[0].mxu0 %v475
        %v2637 = vpop.f32.mrb[0].mxu0
        %v2638 = vadd.f32 0.0, %v2637
        %v2639 = vpop.f32.mrb[0].mxu0
        %v2640 = vadd.f32 0.0, %v2639
        %v2641 = vpop.f32.mrb[0].mxu0
        %v2642 = vpop.f32.mrb[0].mxu0
        %2643 = vdwg.mxu0
        %2644 = vmatprep.subr.bf16.mxu0 %v1013
        %2645 = vmatpush1.bf16.msra.mxu0 %v1012
        %2646 = vmatprep.subr.bf16.mxu0 %v1139
        %2647 = vmatpush1.bf16.msra.mxu0 %v1138
        %2648 = vmatprep.subr.bf16.mxu0 %v1265
        %2649 = vmatpush1.bf16.msra.mxu0 %v1264
        %2650 = vmatprep.subr.bf16.mxu0 %v1391
        %2651 = vmatpush1.bf16.msra.mxu0 %v1390
        %2652 = vmatprep.subr.bf16.mxu0 %v1517
        %2653 = vmatpush1.bf16.msra.mxu0 %v1516
        %2654 = vmatprep.subr.bf16.mxu0 %v1643
        %2655 = vmatpush1.bf16.msra.mxu0 %v1642
        %2656 = vmatprep.subr.bf16.mxu0 %v1769
        %2657 = vmatpush1.bf16.msra.mxu0 %v1768
        %2658 = vmatprep.subr.bf16.mxu0 %v1895
        %2659 = vmatpush1.bf16.msra.mxu0 %v1894
        %2660 = vmatprep.subr.bf16.mxu0 0
        %2661 = vmatpush1.bf16.msra.mxu0 0
        %2662 = vmatprep.subr.bf16.mxu0 0
        %2663 = vmatpush1.bf16.msra.mxu0 0
        %2664 = vmatprep.subr.bf16.mxu0 0
        %2665 = vmatpush1.bf16.msra.mxu0 0
        %2666 = vmatprep.subr.bf16.mxu0 0
        %2667 = vmatpush1.bf16.msra.mxu0 0
        %2668 = vmatprep.subr.bf16.mxu0 0
        %2669 = vmatpush1.bf16.msra.mxu0 0
        %2670 = vmatprep.subr.bf16.mxu0 0
        %2671 = vmatpush1.bf16.msra.mxu0 0
        %2672 = vmatprep.subr.bf16.mxu0 0
        %2673 = vmatpush1.bf16.msra.mxu0 0
        %2674 = vmatprep.subr.bf16.mxu0 0
        %2675 = vmatpush1.bf16.msra.mxu0 0
        %2676 = vmatprep.mubr.bf16.mxu0 0
        %2677 = vmatmul.mubr.bf16.gmra.mrb[0].mxu0 %v475
        %v2678 = vpop.f32.mrb[0].mxu0
        %v2679 = vadd.f32 0.0, %v2678
        %v2680 = vpop.f32.mrb[0].mxu0
        %v2681 = vadd.f32 0.0, %v2680
        %v2682 = vpop.f32.mrb[0].mxu0
        %v2683 = vpop.f32.mrb[0].mxu0
        %2684 = vdwg.mxu0
        %2685 = vmatprep.subr.bf16.mxu0 %v1015
        %2686 = vmatpush1.bf16.msra.mxu0 %v1014
        %2687 = vmatprep.subr.bf16.mxu0 %v1141
        %2688 = vmatpush1.bf16.msra.mxu0 %v1140
        %2689 = vmatprep.subr.bf16.mxu0 %v1267
        %2690 = vmatpush1.bf16.msra.mxu0 %v1266
        %2691 = vmatprep.subr.bf16.mxu0 %v1393
        %2692 = vmatpush1.bf16.msra.mxu0 %v1392
        %2693 = vmatprep.subr.bf16.mxu0 %v1519
        %2694 = vmatpush1.bf16.msra.mxu0 %v1518
        %2695 = vmatprep.subr.bf16.mxu0 %v1645
        %2696 = vmatpush1.bf16.msra.mxu0 %v1644
        %2697 = vmatprep.subr.bf16.mxu0 %v1771
        %2698 = vmatpush1.bf16.msra.mxu0 %v1770
        %2699 = vmatprep.subr.bf16.mxu0 %v1897
        %2700 = vmatpush1.bf16.msra.mxu0 %v1896
        %2701 = vmatprep.subr.bf16.mxu0 0
        %2702 = vmatpush1.bf16.msra.mxu0 0
        %2703 = vmatprep.subr.bf16.mxu0 0
        %2704 = vmatpush1.bf16.msra.mxu0 0
        %2705 = vmatprep.subr.bf16.mxu0 0
        %2706 = vmatpush1.bf16.msra.mxu0 0
        %2707 = vmatprep.subr.bf16.mxu0 0
        %2708 = vmatpush1.bf16.msra.mxu0 0
        %2709 = vmatprep.subr.bf16.mxu0 0
        %2710 = vmatpush1.bf16.msra.mxu0 0
        %2711 = vmatprep.subr.bf16.mxu0 0
        %2712 = vmatpush1.bf16.msra.mxu0 0
        %2713 = vmatprep.subr.bf16.mxu0 0
        %2714 = vmatpush1.bf16.msra.mxu0 0
        %2715 = vmatprep.subr.bf16.mxu0 0
        %2716 = vmatpush1.bf16.msra.mxu0 0
        %2717 = vmatprep.mubr.bf16.mxu0 0
        %2718 = vmatmul.mubr.bf16.gmra.mrb[0].mxu0 %v475
        %v2719 = vpop.f32.mrb[0].mxu0
        %v2720 = vadd.f32 0.0, %v2719
        %v2721 = vpop.f32.mrb[0].mxu0
        %v2722 = vadd.f32 0.0, %v2721
        %v2723 = vpop.f32.mrb[0].mxu0
        %v2724 = vpop.f32.mrb[0].mxu0
        %2725 = vdwg.mxu0
        %2726 = vmatprep.subr.bf16.mxu0 %v1017
        %2727 = vmatpush1.bf16.msra.mxu0 %v1016
        %2728 = vmatprep.subr.bf16.mxu0 %v1143
        %2729 = vmatpush1.bf16.msra.mxu0 %v1142
        %2730 = vmatprep.subr.bf16.mxu0 %v1269
        %2731 = vmatpush1.bf16.msra.mxu0 %v1268
        %2732 = vmatprep.subr.bf16.mxu0 %v1395
        %2733 = vmatpush1.bf16.msra.mxu0 %v1394
        %2734 = vmatprep.subr.bf16.mxu0 %v1521
        %2735 = vmatpush1.bf16.msra.mxu0 %v1520
        %2736 = vmatprep.subr.bf16.mxu0 %v1647
        %2737 = vmatpush1.bf16.msra.mxu0 %v1646
        %2738 = vmatprep.subr.bf16.mxu0 %v1773
        %2739 = vmatpush1.bf16.msra.mxu0 %v1772
        %2740 = vmatprep.subr.bf16.mxu0 %v1899
        %2741 = vmatpush1.bf16.msra.mxu0 %v1898
        %2742 = vmatprep.subr.bf16.mxu0 0
        %2743 = vmatpush1.bf16.msra.mxu0 0
        %2744 = vmatprep.subr.bf16.mxu0 0
        %2745 = vmatpush1.bf16.msra.mxu0 0
        %2746 = vmatprep.subr.bf16.mxu0 0
        %2747 = vmatpush1.bf16.msra.mxu0 0
        %2748 = vmatprep.subr.bf16.mxu0 0
        %2749 = vmatpush1.bf16.msra.mxu0 0
        %2750 = vmatprep.subr.bf16.mxu0 0
        %2751 = vmatpush1.bf16.msra.mxu0 0
        %2752 = vmatprep.subr.bf16.mxu0 0
        %2753 = vmatpush1.bf16.msra.mxu0 0
        %2754 = vmatprep.subr.bf16.mxu0 0
        %2755 = vmatpush1.bf16.msra.mxu0 0
        %2756 = vmatprep.subr.bf16.mxu0 0
        %2757 = vmatpush1.bf16.msra.mxu0 0
        %2758 = vmatprep.mubr.bf16.mxu0 0
        %2759 = vmatmul.mubr.bf16.gmra.mrb[0].mxu0 %v475
        %v2760 = vpop.f32.mrb[0].mxu0
        %v2761 = vadd.f32 0.0, %v2760
        %v2762 = vpop.f32.mrb[0].mxu0
        %v2763 = vadd.f32 0.0, %v2762
        %v2764 = vpop.f32.mrb[0].mxu0
        %v2765 = vpop.f32.mrb[0].mxu0
        %2766 = vdwg.mxu0
        %2767 = vmatprep.subr.bf16.mxu0 %v1019
        %2768 = vmatpush1.bf16.msra.mxu0 %v1018
        %2769 = vmatprep.subr.bf16.mxu0 %v1145
        %2770 = vmatpush1.bf16.msra.mxu0 %v1144
        %2771 = vmatprep.subr.bf16.mxu0 %v1271
        %2772 = vmatpush1.bf16.msra.mxu0 %v1270
        %2773 = vmatprep.subr.bf16.mxu0 %v1397
        %2774 = vmatpush1.bf16.msra.mxu0 %v1396
        %2775 = vmatprep.subr.bf16.mxu0 %v1523
        %2776 = vmatpush1.bf16.msra.mxu0 %v1522
        %2777 = vmatprep.subr.bf16.mxu0 %v1649
        %2778 = vmatpush1.bf16.msra.mxu0 %v1648
        %2779 = vmatprep.subr.bf16.mxu0 %v1775
        %2780 = vmatpush1.bf16.msra.mxu0 %v1774
        %2781 = vmatprep.subr.bf16.mxu0 %v1901
        %2782 = vmatpush1.bf16.msra.mxu0 %v1900
        %2783 = vmatprep.subr.bf16.mxu0 0
        %2784 = vmatpush1.bf16.msra.mxu0 0
        %2785 = vmatprep.subr.bf16.mxu0 0
        %2786 = vmatpush1.bf16.msra.mxu0 0
        %2787 = vmatprep.subr.bf16.mxu0 0
        %2788 = vmatpush1.bf16.msra.mxu0 0
        %2789 = vmatprep.subr.bf16.mxu0 0
        %2790 = vmatpush1.bf16.msra.mxu0 0
        %2791 = vmatprep.subr.bf16.mxu0 0
        %2792 = vmatpush1.bf16.msra.mxu0 0
        %2793 = vmatprep.subr.bf16.mxu0 0
        %2794 = vmatpush1.bf16.msra.mxu0 0
        %2795 = vmatprep.subr.bf16.mxu0 0
        %2796 = vmatpush1.bf16.msra.mxu0 0
        %2797 = vmatprep.subr.bf16.mxu0 0
        %2798 = vmatpush1.bf16.msra.mxu0 0
        %2799 = vmatprep.mubr.bf16.mxu0 0
        %2800 = vmatmul.mubr.bf16.gmra.mrb[0].mxu0 %v475
        %v2801 = vpop.f32.mrb[0].mxu0
        %v2802 = vadd.f32 0.0, %v2801
        %v2803 = vpop.f32.mrb[0].mxu0
        %v2804 = vadd.f32 0.0, %v2803
        %v2805 = vpop.f32.mrb[0].mxu0
        %v2806 = vpop.f32.mrb[0].mxu0
        %2807 = vdwg.mxu0
        %2808 = vmatprep.subr.bf16.mxu0 %v1021
        %2809 = vmatpush1.bf16.msra.mxu0 %v1020
        %2810 = vmatprep.subr.bf16.mxu0 %v1147
        %2811 = vmatpush1.bf16.msra.mxu0 %v1146
        %2812 = vmatprep.subr.bf16.mxu0 %v1273
        %2813 = vmatpush1.bf16.msra.mxu0 %v1272
        %2814 = vmatprep.subr.bf16.mxu0 %v1399
        %2815 = vmatpush1.bf16.msra.mxu0 %v1398
        %2816 = vmatprep.subr.bf16.mxu0 %v1525
        %2817 = vmatpush1.bf16.msra.mxu0 %v1524
        %2818 = vmatprep.subr.bf16.mxu0 %v1651
        %2819 = vmatpush1.bf16.msra.mxu0 %v1650
        %2820 = vmatprep.subr.bf16.mxu0 %v1777
        %2821 = vmatpush1.bf16.msra.mxu0 %v1776
        %2822 = vmatprep.subr.bf16.mxu0 %v1903
        %2823 = vmatpush1.bf16.msra.mxu0 %v1902
        %2824 = vmatprep.subr.bf16.mxu0 0
        %2825 = vmatpush1.bf16.msra.mxu0 0
        %2826 = vmatprep.subr.bf16.mxu0 0
        %2827 = vmatpush1.bf16.msra.mxu0 0
        %2828 = vmatprep.subr.bf16.mxu0 0
        %2829 = vmatpush1.bf16.msra.mxu0 0
        %2830 = vmatprep.subr.bf16.mxu0 0
        %2831 = vmatpush1.bf16.msra.mxu0 0
        %2832 = vmatprep.subr.bf16.mxu0 0
        %2833 = vmatpush1.bf16.msra.mxu0 0
        %2834 = vmatprep.subr.bf16.mxu0 0
        %2835 = vmatpush1.bf16.msra.mxu0 0
        %2836 = vmatprep.subr.bf16.mxu0 0
        %2837 = vmatpush1.bf16.msra.mxu0 0
        %2838 = vmatprep.subr.bf16.mxu0 0
        %2839 = vmatpush1.bf16.msra.mxu0 0
        %2840 = vmatprep.mubr.bf16.mxu0 0
        %2841 = vmatmul.mubr.bf16.gmra.mrb[0].mxu0 %v475
        %v2842 = vpop.f32.mrb[0].mxu0
        %v2843 = vadd.f32 0.0, %v2842
        %v2844 = vpop.f32.mrb[0].mxu0
        %v2845 = vadd.f32 0.0, %v2844
        %v2846 = vpop.f32.mrb[0].mxu0
        %v2847 = vpop.f32.mrb[0].mxu0
        %2848 = vdwg.mxu0
        %2849 = vmatprep.subr.bf16.mxu0 %v1023
        %2850 = vmatpush1.bf16.msra.mxu0 %v1022
        %2851 = vmatprep.subr.bf16.mxu0 %v1149
        %2852 = vmatpush1.bf16.msra.mxu0 %v1148
        %2853 = vmatprep.subr.bf16.mxu0 %v1275
        %2854 = vmatpush1.bf16.msra.mxu0 %v1274
        %2855 = vmatprep.subr.bf16.mxu0 %v1401
        %2856 = vmatpush1.bf16.msra.mxu0 %v1400
        %2857 = vmatprep.subr.bf16.mxu0 %v1527
        %2858 = vmatpush1.bf16.msra.mxu0 %v1526
        %2859 = vmatprep.subr.bf16.mxu0 %v1653
        %2860 = vmatpush1.bf16.msra.mxu0 %v1652
        %2861 = vmatprep.subr.bf16.mxu0 %v1779
        %2862 = vmatpush1.bf16.msra.mxu0 %v1778
        %2863 = vmatprep.subr.bf16.mxu0 %v1905
        %2864 = vmatpush1.bf16.msra.mxu0 %v1904
        %2865 = vmatprep.subr.bf16.mxu0 0
        %2866 = vmatpush1.bf16.msra.mxu0 0
        %2867 = vmatprep.subr.bf16.mxu0 0
        %2868 = vmatpush1.bf16.msra.mxu0 0
        %2869 = vmatprep.subr.bf16.mxu0 0
        %2870 = vmatpush1.bf16.msra.mxu0 0
        %2871 = vmatprep.subr.bf16.mxu0 0
        %2872 = vmatpush1.bf16.msra.mxu0 0
        %2873 = vmatprep.subr.bf16.mxu0 0
        %2874 = vmatpush1.bf16.msra.mxu0 0
        %2875 = vmatprep.subr.bf16.mxu0 0
        %2876 = vmatpush1.bf16.msra.mxu0 0
        %2877 = vmatprep.subr.bf16.mxu0 0
        %2878 = vmatpush1.bf16.msra.mxu0 0
        %2879 = vmatprep.subr.bf16.mxu0 0
        %2880 = vmatpush1.bf16.msra.mxu0 0
        %2881 = vmatprep.mubr.bf16.mxu0 0
        %2882 = vmatmul.mubr.bf16.gmra.mrb[0].mxu0 %v475
        %v2883 = vpop.f32.mrb[0].mxu0
        %v2884 = vadd.f32 0.0, %v2883
        %v2885 = vpop.f32.mrb[0].mxu0
        %v2886 = vadd.f32 0.0, %v2885
        %v2887 = vpop.f32.mrb[0].mxu0
        %v2888 = vpop.f32.mrb[0].mxu0
        %2889 = vdwg.mxu0
        %2890 = vmatprep.subr.bf16.mxu0 %v1025
        %2891 = vmatpush1.bf16.msra.mxu0 %v1024
        %2892 = vmatprep.subr.bf16.mxu0 %v1151
        %2893 = vmatpush1.bf16.msra.mxu0 %v1150
        %2894 = vmatprep.subr.bf16.mxu0 %v1277
        %2895 = vmatpush1.bf16.msra.mxu0 %v1276
        %2896 = vmatprep.subr.bf16.mxu0 %v1403
        %2897 = vmatpush1.bf16.msra.mxu0 %v1402
        %2898 = vmatprep.subr.bf16.mxu0 %v1529
        %2899 = vmatpush1.bf16.msra.mxu0 %v1528
        %2900 = vmatprep.subr.bf16.mxu0 %v1655
        %2901 = vmatpush1.bf16.msra.mxu0 %v1654
        %2902 = vmatprep.subr.bf16.mxu0 %v1781
        %2903 = vmatpush1.bf16.msra.mxu0 %v1780
        %2904 = vmatprep.subr.bf16.mxu0 %v1907
        %2905 = vmatpush1.bf16.msra.mxu0 %v1906
        %2906 = vmatprep.subr.bf16.mxu0 0
        %2907 = vmatpush1.bf16.msra.mxu0 0
        %2908 = vmatprep.subr.bf16.mxu0 0
        %2909 = vmatpush1.bf16.msra.mxu0 0
        %2910 = vmatprep.subr.bf16.mxu0 0
        %2911 = vmatpush1.bf16.msra.mxu0 0
        %2912 = vmatprep.subr.bf16.mxu0 0
        %2913 = vmatpush1.bf16.msra.mxu0 0
        %2914 = vmatprep.subr.bf16.mxu0 0
        %2915 = vmatpush1.bf16.msra.mxu0 0
        %2916 = vmatprep.subr.bf16.mxu0 0
        %2917 = vmatpush1.bf16.msra.mxu0 0
        %2918 = vmatprep.subr.bf16.mxu0 0
        %2919 = vmatpush1.bf16.msra.mxu0 0
        %2920 = vmatprep.subr.bf16.mxu0 0
        %2921 = vmatpush1.bf16.msra.mxu0 0
        %2922 = vmatprep.mubr.bf16.mxu0 0
        %2923 = vmatmul.mubr.bf16.gmra.mrb[0].mxu0 %v475
        %v2924 = vpop.f32.mrb[0].mxu0
        %v2925 = vadd.f32 0.0, %v2924
        %v2926 = vpop.f32.mrb[0].mxu0
        %v2927 = vadd.f32 0.0, %v2926
        %v2928 = vpop.f32.mrb[0].mxu0
        %v2929 = vpop.f32.mrb[0].mxu0
        %2930 = vdwg.mxu0
        %2931 = vmatprep.subr.bf16.mxu0 %v1027
        %2932 = vmatpush1.bf16.msra.mxu0 %v1026
        %2933 = vmatprep.subr.bf16.mxu0 %v1153
        %2934 = vmatpush1.bf16.msra.mxu0 %v1152
        %2935 = vmatprep.subr.bf16.mxu0 %v1279
        %2936 = vmatpush1.bf16.msra.mxu0 %v1278
        %2937 = vmatprep.subr.bf16.mxu0 %v1405
        %2938 = vmatpush1.bf16.msra.mxu0 %v1404
        %2939 = vmatprep.subr.bf16.mxu0 %v1531
        %2940 = vmatpush1.bf16.msra.mxu0 %v1530
        %2941 = vmatprep.subr.bf16.mxu0 %v1657
        %2942 = vmatpush1.bf16.msra.mxu0 %v1656
        %2943 = vmatprep.subr.bf16.mxu0 %v1783
        %2944 = vmatpush1.bf16.msra.mxu0 %v1782
        %2945 = vmatprep.subr.bf16.mxu0 %v1909
        %2946 = vmatpush1.bf16.msra.mxu0 %v1908
        %2947 = vmatprep.subr.bf16.mxu0 0
        %2948 = vmatpush1.bf16.msra.mxu0 0
        %2949 = vmatprep.subr.bf16.mxu0 0
        %2950 = vmatpush1.bf16.msra.mxu0 0
        %2951 = vmatprep.subr.bf16.mxu0 0
        %2952 = vmatpush1.bf16.msra.mxu0 0
        %2953 = vmatprep.subr.bf16.mxu0 0
        %2954 = vmatpush1.bf16.msra.mxu0 0
        %2955 = vmatprep.subr.bf16.mxu0 0
        %2956 = vmatpush1.bf16.msra.mxu0 0
        %2957 = vmatprep.subr.bf16.mxu0 0
        %2958 = vmatpush1.bf16.msra.mxu0 0
        %2959 = vmatprep.subr.bf16.mxu0 0
        %2960 = vmatpush1.bf16.msra.mxu0 0
        %2961 = vmatprep.subr.bf16.mxu0 0
        %2962 = vmatpush1.bf16.msra.mxu0 0
        %2963 = vmatprep.mubr.bf16.mxu0 0
        %2964 = vmatmul.mubr.bf16.gmra.mrb[0].mxu0 %v475
        %v2965 = vpop.f32.mrb[0].mxu0
        %v2966 = vadd.f32 0.0, %v2965
        %v2967 = vpop.f32.mrb[0].mxu0
        %v2968 = vadd.f32 0.0, %v2967
        %v2969 = vpop.f32.mrb[0].mxu0
        %v2970 = vpop.f32.mrb[0].mxu0
        %2971 = vdwg.mxu0
        %2972 = vmatprep.subr.bf16.mxu0 %v1029
        %2973 = vmatpush1.bf16.msra.mxu0 %v1028
        %2974 = vmatprep.subr.bf16.mxu0 %v1155
        %2975 = vmatpush1.bf16.msra.mxu0 %v1154
        %2976 = vmatprep.subr.bf16.mxu0 %v1281
        %2977 = vmatpush1.bf16.msra.mxu0 %v1280
        %2978 = vmatprep.subr.bf16.mxu0 %v1407
        %2979 = vmatpush1.bf16.msra.mxu0 %v1406
        %2980 = vmatprep.subr.bf16.mxu0 %v1533
        %2981 = vmatpush1.bf16.msra.mxu0 %v1532
        %2982 = vmatprep.subr.bf16.mxu0 %v1659
        %2983 = vmatpush1.bf16.msra.mxu0 %v1658
        %2984 = vmatprep.subr.bf16.mxu0 %v1785
        %2985 = vmatpush1.bf16.msra.mxu0 %v1784
        %2986 = vmatprep.subr.bf16.mxu0 %v1911
        %2987 = vmatpush1.bf16.msra.mxu0 %v1910
        %2988 = vmatprep.subr.bf16.mxu0 0
        %2989 = vmatpush1.bf16.msra.mxu0 0
        %2990 = vmatprep.subr.bf16.mxu0 0
        %2991 = vmatpush1.bf16.msra.mxu0 0
        %2992 = vmatprep.subr.bf16.mxu0 0
        %2993 = vmatpush1.bf16.msra.mxu0 0
        %2994 = vmatprep.subr.bf16.mxu0 0
        %2995 = vmatpush1.bf16.msra.mxu0 0
        %2996 = vmatprep.subr.bf16.mxu0 0
        %2997 = vmatpush1.bf16.msra.mxu0 0
        %2998 = vmatprep.subr.bf16.mxu0 0
        %2999 = vmatpush1.bf16.msra.mxu0 0
        %3000 = vmatprep.subr.bf16.mxu0 0
        %3001 = vmatpush1.bf16.msra.mxu0 0
        %3002 = vmatprep.subr.bf16.mxu0 0
        %3003 = vmatpush1.bf16.msra.mxu0 0
        %3004 = vmatprep.mubr.bf16.mxu0 0
        %3005 = vmatmul.mubr.bf16.gmra.mrb[0].mxu0 %v475
        %v3006 = vpop.f32.mrb[0].mxu0
        %v3007 = vadd.f32 0.0, %v3006
        %v3008 = vpop.f32.mrb[0].mxu0
        %v3009 = vadd.f32 0.0, %v3008
        %v3010 = vpop.f32.mrb[0].mxu0
        %v3011 = vpop.f32.mrb[0].mxu0
        %3012 = vdwg.mxu0
        %3013 = vmatprep.subr.bf16.mxu0 %v1031
        %3014 = vmatpush1.bf16.msra.mxu0 %v1030
        %3015 = vmatprep.subr.bf16.mxu0 %v1157
        %3016 = vmatpush1.bf16.msra.mxu0 %v1156
        %3017 = vmatprep.subr.bf16.mxu0 %v1283
        %3018 = vmatpush1.bf16.msra.mxu0 %v1282
        %3019 = vmatprep.subr.bf16.mxu0 %v1409
        %3020 = vmatpush1.bf16.msra.mxu0 %v1408
        %3021 = vmatprep.subr.bf16.mxu0 %v1535
        %3022 = vmatpush1.bf16.msra.mxu0 %v1534
        %3023 = vmatprep.subr.bf16.mxu0 %v1661
        %3024 = vmatpush1.bf16.msra.mxu0 %v1660
        %3025 = vmatprep.subr.bf16.mxu0 %v1787
        %3026 = vmatpush1.bf16.msra.mxu0 %v1786
        %3027 = vmatprep.subr.bf16.mxu0 %v1913
        %3028 = vmatpush1.bf16.msra.mxu0 %v1912
        %3029 = vmatprep.subr.bf16.mxu0 0
        %3030 = vmatpush1.bf16.msra.mxu0 0
        %3031 = vmatprep.subr.bf16.mxu0 0
        %3032 = vmatpush1.bf16.msra.mxu0 0
        %3033 = vmatprep.subr.bf16.mxu0 0
        %3034 = vmatpush1.bf16.msra.mxu0 0
        %3035 = vmatprep.subr.bf16.mxu0 0
        %3036 = vmatpush1.bf16.msra.mxu0 0
        %3037 = vmatprep.subr.bf16.mxu0 0
        %3038 = vmatpush1.bf16.msra.mxu0 0
        %3039 = vmatprep.subr.bf16.mxu0 0
        %3040 = vmatpush1.bf16.msra.mxu0 0
        %3041 = vmatprep.subr.bf16.mxu0 0
        %3042 = vmatpush1.bf16.msra.mxu0 0
        %3043 = vmatprep.subr.bf16.mxu0 0
        %3044 = vmatpush1.bf16.msra.mxu0 0
        %3045 = vmatprep.mubr.bf16.mxu0 0
        %3046 = vmatmul.mubr.bf16.gmra.mrb[0].mxu0 %v475
        %v3047 = vpop.f32.mrb[0].mxu0
        %v3048 = vadd.f32 0.0, %v3047
        %v3049 = vpop.f32.mrb[0].mxu0
        %v3050 = vadd.f32 0.0, %v3049
        %v3051 = vpop.f32.mrb[0].mxu0
        %v3052 = vpop.f32.mrb[0].mxu0
        %3053 = vdwg.mxu0
        %3054 = vmatprep.subr.bf16.mxu0 %v1033
        %3055 = vmatpush1.bf16.msra.mxu0 %v1032
        %3056 = vmatprep.subr.bf16.mxu0 %v1159
        %3057 = vmatpush1.bf16.msra.mxu0 %v1158
        %3058 = vmatprep.subr.bf16.mxu0 %v1285
        %3059 = vmatpush1.bf16.msra.mxu0 %v1284
        %3060 = vmatprep.subr.bf16.mxu0 %v1411
        %3061 = vmatpush1.bf16.msra.mxu0 %v1410
        %3062 = vmatprep.subr.bf16.mxu0 %v1537
        %3063 = vmatpush1.bf16.msra.mxu0 %v1536
        %3064 = vmatprep.subr.bf16.mxu0 %v1663
        %3065 = vmatpush1.bf16.msra.mxu0 %v1662
        %3066 = vmatprep.subr.bf16.mxu0 %v1789
        %3067 = vmatpush1.bf16.msra.mxu0 %v1788
        %3068 = vmatprep.subr.bf16.mxu0 %v1915
        %3069 = vmatpush1.bf16.msra.mxu0 %v1914
        %3070 = vmatprep.subr.bf16.mxu0 0
        %3071 = vmatpush1.bf16.msra.mxu0 0
        %3072 = vmatprep.subr.bf16.mxu0 0
        %3073 = vmatpush1.bf16.msra.mxu0 0
        %3074 = vmatprep.subr.bf16.mxu0 0
        %3075 = vmatpush1.bf16.msra.mxu0 0
        %3076 = vmatprep.subr.bf16.mxu0 0
        %3077 = vmatpush1.bf16.msra.mxu0 0
        %3078 = vmatprep.subr.bf16.mxu0 0
        %3079 = vmatpush1.bf16.msra.mxu0 0
        %3080 = vmatprep.subr.bf16.mxu0 0
        %3081 = vmatpush1.bf16.msra.mxu0 0
        %3082 = vmatprep.subr.bf16.mxu0 0
        %3083 = vmatpush1.bf16.msra.mxu0 0
        %3084 = vmatprep.subr.bf16.mxu0 0
        %3085 = vmatpush1.bf16.msra.mxu0 0
        %3086 = vmatprep.mubr.bf16.mxu0 0
        %3087 = vmatmul.mubr.bf16.gmra.mrb[0].mxu0 %v475
        %v3088 = vpop.f32.mrb[0].mxu0
        %v3089 = vadd.f32 0.0, %v3088
        %v3090 = vpop.f32.mrb[0].mxu0
        %v3091 = vadd.f32 0.0, %v3090
        %v3092 = vpop.f32.mrb[0].mxu0
        %v3093 = vpop.f32.mrb[0].mxu0
        %3094 = vdwg.mxu0
        %3095 = vmatprep.subr.bf16.mxu0 %v1035
        %3096 = vmatpush1.bf16.msra.mxu0 %v1034
        %3097 = vmatprep.subr.bf16.mxu0 %v1161
        %3098 = vmatpush1.bf16.msra.mxu0 %v1160
        %3099 = vmatprep.subr.bf16.mxu0 %v1287
        %3100 = vmatpush1.bf16.msra.mxu0 %v1286
        %3101 = vmatprep.subr.bf16.mxu0 %v1413
        %3102 = vmatpush1.bf16.msra.mxu0 %v1412
        %3103 = vmatprep.subr.bf16.mxu0 %v1539
        %3104 = vmatpush1.bf16.msra.mxu0 %v1538
        %3105 = vmatprep.subr.bf16.mxu0 %v1665
        %3106 = vmatpush1.bf16.msra.mxu0 %v1664
        %3107 = vmatprep.subr.bf16.mxu0 %v1791
        %3108 = vmatpush1.bf16.msra.mxu0 %v1790
        %3109 = vmatprep.subr.bf16.mxu0 %v1917
        %3110 = vmatpush1.bf16.msra.mxu0 %v1916
        %3111 = vmatprep.subr.bf16.mxu0 0
        %3112 = vmatpush1.bf16.msra.mxu0 0
        %3113 = vmatprep.subr.bf16.mxu0 0
        %3114 = vmatpush1.bf16.msra.mxu0 0
        %3115 = vmatprep.subr.bf16.mxu0 0
        %3116 = vmatpush1.bf16.msra.mxu0 0
        %3117 = vmatprep.subr.bf16.mxu0 0
        %3118 = vmatpush1.bf16.msra.mxu0 0
        %3119 = vmatprep.subr.bf16.mxu0 0
        %3120 = vmatpush1.bf16.msra.mxu0 0
        %3121 = vmatprep.subr.bf16.mxu0 0
        %3122 = vmatpush1.bf16.msra.mxu0 0
        %3123 = vmatprep.subr.bf16.mxu0 0
        %3124 = vmatpush1.bf16.msra.mxu0 0
        %3125 = vmatprep.subr.bf16.mxu0 0
        %3126 = vmatpush1.bf16.msra.mxu0 0
        %3127 = vmatprep.mubr.bf16.mxu0 0
        %3128 = vmatmul.mubr.bf16.gmra.mrb[0].mxu0 %v475
        %v3129 = vpop.f32.mrb[0].mxu0
        %v3130 = vadd.f32 0.0, %v3129
        %v3131 = vpop.f32.mrb[0].mxu0
        %v3132 = vadd.f32 0.0, %v3131
        %v3133 = vpop.f32.mrb[0].mxu0
        %v3134 = vpop.f32.mrb[0].mxu0
        %3135 = vdwg.mxu0
        %3136 = vmatprep.subr.bf16.mxu0 %v1037
        %3137 = vmatpush1.bf16.msra.mxu0 %v1036
        %3138 = vmatprep.subr.bf16.mxu0 %v1163
        %3139 = vmatpush1.bf16.msra.mxu0 %v1162
        %3140 = vmatprep.subr.bf16.mxu0 %v1289
        %3141 = vmatpush1.bf16.msra.mxu0 %v1288
        %3142 = vmatprep.subr.bf16.mxu0 %v1415
        %3143 = vmatpush1.bf16.msra.mxu0 %v1414
        %3144 = vmatprep.subr.bf16.mxu0 %v1541
        %3145 = vmatpush1.bf16.msra.mxu0 %v1540
        %3146 = vmatprep.subr.bf16.mxu0 %v1667
        %3147 = vmatpush1.bf16.msra.mxu0 %v1666
        %3148 = vmatprep.subr.bf16.mxu0 %v1793
        %3149 = vmatpush1.bf16.msra.mxu0 %v1792
        %3150 = vmatprep.subr.bf16.mxu0 %v1919
        %3151 = vmatpush1.bf16.msra.mxu0 %v1918
        %3152 = vmatprep.subr.bf16.mxu0 0
        %3153 = vmatpush1.bf16.msra.mxu0 0
        %3154 = vmatprep.subr.bf16.mxu0 0
        %3155 = vmatpush1.bf16.msra.mxu0 0
        %3156 = vmatprep.subr.bf16.mxu0 0
        %3157 = vmatpush1.bf16.msra.mxu0 0
        %3158 = vmatprep.subr.bf16.mxu0 0
        %3159 = vmatpush1.bf16.msra.mxu0 0
        %3160 = vmatprep.subr.bf16.mxu0 0
        %3161 = vmatpush1.bf16.msra.mxu0 0
        %3162 = vmatprep.subr.bf16.mxu0 0
        %3163 = vmatpush1.bf16.msra.mxu0 0
        %3164 = vmatprep.subr.bf16.mxu0 0
        %3165 = vmatpush1.bf16.msra.mxu0 0
        %3166 = vmatprep.subr.bf16.mxu0 0
        %3167 = vmatpush1.bf16.msra.mxu0 0
        %3168 = vmatprep.mubr.bf16.mxu0 0
        %3169 = vmatmul.mubr.bf16.gmra.mrb[0].mxu0 %v475
        %v3170 = vpop.f32.mrb[0].mxu0
        %v3171 = vadd.f32 0.0, %v3170
        %v3172 = vpop.f32.mrb[0].mxu0
        %v3173 = vadd.f32 0.0, %v3172
        %v3174 = vpop.f32.mrb[0].mxu0
        %v3175 = vpop.f32.mrb[0].mxu0
        %3176 = vdwg.mxu0
        %3177 = vmatprep.subr.bf16.mxu0 %v1039
        %3178 = vmatpush1.bf16.msra.mxu0 %v1038
        %3179 = vmatprep.subr.bf16.mxu0 %v1165
        %3180 = vmatpush1.bf16.msra.mxu0 %v1164
        %3181 = vmatprep.subr.bf16.mxu0 %v1291
        %3182 = vmatpush1.bf16.msra.mxu0 %v1290
        %3183 = vmatprep.subr.bf16.mxu0 %v1417
        %3184 = vmatpush1.bf16.msra.mxu0 %v1416
        %3185 = vmatprep.subr.bf16.mxu0 %v1543
        %3186 = vmatpush1.bf16.msra.mxu0 %v1542
        %3187 = vmatprep.subr.bf16.mxu0 %v1669
        %3188 = vmatpush1.bf16.msra.mxu0 %v1668
        %3189 = vmatprep.subr.bf16.mxu0 %v1795
        %3190 = vmatpush1.bf16.msra.mxu0 %v1794
        %3191 = vmatprep.subr.bf16.mxu0 %v1921
        %3192 = vmatpush1.bf16.msra.mxu0 %v1920
        %3193 = vmatprep.subr.bf16.mxu0 0
        %3194 = vmatpush1.bf16.msra.mxu0 0
        %3195 = vmatprep.subr.bf16.mxu0 0
        %3196 = vmatpush1.bf16.msra.mxu0 0
        %3197 = vmatprep.subr.bf16.mxu0 0
        %3198 = vmatpush1.bf16.msra.mxu0 0
        %3199 = vmatprep.subr.bf16.mxu0 0
        %3200 = vmatpush1.bf16.msra.mxu0 0
        %3201 = vmatprep.subr.bf16.mxu0 0
        %3202 = vmatpush1.bf16.msra.mxu0 0
        %3203 = vmatprep.subr.bf16.mxu0 0
        %3204 = vmatpush1.bf16.msra.mxu0 0
        %3205 = vmatprep.subr.bf16.mxu0 0
        %3206 = vmatpush1.bf16.msra.mxu0 0
        %3207 = vmatprep.subr.bf16.mxu0 0
        %3208 = vmatpush1.bf16.msra.mxu0 0
        %3209 = vmatprep.mubr.bf16.mxu0 0
        %3210 = vmatmul.mubr.bf16.gmra.mrb[0].mxu0 %v475
        %v3211 = vpop.f32.mrb[0].mxu0
        %v3212 = vadd.f32 0.0, %v3211
        %v3213 = vpop.f32.mrb[0].mxu0
        %v3214 = vadd.f32 0.0, %v3213
        %v3215 = vpop.f32.mrb[0].mxu0
        %v3216 = vpop.f32.mrb[0].mxu0
        %3217 = vdwg.mxu0
        %3218 = vmatprep.subr.bf16.mxu0 %v1041
        %3219 = vmatpush1.bf16.msra.mxu0 %v1040
        %3220 = vmatprep.subr.bf16.mxu0 %v1167
        %3221 = vmatpush1.bf16.msra.mxu0 %v1166
        %3222 = vmatprep.subr.bf16.mxu0 %v1293
        %3223 = vmatpush1.bf16.msra.mxu0 %v1292
        %3224 = vmatprep.subr.bf16.mxu0 %v1419
        %3225 = vmatpush1.bf16.msra.mxu0 %v1418
        %3226 = vmatprep.subr.bf16.mxu0 %v1545
        %3227 = vmatpush1.bf16.msra.mxu0 %v1544
        %3228 = vmatprep.subr.bf16.mxu0 %v1671
        %3229 = vmatpush1.bf16.msra.mxu0 %v1670
        %3230 = vmatprep.subr.bf16.mxu0 %v1797
        %3231 = vmatpush1.bf16.msra.mxu0 %v1796
        %3232 = vmatprep.subr.bf16.mxu0 %v1923
        %3233 = vmatpush1.bf16.msra.mxu0 %v1922
        %3234 = vmatprep.subr.bf16.mxu0 0
        %3235 = vmatpush1.bf16.msra.mxu0 0
        %3236 = vmatprep.subr.bf16.mxu0 0
        %3237 = vmatpush1.bf16.msra.mxu0 0
        %3238 = vmatprep.subr.bf16.mxu0 0
        %3239 = vmatpush1.bf16.msra.mxu0 0
        %3240 = vmatprep.subr.bf16.mxu0 0
        %3241 = vmatpush1.bf16.msra.mxu0 0
        %3242 = vmatprep.subr.bf16.mxu0 0
        %3243 = vmatpush1.bf16.msra.mxu0 0
        %3244 = vmatprep.subr.bf16.mxu0 0
        %3245 = vmatpush1.bf16.msra.mxu0 0
        %3246 = vmatprep.subr.bf16.mxu0 0
        %3247 = vmatpush1.bf16.msra.mxu0 0
        %3248 = vmatprep.subr.bf16.mxu0 0
        %3249 = vmatpush1.bf16.msra.mxu0 0
        %3250 = vmatprep.mubr.bf16.mxu0 0
        %3251 = vmatmul.mubr.bf16.gmra.mrb[0].mxu0 %v475
        %v3252 = vpop.f32.mrb[0].mxu0
        %v3253 = vadd.f32 0.0, %v3252
        %v3254 = vpop.f32.mrb[0].mxu0
        %v3255 = vadd.f32 0.0, %v3254
        %v3256 = vpop.f32.mrb[0].mxu0
        %v3257 = vpop.f32.mrb[0].mxu0
        %3258 = vdwg.mxu0
        %3259 = vmatprep.subr.bf16.mxu0 %v1043
        %3260 = vmatpush1.bf16.msra.mxu0 %v1042
        %3261 = vmatprep.subr.bf16.mxu0 %v1169
        %3262 = vmatpush1.bf16.msra.mxu0 %v1168
        %3263 = vmatprep.subr.bf16.mxu0 %v1295
        %3264 = vmatpush1.bf16.msra.mxu0 %v1294
        %3265 = vmatprep.subr.bf16.mxu0 %v1421
        %3266 = vmatpush1.bf16.msra.mxu0 %v1420
        %3267 = vmatprep.subr.bf16.mxu0 %v1547
        %3268 = vmatpush1.bf16.msra.mxu0 %v1546
        %3269 = vmatprep.subr.bf16.mxu0 %v1673
        %3270 = vmatpush1.bf16.msra.mxu0 %v1672
        %3271 = vmatprep.subr.bf16.mxu0 %v1799
        %3272 = vmatpush1.bf16.msra.mxu0 %v1798
        %3273 = vmatprep.subr.bf16.mxu0 %v1925
        %3274 = vmatpush1.bf16.msra.mxu0 %v1924
        %3275 = vmatprep.subr.bf16.mxu0 0
        %3276 = vmatpush1.bf16.msra.mxu0 0
        %3277 = vmatprep.subr.bf16.mxu0 0
        %3278 = vmatpush1.bf16.msra.mxu0 0
        %3279 = vmatprep.subr.bf16.mxu0 0
        %3280 = vmatpush1.bf16.msra.mxu0 0
        %3281 = vmatprep.subr.bf16.mxu0 0
        %3282 = vmatpush1.bf16.msra.mxu0 0
        %3283 = vmatprep.subr.bf16.mxu0 0
        %3284 = vmatpush1.bf16.msra.mxu0 0
        %3285 = vmatprep.subr.bf16.mxu0 0
        %3286 = vmatpush1.bf16.msra.mxu0 0
        %3287 = vmatprep.subr.bf16.mxu0 0
        %3288 = vmatpush1.bf16.msra.mxu0 0
        %3289 = vmatprep.subr.bf16.mxu0 0
        %3290 = vmatpush1.bf16.msra.mxu0 0
        %3291 = vmatprep.mubr.bf16.mxu0 0
        %3292 = vmatmul.mubr.bf16.gmra.mrb[0].mxu0 %v475
        %v3293 = vpop.f32.mrb[0].mxu0
        %v3294 = vadd.f32 0.0, %v3293
        %v3295 = vpop.f32.mrb[0].mxu0
        %v3296 = vadd.f32 0.0, %v3295
        %v3297 = vpop.f32.mrb[0].mxu0
        %v3298 = vpop.f32.mrb[0].mxu0
        %3299 = vdwg.mxu0
        %3300 = vmatprep.subr.bf16.mxu0 %v1045
        %3301 = vmatpush1.bf16.msra.mxu0 %v1044
        %3302 = vmatprep.subr.bf16.mxu0 %v1171
        %3303 = vmatpush1.bf16.msra.mxu0 %v1170
        %3304 = vmatprep.subr.bf16.mxu0 %v1297
        %3305 = vmatpush1.bf16.msra.mxu0 %v1296
        %3306 = vmatprep.subr.bf16.mxu0 %v1423
        %3307 = vmatpush1.bf16.msra.mxu0 %v1422
        %3308 = vmatprep.subr.bf16.mxu0 %v1549
        %3309 = vmatpush1.bf16.msra.mxu0 %v1548
        %3310 = vmatprep.subr.bf16.mxu0 %v1675
        %3311 = vmatpush1.bf16.msra.mxu0 %v1674
        %3312 = vmatprep.subr.bf16.mxu0 %v1801
        %3313 = vmatpush1.bf16.msra.mxu0 %v1800
        %3314 = vmatprep.subr.bf16.mxu0 %v1927
        %3315 = vmatpush1.bf16.msra.mxu0 %v1926
        %3316 = vmatprep.subr.bf16.mxu0 0
        %3317 = vmatpush1.bf16.msra.mxu0 0
        %3318 = vmatprep.subr.bf16.mxu0 0
        %3319 = vmatpush1.bf16.msra.mxu0 0
        %3320 = vmatprep.subr.bf16.mxu0 0
        %3321 = vmatpush1.bf16.msra.mxu0 0
        %3322 = vmatprep.subr.bf16.mxu0 0
        %3323 = vmatpush1.bf16.msra.mxu0 0
        %3324 = vmatprep.subr.bf16.mxu0 0
        %3325 = vmatpush1.bf16.msra.mxu0 0
        %3326 = vmatprep.subr.bf16.mxu0 0
        %3327 = vmatpush1.bf16.msra.mxu0 0
        %3328 = vmatprep.subr.bf16.mxu0 0
        %3329 = vmatpush1.bf16.msra.mxu0 0
        %3330 = vmatprep.subr.bf16.mxu0 0
        %3331 = vmatpush1.bf16.msra.mxu0 0
        %3332 = vmatprep.mubr.bf16.mxu0 0
        %3333 = vmatmul.mubr.bf16.gmra.mrb[0].mxu0 %v475
        %v3334 = vpop.f32.mrb[0].mxu0
        %v3335 = vadd.f32 0.0, %v3334
        %v3336 = vpop.f32.mrb[0].mxu0
        %v3337 = vadd.f32 0.0, %v3336
        %v3338 = vpop.f32.mrb[0].mxu0
        %v3339 = vpop.f32.mrb[0].mxu0
        %3340 = vdwg.mxu0
        %3341 = vmatprep.subr.bf16.mxu0 %v1047
        %3342 = vmatpush1.bf16.msra.mxu0 %v1046
        %3343 = vmatprep.subr.bf16.mxu0 %v1173
        %3344 = vmatpush1.bf16.msra.mxu0 %v1172
        %3345 = vmatprep.subr.bf16.mxu0 %v1299
        %3346 = vmatpush1.bf16.msra.mxu0 %v1298
        %3347 = vmatprep.subr.bf16.mxu0 %v1425
        %3348 = vmatpush1.bf16.msra.mxu0 %v1424
        %3349 = vmatprep.subr.bf16.mxu0 %v1551
        %3350 = vmatpush1.bf16.msra.mxu0 %v1550
        %3351 = vmatprep.subr.bf16.mxu0 %v1677
        %3352 = vmatpush1.bf16.msra.mxu0 %v1676
        %3353 = vmatprep.subr.bf16.mxu0 %v1803
        %3354 = vmatpush1.bf16.msra.mxu0 %v1802
        %3355 = vmatprep.subr.bf16.mxu0 %v1929
        %3356 = vmatpush1.bf16.msra.mxu0 %v1928
        %3357 = vmatprep.subr.bf16.mxu0 0
        %3358 = vmatpush1.bf16.msra.mxu0 0
        %3359 = vmatprep.subr.bf16.mxu0 0
        %3360 = vmatpush1.bf16.msra.mxu0 0
        %3361 = vmatprep.subr.bf16.mxu0 0
        %3362 = vmatpush1.bf16.msra.mxu0 0
        %3363 = vmatprep.subr.bf16.mxu0 0
        %3364 = vmatpush1.bf16.msra.mxu0 0
        %3365 = vmatprep.subr.bf16.mxu0 0
        %3366 = vmatpush1.bf16.msra.mxu0 0
        %3367 = vmatprep.subr.bf16.mxu0 0
        %3368 = vmatpush1.bf16.msra.mxu0 0
        %3369 = vmatprep.subr.bf16.mxu0 0
        %3370 = vmatpush1.bf16.msra.mxu0 0
        %3371 = vmatprep.subr.bf16.mxu0 0
        %3372 = vmatpush1.bf16.msra.mxu0 0
        %3373 = vmatprep.mubr.bf16.mxu0 0
        %3374 = vmatmul.mubr.bf16.gmra.mrb[0].mxu0 %v475
        %v3375 = vpop.f32.mrb[0].mxu0
        %v3376 = vadd.f32 0.0, %v3375
        %v3377 = vpop.f32.mrb[0].mxu0
        %v3378 = vadd.f32 0.0, %v3377
        %v3379 = vpop.f32.mrb[0].mxu0
        %v3380 = vpop.f32.mrb[0].mxu0
        %3381 = vdwg.mxu0
        %3382 = vmatprep.subr.bf16.mxu0 %v1049
        %3383 = vmatpush1.bf16.msra.mxu0 %v1048
        %3384 = vmatprep.subr.bf16.mxu0 %v1175
        %3385 = vmatpush1.bf16.msra.mxu0 %v1174
        %3386 = vmatprep.subr.bf16.mxu0 %v1301
        %3387 = vmatpush1.bf16.msra.mxu0 %v1300
        %3388 = vmatprep.subr.bf16.mxu0 %v1427
        %3389 = vmatpush1.bf16.msra.mxu0 %v1426
        %3390 = vmatprep.subr.bf16.mxu0 %v1553
        %3391 = vmatpush1.bf16.msra.mxu0 %v1552
        %3392 = vmatprep.subr.bf16.mxu0 %v1679
        %3393 = vmatpush1.bf16.msra.mxu0 %v1678
        %3394 = vmatprep.subr.bf16.mxu0 %v1805
        %3395 = vmatpush1.bf16.msra.mxu0 %v1804
        %3396 = vmatprep.subr.bf16.mxu0 %v1931
        %3397 = vmatpush1.bf16.msra.mxu0 %v1930
        %3398 = vmatprep.subr.bf16.mxu0 0
        %3399 = vmatpush1.bf16.msra.mxu0 0
        %3400 = vmatprep.subr.bf16.mxu0 0
        %3401 = vmatpush1.bf16.msra.mxu0 0
        %3402 = vmatprep.subr.bf16.mxu0 0
        %3403 = vmatpush1.bf16.msra.mxu0 0
        %3404 = vmatprep.subr.bf16.mxu0 0
        %3405 = vmatpush1.bf16.msra.mxu0 0
        %3406 = vmatprep.subr.bf16.mxu0 0
        %3407 = vmatpush1.bf16.msra.mxu0 0
        %3408 = vmatprep.subr.bf16.mxu0 0
        %3409 = vmatpush1.bf16.msra.mxu0 0
        %3410 = vmatprep.subr.bf16.mxu0 0
        %3411 = vmatpush1.bf16.msra.mxu0 0
        %3412 = vmatprep.subr.bf16.mxu0 0
        %3413 = vmatpush1.bf16.msra.mxu0 0
        %3414 = vmatprep.mubr.bf16.mxu0 0
        %3415 = vmatmul.mubr.bf16.gmra.mrb[0].mxu0 %v475
        %v3416 = vpop.f32.mrb[0].mxu0
        %v3417 = vadd.f32 0.0, %v3416
        %v3418 = vpop.f32.mrb[0].mxu0
        %v3419 = vadd.f32 0.0, %v3418
        %v3420 = vpop.f32.mrb[0].mxu0
        %v3421 = vpop.f32.mrb[0].mxu0
        %3422 = vdwg.mxu0
        %3423 = vmatprep.subr.bf16.mxu0 %v1051
        %3424 = vmatpush1.bf16.msra.mxu0 %v1050
        %3425 = vmatprep.subr.bf16.mxu0 %v1177
        %3426 = vmatpush1.bf16.msra.mxu0 %v1176
        %3427 = vmatprep.subr.bf16.mxu0 %v1303
        %3428 = vmatpush1.bf16.msra.mxu0 %v1302
        %3429 = vmatprep.subr.bf16.mxu0 %v1429
        %3430 = vmatpush1.bf16.msra.mxu0 %v1428
        %3431 = vmatprep.subr.bf16.mxu0 %v1555
        %3432 = vmatpush1.bf16.msra.mxu0 %v1554
        %3433 = vmatprep.subr.bf16.mxu0 %v1681
        %3434 = vmatpush1.bf16.msra.mxu0 %v1680
        %3435 = vmatprep.subr.bf16.mxu0 %v1807
        %3436 = vmatpush1.bf16.msra.mxu0 %v1806
        %3437 = vmatprep.subr.bf16.mxu0 %v1933
        %3438 = vmatpush1.bf16.msra.mxu0 %v1932
        %3439 = vmatprep.subr.bf16.mxu0 0
        %3440 = vmatpush1.bf16.msra.mxu0 0
        %3441 = vmatprep.subr.bf16.mxu0 0
        %3442 = vmatpush1.bf16.msra.mxu0 0
        %3443 = vmatprep.subr.bf16.mxu0 0
        %3444 = vmatpush1.bf16.msra.mxu0 0
        %3445 = vmatprep.subr.bf16.mxu0 0
        %3446 = vmatpush1.bf16.msra.mxu0 0
        %3447 = vmatprep.subr.bf16.mxu0 0
        %3448 = vmatpush1.bf16.msra.mxu0 0
        %3449 = vmatprep.subr.bf16.mxu0 0
        %3450 = vmatpush1.bf16.msra.mxu0 0
        %3451 = vmatprep.subr.bf16.mxu0 0
        %3452 = vmatpush1.bf16.msra.mxu0 0
        %3453 = vmatprep.subr.bf16.mxu0 0
        %3454 = vmatpush1.bf16.msra.mxu0 0
        %3455 = vmatprep.mubr.bf16.mxu0 0
        %3456 = vmatmul.mubr.bf16.gmra.mrb[0].mxu0 %v475
        %v3457 = vpop.f32.mrb[0].mxu0
        %v3458 = vadd.f32 0.0, %v3457
        %v3459 = vpop.f32.mrb[0].mxu0
        %v3460 = vadd.f32 0.0, %v3459
        %v3461 = vpop.f32.mrb[0].mxu0
        %v3462 = vpop.f32.mrb[0].mxu0
        %3463 = vdwg.mxu0
        %3464 = vmatprep.subr.bf16.mxu0 %v1053
        %3465 = vmatpush1.bf16.msra.mxu0 %v1052
        %3466 = vmatprep.subr.bf16.mxu0 %v1179
        %3467 = vmatpush1.bf16.msra.mxu0 %v1178
        %3468 = vmatprep.subr.bf16.mxu0 %v1305
        %3469 = vmatpush1.bf16.msra.mxu0 %v1304
        %3470 = vmatprep.subr.bf16.mxu0 %v1431
        %3471 = vmatpush1.bf16.msra.mxu0 %v1430
        %3472 = vmatprep.subr.bf16.mxu0 %v1557
        %3473 = vmatpush1.bf16.msra.mxu0 %v1556
        %3474 = vmatprep.subr.bf16.mxu0 %v1683
        %3475 = vmatpush1.bf16.msra.mxu0 %v1682
        %3476 = vmatprep.subr.bf16.mxu0 %v1809
        %3477 = vmatpush1.bf16.msra.mxu0 %v1808
        %3478 = vmatprep.subr.bf16.mxu0 %v1935
        %3479 = vmatpush1.bf16.msra.mxu0 %v1934
        %3480 = vmatprep.subr.bf16.mxu0 0
        %3481 = vmatpush1.bf16.msra.mxu0 0
        %3482 = vmatprep.subr.bf16.mxu0 0
        %3483 = vmatpush1.bf16.msra.mxu0 0
        %3484 = vmatprep.subr.bf16.mxu0 0
        %3485 = vmatpush1.bf16.msra.mxu0 0
        %3486 = vmatprep.subr.bf16.mxu0 0
        %3487 = vmatpush1.bf16.msra.mxu0 0
        %3488 = vmatprep.subr.bf16.mxu0 0
        %3489 = vmatpush1.bf16.msra.mxu0 0
        %3490 = vmatprep.subr.bf16.mxu0 0
        %3491 = vmatpush1.bf16.msra.mxu0 0
        %3492 = vmatprep.subr.bf16.mxu0 0
        %3493 = vmatpush1.bf16.msra.mxu0 0
        %3494 = vmatprep.subr.bf16.mxu0 0
        %3495 = vmatpush1.bf16.msra.mxu0 0
        %3496 = vmatprep.mubr.bf16.mxu0 0
        %3497 = vmatmul.mubr.bf16.gmra.mrb[0].mxu0 %v475
        %v3498 = vpop.f32.mrb[0].mxu0
        %v3499 = vadd.f32 0.0, %v3498
        %v3500 = vpop.f32.mrb[0].mxu0
        %v3501 = vadd.f32 0.0, %v3500
        %v3502 = vpop.f32.mrb[0].mxu0
        %v3503 = vpop.f32.mrb[0].mxu0
        %3504 = vdwg.mxu0
        %3505 = vmatprep.subr.bf16.mxu0 %v1055
        %3506 = vmatpush1.bf16.msra.mxu0 %v1054
        %3507 = vmatprep.subr.bf16.mxu0 %v1181
        %3508 = vmatpush1.bf16.msra.mxu0 %v1180
        %3509 = vmatprep.subr.bf16.mxu0 %v1307
        %3510 = vmatpush1.bf16.msra.mxu0 %v1306
        %3511 = vmatprep.subr.bf16.mxu0 %v1433
        %3512 = vmatpush1.bf16.msra.mxu0 %v1432
        %3513 = vmatprep.subr.bf16.mxu0 %v1559
        %3514 = vmatpush1.bf16.msra.mxu0 %v1558
        %3515 = vmatprep.subr.bf16.mxu0 %v1685
        %3516 = vmatpush1.bf16.msra.mxu0 %v1684
        %3517 = vmatprep.subr.bf16.mxu0 %v1811
        %3518 = vmatpush1.bf16.msra.mxu0 %v1810
        %3519 = vmatprep.subr.bf16.mxu0 %v1937
        %3520 = vmatpush1.bf16.msra.mxu0 %v1936
        %3521 = vmatprep.subr.bf16.mxu0 0
        %3522 = vmatpush1.bf16.msra.mxu0 0
        %3523 = vmatprep.subr.bf16.mxu0 0
        %3524 = vmatpush1.bf16.msra.mxu0 0
        %3525 = vmatprep.subr.bf16.mxu0 0
        %3526 = vmatpush1.bf16.msra.mxu0 0
        %3527 = vmatprep.subr.bf16.mxu0 0
        %3528 = vmatpush1.bf16.msra.mxu0 0
        %3529 = vmatprep.subr.bf16.mxu0 0
        %3530 = vmatpush1.bf16.msra.mxu0 0
        %3531 = vmatprep.subr.bf16.mxu0 0
        %3532 = vmatpush1.bf16.msra.mxu0 0
        %3533 = vmatprep.subr.bf16.mxu0 0
        %3534 = vmatpush1.bf16.msra.mxu0 0
        %3535 = vmatprep.subr.bf16.mxu0 0
        %3536 = vmatpush1.bf16.msra.mxu0 0
        %3537 = vmatprep.mubr.bf16.mxu0 0
        %3538 = vmatmul.mubr.bf16.gmra.mrb[0].mxu0 %v475
        %v3539 = vpop.f32.mrb[0].mxu0
        %v3540 = vadd.f32 0.0, %v3539
        %v3541 = vpop.f32.mrb[0].mxu0
        %v3542 = vadd.f32 0.0, %v3541
        %v3543 = vpop.f32.mrb[0].mxu0
        %v3544 = vpop.f32.mrb[0].mxu0
        %3545 = vdwg.mxu0
        %3546 = vmatprep.subr.bf16.mxu0 %v1057
        %3547 = vmatpush1.bf16.msra.mxu0 %v1056
        %3548 = vmatprep.subr.bf16.mxu0 %v1183
        %3549 = vmatpush1.bf16.msra.mxu0 %v1182
        %3550 = vmatprep.subr.bf16.mxu0 %v1309
        %3551 = vmatpush1.bf16.msra.mxu0 %v1308
        %3552 = vmatprep.subr.bf16.mxu0 %v1435
        %3553 = vmatpush1.bf16.msra.mxu0 %v1434
        %3554 = vmatprep.subr.bf16.mxu0 %v1561
        %3555 = vmatpush1.bf16.msra.mxu0 %v1560
        %3556 = vmatprep.subr.bf16.mxu0 %v1687
        %3557 = vmatpush1.bf16.msra.mxu0 %v1686
        %3558 = vmatprep.subr.bf16.mxu0 %v1813
        %3559 = vmatpush1.bf16.msra.mxu0 %v1812
        %3560 = vmatprep.subr.bf16.mxu0 %v1939
        %3561 = vmatpush1.bf16.msra.mxu0 %v1938
        %3562 = vmatprep.subr.bf16.mxu0 0
        %3563 = vmatpush1.bf16.msra.mxu0 0
        %3564 = vmatprep.subr.bf16.mxu0 0
        %3565 = vmatpush1.bf16.msra.mxu0 0
        %3566 = vmatprep.subr.bf16.mxu0 0
        %3567 = vmatpush1.bf16.msra.mxu0 0
        %3568 = vmatprep.subr.bf16.mxu0 0
        %3569 = vmatpush1.bf16.msra.mxu0 0
        %3570 = vmatprep.subr.bf16.mxu0 0
        %3571 = vmatpush1.bf16.msra.mxu0 0
        %3572 = vmatprep.subr.bf16.mxu0 0
        %3573 = vmatpush1.bf16.msra.mxu0 0
        %3574 = vmatprep.subr.bf16.mxu0 0
        %3575 = vmatpush1.bf16.msra.mxu0 0
        %3576 = vmatprep.subr.bf16.mxu0 0
        %3577 = vmatpush1.bf16.msra.mxu0 0
        %3578 = vmatprep.mubr.bf16.mxu0 0
        %3579 = vmatmul.mubr.bf16.gmra.mrb[0].mxu0 %v475
        %v3580 = vpop.f32.mrb[0].mxu0
        %v3581 = vadd.f32 0.0, %v3580
        %v3582 = vpop.f32.mrb[0].mxu0
        %v3583 = vadd.f32 0.0, %v3582
        %v3584 = vpop.f32.mrb[0].mxu0
        %v3585 = vpop.f32.mrb[0].mxu0
        %3586 = vdwg.mxu0
        %3587 = vmatprep.subr.bf16.mxu0 %v1059
        %3588 = vmatpush1.bf16.msra.mxu0 %v1058
        %3589 = vmatprep.subr.bf16.mxu0 %v1185
        %3590 = vmatpush1.bf16.msra.mxu0 %v1184
        %3591 = vmatprep.subr.bf16.mxu0 %v1311
        %3592 = vmatpush1.bf16.msra.mxu0 %v1310
        %3593 = vmatprep.subr.bf16.mxu0 %v1437
        %3594 = vmatpush1.bf16.msra.mxu0 %v1436
        %3595 = vmatprep.subr.bf16.mxu0 %v1563
        %3596 = vmatpush1.bf16.msra.mxu0 %v1562
        %3597 = vmatprep.subr.bf16.mxu0 %v1689
        %3598 = vmatpush1.bf16.msra.mxu0 %v1688
        %3599 = vmatprep.subr.bf16.mxu0 %v1815
        %3600 = vmatpush1.bf16.msra.mxu0 %v1814
        %3601 = vmatprep.subr.bf16.mxu0 %v1941
        %3602 = vmatpush1.bf16.msra.mxu0 %v1940
        %3603 = vmatprep.subr.bf16.mxu0 0
        %3604 = vmatpush1.bf16.msra.mxu0 0
        %3605 = vmatprep.subr.bf16.mxu0 0
        %3606 = vmatpush1.bf16.msra.mxu0 0
        %3607 = vmatprep.subr.bf16.mxu0 0
        %3608 = vmatpush1.bf16.msra.mxu0 0
        %3609 = vmatprep.subr.bf16.mxu0 0
        %3610 = vmatpush1.bf16.msra.mxu0 0
        %3611 = vmatprep.subr.bf16.mxu0 0
        %3612 = vmatpush1.bf16.msra.mxu0 0
        %3613 = vmatprep.subr.bf16.mxu0 0
        %3614 = vmatpush1.bf16.msra.mxu0 0
        %3615 = vmatprep.subr.bf16.mxu0 0
        %3616 = vmatpush1.bf16.msra.mxu0 0
        %3617 = vmatprep.subr.bf16.mxu0 0
        %3618 = vmatpush1.bf16.msra.mxu0 0
        %3619 = vmatprep.mubr.bf16.mxu0 0
        %3620 = vmatmul.mubr.bf16.gmra.mrb[0].mxu0 %v475
        %v3621 = vpop.f32.mrb[0].mxu0
        %v3622 = vadd.f32 0.0, %v3621
        %v3623 = vpop.f32.mrb[0].mxu0
        %v3624 = vadd.f32 0.0, %v3623
        %v3625 = vpop.f32.mrb[0].mxu0
        %v3626 = vpop.f32.mrb[0].mxu0
        %3627 = vdwg.mxu0
        %3628 = vmatprep.subr.bf16.mxu0 %v1061
        %3629 = vmatpush1.bf16.msra.mxu0 %v1060
        %3630 = vmatprep.subr.bf16.mxu0 %v1187
        %3631 = vmatpush1.bf16.msra.mxu0 %v1186
        %3632 = vmatprep.subr.bf16.mxu0 %v1313
        %3633 = vmatpush1.bf16.msra.mxu0 %v1312
        %3634 = vmatprep.subr.bf16.mxu0 %v1439
        %3635 = vmatpush1.bf16.msra.mxu0 %v1438
        %3636 = vmatprep.subr.bf16.mxu0 %v1565
        %3637 = vmatpush1.bf16.msra.mxu0 %v1564
        %3638 = vmatprep.subr.bf16.mxu0 %v1691
        %3639 = vmatpush1.bf16.msra.mxu0 %v1690
        %3640 = vmatprep.subr.bf16.mxu0 %v1817
        %3641 = vmatpush1.bf16.msra.mxu0 %v1816
        %3642 = vmatprep.subr.bf16.mxu0 %v1943
        %3643 = vmatpush1.bf16.msra.mxu0 %v1942
        %3644 = vmatprep.subr.bf16.mxu0 0
        %3645 = vmatpush1.bf16.msra.mxu0 0
        %3646 = vmatprep.subr.bf16.mxu0 0
        %3647 = vmatpush1.bf16.msra.mxu0 0
        %3648 = vmatprep.subr.bf16.mxu0 0
        %3649 = vmatpush1.bf16.msra.mxu0 0
        %3650 = vmatprep.subr.bf16.mxu0 0
        %3651 = vmatpush1.bf16.msra.mxu0 0
        %3652 = vmatprep.subr.bf16.mxu0 0
        %3653 = vmatpush1.bf16.msra.mxu0 0
        %3654 = vmatprep.subr.bf16.mxu0 0
        %3655 = vmatpush1.bf16.msra.mxu0 0
        %3656 = vmatprep.subr.bf16.mxu0 0
        %3657 = vmatpush1.bf16.msra.mxu0 0
        %3658 = vmatprep.subr.bf16.mxu0 0
        %3659 = vmatpush1.bf16.msra.mxu0 0
        %3660 = vmatprep.mubr.bf16.mxu0 0
        %3661 = vmatmul.mubr.bf16.gmra.mrb[0].mxu0 %v475
        %v3662 = vpop.f32.mrb[0].mxu0
        %v3663 = vadd.f32 0.0, %v3662
        %v3664 = vpop.f32.mrb[0].mxu0
        %v3665 = vadd.f32 0.0, %v3664
        %v3666 = vpop.f32.mrb[0].mxu0
        %v3667 = vpop.f32.mrb[0].mxu0
        %3668 = vdwg.mxu0
        %3669 = vmatprep.subr.bf16.mxu0 %v1063
        %3670 = vmatpush1.bf16.msra.mxu0 %v1062
        %3671 = vmatprep.subr.bf16.mxu0 %v1189
        %3672 = vmatpush1.bf16.msra.mxu0 %v1188
        %3673 = vmatprep.subr.bf16.mxu0 %v1315
        %3674 = vmatpush1.bf16.msra.mxu0 %v1314
        %3675 = vmatprep.subr.bf16.mxu0 %v1441
        %3676 = vmatpush1.bf16.msra.mxu0 %v1440
        %3677 = vmatprep.subr.bf16.mxu0 %v1567
        %3678 = vmatpush1.bf16.msra.mxu0 %v1566
        %3679 = vmatprep.subr.bf16.mxu0 %v1693
        %3680 = vmatpush1.bf16.msra.mxu0 %v1692
        %3681 = vmatprep.subr.bf16.mxu0 %v1819
        %3682 = vmatpush1.bf16.msra.mxu0 %v1818
        %3683 = vmatprep.subr.bf16.mxu0 %v1945
        %3684 = vmatpush1.bf16.msra.mxu0 %v1944
        %3685 = vmatprep.subr.bf16.mxu0 0
        %3686 = vmatpush1.bf16.msra.mxu0 0
        %3687 = vmatprep.subr.bf16.mxu0 0
        %3688 = vmatpush1.bf16.msra.mxu0 0
        %3689 = vmatprep.subr.bf16.mxu0 0
        %3690 = vmatpush1.bf16.msra.mxu0 0
        %3691 = vmatprep.subr.bf16.mxu0 0
        %3692 = vmatpush1.bf16.msra.mxu0 0
        %3693 = vmatprep.subr.bf16.mxu0 0
        %3694 = vmatpush1.bf16.msra.mxu0 0
        %3695 = vmatprep.subr.bf16.mxu0 0
        %3696 = vmatpush1.bf16.msra.mxu0 0
        %3697 = vmatprep.subr.bf16.mxu0 0
        %3698 = vmatpush1.bf16.msra.mxu0 0
        %3699 = vmatprep.subr.bf16.mxu0 0
        %3700 = vmatpush1.bf16.msra.mxu0 0
        %3701 = vmatprep.mubr.bf16.mxu0 0
        %3702 = vmatmul.mubr.bf16.gmra.mrb[0].mxu0 %v475
        %v3703 = vpop.f32.mrb[0].mxu0
        %v3704 = vadd.f32 0.0, %v3703
        %v3705 = vpop.f32.mrb[0].mxu0
        %v3706 = vadd.f32 0.0, %v3705
        %v3707 = vpop.f32.mrb[0].mxu0
        %v3708 = vpop.f32.mrb[0].mxu0
        %3709 = vdwg.mxu0
        %3710 = vmatprep.subr.bf16.mxu0 %v1065
        %3711 = vmatpush1.bf16.msra.mxu0 %v1064
        %3712 = vmatprep.subr.bf16.mxu0 %v1191
        %3713 = vmatpush1.bf16.msra.mxu0 %v1190
        %3714 = vmatprep.subr.bf16.mxu0 %v1317
        %3715 = vmatpush1.bf16.msra.mxu0 %v1316
        %3716 = vmatprep.subr.bf16.mxu0 %v1443
        %3717 = vmatpush1.bf16.msra.mxu0 %v1442
        %3718 = vmatprep.subr.bf16.mxu0 %v1569
        %3719 = vmatpush1.bf16.msra.mxu0 %v1568
        %3720 = vmatprep.subr.bf16.mxu0 %v1695
        %3721 = vmatpush1.bf16.msra.mxu0 %v1694
        %3722 = vmatprep.subr.bf16.mxu0 %v1821
        %3723 = vmatpush1.bf16.msra.mxu0 %v1820
        %3724 = vmatprep.subr.bf16.mxu0 %v1947
        %3725 = vmatpush1.bf16.msra.mxu0 %v1946
        %3726 = vmatprep.subr.bf16.mxu0 0
        %3727 = vmatpush1.bf16.msra.mxu0 0
        %3728 = vmatprep.subr.bf16.mxu0 0
        %3729 = vmatpush1.bf16.msra.mxu0 0
        %3730 = vmatprep.subr.bf16.mxu0 0
        %3731 = vmatpush1.bf16.msra.mxu0 0
        %3732 = vmatprep.subr.bf16.mxu0 0
        %3733 = vmatpush1.bf16.msra.mxu0 0
        %3734 = vmatprep.subr.bf16.mxu0 0
        %3735 = vmatpush1.bf16.msra.mxu0 0
        %3736 = vmatprep.subr.bf16.mxu0 0
        %3737 = vmatpush1.bf16.msra.mxu0 0
        %3738 = vmatprep.subr.bf16.mxu0 0
        %3739 = vmatpush1.bf16.msra.mxu0 0
        %3740 = vmatprep.subr.bf16.mxu0 0
        %3741 = vmatpush1.bf16.msra.mxu0 0
        %3742 = vmatprep.mubr.bf16.mxu0 0
        %3743 = vmatmul.mubr.bf16.gmra.mrb[0].mxu0 %v475
        %v3744 = vpop.f32.mrb[0].mxu0
        %v3745 = vadd.f32 0.0, %v3744
        %v3746 = vpop.f32.mrb[0].mxu0
        %v3747 = vadd.f32 0.0, %v3746
        %v3748 = vpop.f32.mrb[0].mxu0
        %v3749 = vpop.f32.mrb[0].mxu0
        %3750 = vdwg.mxu0
        %3751 = vmatprep.subr.bf16.mxu0 %v1067
        %3752 = vmatpush1.bf16.msra.mxu0 %v1066
        %3753 = vmatprep.subr.bf16.mxu0 %v1193
        %3754 = vmatpush1.bf16.msra.mxu0 %v1192
        %3755 = vmatprep.subr.bf16.mxu0 %v1319
        %3756 = vmatpush1.bf16.msra.mxu0 %v1318
        %3757 = vmatprep.subr.bf16.mxu0 %v1445
        %3758 = vmatpush1.bf16.msra.mxu0 %v1444
        %3759 = vmatprep.subr.bf16.mxu0 %v1571
        %3760 = vmatpush1.bf16.msra.mxu0 %v1570
        %3761 = vmatprep.subr.bf16.mxu0 %v1697
        %3762 = vmatpush1.bf16.msra.mxu0 %v1696
        %3763 = vmatprep.subr.bf16.mxu0 %v1823
        %3764 = vmatpush1.bf16.msra.mxu0 %v1822
        %3765 = vmatprep.subr.bf16.mxu0 %v1949
        %3766 = vmatpush1.bf16.msra.mxu0 %v1948
        %3767 = vmatprep.subr.bf16.mxu0 0
        %3768 = vmatpush1.bf16.msra.mxu0 0
        %3769 = vmatprep.subr.bf16.mxu0 0
        %3770 = vmatpush1.bf16.msra.mxu0 0
        %3771 = vmatprep.subr.bf16.mxu0 0
        %3772 = vmatpush1.bf16.msra.mxu0 0
        %3773 = vmatprep.subr.bf16.mxu0 0
        %3774 = vmatpush1.bf16.msra.mxu0 0
        %3775 = vmatprep.subr.bf16.mxu0 0
        %3776 = vmatpush1.bf16.msra.mxu0 0
        %3777 = vmatprep.subr.bf16.mxu0 0
        %3778 = vmatpush1.bf16.msra.mxu0 0
        %3779 = vmatprep.subr.bf16.mxu0 0
        %3780 = vmatpush1.bf16.msra.mxu0 0
        %3781 = vmatprep.subr.bf16.mxu0 0
        %3782 = vmatpush1.bf16.msra.mxu0 0
        %3783 = vmatprep.mubr.bf16.mxu0 0
        %3784 = vmatmul.mubr.bf16.gmra.mrb[0].mxu0 %v475
        %v3785 = vpop.f32.mrb[0].mxu0
        %v3786 = vadd.f32 0.0, %v3785
        %v3787 = vpop.f32.mrb[0].mxu0
        %v3788 = vadd.f32 0.0, %v3787
        %v3789 = vpop.f32.mrb[0].mxu0
        %v3790 = vpop.f32.mrb[0].mxu0
        %3791 = vdwg.mxu0
        %3792 = vmatprep.subr.bf16.mxu0 %v1069
        %3793 = vmatpush1.bf16.msra.mxu0 %v1068
        %3794 = vmatprep.subr.bf16.mxu0 %v1195
        %3795 = vmatpush1.bf16.msra.mxu0 %v1194
        %3796 = vmatprep.subr.bf16.mxu0 %v1321
        %3797 = vmatpush1.bf16.msra.mxu0 %v1320
        %3798 = vmatprep.subr.bf16.mxu0 %v1447
        %3799 = vmatpush1.bf16.msra.mxu0 %v1446
        %3800 = vmatprep.subr.bf16.mxu0 %v1573
        %3801 = vmatpush1.bf16.msra.mxu0 %v1572
        %3802 = vmatprep.subr.bf16.mxu0 %v1699
        %3803 = vmatpush1.bf16.msra.mxu0 %v1698
        %3804 = vmatprep.subr.bf16.mxu0 %v1825
        %3805 = vmatpush1.bf16.msra.mxu0 %v1824
        %3806 = vmatprep.subr.bf16.mxu0 %v1951
        %3807 = vmatpush1.bf16.msra.mxu0 %v1950
        %3808 = vmatprep.subr.bf16.mxu0 0
        %3809 = vmatpush1.bf16.msra.mxu0 0
        %3810 = vmatprep.subr.bf16.mxu0 0
        %3811 = vmatpush1.bf16.msra.mxu0 0
        %3812 = vmatprep.subr.bf16.mxu0 0
        %3813 = vmatpush1.bf16.msra.mxu0 0
        %3814 = vmatprep.subr.bf16.mxu0 0
        %3815 = vmatpush1.bf16.msra.mxu0 0
        %3816 = vmatprep.subr.bf16.mxu0 0
        %3817 = vmatpush1.bf16.msra.mxu0 0
        %3818 = vmatprep.subr.bf16.mxu0 0
        %3819 = vmatpush1.bf16.msra.mxu0 0
        %3820 = vmatprep.subr.bf16.mxu0 0
        %3821 = vmatpush1.bf16.msra.mxu0 0
        %3822 = vmatprep.subr.bf16.mxu0 0
        %3823 = vmatpush1.bf16.msra.mxu0 0
        %3824 = vmatprep.mubr.bf16.mxu0 0
        %3825 = vmatmul.mubr.bf16.gmra.mrb[0].mxu0 %v475
        %v3826 = vpop.f32.mrb[0].mxu0
        %v3827 = vadd.f32 0.0, %v3826
        %v3828 = vpop.f32.mrb[0].mxu0
        %v3829 = vadd.f32 0.0, %v3828
        %v3830 = vpop.f32.mrb[0].mxu0
        %v3831 = vpop.f32.mrb[0].mxu0
        %3832 = vdwg.mxu0
        %3833 = vmatprep.subr.bf16.mxu0 %v1071
        %3834 = vmatpush1.bf16.msra.mxu0 %v1070
        %3835 = vmatprep.subr.bf16.mxu0 %v1197
        %3836 = vmatpush1.bf16.msra.mxu0 %v1196
        %3837 = vmatprep.subr.bf16.mxu0 %v1323
        %3838 = vmatpush1.bf16.msra.mxu0 %v1322
        %3839 = vmatprep.subr.bf16.mxu0 %v1449
        %3840 = vmatpush1.bf16.msra.mxu0 %v1448
        %3841 = vmatprep.subr.bf16.mxu0 %v1575
        %3842 = vmatpush1.bf16.msra.mxu0 %v1574
        %3843 = vmatprep.subr.bf16.mxu0 %v1701
        %3844 = vmatpush1.bf16.msra.mxu0 %v1700
        %3845 = vmatprep.subr.bf16.mxu0 %v1827
        %3846 = vmatpush1.bf16.msra.mxu0 %v1826
        %3847 = vmatprep.subr.bf16.mxu0 %v1953
        %3848 = vmatpush1.bf16.msra.mxu0 %v1952
        %3849 = vmatprep.subr.bf16.mxu0 0
        %3850 = vmatpush1.bf16.msra.mxu0 0
        %3851 = vmatprep.subr.bf16.mxu0 0
        %3852 = vmatpush1.bf16.msra.mxu0 0
        %3853 = vmatprep.subr.bf16.mxu0 0
        %3854 = vmatpush1.bf16.msra.mxu0 0
        %3855 = vmatprep.subr.bf16.mxu0 0
        %3856 = vmatpush1.bf16.msra.mxu0 0
        %3857 = vmatprep.subr.bf16.mxu0 0
        %3858 = vmatpush1.bf16.msra.mxu0 0
        %3859 = vmatprep.subr.bf16.mxu0 0
        %3860 = vmatpush1.bf16.msra.mxu0 0
        %3861 = vmatprep.subr.bf16.mxu0 0
        %3862 = vmatpush1.bf16.msra.mxu0 0
        %3863 = vmatprep.subr.bf16.mxu0 0
        %3864 = vmatpush1.bf16.msra.mxu0 0
        %3865 = vmatprep.mubr.bf16.mxu0 0
        %3866 = vmatmul.mubr.bf16.gmra.mrb[0].mxu0 %v475
        %v3867 = vpop.f32.mrb[0].mxu0
        %v3868 = vadd.f32 0.0, %v3867
        %v3869 = vpop.f32.mrb[0].mxu0
        %v3870 = vadd.f32 0.0, %v3869
        %v3871 = vpop.f32.mrb[0].mxu0
        %v3872 = vpop.f32.mrb[0].mxu0
        %3873 = vdwg.mxu0
        %3874 = vmatprep.subr.bf16.mxu0 %v1073
        %3875 = vmatpush1.bf16.msra.mxu0 %v1072
        %3876 = vmatprep.subr.bf16.mxu0 %v1199
        %3877 = vmatpush1.bf16.msra.mxu0 %v1198
        %3878 = vmatprep.subr.bf16.mxu0 %v1325
        %3879 = vmatpush1.bf16.msra.mxu0 %v1324
        %3880 = vmatprep.subr.bf16.mxu0 %v1451
        %3881 = vmatpush1.bf16.msra.mxu0 %v1450
        %3882 = vmatprep.subr.bf16.mxu0 %v1577
        %3883 = vmatpush1.bf16.msra.mxu0 %v1576
        %3884 = vmatprep.subr.bf16.mxu0 %v1703
        %3885 = vmatpush1.bf16.msra.mxu0 %v1702
        %3886 = vmatprep.subr.bf16.mxu0 %v1829
        %3887 = vmatpush1.bf16.msra.mxu0 %v1828
        %3888 = vmatprep.subr.bf16.mxu0 %v1955
        %3889 = vmatpush1.bf16.msra.mxu0 %v1954
        %3890 = vmatprep.subr.bf16.mxu0 0
        %3891 = vmatpush1.bf16.msra.mxu0 0
        %3892 = vmatprep.subr.bf16.mxu0 0
        %3893 = vmatpush1.bf16.msra.mxu0 0
        %3894 = vmatprep.subr.bf16.mxu0 0
        %3895 = vmatpush1.bf16.msra.mxu0 0
        %3896 = vmatprep.subr.bf16.mxu0 0
        %3897 = vmatpush1.bf16.msra.mxu0 0
        %3898 = vmatprep.subr.bf16.mxu0 0
        %3899 = vmatpush1.bf16.msra.mxu0 0
        %3900 = vmatprep.subr.bf16.mxu0 0
        %3901 = vmatpush1.bf16.msra.mxu0 0
        %3902 = vmatprep.subr.bf16.mxu0 0
        %3903 = vmatpush1.bf16.msra.mxu0 0
        %3904 = vmatprep.subr.bf16.mxu0 0
        %3905 = vmatpush1.bf16.msra.mxu0 0
        %3906 = vmatprep.mubr.bf16.mxu0 0
        %3907 = vmatmul.mubr.bf16.gmra.mrb[0].mxu0 %v475
        %v3908 = vpop.f32.mrb[0].mxu0
        %v3909 = vadd.f32 0.0, %v3908
        %v3910 = vpop.f32.mrb[0].mxu0
        %v3911 = vadd.f32 0.0, %v3910
        %v3912 = vpop.f32.mrb[0].mxu0
        %v3913 = vpop.f32.mrb[0].mxu0
        %3914 = vdwg.mxu0
        %3915 = vmatprep.subr.bf16.mxu0 %v1075
        %3916 = vmatpush1.bf16.msra.mxu0 %v1074
        %3917 = vmatprep.subr.bf16.mxu0 %v1201
        %3918 = vmatpush1.bf16.msra.mxu0 %v1200
        %3919 = vmatprep.subr.bf16.mxu0 %v1327
        %3920 = vmatpush1.bf16.msra.mxu0 %v1326
        %3921 = vmatprep.subr.bf16.mxu0 %v1453
        %3922 = vmatpush1.bf16.msra.mxu0 %v1452
        %3923 = vmatprep.subr.bf16.mxu0 %v1579
        %3924 = vmatpush1.bf16.msra.mxu0 %v1578
        %3925 = vmatprep.subr.bf16.mxu0 %v1705
        %3926 = vmatpush1.bf16.msra.mxu0 %v1704
        %3927 = vmatprep.subr.bf16.mxu0 %v1831
        %3928 = vmatpush1.bf16.msra.mxu0 %v1830
        %3929 = vmatprep.subr.bf16.mxu0 %v1957
        %3930 = vmatpush1.bf16.msra.mxu0 %v1956
        %3931 = vmatprep.subr.bf16.mxu0 0
        %3932 = vmatpush1.bf16.msra.mxu0 0
        %3933 = vmatprep.subr.bf16.mxu0 0
        %3934 = vmatpush1.bf16.msra.mxu0 0
        %3935 = vmatprep.subr.bf16.mxu0 0
        %3936 = vmatpush1.bf16.msra.mxu0 0
        %3937 = vmatprep.subr.bf16.mxu0 0
        %3938 = vmatpush1.bf16.msra.mxu0 0
        %3939 = vmatprep.subr.bf16.mxu0 0
        %3940 = vmatpush1.bf16.msra.mxu0 0
        %3941 = vmatprep.subr.bf16.mxu0 0
        %3942 = vmatpush1.bf16.msra.mxu0 0
        %3943 = vmatprep.subr.bf16.mxu0 0
        %3944 = vmatpush1.bf16.msra.mxu0 0
        %3945 = vmatprep.subr.bf16.mxu0 0
        %3946 = vmatpush1.bf16.msra.mxu0 0
        %3947 = vmatprep.mubr.bf16.mxu0 0
        %3948 = vmatmul.mubr.bf16.gmra.mrb[0].mxu0 %v475
        %v3949 = vpop.f32.mrb[0].mxu0
        %v3950 = vadd.f32 0.0, %v3949
        %v3951 = vpop.f32.mrb[0].mxu0
        %v3952 = vadd.f32 0.0, %v3951
        %v3953 = vpop.f32.mrb[0].mxu0
        %v3954 = vpop.f32.mrb[0].mxu0
        %3955 = vdwg.mxu0
        %3956 = vmatprep.subr.bf16.mxu0 %v1077
        %3957 = vmatpush1.bf16.msra.mxu0 %v1076
        %3958 = vmatprep.subr.bf16.mxu0 %v1203
        %3959 = vmatpush1.bf16.msra.mxu0 %v1202
        %3960 = vmatprep.subr.bf16.mxu0 %v1329
        %3961 = vmatpush1.bf16.msra.mxu0 %v1328
        %3962 = vmatprep.subr.bf16.mxu0 %v1455
        %3963 = vmatpush1.bf16.msra.mxu0 %v1454
        %3964 = vmatprep.subr.bf16.mxu0 %v1581
        %3965 = vmatpush1.bf16.msra.mxu0 %v1580
        %3966 = vmatprep.subr.bf16.mxu0 %v1707
        %3967 = vmatpush1.bf16.msra.mxu0 %v1706
        %3968 = vmatprep.subr.bf16.mxu0 %v1833
        %3969 = vmatpush1.bf16.msra.mxu0 %v1832
        %3970 = vmatprep.subr.bf16.mxu0 %v1959
        %3971 = vmatpush1.bf16.msra.mxu0 %v1958
        %3972 = vmatprep.subr.bf16.mxu0 0
        %3973 = vmatpush1.bf16.msra.mxu0 0
        %3974 = vmatprep.subr.bf16.mxu0 0
        %3975 = vmatpush1.bf16.msra.mxu0 0
        %3976 = vmatprep.subr.bf16.mxu0 0
        %3977 = vmatpush1.bf16.msra.mxu0 0
        %3978 = vmatprep.subr.bf16.mxu0 0
        %3979 = vmatpush1.bf16.msra.mxu0 0
        %3980 = vmatprep.subr.bf16.mxu0 0
        %3981 = vmatpush1.bf16.msra.mxu0 0
        %3982 = vmatprep.subr.bf16.mxu0 0
        %3983 = vmatpush1.bf16.msra.mxu0 0
        %3984 = vmatprep.subr.bf16.mxu0 0
        %3985 = vmatpush1.bf16.msra.mxu0 0
        %3986 = vmatprep.subr.bf16.mxu0 0
        %3987 = vmatpush1.bf16.msra.mxu0 0
        %3988 = vmatprep.mubr.bf16.mxu0 0
        %3989 = vmatmul.mubr.bf16.gmra.mrb[0].mxu0 %v475
        %v3990 = vpop.f32.mrb[0].mxu0
        %v3991 = vadd.f32 0.0, %v3990
        %v3992 = vpop.f32.mrb[0].mxu0
        %v3993 = vadd.f32 0.0, %v3992
        %v3994 = vpop.f32.mrb[0].mxu0
        %v3995 = vpop.f32.mrb[0].mxu0
        %3996 = vdwg.mxu0
        %3997 = vmatprep.subr.bf16.mxu0 %v1079
        %3998 = vmatpush1.bf16.msra.mxu0 %v1078
        %3999 = vmatprep.subr.bf16.mxu0 %v1205
        %4000 = vmatpush1.bf16.msra.mxu0 %v1204
        %4001 = vmatprep.subr.bf16.mxu0 %v1331
        %4002 = vmatpush1.bf16.msra.mxu0 %v1330
        %4003 = vmatprep.subr.bf16.mxu0 %v1457
        %4004 = vmatpush1.bf16.msra.mxu0 %v1456
        %4005 = vmatprep.subr.bf16.mxu0 %v1583
        %4006 = vmatpush1.bf16.msra.mxu0 %v1582
        %4007 = vmatprep.subr.bf16.mxu0 %v1709
        %4008 = vmatpush1.bf16.msra.mxu0 %v1708
        %4009 = vmatprep.subr.bf16.mxu0 %v1835
        %4010 = vmatpush1.bf16.msra.mxu0 %v1834
        %4011 = vmatprep.subr.bf16.mxu0 %v1961
        %4012 = vmatpush1.bf16.msra.mxu0 %v1960
        %4013 = vmatprep.subr.bf16.mxu0 0
        %4014 = vmatpush1.bf16.msra.mxu0 0
        %4015 = vmatprep.subr.bf16.mxu0 0
        %4016 = vmatpush1.bf16.msra.mxu0 0
        %4017 = vmatprep.subr.bf16.mxu0 0
        %4018 = vmatpush1.bf16.msra.mxu0 0
        %4019 = vmatprep.subr.bf16.mxu0 0
        %4020 = vmatpush1.bf16.msra.mxu0 0
        %4021 = vmatprep.subr.bf16.mxu0 0
        %4022 = vmatpush1.bf16.msra.mxu0 0
        %4023 = vmatprep.subr.bf16.mxu0 0
        %4024 = vmatpush1.bf16.msra.mxu0 0
        %4025 = vmatprep.subr.bf16.mxu0 0
        %4026 = vmatpush1.bf16.msra.mxu0 0
        %4027 = vmatprep.subr.bf16.mxu0 0
        %4028 = vmatpush1.bf16.msra.mxu0 0
        %4029 = vmatprep.mubr.bf16.mxu0 0
        %4030 = vmatmul.mubr.bf16.gmra.mrb[0].mxu0 %v475
        %v4031 = vpop.f32.mrb[0].mxu0
        %v4032 = vadd.f32 0.0, %v4031
        %v4033 = vpop.f32.mrb[0].mxu0
        %v4034 = vadd.f32 0.0, %v4033
        %v4035 = vpop.f32.mrb[0].mxu0
        %v4036 = vpop.f32.mrb[0].mxu0
        %4037 = vdwg.mxu0
        %4038 = vmatprep.subr.bf16.mxu0 %v1081
        %4039 = vmatpush1.bf16.msra.mxu0 %v1080
        %4040 = vmatprep.subr.bf16.mxu0 %v1207
        %4041 = vmatpush1.bf16.msra.mxu0 %v1206
        %4042 = vmatprep.subr.bf16.mxu0 %v1333
        %4043 = vmatpush1.bf16.msra.mxu0 %v1332
        %4044 = vmatprep.subr.bf16.mxu0 %v1459
        %4045 = vmatpush1.bf16.msra.mxu0 %v1458
        %4046 = vmatprep.subr.bf16.mxu0 %v1585
        %4047 = vmatpush1.bf16.msra.mxu0 %v1584
        %4048 = vmatprep.subr.bf16.mxu0 %v1711
        %4049 = vmatpush1.bf16.msra.mxu0 %v1710
        %4050 = vmatprep.subr.bf16.mxu0 %v1837
        %4051 = vmatpush1.bf16.msra.mxu0 %v1836
        %4052 = vmatprep.subr.bf16.mxu0 %v1963
        %4053 = vmatpush1.bf16.msra.mxu0 %v1962
        %4054 = vmatprep.subr.bf16.mxu0 0
        %4055 = vmatpush1.bf16.msra.mxu0 0
        %4056 = vmatprep.subr.bf16.mxu0 0
        %4057 = vmatpush1.bf16.msra.mxu0 0
        %4058 = vmatprep.subr.bf16.mxu0 0
        %4059 = vmatpush1.bf16.msra.mxu0 0
        %4060 = vmatprep.subr.bf16.mxu0 0
        %4061 = vmatpush1.bf16.msra.mxu0 0
        %4062 = vmatprep.subr.bf16.mxu0 0
        %4063 = vmatpush1.bf16.msra.mxu0 0
        %4064 = vmatprep.subr.bf16.mxu0 0
        %4065 = vmatpush1.bf16.msra.mxu0 0
        %4066 = vmatprep.subr.bf16.mxu0 0
        %4067 = vmatpush1.bf16.msra.mxu0 0
        %4068 = vmatprep.subr.bf16.mxu0 0
        %4069 = vmatpush1.bf16.msra.mxu0 0
        %4070 = vmatprep.mubr.bf16.mxu0 0
        %4071 = vmatmul.mubr.bf16.gmra.mrb[0].mxu0 %v475
        %v4072 = vpop.f32.mrb[0].mxu0
        %v4073 = vadd.f32 0.0, %v4072
        %v4074 = vpop.f32.mrb[0].mxu0
        %v4075 = vadd.f32 0.0, %v4074
        %v4076 = vpop.f32.mrb[0].mxu0
        %v4077 = vpop.f32.mrb[0].mxu0
        %4078 = vdwg.mxu0
        %4079 = vmatprep.subr.bf16.mxu0 %v1083
        %4080 = vmatpush1.bf16.msra.mxu0 %v1082
        %4081 = vmatprep.subr.bf16.mxu0 %v1209
        %4082 = vmatpush1.bf16.msra.mxu0 %v1208
        %4083 = vmatprep.subr.bf16.mxu0 %v1335
        %4084 = vmatpush1.bf16.msra.mxu0 %v1334
        %4085 = vmatprep.subr.bf16.mxu0 %v1461
        %4086 = vmatpush1.bf16.msra.mxu0 %v1460
        %4087 = vmatprep.subr.bf16.mxu0 %v1587
        %4088 = vmatpush1.bf16.msra.mxu0 %v1586
        %4089 = vmatprep.subr.bf16.mxu0 %v1713
        %4090 = vmatpush1.bf16.msra.mxu0 %v1712
        %4091 = vmatprep.subr.bf16.mxu0 %v1839
        %4092 = vmatpush1.bf16.msra.mxu0 %v1838
        %4093 = vmatprep.subr.bf16.mxu0 %v1965
        %4094 = vmatpush1.bf16.msra.mxu0 %v1964
        %4095 = vmatprep.subr.bf16.mxu0 0
        %4096 = vmatpush1.bf16.msra.mxu0 0
        %4097 = vmatprep.subr.bf16.mxu0 0
        %4098 = vmatpush1.bf16.msra.mxu0 0
        %4099 = vmatprep.subr.bf16.mxu0 0
        %4100 = vmatpush1.bf16.msra.mxu0 0
        %4101 = vmatprep.subr.bf16.mxu0 0
        %4102 = vmatpush1.bf16.msra.mxu0 0
        %4103 = vmatprep.subr.bf16.mxu0 0
        %4104 = vmatpush1.bf16.msra.mxu0 0
        %4105 = vmatprep.subr.bf16.mxu0 0
        %4106 = vmatpush1.bf16.msra.mxu0 0
        %4107 = vmatprep.subr.bf16.mxu0 0
        %4108 = vmatpush1.bf16.msra.mxu0 0
        %4109 = vmatprep.subr.bf16.mxu0 0
        %4110 = vmatpush1.bf16.msra.mxu0 0
        %4111 = vmatprep.mubr.bf16.mxu0 0
        %4112 = vmatmul.mubr.bf16.gmra.mrb[0].mxu0 %v475
        %v4113 = vpop.f32.mrb[0].mxu0
        %v4114 = vadd.f32 0.0, %v4113
        %v4115 = vpop.f32.mrb[0].mxu0
        %v4116 = vadd.f32 0.0, %v4115
        %v4117 = vpop.f32.mrb[0].mxu0
        %v4118 = vpop.f32.mrb[0].mxu0
        %4119 = vdwg.mxu0
        %4120 = vmatprep.subr.bf16.mxu0 %v1085
        %4121 = vmatpush1.bf16.msra.mxu0 %v1084
        %4122 = vmatprep.subr.bf16.mxu0 %v1211
        %4123 = vmatpush1.bf16.msra.mxu0 %v1210
        %4124 = vmatprep.subr.bf16.mxu0 %v1337
        %4125 = vmatpush1.bf16.msra.mxu0 %v1336
        %4126 = vmatprep.subr.bf16.mxu0 %v1463
        %4127 = vmatpush1.bf16.msra.mxu0 %v1462
        %4128 = vmatprep.subr.bf16.mxu0 %v1589
        %4129 = vmatpush1.bf16.msra.mxu0 %v1588
        %4130 = vmatprep.subr.bf16.mxu0 %v1715
        %4131 = vmatpush1.bf16.msra.mxu0 %v1714
        %4132 = vmatprep.subr.bf16.mxu0 %v1841
        %4133 = vmatpush1.bf16.msra.mxu0 %v1840
        %4134 = vmatprep.subr.bf16.mxu0 %v1967
        %4135 = vmatpush1.bf16.msra.mxu0 %v1966
        %4136 = vmatprep.subr.bf16.mxu0 0
        %4137 = vmatpush1.bf16.msra.mxu0 0
        %4138 = vmatprep.subr.bf16.mxu0 0
        %4139 = vmatpush1.bf16.msra.mxu0 0
        %4140 = vmatprep.subr.bf16.mxu0 0
        %4141 = vmatpush1.bf16.msra.mxu0 0
        %4142 = vmatprep.subr.bf16.mxu0 0
        %4143 = vmatpush1.bf16.msra.mxu0 0
        %4144 = vmatprep.subr.bf16.mxu0 0
        %4145 = vmatpush1.bf16.msra.mxu0 0
        %4146 = vmatprep.subr.bf16.mxu0 0
        %4147 = vmatpush1.bf16.msra.mxu0 0
        %4148 = vmatprep.subr.bf16.mxu0 0
        %4149 = vmatpush1.bf16.msra.mxu0 0
        %4150 = vmatprep.subr.bf16.mxu0 0
        %4151 = vmatpush1.bf16.msra.mxu0 0
        %4152 = vmatprep.mubr.bf16.mxu0 0
        %4153 = vmatmul.mubr.bf16.gmra.mrb[0].mxu0 %v475
        %v4154 = vpop.f32.mrb[0].mxu0
        %v4155 = vadd.f32 0.0, %v4154
        %v4156 = vpop.f32.mrb[0].mxu0
        %v4157 = vadd.f32 0.0, %v4156
        %v4158 = vpop.f32.mrb[0].mxu0
        %v4159 = vpop.f32.mrb[0].mxu0
        %4160 = vdwg.mxu0
        %4161 = vmatprep.subr.bf16.mxu0 %v1087
        %4162 = vmatpush1.bf16.msra.mxu0 %v1086
        %4163 = vmatprep.subr.bf16.mxu0 %v1213
        %4164 = vmatpush1.bf16.msra.mxu0 %v1212
        %4165 = vmatprep.subr.bf16.mxu0 %v1339
        %4166 = vmatpush1.bf16.msra.mxu0 %v1338
        %4167 = vmatprep.subr.bf16.mxu0 %v1465
        %4168 = vmatpush1.bf16.msra.mxu0 %v1464
        %4169 = vmatprep.subr.bf16.mxu0 %v1591
        %4170 = vmatpush1.bf16.msra.mxu0 %v1590
        %4171 = vmatprep.subr.bf16.mxu0 %v1717
        %4172 = vmatpush1.bf16.msra.mxu0 %v1716
        %4173 = vmatprep.subr.bf16.mxu0 %v1843
        %4174 = vmatpush1.bf16.msra.mxu0 %v1842
        %4175 = vmatprep.subr.bf16.mxu0 %v1969
        %4176 = vmatpush1.bf16.msra.mxu0 %v1968
        %4177 = vmatprep.subr.bf16.mxu0 0
        %4178 = vmatpush1.bf16.msra.mxu0 0
        %4179 = vmatprep.subr.bf16.mxu0 0
        %4180 = vmatpush1.bf16.msra.mxu0 0
        %4181 = vmatprep.subr.bf16.mxu0 0
        %4182 = vmatpush1.bf16.msra.mxu0 0
        %4183 = vmatprep.subr.bf16.mxu0 0
        %4184 = vmatpush1.bf16.msra.mxu0 0
        %4185 = vmatprep.subr.bf16.mxu0 0
        %4186 = vmatpush1.bf16.msra.mxu0 0
        %4187 = vmatprep.subr.bf16.mxu0 0
        %4188 = vmatpush1.bf16.msra.mxu0 0
        %4189 = vmatprep.subr.bf16.mxu0 0
        %4190 = vmatpush1.bf16.msra.mxu0 0
        %4191 = vmatprep.subr.bf16.mxu0 0
        %4192 = vmatpush1.bf16.msra.mxu0 0
        %4193 = vmatprep.mubr.bf16.mxu0 0
        %4194 = vmatmul.mubr.bf16.gmra.mrb[0].mxu0 %v475
        %v4195 = vpop.f32.mrb[0].mxu0
        %v4196 = vadd.f32 0.0, %v4195
        %v4197 = vpop.f32.mrb[0].mxu0
        %v4198 = vadd.f32 0.0, %v4197
        %v4199 = vpop.f32.mrb[0].mxu0
        %v4200 = vpop.f32.mrb[0].mxu0
        %4201 = vdwg.mxu0
        %4202 = vmatprep.subr.bf16.mxu0 %v1089
        %4203 = vmatpush1.bf16.msra.mxu0 %v1088
        %4204 = vmatprep.subr.bf16.mxu0 %v1215
        %4205 = vmatpush1.bf16.msra.mxu0 %v1214
        %4206 = vmatprep.subr.bf16.mxu0 %v1341
        %4207 = vmatpush1.bf16.msra.mxu0 %v1340
        %4208 = vmatprep.subr.bf16.mxu0 %v1467
        %4209 = vmatpush1.bf16.msra.mxu0 %v1466
        %4210 = vmatprep.subr.bf16.mxu0 %v1593
        %4211 = vmatpush1.bf16.msra.mxu0 %v1592
        %4212 = vmatprep.subr.bf16.mxu0 %v1719
        %4213 = vmatpush1.bf16.msra.mxu0 %v1718
        %4214 = vmatprep.subr.bf16.mxu0 %v1845
        %4215 = vmatpush1.bf16.msra.mxu0 %v1844
        %4216 = vmatprep.subr.bf16.mxu0 %v1971
        %4217 = vmatpush1.bf16.msra.mxu0 %v1970
        %4218 = vmatprep.subr.bf16.mxu0 0
        %4219 = vmatpush1.bf16.msra.mxu0 0
        %4220 = vmatprep.subr.bf16.mxu0 0
        %4221 = vmatpush1.bf16.msra.mxu0 0
        %4222 = vmatprep.subr.bf16.mxu0 0
        %4223 = vmatpush1.bf16.msra.mxu0 0
        %4224 = vmatprep.subr.bf16.mxu0 0
        %4225 = vmatpush1.bf16.msra.mxu0 0
        %4226 = vmatprep.subr.bf16.mxu0 0
        %4227 = vmatpush1.bf16.msra.mxu0 0
        %4228 = vmatprep.subr.bf16.mxu0 0
        %4229 = vmatpush1.bf16.msra.mxu0 0
        %4230 = vmatprep.subr.bf16.mxu0 0
        %4231 = vmatpush1.bf16.msra.mxu0 0
        %4232 = vmatprep.subr.bf16.mxu0 0
        %4233 = vmatpush1.bf16.msra.mxu0 0
        %4234 = vmatprep.mubr.bf16.mxu0 0
        %4235 = vmatmul.mubr.bf16.gmra.mrb[0].mxu0 %v475
        %v4236 = vpop.f32.mrb[0].mxu0
        %v4237 = vadd.f32 0.0, %v4236
        %v4238 = vpop.f32.mrb[0].mxu0
        %v4239 = vadd.f32 0.0, %v4238
        %v4240 = vpop.f32.mrb[0].mxu0
        %v4241 = vpop.f32.mrb[0].mxu0
        %4242 = vdwg.mxu0
        %4243 = vmatprep.subr.bf16.mxu0 %v1091
        %4244 = vmatpush1.bf16.msra.mxu0 %v1090
        %4245 = vmatprep.subr.bf16.mxu0 %v1217
        %4246 = vmatpush1.bf16.msra.mxu0 %v1216
        %4247 = vmatprep.subr.bf16.mxu0 %v1343
        %4248 = vmatpush1.bf16.msra.mxu0 %v1342
        %4249 = vmatprep.subr.bf16.mxu0 %v1469
        %4250 = vmatpush1.bf16.msra.mxu0 %v1468
        %4251 = vmatprep.subr.bf16.mxu0 %v1595
        %4252 = vmatpush1.bf16.msra.mxu0 %v1594
        %4253 = vmatprep.subr.bf16.mxu0 %v1721
        %4254 = vmatpush1.bf16.msra.mxu0 %v1720
        %4255 = vmatprep.subr.bf16.mxu0 %v1847
        %4256 = vmatpush1.bf16.msra.mxu0 %v1846
        %4257 = vmatprep.subr.bf16.mxu0 %v1973
        %4258 = vmatpush1.bf16.msra.mxu0 %v1972
        %4259 = vmatprep.subr.bf16.mxu0 0
        %4260 = vmatpush1.bf16.msra.mxu0 0
        %4261 = vmatprep.subr.bf16.mxu0 0
        %4262 = vmatpush1.bf16.msra.mxu0 0
        %4263 = vmatprep.subr.bf16.mxu0 0
        %4264 = vmatpush1.bf16.msra.mxu0 0
        %4265 = vmatprep.subr.bf16.mxu0 0
        %4266 = vmatpush1.bf16.msra.mxu0 0
        %4267 = vmatprep.subr.bf16.mxu0 0
        %4268 = vmatpush1.bf16.msra.mxu0 0
        %4269 = vmatprep.subr.bf16.mxu0 0
        %4270 = vmatpush1.bf16.msra.mxu0 0
        %4271 = vmatprep.subr.bf16.mxu0 0
        %4272 = vmatpush1.bf16.msra.mxu0 0
        %4273 = vmatprep.subr.bf16.mxu0 0
        %4274 = vmatpush1.bf16.msra.mxu0 0
        %4275 = vmatprep.mubr.bf16.mxu0 0
        %4276 = vmatmul.mubr.bf16.gmra.mrb[0].mxu0 %v475
        %v4277 = vpop.f32.mrb[0].mxu0
        %v4278 = vadd.f32 0.0, %v4277
        %v4279 = vpop.f32.mrb[0].mxu0
        %v4280 = vadd.f32 0.0, %v4279
        %v4281 = vpop.f32.mrb[0].mxu0
        %v4282 = vpop.f32.mrb[0].mxu0
        %4283 = vdwg.mxu0
        %4284 = vmatprep.subr.bf16.mxu0 %v1093
        %4285 = vmatpush1.bf16.msra.mxu0 %v1092
        %4286 = vmatprep.subr.bf16.mxu0 %v1219
        %4287 = vmatpush1.bf16.msra.mxu0 %v1218
        %4288 = vmatprep.subr.bf16.mxu0 %v1345
        %4289 = vmatpush1.bf16.msra.mxu0 %v1344
        %4290 = vmatprep.subr.bf16.mxu0 %v1471
        %4291 = vmatpush1.bf16.msra.mxu0 %v1470
        %4292 = vmatprep.subr.bf16.mxu0 %v1597
        %4293 = vmatpush1.bf16.msra.mxu0 %v1596
        %4294 = vmatprep.subr.bf16.mxu0 %v1723
        %4295 = vmatpush1.bf16.msra.mxu0 %v1722
        %4296 = vmatprep.subr.bf16.mxu0 %v1849
        %4297 = vmatpush1.bf16.msra.mxu0 %v1848
        %4298 = vmatprep.subr.bf16.mxu0 %v1975
        %4299 = vmatpush1.bf16.msra.mxu0 %v1974
        %4300 = vmatprep.subr.bf16.mxu0 0
        %4301 = vmatpush1.bf16.msra.mxu0 0
        %4302 = vmatprep.subr.bf16.mxu0 0
        %4303 = vmatpush1.bf16.msra.mxu0 0
        %4304 = vmatprep.subr.bf16.mxu0 0
        %4305 = vmatpush1.bf16.msra.mxu0 0
        %4306 = vmatprep.subr.bf16.mxu0 0
        %4307 = vmatpush1.bf16.msra.mxu0 0
        %4308 = vmatprep.subr.bf16.mxu0 0
        %4309 = vmatpush1.bf16.msra.mxu0 0
        %4310 = vmatprep.subr.bf16.mxu0 0
        %4311 = vmatpush1.bf16.msra.mxu0 0
        %4312 = vmatprep.subr.bf16.mxu0 0
        %4313 = vmatpush1.bf16.msra.mxu0 0
        %4314 = vmatprep.subr.bf16.mxu0 0
        %4315 = vmatpush1.bf16.msra.mxu0 0
        %4316 = vmatprep.mubr.bf16.mxu0 0
        %4317 = vmatmul.mubr.bf16.gmra.mrb[0].mxu0 %v475
        %v4318 = vpop.f32.mrb[0].mxu0
        %v4319 = vadd.f32 0.0, %v4318
        %v4320 = vpop.f32.mrb[0].mxu0
        %v4321 = vadd.f32 0.0, %v4320
        %v4322 = vpop.f32.mrb[0].mxu0
        %v4323 = vpop.f32.mrb[0].mxu0
        %4324 = vdwg.mxu0
        %4325 = vmatprep.subr.bf16.mxu0 %v1095
        %4326 = vmatpush1.bf16.msra.mxu0 %v1094
        %4327 = vmatprep.subr.bf16.mxu0 %v1221
        %4328 = vmatpush1.bf16.msra.mxu0 %v1220
        %4329 = vmatprep.subr.bf16.mxu0 %v1347
        %4330 = vmatpush1.bf16.msra.mxu0 %v1346
        %4331 = vmatprep.subr.bf16.mxu0 %v1473
        %4332 = vmatpush1.bf16.msra.mxu0 %v1472
        %4333 = vmatprep.subr.bf16.mxu0 %v1599
        %4334 = vmatpush1.bf16.msra.mxu0 %v1598
        %4335 = vmatprep.subr.bf16.mxu0 %v1725
        %4336 = vmatpush1.bf16.msra.mxu0 %v1724
        %4337 = vmatprep.subr.bf16.mxu0 %v1851
        %4338 = vmatpush1.bf16.msra.mxu0 %v1850
        %4339 = vmatprep.subr.bf16.mxu0 %v1977
        %4340 = vmatpush1.bf16.msra.mxu0 %v1976
        %4341 = vmatprep.subr.bf16.mxu0 0
        %4342 = vmatpush1.bf16.msra.mxu0 0
        %4343 = vmatprep.subr.bf16.mxu0 0
        %4344 = vmatpush1.bf16.msra.mxu0 0
        %4345 = vmatprep.subr.bf16.mxu0 0
        %4346 = vmatpush1.bf16.msra.mxu0 0
        %4347 = vmatprep.subr.bf16.mxu0 0
        %4348 = vmatpush1.bf16.msra.mxu0 0
        %4349 = vmatprep.subr.bf16.mxu0 0
        %4350 = vmatpush1.bf16.msra.mxu0 0
        %4351 = vmatprep.subr.bf16.mxu0 0
        %4352 = vmatpush1.bf16.msra.mxu0 0
        %4353 = vmatprep.subr.bf16.mxu0 0
        %4354 = vmatpush1.bf16.msra.mxu0 0
        %4355 = vmatprep.subr.bf16.mxu0 0
        %4356 = vmatpush1.bf16.msra.mxu0 0
        %4357 = vmatprep.mubr.bf16.mxu0 0
        %4358 = vmatmul.mubr.bf16.gmra.mrb[0].mxu0 %v475
        %v4359 = vpop.f32.mrb[0].mxu0
        %v4360 = vadd.f32 0.0, %v4359
        %v4361 = vpop.f32.mrb[0].mxu0
        %v4362 = vadd.f32 0.0, %v4361
        %v4363 = vpop.f32.mrb[0].mxu0
        %v4364 = vpop.f32.mrb[0].mxu0
        %4365 = vdwg.mxu0
        %4366 = vmatprep.subr.bf16.mxu0 %v1097
        %4367 = vmatpush1.bf16.msra.mxu0 %v1096
        %4368 = vmatprep.subr.bf16.mxu0 %v1223
        %4369 = vmatpush1.bf16.msra.mxu0 %v1222
        %4370 = vmatprep.subr.bf16.mxu0 %v1349
        %4371 = vmatpush1.bf16.msra.mxu0 %v1348
        %4372 = vmatprep.subr.bf16.mxu0 %v1475
        %4373 = vmatpush1.bf16.msra.mxu0 %v1474
        %4374 = vmatprep.subr.bf16.mxu0 %v1601
        %4375 = vmatpush1.bf16.msra.mxu0 %v1600
        %4376 = vmatprep.subr.bf16.mxu0 %v1727
        %4377 = vmatpush1.bf16.msra.mxu0 %v1726
        %4378 = vmatprep.subr.bf16.mxu0 %v1853
        %4379 = vmatpush1.bf16.msra.mxu0 %v1852
        %4380 = vmatprep.subr.bf16.mxu0 %v1979
        %4381 = vmatpush1.bf16.msra.mxu0 %v1978
        %4382 = vmatprep.subr.bf16.mxu0 0
        %4383 = vmatpush1.bf16.msra.mxu0 0
        %4384 = vmatprep.subr.bf16.mxu0 0
        %4385 = vmatpush1.bf16.msra.mxu0 0
        %4386 = vmatprep.subr.bf16.mxu0 0
        %4387 = vmatpush1.bf16.msra.mxu0 0
        %4388 = vmatprep.subr.bf16.mxu0 0
        %4389 = vmatpush1.bf16.msra.mxu0 0
        %4390 = vmatprep.subr.bf16.mxu0 0
        %4391 = vmatpush1.bf16.msra.mxu0 0
        %4392 = vmatprep.subr.bf16.mxu0 0
        %4393 = vmatpush1.bf16.msra.mxu0 0
        %4394 = vmatprep.subr.bf16.mxu0 0
        %4395 = vmatpush1.bf16.msra.mxu0 0
        %4396 = vmatprep.subr.bf16.mxu0 0
        %4397 = vmatpush1.bf16.msra.mxu0 0
        %4398 = vmatprep.mubr.bf16.mxu0 0
        %4399 = vmatmul.mubr.bf16.gmra.mrb[0].mxu0 %v475
        %v4400 = vpop.f32.mrb[0].mxu0
        %v4401 = vadd.f32 0.0, %v4400
        %v4402 = vpop.f32.mrb[0].mxu0
        %v4403 = vadd.f32 0.0, %v4402
        %v4404 = vpop.f32.mrb[0].mxu0
        %v4405 = vpop.f32.mrb[0].mxu0
        %4406 = vdwg.mxu0
        %4407 = vmatprep.subr.bf16.mxu0 %v1099
        %4408 = vmatpush1.bf16.msra.mxu0 %v1098
        %4409 = vmatprep.subr.bf16.mxu0 %v1225
        %4410 = vmatpush1.bf16.msra.mxu0 %v1224
        %4411 = vmatprep.subr.bf16.mxu0 %v1351
        %4412 = vmatpush1.bf16.msra.mxu0 %v1350
        %4413 = vmatprep.subr.bf16.mxu0 %v1477
        %4414 = vmatpush1.bf16.msra.mxu0 %v1476
        %4415 = vmatprep.subr.bf16.mxu0 %v1603
        %4416 = vmatpush1.bf16.msra.mxu0 %v1602
        %4417 = vmatprep.subr.bf16.mxu0 %v1729
        %4418 = vmatpush1.bf16.msra.mxu0 %v1728
        %4419 = vmatprep.subr.bf16.mxu0 %v1855
        %4420 = vmatpush1.bf16.msra.mxu0 %v1854
        %4421 = vmatprep.subr.bf16.mxu0 %v1981
        %4422 = vmatpush1.bf16.msra.mxu0 %v1980
        %4423 = vmatprep.subr.bf16.mxu0 0
        %4424 = vmatpush1.bf16.msra.mxu0 0
        %4425 = vmatprep.subr.bf16.mxu0 0
        %4426 = vmatpush1.bf16.msra.mxu0 0
        %4427 = vmatprep.subr.bf16.mxu0 0
        %4428 = vmatpush1.bf16.msra.mxu0 0
        %4429 = vmatprep.subr.bf16.mxu0 0
        %4430 = vmatpush1.bf16.msra.mxu0 0
        %4431 = vmatprep.subr.bf16.mxu0 0
        %4432 = vmatpush1.bf16.msra.mxu0 0
        %4433 = vmatprep.subr.bf16.mxu0 0
        %4434 = vmatpush1.bf16.msra.mxu0 0
        %4435 = vmatprep.subr.bf16.mxu0 0
        %4436 = vmatpush1.bf16.msra.mxu0 0
        %4437 = vmatprep.subr.bf16.mxu0 0
        %4438 = vmatpush1.bf16.msra.mxu0 0
        %4439 = vmatprep.mubr.bf16.mxu0 0
        %4440 = vmatmul.mubr.bf16.gmra.mrb[0].mxu0 %v475
        %v4441 = vpop.f32.mrb[0].mxu0
        %v4442 = vadd.f32 0.0, %v4441
        %v4443 = vpop.f32.mrb[0].mxu0
        %v4444 = vadd.f32 0.0, %v4443
        %v4445 = vpop.f32.mrb[0].mxu0
        %v4446 = vpop.f32.mrb[0].mxu0
        %4447 = vdwg.mxu0
        %4448 = vmatprep.subr.bf16.mxu0 %v1101
        %4449 = vmatpush1.bf16.msra.mxu0 %v1100
        %4450 = vmatprep.subr.bf16.mxu0 %v1227
        %4451 = vmatpush1.bf16.msra.mxu0 %v1226
        %4452 = vmatprep.subr.bf16.mxu0 %v1353
        %4453 = vmatpush1.bf16.msra.mxu0 %v1352
        %4454 = vmatprep.subr.bf16.mxu0 %v1479
        %4455 = vmatpush1.bf16.msra.mxu0 %v1478
        %4456 = vmatprep.subr.bf16.mxu0 %v1605
        %4457 = vmatpush1.bf16.msra.mxu0 %v1604
        %4458 = vmatprep.subr.bf16.mxu0 %v1731
        %4459 = vmatpush1.bf16.msra.mxu0 %v1730
        %4460 = vmatprep.subr.bf16.mxu0 %v1857
        %4461 = vmatpush1.bf16.msra.mxu0 %v1856
        %4462 = vmatprep.subr.bf16.mxu0 %v1983
        %4463 = vmatpush1.bf16.msra.mxu0 %v1982
        %4464 = vmatprep.subr.bf16.mxu0 0
        %4465 = vmatpush1.bf16.msra.mxu0 0
        %4466 = vmatprep.subr.bf16.mxu0 0
        %4467 = vmatpush1.bf16.msra.mxu0 0
        %4468 = vmatprep.subr.bf16.mxu0 0
        %4469 = vmatpush1.bf16.msra.mxu0 0
        %4470 = vmatprep.subr.bf16.mxu0 0
        %4471 = vmatpush1.bf16.msra.mxu0 0
        %4472 = vmatprep.subr.bf16.mxu0 0
        %4473 = vmatpush1.bf16.msra.mxu0 0
        %4474 = vmatprep.subr.bf16.mxu0 0
        %4475 = vmatpush1.bf16.msra.mxu0 0
        %4476 = vmatprep.subr.bf16.mxu0 0
        %4477 = vmatpush1.bf16.msra.mxu0 0
        %4478 = vmatprep.subr.bf16.mxu0 0
        %4479 = vmatpush1.bf16.msra.mxu0 0
        %4480 = vmatprep.mubr.bf16.mxu0 0
        %4481 = vmatmul.mubr.bf16.gmra.mrb[0].mxu0 %v475
        %v4482 = vpop.f32.mrb[0].mxu0
        %v4483 = vadd.f32 0.0, %v4482
        %v4484 = vpop.f32.mrb[0].mxu0
        %v4485 = vadd.f32 0.0, %v4484
        %v4486 = vpop.f32.mrb[0].mxu0
        %v4487 = vpop.f32.mrb[0].mxu0
        %4488 = vdwg.mxu0
        %4489 = vmatprep.subr.bf16.mxu0 %v1103
        %4490 = vmatpush1.bf16.msra.mxu0 %v1102
        %4491 = vmatprep.subr.bf16.mxu0 %v1229
        %4492 = vmatpush1.bf16.msra.mxu0 %v1228
        %4493 = vmatprep.subr.bf16.mxu0 %v1355
        %4494 = vmatpush1.bf16.msra.mxu0 %v1354
        %4495 = vmatprep.subr.bf16.mxu0 %v1481
        %4496 = vmatpush1.bf16.msra.mxu0 %v1480
        %4497 = vmatprep.subr.bf16.mxu0 %v1607
        %4498 = vmatpush1.bf16.msra.mxu0 %v1606
        %4499 = vmatprep.subr.bf16.mxu0 %v1733
        %4500 = vmatpush1.bf16.msra.mxu0 %v1732
        %4501 = vmatprep.subr.bf16.mxu0 %v1859
        %4502 = vmatpush1.bf16.msra.mxu0 %v1858
        %4503 = vmatprep.subr.bf16.mxu0 %v1985
        %4504 = vmatpush1.bf16.msra.mxu0 %v1984
        %4505 = vmatprep.subr.bf16.mxu0 0
        %4506 = vmatpush1.bf16.msra.mxu0 0
        %4507 = vmatprep.subr.bf16.mxu0 0
        %4508 = vmatpush1.bf16.msra.mxu0 0
        %4509 = vmatprep.subr.bf16.mxu0 0
        %4510 = vmatpush1.bf16.msra.mxu0 0
        %4511 = vmatprep.subr.bf16.mxu0 0
        %4512 = vmatpush1.bf16.msra.mxu0 0
        %4513 = vmatprep.subr.bf16.mxu0 0
        %4514 = vmatpush1.bf16.msra.mxu0 0
        %4515 = vmatprep.subr.bf16.mxu0 0
        %4516 = vmatpush1.bf16.msra.mxu0 0
        %4517 = vmatprep.subr.bf16.mxu0 0
        %4518 = vmatpush1.bf16.msra.mxu0 0
        %4519 = vmatprep.subr.bf16.mxu0 0
        %4520 = vmatpush1.bf16.msra.mxu0 0
        %4521 = vmatprep.mubr.bf16.mxu0 0
        %4522 = vmatmul.mubr.bf16.gmra.mrb[0].mxu0 %v475
        %v4523 = vpop.f32.mrb[0].mxu0
        %v4524 = vadd.f32 0.0, %v4523
        %v4525 = vpop.f32.mrb[0].mxu0
        %v4526 = vadd.f32 0.0, %v4525
        %v4527 = vpop.f32.mrb[0].mxu0
        %v4528 = vpop.f32.mrb[0].mxu0
        %4529 = vdwg.mxu0
        %4530 = vmatprep.subr.bf16.mxu0 %v1105
        %4531 = vmatpush1.bf16.msra.mxu0 %v1104
        %4532 = vmatprep.subr.bf16.mxu0 %v1231
        %4533 = vmatpush1.bf16.msra.mxu0 %v1230
        %4534 = vmatprep.subr.bf16.mxu0 %v1357
        %4535 = vmatpush1.bf16.msra.mxu0 %v1356
        %4536 = vmatprep.subr.bf16.mxu0 %v1483
        %4537 = vmatpush1.bf16.msra.mxu0 %v1482
        %4538 = vmatprep.subr.bf16.mxu0 %v1609
        %4539 = vmatpush1.bf16.msra.mxu0 %v1608
        %4540 = vmatprep.subr.bf16.mxu0 %v1735
        %4541 = vmatpush1.bf16.msra.mxu0 %v1734
        %4542 = vmatprep.subr.bf16.mxu0 %v1861
        %4543 = vmatpush1.bf16.msra.mxu0 %v1860
        %4544 = vmatprep.subr.bf16.mxu0 %v1987
        %4545 = vmatpush1.bf16.msra.mxu0 %v1986
        %4546 = vmatprep.subr.bf16.mxu0 0
        %4547 = vmatpush1.bf16.msra.mxu0 0
        %4548 = vmatprep.subr.bf16.mxu0 0
        %4549 = vmatpush1.bf16.msra.mxu0 0
        %4550 = vmatprep.subr.bf16.mxu0 0
        %4551 = vmatpush1.bf16.msra.mxu0 0
        %4552 = vmatprep.subr.bf16.mxu0 0
        %4553 = vmatpush1.bf16.msra.mxu0 0
        %4554 = vmatprep.subr.bf16.mxu0 0
        %4555 = vmatpush1.bf16.msra.mxu0 0
        %4556 = vmatprep.subr.bf16.mxu0 0
        %4557 = vmatpush1.bf16.msra.mxu0 0
        %4558 = vmatprep.subr.bf16.mxu0 0
        %4559 = vmatpush1.bf16.msra.mxu0 0
        %4560 = vmatprep.subr.bf16.mxu0 0
        %4561 = vmatpush1.bf16.msra.mxu0 0
        %4562 = vmatprep.mubr.bf16.mxu0 0
        %4563 = vmatmul.mubr.bf16.gmra.mrb[0].mxu0 %v475
        %v4564 = vpop.f32.mrb[0].mxu0
        %v4565 = vadd.f32 0.0, %v4564
        %v4566 = vpop.f32.mrb[0].mxu0
        %v4567 = vadd.f32 0.0, %v4566
        %v4568 = vpop.f32.mrb[0].mxu0
        %v4569 = vpop.f32.mrb[0].mxu0
        %4570 = vdwg.mxu0
        %v4571 = vld [vmem:[%s332] sm:$0xff]
        %v4572 = vld [vmem:[%s332 + $0x8] sm:$0xff]
        %v4573 = vld [vmem:[%s332 + $0x10] sm:$0xff]
        %v4574 = vld [vmem:[%s332 + $0x18] sm:$0xff]
        %v4575 = vld [vmem:[%s332 + $0x20] sm:$0xff]
        %v4576 = vld [vmem:[%s332 + $0x28] sm:$0xff]
        %v4577 = vld [vmem:[%s332 + $0x30] sm:$0xff]
        %v4578 = vld [vmem:[%s332 + $0x38] sm:$0xff]
        %v4579 = vld [vmem:[%s332 + $0x40] sm:$0xff]
        %v4580 = vld [vmem:[%s332 + $0x48] sm:$0xff]
        %v4581 = vld [vmem:[%s332 + $0x50] sm:$0xff]
        %v4582 = vld [vmem:[%s332 + $0x58] sm:$0xff]
        %v4583 = vld [vmem:[%s332 + $0x60] sm:$0xff]
        %v4584 = vld [vmem:[%s332 + $0x68] sm:$0xff]
        %v4585 = vld [vmem:[%s332 + $0x70] sm:$0xff]
        %v4586 = vld [vmem:[%s332 + $0x78] sm:$0x3f]
        %v4603 = vlaneseq
        %v4604 = vshrl.u32 %v4603, 7
        %v4605 = vsub.s32 0, %v4604
        %v4606 = vrot.slane %v4571, %v4605
        %v4607 = vlaneseq
        %v4608 = vshrl.u32 %v4607, 7
        %v4609 = vsub.s32 1, %v4608
        %v4610 = vrot.slane %v4571, %v4609
        %v4611 = vlaneseq
        %v4612 = vshrl.u32 %v4611, 7
        %v4613 = vsub.s32 2, %v4612
        %v4614 = vrot.slane %v4571, %v4613
        %v4615 = vlaneseq
        %v4616 = vshrl.u32 %v4615, 7
        %v4617 = vsub.s32 3, %v4616
        %v4618 = vrot.slane %v4571, %v4617
        %v4619 = vlaneseq
        %v4620 = vshrl.u32 %v4619, 7
        %v4621 = vsub.s32 4, %v4620
        %v4622 = vrot.slane %v4571, %v4621
        %v4623 = vlaneseq
        %v4624 = vshrl.u32 %v4623, 7
        %v4625 = vsub.s32 5, %v4624
        %v4626 = vrot.slane %v4571, %v4625
        %v4627 = vlaneseq
        %v4628 = vshrl.u32 %v4627, 7
        %v4629 = vsub.s32 6, %v4628
        %v4630 = vrot.slane %v4571, %v4629
        %v4631 = vlaneseq
        %v4632 = vshrl.u32 %v4631, 7
        %v4633 = vsub.s32 7, %v4632
        %v4634 = vrot.slane %v4571, %v4633
        %v4635 = vlaneseq
        %v4636 = vshrl.u32 %v4635, 7
        %v4637 = vsub.s32 0, %v4636
        %v4638 = vrot.slane %v4572, %v4637
        %v4639 = vlaneseq
        %v4640 = vshrl.u32 %v4639, 7
        %v4641 = vsub.s32 1, %v4640
        %v4642 = vrot.slane %v4572, %v4641
        %v4643 = vlaneseq
        %v4644 = vshrl.u32 %v4643, 7
        %v4645 = vsub.s32 2, %v4644
        %v4646 = vrot.slane %v4572, %v4645
        %v4647 = vlaneseq
        %v4648 = vshrl.u32 %v4647, 7
        %v4649 = vsub.s32 3, %v4648
        %v4650 = vrot.slane %v4572, %v4649
        %v4651 = vlaneseq
        %v4652 = vshrl.u32 %v4651, 7
        %v4653 = vsub.s32 4, %v4652
        %v4654 = vrot.slane %v4572, %v4653
        %v4655 = vlaneseq
        %v4656 = vshrl.u32 %v4655, 7
        %v4657 = vsub.s32 5, %v4656
        %v4658 = vrot.slane %v4572, %v4657
        %v4659 = vlaneseq
        %v4660 = vshrl.u32 %v4659, 7
        %v4661 = vsub.s32 6, %v4660
        %v4662 = vrot.slane %v4572, %v4661
        %v4663 = vlaneseq
        %v4664 = vshrl.u32 %v4663, 7
        %v4665 = vsub.s32 7, %v4664
        %v4666 = vrot.slane %v4572, %v4665
        %v4667 = vlaneseq
        %v4668 = vshrl.u32 %v4667, 7
        %v4669 = vsub.s32 0, %v4668
        %v4670 = vrot.slane %v4573, %v4669
        %v4671 = vlaneseq
        %v4672 = vshrl.u32 %v4671, 7
        %v4673 = vsub.s32 1, %v4672
        %v4674 = vrot.slane %v4573, %v4673
        %v4675 = vlaneseq
        %v4676 = vshrl.u32 %v4675, 7
        %v4677 = vsub.s32 2, %v4676
        %v4678 = vrot.slane %v4573, %v4677
        %v4679 = vlaneseq
        %v4680 = vshrl.u32 %v4679, 7
        %v4681 = vsub.s32 3, %v4680
        %v4682 = vrot.slane %v4573, %v4681
        %v4683 = vlaneseq
        %v4684 = vshrl.u32 %v4683, 7
        %v4685 = vsub.s32 4, %v4684
        %v4686 = vrot.slane %v4573, %v4685
        %v4687 = vlaneseq
        %v4688 = vshrl.u32 %v4687, 7
        %v4689 = vsub.s32 5, %v4688
        %v4690 = vrot.slane %v4573, %v4689
        %v4691 = vlaneseq
        %v4692 = vshrl.u32 %v4691, 7
        %v4693 = vsub.s32 6, %v4692
        %v4694 = vrot.slane %v4573, %v4693
        %v4695 = vlaneseq
        %v4696 = vshrl.u32 %v4695, 7
        %v4697 = vsub.s32 7, %v4696
        %v4698 = vrot.slane %v4573, %v4697
        %v4699 = vlaneseq
        %v4700 = vshrl.u32 %v4699, 7
        %v4701 = vsub.s32 0, %v4700
        %v4702 = vrot.slane %v4574, %v4701
        %v4703 = vlaneseq
        %v4704 = vshrl.u32 %v4703, 7
        %v4705 = vsub.s32 1, %v4704
        %v4706 = vrot.slane %v4574, %v4705
        %v4707 = vlaneseq
        %v4708 = vshrl.u32 %v4707, 7
        %v4709 = vsub.s32 2, %v4708
        %v4710 = vrot.slane %v4574, %v4709
        %v4711 = vlaneseq
        %v4712 = vshrl.u32 %v4711, 7
        %v4713 = vsub.s32 3, %v4712
        %v4714 = vrot.slane %v4574, %v4713
        %v4715 = vlaneseq
        %v4716 = vshrl.u32 %v4715, 7
        %v4717 = vsub.s32 4, %v4716
        %v4718 = vrot.slane %v4574, %v4717
        %v4719 = vlaneseq
        %v4720 = vshrl.u32 %v4719, 7
        %v4721 = vsub.s32 5, %v4720
        %v4722 = vrot.slane %v4574, %v4721
        %v4723 = vlaneseq
        %v4724 = vshrl.u32 %v4723, 7
        %v4725 = vsub.s32 6, %v4724
        %v4726 = vrot.slane %v4574, %v4725
        %v4727 = vlaneseq
        %v4728 = vshrl.u32 %v4727, 7
        %v4729 = vsub.s32 7, %v4728
        %v4730 = vrot.slane %v4574, %v4729
        %v4731 = vlaneseq
        %v4732 = vshrl.u32 %v4731, 7
        %v4733 = vsub.s32 0, %v4732
        %v4734 = vrot.slane %v4575, %v4733
        %v4735 = vlaneseq
        %v4736 = vshrl.u32 %v4735, 7
        %v4737 = vsub.s32 1, %v4736
        %v4738 = vrot.slane %v4575, %v4737
        %v4739 = vlaneseq
        %v4740 = vshrl.u32 %v4739, 7
        %v4741 = vsub.s32 2, %v4740
        %v4742 = vrot.slane %v4575, %v4741
        %v4743 = vlaneseq
        %v4744 = vshrl.u32 %v4743, 7
        %v4745 = vsub.s32 3, %v4744
        %v4746 = vrot.slane %v4575, %v4745
        %v4747 = vlaneseq
        %v4748 = vshrl.u32 %v4747, 7
        %v4749 = vsub.s32 4, %v4748
        %v4750 = vrot.slane %v4575, %v4749
        %v4751 = vlaneseq
        %v4752 = vshrl.u32 %v4751, 7
        %v4753 = vsub.s32 5, %v4752
        %v4754 = vrot.slane %v4575, %v4753
        %v4755 = vlaneseq
        %v4756 = vshrl.u32 %v4755, 7
        %v4757 = vsub.s32 6, %v4756
        %v4758 = vrot.slane %v4575, %v4757
        %v4759 = vlaneseq
        %v4760 = vshrl.u32 %v4759, 7
        %v4761 = vsub.s32 7, %v4760
        %v4762 = vrot.slane %v4575, %v4761
        %v4763 = vlaneseq
        %v4764 = vshrl.u32 %v4763, 7
        %v4765 = vsub.s32 0, %v4764
        %v4766 = vrot.slane %v4576, %v4765
        %v4767 = vlaneseq
        %v4768 = vshrl.u32 %v4767, 7
        %v4769 = vsub.s32 1, %v4768
        %v4770 = vrot.slane %v4576, %v4769
        %v4771 = vlaneseq
        %v4772 = vshrl.u32 %v4771, 7
        %v4773 = vsub.s32 2, %v4772
        %v4774 = vrot.slane %v4576, %v4773
        %v4775 = vlaneseq
        %v4776 = vshrl.u32 %v4775, 7
        %v4777 = vsub.s32 3, %v4776
        %v4778 = vrot.slane %v4576, %v4777
        %v4779 = vlaneseq
        %v4780 = vshrl.u32 %v4779, 7
        %v4781 = vsub.s32 4, %v4780
        %v4782 = vrot.slane %v4576, %v4781
        %v4783 = vlaneseq
        %v4784 = vshrl.u32 %v4783, 7
        %v4785 = vsub.s32 5, %v4784
        %v4786 = vrot.slane %v4576, %v4785
        %v4787 = vlaneseq
        %v4788 = vshrl.u32 %v4787, 7
        %v4789 = vsub.s32 6, %v4788
        %v4790 = vrot.slane %v4576, %v4789
        %v4791 = vlaneseq
        %v4792 = vshrl.u32 %v4791, 7
        %v4793 = vsub.s32 7, %v4792
        %v4794 = vrot.slane %v4576, %v4793
        %v4795 = vlaneseq
        %v4796 = vshrl.u32 %v4795, 7
        %v4797 = vsub.s32 0, %v4796
        %v4798 = vrot.slane %v4577, %v4797
        %v4799 = vlaneseq
        %v4800 = vshrl.u32 %v4799, 7
        %v4801 = vsub.s32 1, %v4800
        %v4802 = vrot.slane %v4577, %v4801
        %v4803 = vlaneseq
        %v4804 = vshrl.u32 %v4803, 7
        %v4805 = vsub.s32 2, %v4804
        %v4806 = vrot.slane %v4577, %v4805
        %v4807 = vlaneseq
        %v4808 = vshrl.u32 %v4807, 7
        %v4809 = vsub.s32 3, %v4808
        %v4810 = vrot.slane %v4577, %v4809
        %v4811 = vlaneseq
        %v4812 = vshrl.u32 %v4811, 7
        %v4813 = vsub.s32 4, %v4812
        %v4814 = vrot.slane %v4577, %v4813
        %v4815 = vlaneseq
        %v4816 = vshrl.u32 %v4815, 7
        %v4817 = vsub.s32 5, %v4816
        %v4818 = vrot.slane %v4577, %v4817
        %v4819 = vlaneseq
        %v4820 = vshrl.u32 %v4819, 7
        %v4821 = vsub.s32 6, %v4820
        %v4822 = vrot.slane %v4577, %v4821
        %v4823 = vlaneseq
        %v4824 = vshrl.u32 %v4823, 7
        %v4825 = vsub.s32 7, %v4824
        %v4826 = vrot.slane %v4577, %v4825
        %v4827 = vlaneseq
        %v4828 = vshrl.u32 %v4827, 7
        %v4829 = vsub.s32 0, %v4828
        %v4830 = vrot.slane %v4578, %v4829
        %v4831 = vlaneseq
        %v4832 = vshrl.u32 %v4831, 7
        %v4833 = vsub.s32 1, %v4832
        %v4834 = vrot.slane %v4578, %v4833
        %v4835 = vlaneseq
        %v4836 = vshrl.u32 %v4835, 7
        %v4837 = vsub.s32 2, %v4836
        %v4838 = vrot.slane %v4578, %v4837
        %v4839 = vlaneseq
        %v4840 = vshrl.u32 %v4839, 7
        %v4841 = vsub.s32 3, %v4840
        %v4842 = vrot.slane %v4578, %v4841
        %v4843 = vlaneseq
        %v4844 = vshrl.u32 %v4843, 7
        %v4845 = vsub.s32 4, %v4844
        %v4846 = vrot.slane %v4578, %v4845
        %v4847 = vlaneseq
        %v4848 = vshrl.u32 %v4847, 7
        %v4849 = vsub.s32 5, %v4848
        %v4850 = vrot.slane %v4578, %v4849
        %v4851 = vlaneseq
        %v4852 = vshrl.u32 %v4851, 7
        %v4853 = vsub.s32 6, %v4852
        %v4854 = vrot.slane %v4578, %v4853
        %v4855 = vlaneseq
        %v4856 = vshrl.u32 %v4855, 7
        %v4857 = vsub.s32 7, %v4856
        %v4858 = vrot.slane %v4578, %v4857
        %v4859 = vlaneseq
        %v4860 = vshrl.u32 %v4859, 7
        %v4861 = vsub.s32 0, %v4860
        %v4862 = vrot.slane %v4579, %v4861
        %v4863 = vlaneseq
        %v4864 = vshrl.u32 %v4863, 7
        %v4865 = vsub.s32 1, %v4864
        %v4866 = vrot.slane %v4579, %v4865
        %v4867 = vlaneseq
        %v4868 = vshrl.u32 %v4867, 7
        %v4869 = vsub.s32 2, %v4868
        %v4870 = vrot.slane %v4579, %v4869
        %v4871 = vlaneseq
        %v4872 = vshrl.u32 %v4871, 7
        %v4873 = vsub.s32 3, %v4872
        %v4874 = vrot.slane %v4579, %v4873
        %v4875 = vlaneseq
        %v4876 = vshrl.u32 %v4875, 7
        %v4877 = vsub.s32 4, %v4876
        %v4878 = vrot.slane %v4579, %v4877
        %v4879 = vlaneseq
        %v4880 = vshrl.u32 %v4879, 7
        %v4881 = vsub.s32 5, %v4880
        %v4882 = vrot.slane %v4579, %v4881
        %v4883 = vlaneseq
        %v4884 = vshrl.u32 %v4883, 7
        %v4885 = vsub.s32 6, %v4884
        %v4886 = vrot.slane %v4579, %v4885
        %v4887 = vlaneseq
        %v4888 = vshrl.u32 %v4887, 7
        %v4889 = vsub.s32 7, %v4888
        %v4890 = vrot.slane %v4579, %v4889
        %v4891 = vlaneseq
        %v4892 = vshrl.u32 %v4891, 7
        %v4893 = vsub.s32 0, %v4892
        %v4894 = vrot.slane %v4580, %v4893
        %v4895 = vlaneseq
        %v4896 = vshrl.u32 %v4895, 7
        %v4897 = vsub.s32 1, %v4896
        %v4898 = vrot.slane %v4580, %v4897
        %v4899 = vlaneseq
        %v4900 = vshrl.u32 %v4899, 7
        %v4901 = vsub.s32 2, %v4900
        %v4902 = vrot.slane %v4580, %v4901
        %v4903 = vlaneseq
        %v4904 = vshrl.u32 %v4903, 7
        %v4905 = vsub.s32 3, %v4904
        %v4906 = vrot.slane %v4580, %v4905
        %v4907 = vlaneseq
        %v4908 = vshrl.u32 %v4907, 7
        %v4909 = vsub.s32 4, %v4908
        %v4910 = vrot.slane %v4580, %v4909
        %v4911 = vlaneseq
        %v4912 = vshrl.u32 %v4911, 7
        %v4913 = vsub.s32 5, %v4912
        %v4914 = vrot.slane %v4580, %v4913
        %v4915 = vlaneseq
        %v4916 = vshrl.u32 %v4915, 7
        %v4917 = vsub.s32 6, %v4916
        %v4918 = vrot.slane %v4580, %v4917
        %v4919 = vlaneseq
        %v4920 = vshrl.u32 %v4919, 7
        %v4921 = vsub.s32 7, %v4920
        %v4922 = vrot.slane %v4580, %v4921
        %v4923 = vlaneseq
        %v4924 = vshrl.u32 %v4923, 7
        %v4925 = vsub.s32 0, %v4924
        %v4926 = vrot.slane %v4581, %v4925
        %v4927 = vlaneseq
        %v4928 = vshrl.u32 %v4927, 7
        %v4929 = vsub.s32 1, %v4928
        %v4930 = vrot.slane %v4581, %v4929
        %v4931 = vlaneseq
        %v4932 = vshrl.u32 %v4931, 7
        %v4933 = vsub.s32 2, %v4932
        %v4934 = vrot.slane %v4581, %v4933
        %v4935 = vlaneseq
        %v4936 = vshrl.u32 %v4935, 7
        %v4937 = vsub.s32 3, %v4936
        %v4938 = vrot.slane %v4581, %v4937
        %v4939 = vlaneseq
        %v4940 = vshrl.u32 %v4939, 7
        %v4941 = vsub.s32 4, %v4940
        %v4942 = vrot.slane %v4581, %v4941
        %v4943 = vlaneseq
        %v4944 = vshrl.u32 %v4943, 7
        %v4945 = vsub.s32 5, %v4944
        %v4946 = vrot.slane %v4581, %v4945
        %v4947 = vlaneseq
        %v4948 = vshrl.u32 %v4947, 7
        %v4949 = vsub.s32 6, %v4948
        %v4950 = vrot.slane %v4581, %v4949
        %v4951 = vlaneseq
        %v4952 = vshrl.u32 %v4951, 7
        %v4953 = vsub.s32 7, %v4952
        %v4954 = vrot.slane %v4581, %v4953
        %v4955 = vlaneseq
        %v4956 = vshrl.u32 %v4955, 7
        %v4957 = vsub.s32 0, %v4956
        %v4958 = vrot.slane %v4582, %v4957
        %v4959 = vlaneseq
        %v4960 = vshrl.u32 %v4959, 7
        %v4961 = vsub.s32 1, %v4960
        %v4962 = vrot.slane %v4582, %v4961
        %v4963 = vlaneseq
        %v4964 = vshrl.u32 %v4963, 7
        %v4965 = vsub.s32 2, %v4964
        %v4966 = vrot.slane %v4582, %v4965
        %v4967 = vlaneseq
        %v4968 = vshrl.u32 %v4967, 7
        %v4969 = vsub.s32 3, %v4968
        %v4970 = vrot.slane %v4582, %v4969
        %v4971 = vlaneseq
        %v4972 = vshrl.u32 %v4971, 7
        %v4973 = vsub.s32 4, %v4972
        %v4974 = vrot.slane %v4582, %v4973
        %v4975 = vlaneseq
        %v4976 = vshrl.u32 %v4975, 7
        %v4977 = vsub.s32 5, %v4976
        %v4978 = vrot.slane %v4582, %v4977
        %v4979 = vlaneseq
        %v4980 = vshrl.u32 %v4979, 7
        %v4981 = vsub.s32 6, %v4980
        %v4982 = vrot.slane %v4582, %v4981
        %v4983 = vlaneseq
        %v4984 = vshrl.u32 %v4983, 7
        %v4985 = vsub.s32 7, %v4984
        %v4986 = vrot.slane %v4582, %v4985
        %v4987 = vlaneseq
        %v4988 = vshrl.u32 %v4987, 7
        %v4989 = vsub.s32 0, %v4988
        %v4990 = vrot.slane %v4583, %v4989
        %v4991 = vlaneseq
        %v4992 = vshrl.u32 %v4991, 7
        %v4993 = vsub.s32 1, %v4992
        %v4994 = vrot.slane %v4583, %v4993
        %v4995 = vlaneseq
        %v4996 = vshrl.u32 %v4995, 7
        %v4997 = vsub.s32 2, %v4996
        %v4998 = vrot.slane %v4583, %v4997
        %v4999 = vlaneseq
        %v5000 = vshrl.u32 %v4999, 7
        %v5001 = vsub.s32 3, %v5000
        %v5002 = vrot.slane %v4583, %v5001
        %v5003 = vlaneseq
        %v5004 = vshrl.u32 %v5003, 7
        %v5005 = vsub.s32 4, %v5004
        %v5006 = vrot.slane %v4583, %v5005
        %v5007 = vlaneseq
        %v5008 = vshrl.u32 %v5007, 7
        %v5009 = vsub.s32 5, %v5008
        %v5010 = vrot.slane %v4583, %v5009
        %v5011 = vlaneseq
        %v5012 = vshrl.u32 %v5011, 7
        %v5013 = vsub.s32 6, %v5012
        %v5014 = vrot.slane %v4583, %v5013
        %v5015 = vlaneseq
        %v5016 = vshrl.u32 %v5015, 7
        %v5017 = vsub.s32 7, %v5016
        %v5018 = vrot.slane %v4583, %v5017
        %v5019 = vlaneseq
        %v5020 = vshrl.u32 %v5019, 7
        %v5021 = vsub.s32 0, %v5020
        %v5022 = vrot.slane %v4584, %v5021
        %v5023 = vlaneseq
        %v5024 = vshrl.u32 %v5023, 7
        %v5025 = vsub.s32 1, %v5024
        %v5026 = vrot.slane %v4584, %v5025
        %v5027 = vlaneseq
        %v5028 = vshrl.u32 %v5027, 7
        %v5029 = vsub.s32 2, %v5028
        %v5030 = vrot.slane %v4584, %v5029
        %v5031 = vlaneseq
        %v5032 = vshrl.u32 %v5031, 7
        %v5033 = vsub.s32 3, %v5032
        %v5034 = vrot.slane %v4584, %v5033
        %v5035 = vlaneseq
        %v5036 = vshrl.u32 %v5035, 7
        %v5037 = vsub.s32 4, %v5036
        %v5038 = vrot.slane %v4584, %v5037
        %v5039 = vlaneseq
        %v5040 = vshrl.u32 %v5039, 7
        %v5041 = vsub.s32 5, %v5040
        %v5042 = vrot.slane %v4584, %v5041
        %v5043 = vlaneseq
        %v5044 = vshrl.u32 %v5043, 7
        %v5045 = vsub.s32 6, %v5044
        %v5046 = vrot.slane %v4584, %v5045
        %v5047 = vlaneseq
        %v5048 = vshrl.u32 %v5047, 7
        %v5049 = vsub.s32 7, %v5048
        %v5050 = vrot.slane %v4584, %v5049
        %v5051 = vlaneseq
        %v5052 = vshrl.u32 %v5051, 7
        %v5053 = vsub.s32 0, %v5052
        %v5054 = vrot.slane %v4585, %v5053
        %v5055 = vlaneseq
        %v5056 = vshrl.u32 %v5055, 7
        %v5057 = vsub.s32 1, %v5056
        %v5058 = vrot.slane %v4585, %v5057
        %v5059 = vlaneseq
        %v5060 = vshrl.u32 %v5059, 7
        %v5061 = vsub.s32 2, %v5060
        %v5062 = vrot.slane %v4585, %v5061
        %v5063 = vlaneseq
        %v5064 = vshrl.u32 %v5063, 7
        %v5065 = vsub.s32 3, %v5064
        %v5066 = vrot.slane %v4585, %v5065
        %v5067 = vlaneseq
        %v5068 = vshrl.u32 %v5067, 7
        %v5069 = vsub.s32 4, %v5068
        %v5070 = vrot.slane %v4585, %v5069
        %v5071 = vlaneseq
        %v5072 = vshrl.u32 %v5071, 7
        %v5073 = vsub.s32 5, %v5072
        %v5074 = vrot.slane %v4585, %v5073
        %v5075 = vlaneseq
        %v5076 = vshrl.u32 %v5075, 7
        %v5077 = vsub.s32 6, %v5076
        %v5078 = vrot.slane %v4585, %v5077
        %v5079 = vlaneseq
        %v5080 = vshrl.u32 %v5079, 7
        %v5081 = vsub.s32 7, %v5080
        %v5082 = vrot.slane %v4585, %v5081
        %v5083 = vlaneseq
        %v5084 = vshrl.u32 %v5083, 7
        %v5085 = vsub.s32 0, %v5084
        %v5086 = vrot.slane %v4586, %v5085
        %v5087 = vlaneseq
        %v5088 = vshrl.u32 %v5087, 7
        %v5089 = vsub.s32 1, %v5088
        %v5090 = vrot.slane %v4586, %v5089
        %v5091 = vlaneseq
        %v5092 = vshrl.u32 %v5091, 7
        %v5093 = vsub.s32 2, %v5092
        %v5094 = vrot.slane %v4586, %v5093
        %v5095 = vlaneseq
        %v5096 = vshrl.u32 %v5095, 7
        %v5097 = vsub.s32 3, %v5096
        %v5098 = vrot.slane %v4586, %v5097
        %v5099 = vlaneseq
        %v5100 = vshrl.u32 %v5099, 7
        %v5101 = vsub.s32 4, %v5100
        %v5102 = vrot.slane %v4586, %v5101
        %v5103 = vlaneseq
        %v5104 = vshrl.u32 %v5103, 7
        %v5105 = vsub.s32 5, %v5104
        %v5106 = vrot.slane %v4586, %v5105
        %v5233 = vmul.f32 %v2023, %v4606
        %v5234 = vmul.f32 %v2025, %v4610
        %v5235 = vmul.f32 %v2064, %v4614
        %v5236 = vmul.f32 %v2066, %v4618
        %v5237 = vmul.f32 %v2105, %v4622
        %v5238 = vmul.f32 %v2107, %v4626
        %v5239 = vmul.f32 %v2146, %v4630
        %v5240 = vmul.f32 %v2148, %v4634
        %v5241 = vmul.f32 %v2187, %v4638
        %v5242 = vmul.f32 %v2189, %v4642
        %v5243 = vmul.f32 %v2228, %v4646
        %v5244 = vmul.f32 %v2230, %v4650
        %v5245 = vmul.f32 %v2269, %v4654
        %v5246 = vmul.f32 %v2271, %v4658
        %v5247 = vmul.f32 %v2310, %v4662
        %v5248 = vmul.f32 %v2312, %v4666
        %v5249 = vmul.f32 %v2351, %v4670
        %v5250 = vmul.f32 %v2353, %v4674
        %v5251 = vmul.f32 %v2392, %v4678
        %v5252 = vmul.f32 %v2394, %v4682
        %v5253 = vmul.f32 %v2433, %v4686
        %v5254 = vmul.f32 %v2435, %v4690
        %v5255 = vmul.f32 %v2474, %v4694
        %v5256 = vmul.f32 %v2476, %v4698
        %v5257 = vmul.f32 %v2515, %v4702
        %v5258 = vmul.f32 %v2517, %v4706
        %v5259 = vmul.f32 %v2556, %v4710
        %v5260 = vmul.f32 %v2558, %v4714
        %v5261 = vmul.f32 %v2597, %v4718
        %v5262 = vmul.f32 %v2599, %v4722
        %v5263 = vmul.f32 %v2638, %v4726
        %v5264 = vmul.f32 %v2640, %v4730
        %v5265 = vmul.f32 %v2679, %v4734
        %v5266 = vmul.f32 %v2681, %v4738
        %v5267 = vmul.f32 %v2720, %v4742
        %v5268 = vmul.f32 %v2722, %v4746
        %v5269 = vmul.f32 %v2761, %v4750
        %v5270 = vmul.f32 %v2763, %v4754
        %v5271 = vmul.f32 %v2802, %v4758
        %v5272 = vmul.f32 %v2804, %v4762
        %v5273 = vmul.f32 %v2843, %v4766
        %v5274 = vmul.f32 %v2845, %v4770
        %v5275 = vmul.f32 %v2884, %v4774
        %v5276 = vmul.f32 %v2886, %v4778
        %v5277 = vmul.f32 %v2925, %v4782
        %v5278 = vmul.f32 %v2927, %v4786
        %v5279 = vmul.f32 %v2966, %v4790
        %v5280 = vmul.f32 %v2968, %v4794
        %v5281 = vmul.f32 %v3007, %v4798
        %v5282 = vmul.f32 %v3009, %v4802
        %v5283 = vmul.f32 %v3048, %v4806
        %v5284 = vmul.f32 %v3050, %v4810
        %v5285 = vmul.f32 %v3089, %v4814
        %v5286 = vmul.f32 %v3091, %v4818
        %v5287 = vmul.f32 %v3130, %v4822
        %v5288 = vmul.f32 %v3132, %v4826
        %v5289 = vmul.f32 %v3171, %v4830
        %v5290 = vmul.f32 %v3173, %v4834
        %v5291 = vmul.f32 %v3212, %v4838
        %v5292 = vmul.f32 %v3214, %v4842
        %v5293 = vmul.f32 %v3253, %v4846
        %v5294 = vmul.f32 %v3255, %v4850
        %v5295 = vmul.f32 %v3294, %v4854
        %v5296 = vmul.f32 %v3296, %v4858
        %v5297 = vmul.f32 %v3335, %v4862
        %v5298 = vmul.f32 %v3337, %v4866
        %v5299 = vmul.f32 %v3376, %v4870
        %v5300 = vmul.f32 %v3378, %v4874
        %v5301 = vmul.f32 %v3417, %v4878
        %v5302 = vmul.f32 %v3419, %v4882
        %v5303 = vmul.f32 %v3458, %v4886
        %v5304 = vmul.f32 %v3460, %v4890
        %v5305 = vmul.f32 %v3499, %v4894
        %v5306 = vmul.f32 %v3501, %v4898
        %v5307 = vmul.f32 %v3540, %v4902
        %v5308 = vmul.f32 %v3542, %v4906
        %v5309 = vmul.f32 %v3581, %v4910
        %v5310 = vmul.f32 %v3583, %v4914
        %v5311 = vmul.f32 %v3622, %v4918
        %v5312 = vmul.f32 %v3624, %v4922
        %v5313 = vmul.f32 %v3663, %v4926
        %v5314 = vmul.f32 %v3665, %v4930
        %v5315 = vmul.f32 %v3704, %v4934
        %v5316 = vmul.f32 %v3706, %v4938
        %v5317 = vmul.f32 %v3745, %v4942
        %v5318 = vmul.f32 %v3747, %v4946
        %v5319 = vmul.f32 %v3786, %v4950
        %v5320 = vmul.f32 %v3788, %v4954
        %v5321 = vmul.f32 %v3827, %v4958
        %v5322 = vmul.f32 %v3829, %v4962
        %v5323 = vmul.f32 %v3868, %v4966
        %v5324 = vmul.f32 %v3870, %v4970
        %v5325 = vmul.f32 %v3909, %v4974
        %v5326 = vmul.f32 %v3911, %v4978
        %v5327 = vmul.f32 %v3950, %v4982
        %v5328 = vmul.f32 %v3952, %v4986
        %v5329 = vmul.f32 %v3991, %v4990
        %v5330 = vmul.f32 %v3993, %v4994
        %v5331 = vmul.f32 %v4032, %v4998
        %v5332 = vmul.f32 %v4034, %v5002
        %v5333 = vmul.f32 %v4073, %v5006
        %v5334 = vmul.f32 %v4075, %v5010
        %v5335 = vmul.f32 %v4114, %v5014
        %v5336 = vmul.f32 %v4116, %v5018
        %v5337 = vmul.f32 %v4155, %v5022
        %v5338 = vmul.f32 %v4157, %v5026
        %v5339 = vmul.f32 %v4196, %v5030
        %v5340 = vmul.f32 %v4198, %v5034
        %v5341 = vmul.f32 %v4237, %v5038
        %v5342 = vmul.f32 %v4239, %v5042
        %v5343 = vmul.f32 %v4278, %v5046
        %v5344 = vmul.f32 %v4280, %v5050
        %v5345 = vmul.f32 %v4319, %v5054
        %v5346 = vmul.f32 %v4321, %v5058
        %v5347 = vmul.f32 %v4360, %v5062
        %v5348 = vmul.f32 %v4362, %v5066
        %v5349 = vmul.f32 %v4401, %v5070
        %v5350 = vmul.f32 %v4403, %v5074
        %v5351 = vmul.f32 %v4442, %v5078
        %v5352 = vmul.f32 %v4444, %v5082
        %v5353 = vmul.f32 %v4483, %v5086
        %v5354 = vmul.f32 %v4485, %v5090
        %v5355 = vmul.f32 %v4524, %v5094
        %v5356 = vmul.f32 %v4526, %v5098
        %v5357 = vmul.f32 %v4565, %v5102
        %v5358 = vmul.f32 %v4567, %v5106
        %v5359 = vld [vmem:[%s341] sm:$0xff]
        %v5360 = vld [vmem:[%s341 + $0x8] sm:$0xff]
        %v5361 = vld [vmem:[%s341 + $0x10] sm:$0xff]
        %v5362 = vld [vmem:[%s341 + $0x18] sm:$0xff]
        %v5363 = vld [vmem:[%s341 + $0x20] sm:$0xff]
        %v5364 = vld [vmem:[%s341 + $0x28] sm:$0xff]
        %v5365 = vld [vmem:[%s341 + $0x30] sm:$0xff]
        %v5366 = vld [vmem:[%s341 + $0x38] sm:$0xff]
        %v5367 = vld [vmem:[%s341 + $0x40] sm:$0xff]
        %v5368 = vld [vmem:[%s341 + $0x48] sm:$0xff]
        %v5369 = vld [vmem:[%s341 + $0x50] sm:$0xff]
        %v5370 = vld [vmem:[%s341 + $0x58] sm:$0xff]
        %v5371 = vld [vmem:[%s341 + $0x60] sm:$0xff]
        %v5372 = vld [vmem:[%s341 + $0x68] sm:$0xff]
        %v5373 = vld [vmem:[%s341 + $0x70] sm:$0xff]
        %v5374 = vld [vmem:[%s341 + $0x78] sm:$0x3f]
        %v5391 = vlaneseq
        %v5392 = vshrl.u32 %v5391, 7
        %v5393 = vsub.s32 0, %v5392
        %v5394 = vrot.slane %v5359, %v5393
        %v5395 = vlaneseq
        %v5396 = vshrl.u32 %v5395, 7
        %v5397 = vsub.s32 1, %v5396
        %v5398 = vrot.slane %v5359, %v5397
        %v5399 = vlaneseq
        %v5400 = vshrl.u32 %v5399, 7
        %v5401 = vsub.s32 2, %v5400
        %v5402 = vrot.slane %v5359, %v5401
        %v5403 = vlaneseq
        %v5404 = vshrl.u32 %v5403, 7
        %v5405 = vsub.s32 3, %v5404
        %v5406 = vrot.slane %v5359, %v5405
        %v5407 = vlaneseq
        %v5408 = vshrl.u32 %v5407, 7
        %v5409 = vsub.s32 4, %v5408
        %v5410 = vrot.slane %v5359, %v5409
        %v5411 = vlaneseq
        %v5412 = vshrl.u32 %v5411, 7
        %v5413 = vsub.s32 5, %v5412
        %v5414 = vrot.slane %v5359, %v5413
        %v5415 = vlaneseq
        %v5416 = vshrl.u32 %v5415, 7
        %v5417 = vsub.s32 6, %v5416
        %v5418 = vrot.slane %v5359, %v5417
        %v5419 = vlaneseq
        %v5420 = vshrl.u32 %v5419, 7
        %v5421 = vsub.s32 7, %v5420
        %v5422 = vrot.slane %v5359, %v5421
        %v5423 = vlaneseq
        %v5424 = vshrl.u32 %v5423, 7
        %v5425 = vsub.s32 0, %v5424
        %v5426 = vrot.slane %v5360, %v5425
        %v5427 = vlaneseq
        %v5428 = vshrl.u32 %v5427, 7
        %v5429 = vsub.s32 1, %v5428
        %v5430 = vrot.slane %v5360, %v5429
        %v5431 = vlaneseq
        %v5432 = vshrl.u32 %v5431, 7
        %v5433 = vsub.s32 2, %v5432
        %v5434 = vrot.slane %v5360, %v5433
        %v5435 = vlaneseq
        %v5436 = vshrl.u32 %v5435, 7
        %v5437 = vsub.s32 3, %v5436
        %v5438 = vrot.slane %v5360, %v5437
        %v5439 = vlaneseq
        %v5440 = vshrl.u32 %v5439, 7
        %v5441 = vsub.s32 4, %v5440
        %v5442 = vrot.slane %v5360, %v5441
        %v5443 = vlaneseq
        %v5444 = vshrl.u32 %v5443, 7
        %v5445 = vsub.s32 5, %v5444
        %v5446 = vrot.slane %v5360, %v5445
        %v5447 = vlaneseq
        %v5448 = vshrl.u32 %v5447, 7
        %v5449 = vsub.s32 6, %v5448
        %v5450 = vrot.slane %v5360, %v5449
        %v5451 = vlaneseq
        %v5452 = vshrl.u32 %v5451, 7
        %v5453 = vsub.s32 7, %v5452
        %v5454 = vrot.slane %v5360, %v5453
        %v5455 = vlaneseq
        %v5456 = vshrl.u32 %v5455, 7
        %v5457 = vsub.s32 0, %v5456
        %v5458 = vrot.slane %v5361, %v5457
        %v5459 = vlaneseq
        %v5460 = vshrl.u32 %v5459, 7
        %v5461 = vsub.s32 1, %v5460
        %v5462 = vrot.slane %v5361, %v5461
        %v5463 = vlaneseq
        %v5464 = vshrl.u32 %v5463, 7
        %v5465 = vsub.s32 2, %v5464
        %v5466 = vrot.slane %v5361, %v5465
        %v5467 = vlaneseq
        %v5468 = vshrl.u32 %v5467, 7
        %v5469 = vsub.s32 3, %v5468
        %v5470 = vrot.slane %v5361, %v5469
        %v5471 = vlaneseq
        %v5472 = vshrl.u32 %v5471, 7
        %v5473 = vsub.s32 4, %v5472
        %v5474 = vrot.slane %v5361, %v5473
        %v5475 = vlaneseq
        %v5476 = vshrl.u32 %v5475, 7
        %v5477 = vsub.s32 5, %v5476
        %v5478 = vrot.slane %v5361, %v5477
        %v5479 = vlaneseq
        %v5480 = vshrl.u32 %v5479, 7
        %v5481 = vsub.s32 6, %v5480
        %v5482 = vrot.slane %v5361, %v5481
        %v5483 = vlaneseq
        %v5484 = vshrl.u32 %v5483, 7
        %v5485 = vsub.s32 7, %v5484
        %v5486 = vrot.slane %v5361, %v5485
        %v5487 = vlaneseq
        %v5488 = vshrl.u32 %v5487, 7
        %v5489 = vsub.s32 0, %v5488
        %v5490 = vrot.slane %v5362, %v5489
        %v5491 = vlaneseq
        %v5492 = vshrl.u32 %v5491, 7
        %v5493 = vsub.s32 1, %v5492
        %v5494 = vrot.slane %v5362, %v5493
        %v5495 = vlaneseq
        %v5496 = vshrl.u32 %v5495, 7
        %v5497 = vsub.s32 2, %v5496
        %v5498 = vrot.slane %v5362, %v5497
        %v5499 = vlaneseq
        %v5500 = vshrl.u32 %v5499, 7
        %v5501 = vsub.s32 3, %v5500
        %v5502 = vrot.slane %v5362, %v5501
        %v5503 = vlaneseq
        %v5504 = vshrl.u32 %v5503, 7
        %v5505 = vsub.s32 4, %v5504
        %v5506 = vrot.slane %v5362, %v5505
        %v5507 = vlaneseq
        %v5508 = vshrl.u32 %v5507, 7
        %v5509 = vsub.s32 5, %v5508
        %v5510 = vrot.slane %v5362, %v5509
        %v5511 = vlaneseq
        %v5512 = vshrl.u32 %v5511, 7
        %v5513 = vsub.s32 6, %v5512
        %v5514 = vrot.slane %v5362, %v5513
        %v5515 = vlaneseq
        %v5516 = vshrl.u32 %v5515, 7
        %v5517 = vsub.s32 7, %v5516
        %v5518 = vrot.slane %v5362, %v5517
        %v5519 = vlaneseq
        %v5520 = vshrl.u32 %v5519, 7
        %v5521 = vsub.s32 0, %v5520
        %v5522 = vrot.slane %v5363, %v5521
        %v5523 = vlaneseq
        %v5524 = vshrl.u32 %v5523, 7
        %v5525 = vsub.s32 1, %v5524
        %v5526 = vrot.slane %v5363, %v5525
        %v5527 = vlaneseq
        %v5528 = vshrl.u32 %v5527, 7
        %v5529 = vsub.s32 2, %v5528
        %v5530 = vrot.slane %v5363, %v5529
        %v5531 = vlaneseq
        %v5532 = vshrl.u32 %v5531, 7
        %v5533 = vsub.s32 3, %v5532
        %v5534 = vrot.slane %v5363, %v5533
        %v5535 = vlaneseq
        %v5536 = vshrl.u32 %v5535, 7
        %v5537 = vsub.s32 4, %v5536
        %v5538 = vrot.slane %v5363, %v5537
        %v5539 = vlaneseq
        %v5540 = vshrl.u32 %v5539, 7
        %v5541 = vsub.s32 5, %v5540
        %v5542 = vrot.slane %v5363, %v5541
        %v5543 = vlaneseq
        %v5544 = vshrl.u32 %v5543, 7
        %v5545 = vsub.s32 6, %v5544
        %v5546 = vrot.slane %v5363, %v5545
        %v5547 = vlaneseq
        %v5548 = vshrl.u32 %v5547, 7
        %v5549 = vsub.s32 7, %v5548
        %v5550 = vrot.slane %v5363, %v5549
        %v5551 = vlaneseq
        %v5552 = vshrl.u32 %v5551, 7
        %v5553 = vsub.s32 0, %v5552
        %v5554 = vrot.slane %v5364, %v5553
        %v5555 = vlaneseq
        %v5556 = vshrl.u32 %v5555, 7
        %v5557 = vsub.s32 1, %v5556
        %v5558 = vrot.slane %v5364, %v5557
        %v5559 = vlaneseq
        %v5560 = vshrl.u32 %v5559, 7
        %v5561 = vsub.s32 2, %v5560
        %v5562 = vrot.slane %v5364, %v5561
        %v5563 = vlaneseq
        %v5564 = vshrl.u32 %v5563, 7
        %v5565 = vsub.s32 3, %v5564
        %v5566 = vrot.slane %v5364, %v5565
        %v5567 = vlaneseq
        %v5568 = vshrl.u32 %v5567, 7
        %v5569 = vsub.s32 4, %v5568
        %v5570 = vrot.slane %v5364, %v5569
        %v5571 = vlaneseq
        %v5572 = vshrl.u32 %v5571, 7
        %v5573 = vsub.s32 5, %v5572
        %v5574 = vrot.slane %v5364, %v5573
        %v5575 = vlaneseq
        %v5576 = vshrl.u32 %v5575, 7
        %v5577 = vsub.s32 6, %v5576
        %v5578 = vrot.slane %v5364, %v5577
        %v5579 = vlaneseq
        %v5580 = vshrl.u32 %v5579, 7
        %v5581 = vsub.s32 7, %v5580
        %v5582 = vrot.slane %v5364, %v5581
        %v5583 = vlaneseq
        %v5584 = vshrl.u32 %v5583, 7
        %v5585 = vsub.s32 0, %v5584
        %v5586 = vrot.slane %v5365, %v5585
        %v5587 = vlaneseq
        %v5588 = vshrl.u32 %v5587, 7
        %v5589 = vsub.s32 1, %v5588
        %v5590 = vrot.slane %v5365, %v5589
        %v5591 = vlaneseq
        %v5592 = vshrl.u32 %v5591, 7
        %v5593 = vsub.s32 2, %v5592
        %v5594 = vrot.slane %v5365, %v5593
        %v5595 = vlaneseq
        %v5596 = vshrl.u32 %v5595, 7
        %v5597 = vsub.s32 3, %v5596
        %v5598 = vrot.slane %v5365, %v5597
        %v5599 = vlaneseq
        %v5600 = vshrl.u32 %v5599, 7
        %v5601 = vsub.s32 4, %v5600
        %v5602 = vrot.slane %v5365, %v5601
        %v5603 = vlaneseq
        %v5604 = vshrl.u32 %v5603, 7
        %v5605 = vsub.s32 5, %v5604
        %v5606 = vrot.slane %v5365, %v5605
        %v5607 = vlaneseq
        %v5608 = vshrl.u32 %v5607, 7
        %v5609 = vsub.s32 6, %v5608
        %v5610 = vrot.slane %v5365, %v5609
        %v5611 = vlaneseq
        %v5612 = vshrl.u32 %v5611, 7
        %v5613 = vsub.s32 7, %v5612
        %v5614 = vrot.slane %v5365, %v5613
        %v5615 = vlaneseq
        %v5616 = vshrl.u32 %v5615, 7
        %v5617 = vsub.s32 0, %v5616
        %v5618 = vrot.slane %v5366, %v5617
        %v5619 = vlaneseq
        %v5620 = vshrl.u32 %v5619, 7
        %v5621 = vsub.s32 1, %v5620
        %v5622 = vrot.slane %v5366, %v5621
        %v5623 = vlaneseq
        %v5624 = vshrl.u32 %v5623, 7
        %v5625 = vsub.s32 2, %v5624
        %v5626 = vrot.slane %v5366, %v5625
        %v5627 = vlaneseq
        %v5628 = vshrl.u32 %v5627, 7
        %v5629 = vsub.s32 3, %v5628
        %v5630 = vrot.slane %v5366, %v5629
        %v5631 = vlaneseq
        %v5632 = vshrl.u32 %v5631, 7
        %v5633 = vsub.s32 4, %v5632
        %v5634 = vrot.slane %v5366, %v5633
        %v5635 = vlaneseq
        %v5636 = vshrl.u32 %v5635, 7
        %v5637 = vsub.s32 5, %v5636
        %v5638 = vrot.slane %v5366, %v5637
        %v5639 = vlaneseq
        %v5640 = vshrl.u32 %v5639, 7
        %v5641 = vsub.s32 6, %v5640
        %v5642 = vrot.slane %v5366, %v5641
        %v5643 = vlaneseq
        %v5644 = vshrl.u32 %v5643, 7
        %v5645 = vsub.s32 7, %v5644
        %v5646 = vrot.slane %v5366, %v5645
        %v5647 = vlaneseq
        %v5648 = vshrl.u32 %v5647, 7
        %v5649 = vsub.s32 0, %v5648
        %v5650 = vrot.slane %v5367, %v5649
        %v5651 = vlaneseq
        %v5652 = vshrl.u32 %v5651, 7
        %v5653 = vsub.s32 1, %v5652
        %v5654 = vrot.slane %v5367, %v5653
        %v5655 = vlaneseq
        %v5656 = vshrl.u32 %v5655, 7
        %v5657 = vsub.s32 2, %v5656
        %v5658 = vrot.slane %v5367, %v5657
        %v5659 = vlaneseq
        %v5660 = vshrl.u32 %v5659, 7
        %v5661 = vsub.s32 3, %v5660
        %v5662 = vrot.slane %v5367, %v5661
        %v5663 = vlaneseq
        %v5664 = vshrl.u32 %v5663, 7
        %v5665 = vsub.s32 4, %v5664
        %v5666 = vrot.slane %v5367, %v5665
        %v5667 = vlaneseq
        %v5668 = vshrl.u32 %v5667, 7
        %v5669 = vsub.s32 5, %v5668
        %v5670 = vrot.slane %v5367, %v5669
        %v5671 = vlaneseq
        %v5672 = vshrl.u32 %v5671, 7
        %v5673 = vsub.s32 6, %v5672
        %v5674 = vrot.slane %v5367, %v5673
        %v5675 = vlaneseq
        %v5676 = vshrl.u32 %v5675, 7
        %v5677 = vsub.s32 7, %v5676
        %v5678 = vrot.slane %v5367, %v5677
        %v5679 = vlaneseq
        %v5680 = vshrl.u32 %v5679, 7
        %v5681 = vsub.s32 0, %v5680
        %v5682 = vrot.slane %v5368, %v5681
        %v5683 = vlaneseq
        %v5684 = vshrl.u32 %v5683, 7
        %v5685 = vsub.s32 1, %v5684
        %v5686 = vrot.slane %v5368, %v5685
        %v5687 = vlaneseq
        %v5688 = vshrl.u32 %v5687, 7
        %v5689 = vsub.s32 2, %v5688
        %v5690 = vrot.slane %v5368, %v5689
        %v5691 = vlaneseq
        %v5692 = vshrl.u32 %v5691, 7
        %v5693 = vsub.s32 3, %v5692
        %v5694 = vrot.slane %v5368, %v5693
        %v5695 = vlaneseq
        %v5696 = vshrl.u32 %v5695, 7
        %v5697 = vsub.s32 4, %v5696
        %v5698 = vrot.slane %v5368, %v5697
        %v5699 = vlaneseq
        %v5700 = vshrl.u32 %v5699, 7
        %v5701 = vsub.s32 5, %v5700
        %v5702 = vrot.slane %v5368, %v5701
        %v5703 = vlaneseq
        %v5704 = vshrl.u32 %v5703, 7
        %v5705 = vsub.s32 6, %v5704
        %v5706 = vrot.slane %v5368, %v5705
        %v5707 = vlaneseq
        %v5708 = vshrl.u32 %v5707, 7
        %v5709 = vsub.s32 7, %v5708
        %v5710 = vrot.slane %v5368, %v5709
        %v5711 = vlaneseq
        %v5712 = vshrl.u32 %v5711, 7
        %v5713 = vsub.s32 0, %v5712
        %v5714 = vrot.slane %v5369, %v5713
        %v5715 = vlaneseq
        %v5716 = vshrl.u32 %v5715, 7
        %v5717 = vsub.s32 1, %v5716
        %v5718 = vrot.slane %v5369, %v5717
        %v5719 = vlaneseq
        %v5720 = vshrl.u32 %v5719, 7
        %v5721 = vsub.s32 2, %v5720
        %v5722 = vrot.slane %v5369, %v5721
        %v5723 = vlaneseq
        %v5724 = vshrl.u32 %v5723, 7
        %v5725 = vsub.s32 3, %v5724
        %v5726 = vrot.slane %v5369, %v5725
        %v5727 = vlaneseq
        %v5728 = vshrl.u32 %v5727, 7
        %v5729 = vsub.s32 4, %v5728
        %v5730 = vrot.slane %v5369, %v5729
        %v5731 = vlaneseq
        %v5732 = vshrl.u32 %v5731, 7
        %v5733 = vsub.s32 5, %v5732
        %v5734 = vrot.slane %v5369, %v5733
        %v5735 = vlaneseq
        %v5736 = vshrl.u32 %v5735, 7
        %v5737 = vsub.s32 6, %v5736
        %v5738 = vrot.slane %v5369, %v5737
        %v5739 = vlaneseq
        %v5740 = vshrl.u32 %v5739, 7
        %v5741 = vsub.s32 7, %v5740
        %v5742 = vrot.slane %v5369, %v5741
        %v5743 = vlaneseq
        %v5744 = vshrl.u32 %v5743, 7
        %v5745 = vsub.s32 0, %v5744
        %v5746 = vrot.slane %v5370, %v5745
        %v5747 = vlaneseq
        %v5748 = vshrl.u32 %v5747, 7
        %v5749 = vsub.s32 1, %v5748
        %v5750 = vrot.slane %v5370, %v5749
        %v5751 = vlaneseq
        %v5752 = vshrl.u32 %v5751, 7
        %v5753 = vsub.s32 2, %v5752
        %v5754 = vrot.slane %v5370, %v5753
        %v5755 = vlaneseq
        %v5756 = vshrl.u32 %v5755, 7
        %v5757 = vsub.s32 3, %v5756
        %v5758 = vrot.slane %v5370, %v5757
        %v5759 = vlaneseq
        %v5760 = vshrl.u32 %v5759, 7
        %v5761 = vsub.s32 4, %v5760
        %v5762 = vrot.slane %v5370, %v5761
        %v5763 = vlaneseq
        %v5764 = vshrl.u32 %v5763, 7
        %v5765 = vsub.s32 5, %v5764
        %v5766 = vrot.slane %v5370, %v5765
        %v5767 = vlaneseq
        %v5768 = vshrl.u32 %v5767, 7
        %v5769 = vsub.s32 6, %v5768
        %v5770 = vrot.slane %v5370, %v5769
        %v5771 = vlaneseq
        %v5772 = vshrl.u32 %v5771, 7
        %v5773 = vsub.s32 7, %v5772
        %v5774 = vrot.slane %v5370, %v5773
        %v5775 = vlaneseq
        %v5776 = vshrl.u32 %v5775, 7
        %v5777 = vsub.s32 0, %v5776
        %v5778 = vrot.slane %v5371, %v5777
        %v5779 = vlaneseq
        %v5780 = vshrl.u32 %v5779, 7
        %v5781 = vsub.s32 1, %v5780
        %v5782 = vrot.slane %v5371, %v5781
        %v5783 = vlaneseq
        %v5784 = vshrl.u32 %v5783, 7
        %v5785 = vsub.s32 2, %v5784
        %v5786 = vrot.slane %v5371, %v5785
        %v5787 = vlaneseq
        %v5788 = vshrl.u32 %v5787, 7
        %v5789 = vsub.s32 3, %v5788
        %v5790 = vrot.slane %v5371, %v5789
        %v5791 = vlaneseq
        %v5792 = vshrl.u32 %v5791, 7
        %v5793 = vsub.s32 4, %v5792
        %v5794 = vrot.slane %v5371, %v5793
        %v5795 = vlaneseq
        %v5796 = vshrl.u32 %v5795, 7
        %v5797 = vsub.s32 5, %v5796
        %v5798 = vrot.slane %v5371, %v5797
        %v5799 = vlaneseq
        %v5800 = vshrl.u32 %v5799, 7
        %v5801 = vsub.s32 6, %v5800
        %v5802 = vrot.slane %v5371, %v5801
        %v5803 = vlaneseq
        %v5804 = vshrl.u32 %v5803, 7
        %v5805 = vsub.s32 7, %v5804
        %v5806 = vrot.slane %v5371, %v5805
        %v5807 = vlaneseq
        %v5808 = vshrl.u32 %v5807, 7
        %v5809 = vsub.s32 0, %v5808
        %v5810 = vrot.slane %v5372, %v5809
        %v5811 = vlaneseq
        %v5812 = vshrl.u32 %v5811, 7
        %v5813 = vsub.s32 1, %v5812
        %v5814 = vrot.slane %v5372, %v5813
        %v5815 = vlaneseq
        %v5816 = vshrl.u32 %v5815, 7
        %v5817 = vsub.s32 2, %v5816
        %v5818 = vrot.slane %v5372, %v5817
        %v5819 = vlaneseq
        %v5820 = vshrl.u32 %v5819, 7
        %v5821 = vsub.s32 3, %v5820
        %v5822 = vrot.slane %v5372, %v5821
        %v5823 = vlaneseq
        %v5824 = vshrl.u32 %v5823, 7
        %v5825 = vsub.s32 4, %v5824
        %v5826 = vrot.slane %v5372, %v5825
        %v5827 = vlaneseq
        %v5828 = vshrl.u32 %v5827, 7
        %v5829 = vsub.s32 5, %v5828
        %v5830 = vrot.slane %v5372, %v5829
        %v5831 = vlaneseq
        %v5832 = vshrl.u32 %v5831, 7
        %v5833 = vsub.s32 6, %v5832
        %v5834 = vrot.slane %v5372, %v5833
        %v5835 = vlaneseq
        %v5836 = vshrl.u32 %v5835, 7
        %v5837 = vsub.s32 7, %v5836
        %v5838 = vrot.slane %v5372, %v5837
        %v5839 = vlaneseq
        %v5840 = vshrl.u32 %v5839, 7
        %v5841 = vsub.s32 0, %v5840
        %v5842 = vrot.slane %v5373, %v5841
        %v5843 = vlaneseq
        %v5844 = vshrl.u32 %v5843, 7
        %v5845 = vsub.s32 1, %v5844
        %v5846 = vrot.slane %v5373, %v5845
        %v5847 = vlaneseq
        %v5848 = vshrl.u32 %v5847, 7
        %v5849 = vsub.s32 2, %v5848
        %v5850 = vrot.slane %v5373, %v5849
        %v5851 = vlaneseq
        %v5852 = vshrl.u32 %v5851, 7
        %v5853 = vsub.s32 3, %v5852
        %v5854 = vrot.slane %v5373, %v5853
        %v5855 = vlaneseq
        %v5856 = vshrl.u32 %v5855, 7
        %v5857 = vsub.s32 4, %v5856
        %v5858 = vrot.slane %v5373, %v5857
        %v5859 = vlaneseq
        %v5860 = vshrl.u32 %v5859, 7
        %v5861 = vsub.s32 5, %v5860
        %v5862 = vrot.slane %v5373, %v5861
        %v5863 = vlaneseq
        %v5864 = vshrl.u32 %v5863, 7
        %v5865 = vsub.s32 6, %v5864
        %v5866 = vrot.slane %v5373, %v5865
        %v5867 = vlaneseq
        %v5868 = vshrl.u32 %v5867, 7
        %v5869 = vsub.s32 7, %v5868
        %v5870 = vrot.slane %v5373, %v5869
        %v5871 = vlaneseq
        %v5872 = vshrl.u32 %v5871, 7
        %v5873 = vsub.s32 0, %v5872
        %v5874 = vrot.slane %v5374, %v5873
        %v5875 = vlaneseq
        %v5876 = vshrl.u32 %v5875, 7
        %v5877 = vsub.s32 1, %v5876
        %v5878 = vrot.slane %v5374, %v5877
        %v5879 = vlaneseq
        %v5880 = vshrl.u32 %v5879, 7
        %v5881 = vsub.s32 2, %v5880
        %v5882 = vrot.slane %v5374, %v5881
        %v5883 = vlaneseq
        %v5884 = vshrl.u32 %v5883, 7
        %v5885 = vsub.s32 3, %v5884
        %v5886 = vrot.slane %v5374, %v5885
        %v5887 = vlaneseq
        %v5888 = vshrl.u32 %v5887, 7
        %v5889 = vsub.s32 4, %v5888
        %v5890 = vrot.slane %v5374, %v5889
        %v5891 = vlaneseq
        %v5892 = vshrl.u32 %v5891, 7
        %v5893 = vsub.s32 5, %v5892
        %v5894 = vrot.slane %v5374, %v5893
        %v6021 = vadd.f32 %v5233, %v5394
        %v6022 = vadd.f32 %v5234, %v5398
        %v6023 = vadd.f32 %v5235, %v5402
        %v6024 = vadd.f32 %v5236, %v5406
        %v6025 = vadd.f32 %v5237, %v5410
        %v6026 = vadd.f32 %v5238, %v5414
        %v6027 = vadd.f32 %v5239, %v5418
        %v6028 = vadd.f32 %v5240, %v5422
        %v6029 = vadd.f32 %v5241, %v5426
        %v6030 = vadd.f32 %v5242, %v5430
        %v6031 = vadd.f32 %v5243, %v5434
        %v6032 = vadd.f32 %v5244, %v5438
        %v6033 = vadd.f32 %v5245, %v5442
        %v6034 = vadd.f32 %v5246, %v5446
        %v6035 = vadd.f32 %v5247, %v5450
        %v6036 = vadd.f32 %v5248, %v5454
        %v6037 = vadd.f32 %v5249, %v5458
        %v6038 = vadd.f32 %v5250, %v5462
        %v6039 = vadd.f32 %v5251, %v5466
        %v6040 = vadd.f32 %v5252, %v5470
        %v6041 = vadd.f32 %v5253, %v5474
        %v6042 = vadd.f32 %v5254, %v5478
        %v6043 = vadd.f32 %v5255, %v5482
        %v6044 = vadd.f32 %v5256, %v5486
        %v6045 = vadd.f32 %v5257, %v5490
        %v6046 = vadd.f32 %v5258, %v5494
        %v6047 = vadd.f32 %v5259, %v5498
        %v6048 = vadd.f32 %v5260, %v5502
        %v6049 = vadd.f32 %v5261, %v5506
        %v6050 = vadd.f32 %v5262, %v5510
        %v6051 = vadd.f32 %v5263, %v5514
        %v6052 = vadd.f32 %v5264, %v5518
        %v6053 = vadd.f32 %v5265, %v5522
        %v6054 = vadd.f32 %v5266, %v5526
        %v6055 = vadd.f32 %v5267, %v5530
        %v6056 = vadd.f32 %v5268, %v5534
        %v6057 = vadd.f32 %v5269, %v5538
        %v6058 = vadd.f32 %v5270, %v5542
        %v6059 = vadd.f32 %v5271, %v5546
        %v6060 = vadd.f32 %v5272, %v5550
        %v6061 = vadd.f32 %v5273, %v5554
        %v6062 = vadd.f32 %v5274, %v5558
        %v6063 = vadd.f32 %v5275, %v5562
        %v6064 = vadd.f32 %v5276, %v5566
        %v6065 = vadd.f32 %v5277, %v5570
        %v6066 = vadd.f32 %v5278, %v5574
        %v6067 = vadd.f32 %v5279, %v5578
        %v6068 = vadd.f32 %v5280, %v5582
        %v6069 = vadd.f32 %v5281, %v5586
        %v6070 = vadd.f32 %v5282, %v5590
        %v6071 = vadd.f32 %v5283, %v5594
        %v6072 = vadd.f32 %v5284, %v5598
        %v6073 = vadd.f32 %v5285, %v5602
        %v6074 = vadd.f32 %v5286, %v5606
        %v6075 = vadd.f32 %v5287, %v5610
        %v6076 = vadd.f32 %v5288, %v5614
        %v6077 = vadd.f32 %v5289, %v5618
        %v6078 = vadd.f32 %v5290, %v5622
        %v6079 = vadd.f32 %v5291, %v5626
        %v6080 = vadd.f32 %v5292, %v5630
        %v6081 = vadd.f32 %v5293, %v5634
        %v6082 = vadd.f32 %v5294, %v5638
        %v6083 = vadd.f32 %v5295, %v5642
        %v6084 = vadd.f32 %v5296, %v5646
        %v6085 = vadd.f32 %v5297, %v5650
        %v6086 = vadd.f32 %v5298, %v5654
        %v6087 = vadd.f32 %v5299, %v5658
        %v6088 = vadd.f32 %v5300, %v5662
        %v6089 = vadd.f32 %v5301, %v5666
        %v6090 = vadd.f32 %v5302, %v5670
        %v6091 = vadd.f32 %v5303, %v5674
        %v6092 = vadd.f32 %v5304, %v5678
        %v6093 = vadd.f32 %v5305, %v5682
        %v6094 = vadd.f32 %v5306, %v5686
        %v6095 = vadd.f32 %v5307, %v5690
        %v6096 = vadd.f32 %v5308, %v5694
        %v6097 = vadd.f32 %v5309, %v5698
        %v6098 = vadd.f32 %v5310, %v5702
        %v6099 = vadd.f32 %v5311, %v5706
        %v6100 = vadd.f32 %v5312, %v5710
        %v6101 = vadd.f32 %v5313, %v5714
        %v6102 = vadd.f32 %v5314, %v5718
        %v6103 = vadd.f32 %v5315, %v5722
        %v6104 = vadd.f32 %v5316, %v5726
        %v6105 = vadd.f32 %v5317, %v5730
        %v6106 = vadd.f32 %v5318, %v5734
        %v6107 = vadd.f32 %v5319, %v5738
        %v6108 = vadd.f32 %v5320, %v5742
        %v6109 = vadd.f32 %v5321, %v5746
        %v6110 = vadd.f32 %v5322, %v5750
        %v6111 = vadd.f32 %v5323, %v5754
        %v6112 = vadd.f32 %v5324, %v5758
        %v6113 = vadd.f32 %v5325, %v5762
        %v6114 = vadd.f32 %v5326, %v5766
        %v6115 = vadd.f32 %v5327, %v5770
        %v6116 = vadd.f32 %v5328, %v5774
        %v6117 = vadd.f32 %v5329, %v5778
        %v6118 = vadd.f32 %v5330, %v5782
        %v6119 = vadd.f32 %v5331, %v5786
        %v6120 = vadd.f32 %v5332, %v5790
        %v6121 = vadd.f32 %v5333, %v5794
        %v6122 = vadd.f32 %v5334, %v5798
        %v6123 = vadd.f32 %v5335, %v5802
        %v6124 = vadd.f32 %v5336, %v5806
        %v6125 = vadd.f32 %v5337, %v5810
        %v6126 = vadd.f32 %v5338, %v5814
        %v6127 = vadd.f32 %v5339, %v5818
        %v6128 = vadd.f32 %v5340, %v5822
        %v6129 = vadd.f32 %v5341, %v5826
        %v6130 = vadd.f32 %v5342, %v5830
        %v6131 = vadd.f32 %v5343, %v5834
        %v6132 = vadd.f32 %v5344, %v5838
        %v6133 = vadd.f32 %v5345, %v5842
        %v6134 = vadd.f32 %v5346, %v5846
        %v6135 = vadd.f32 %v5347, %v5850
        %v6136 = vadd.f32 %v5348, %v5854
        %v6137 = vadd.f32 %v5349, %v5858
        %v6138 = vadd.f32 %v5350, %v5862
        %v6139 = vadd.f32 %v5351, %v5866
        %v6140 = vadd.f32 %v5352, %v5870
        %v6141 = vadd.f32 %v5353, %v5874
        %v6142 = vadd.f32 %v5354, %v5878
        %v6143 = vadd.f32 %v5355, %v5882
        %v6144 = vadd.f32 %v5356, %v5886
        %v6145 = vadd.f32 %v5357, %v5890
        %v6146 = vadd.f32 %v5358, %v5894
        %v6147 = vmax.f32 %v6021, 0.0
        %v6148 = vmax.f32 %v6022, 0.0
        %v6149 = vmax.f32 %v6023, 0.0
        %v6150 = vmax.f32 %v6024, 0.0
        %v6151 = vmax.f32 %v6025, 0.0
        %v6152 = vmax.f32 %v6026, 0.0
        %v6153 = vmax.f32 %v6027, 0.0
        %v6154 = vmax.f32 %v6028, 0.0
        %v6155 = vmax.f32 %v6029, 0.0
        %v6156 = vmax.f32 %v6030, 0.0
        %v6157 = vmax.f32 %v6031, 0.0
        %v6158 = vmax.f32 %v6032, 0.0
        %v6159 = vmax.f32 %v6033, 0.0
        %v6160 = vmax.f32 %v6034, 0.0
        %v6161 = vmax.f32 %v6035, 0.0
        %v6162 = vmax.f32 %v6036, 0.0
        %v6163 = vmax.f32 %v6037, 0.0
        %v6164 = vmax.f32 %v6038, 0.0
        %v6165 = vmax.f32 %v6039, 0.0
        %v6166 = vmax.f32 %v6040, 0.0
        %v6167 = vmax.f32 %v6041, 0.0
        %v6168 = vmax.f32 %v6042, 0.0
        %v6169 = vmax.f32 %v6043, 0.0
        %v6170 = vmax.f32 %v6044, 0.0
        %v6171 = vmax.f32 %v6045, 0.0
        %v6172 = vmax.f32 %v6046, 0.0
        %v6173 = vmax.f32 %v6047, 0.0
        %v6174 = vmax.f32 %v6048, 0.0
        %v6175 = vmax.f32 %v6049, 0.0
        %v6176 = vmax.f32 %v6050, 0.0
        %v6177 = vmax.f32 %v6051, 0.0
        %v6178 = vmax.f32 %v6052, 0.0
        %v6179 = vmax.f32 %v6053, 0.0
        %v6180 = vmax.f32 %v6054, 0.0
        %v6181 = vmax.f32 %v6055, 0.0
        %v6182 = vmax.f32 %v6056, 0.0
        %v6183 = vmax.f32 %v6057, 0.0
        %v6184 = vmax.f32 %v6058, 0.0
        %v6185 = vmax.f32 %v6059, 0.0
        %v6186 = vmax.f32 %v6060, 0.0
        %v6187 = vmax.f32 %v6061, 0.0
        %v6188 = vmax.f32 %v6062, 0.0
        %v6189 = vmax.f32 %v6063, 0.0
        %v6190 = vmax.f32 %v6064, 0.0
        %v6191 = vmax.f32 %v6065, 0.0
        %v6192 = vmax.f32 %v6066, 0.0
        %v6193 = vmax.f32 %v6067, 0.0
        %v6194 = vmax.f32 %v6068, 0.0
        %v6195 = vmax.f32 %v6069, 0.0
        %v6196 = vmax.f32 %v6070, 0.0
        %v6197 = vmax.f32 %v6071, 0.0
        %v6198 = vmax.f32 %v6072, 0.0
        %v6199 = vmax.f32 %v6073, 0.0
        %v6200 = vmax.f32 %v6074, 0.0
        %v6201 = vmax.f32 %v6075, 0.0
        %v6202 = vmax.f32 %v6076, 0.0
        %v6203 = vmax.f32 %v6077, 0.0
        %v6204 = vmax.f32 %v6078, 0.0
        %v6205 = vmax.f32 %v6079, 0.0
        %v6206 = vmax.f32 %v6080, 0.0
        %v6207 = vmax.f32 %v6081, 0.0
        %v6208 = vmax.f32 %v6082, 0.0
        %v6209 = vmax.f32 %v6083, 0.0
        %v6210 = vmax.f32 %v6084, 0.0
        %v6211 = vmax.f32 %v6085, 0.0
        %v6212 = vmax.f32 %v6086, 0.0
        %v6213 = vmax.f32 %v6087, 0.0
        %v6214 = vmax.f32 %v6088, 0.0
        %v6215 = vmax.f32 %v6089, 0.0
        %v6216 = vmax.f32 %v6090, 0.0
        %v6217 = vmax.f32 %v6091, 0.0
        %v6218 = vmax.f32 %v6092, 0.0
        %v6219 = vmax.f32 %v6093, 0.0
        %v6220 = vmax.f32 %v6094, 0.0
        %v6221 = vmax.f32 %v6095, 0.0
        %v6222 = vmax.f32 %v6096, 0.0
        %v6223 = vmax.f32 %v6097, 0.0
        %v6224 = vmax.f32 %v6098, 0.0
        %v6225 = vmax.f32 %v6099, 0.0
        %v6226 = vmax.f32 %v6100, 0.0
        %v6227 = vmax.f32 %v6101, 0.0
        %v6228 = vmax.f32 %v6102, 0.0
        %v6229 = vmax.f32 %v6103, 0.0
        %v6230 = vmax.f32 %v6104, 0.0
        %v6231 = vmax.f32 %v6105, 0.0
        %v6232 = vmax.f32 %v6106, 0.0
        %v6233 = vmax.f32 %v6107, 0.0
        %v6234 = vmax.f32 %v6108, 0.0
        %v6235 = vmax.f32 %v6109, 0.0
        %v6236 = vmax.f32 %v6110, 0.0
        %v6237 = vmax.f32 %v6111, 0.0
        %v6238 = vmax.f32 %v6112, 0.0
        %v6239 = vmax.f32 %v6113, 0.0
        %v6240 = vmax.f32 %v6114, 0.0
        %v6241 = vmax.f32 %v6115, 0.0
        %v6242 = vmax.f32 %v6116, 0.0
        %v6243 = vmax.f32 %v6117, 0.0
        %v6244 = vmax.f32 %v6118, 0.0
        %v6245 = vmax.f32 %v6119, 0.0
        %v6246 = vmax.f32 %v6120, 0.0
        %v6247 = vmax.f32 %v6121, 0.0
        %v6248 = vmax.f32 %v6122, 0.0
        %v6249 = vmax.f32 %v6123, 0.0
        %v6250 = vmax.f32 %v6124, 0.0
        %v6251 = vmax.f32 %v6125, 0.0
        %v6252 = vmax.f32 %v6126, 0.0
        %v6253 = vmax.f32 %v6127, 0.0
        %v6254 = vmax.f32 %v6128, 0.0
        %v6255 = vmax.f32 %v6129, 0.0
        %v6256 = vmax.f32 %v6130, 0.0
        %v6257 = vmax.f32 %v6131, 0.0
        %v6258 = vmax.f32 %v6132, 0.0
        %v6259 = vmax.f32 %v6133, 0.0
        %v6260 = vmax.f32 %v6134, 0.0
        %v6261 = vmax.f32 %v6135, 0.0
        %v6262 = vmax.f32 %v6136, 0.0
        %v6263 = vmax.f32 %v6137, 0.0
        %v6264 = vmax.f32 %v6138, 0.0
        %v6265 = vmax.f32 %v6139, 0.0
        %v6266 = vmax.f32 %v6140, 0.0
        %v6267 = vmax.f32 %v6141, 0.0
        %v6268 = vmax.f32 %v6142, 0.0
        %v6269 = vmax.f32 %v6143, 0.0
        %v6270 = vmax.f32 %v6144, 0.0
        %v6271 = vmax.f32 %v6145, 0.0
        %v6272 = vmax.f32 %v6146, 0.0
        %v6273 = vpack.c.bf16 %v6147, %v6147
        %v6274 = vpack.c.bf16 %v6148, %v6148
        %v6275 = vpack.c.bf16 %v6149, %v6149
        %v6276 = vpack.c.bf16 %v6150, %v6150
        %v6277 = vpack.c.bf16 %v6151, %v6151
        %v6278 = vpack.c.bf16 %v6152, %v6152
        %v6279 = vpack.c.bf16 %v6153, %v6153
        %v6280 = vpack.c.bf16 %v6154, %v6154
        %v6281 = vpack.c.bf16 %v6155, %v6155
        %v6282 = vpack.c.bf16 %v6156, %v6156
        %v6283 = vpack.c.bf16 %v6157, %v6157
        %v6284 = vpack.c.bf16 %v6158, %v6158
        %v6285 = vpack.c.bf16 %v6159, %v6159
        %v6286 = vpack.c.bf16 %v6160, %v6160
        %v6287 = vpack.c.bf16 %v6161, %v6161
        %v6288 = vpack.c.bf16 %v6162, %v6162
        %v6289 = vpack.c.bf16 %v6163, %v6163
        %v6290 = vpack.c.bf16 %v6164, %v6164
        %v6291 = vpack.c.bf16 %v6165, %v6165
        %v6292 = vpack.c.bf16 %v6166, %v6166
        %v6293 = vpack.c.bf16 %v6167, %v6167
        %v6294 = vpack.c.bf16 %v6168, %v6168
        %v6295 = vpack.c.bf16 %v6169, %v6169
        %v6296 = vpack.c.bf16 %v6170, %v6170
        %v6297 = vpack.c.bf16 %v6171, %v6171
        %v6298 = vpack.c.bf16 %v6172, %v6172
        %v6299 = vpack.c.bf16 %v6173, %v6173
        %v6300 = vpack.c.bf16 %v6174, %v6174
        %v6301 = vpack.c.bf16 %v6175, %v6175
        %v6302 = vpack.c.bf16 %v6176, %v6176
        %v6303 = vpack.c.bf16 %v6177, %v6177
        %v6304 = vpack.c.bf16 %v6178, %v6178
        %v6305 = vpack.c.bf16 %v6179, %v6179
        %v6306 = vpack.c.bf16 %v6180, %v6180
        %v6307 = vpack.c.bf16 %v6181, %v6181
        %v6308 = vpack.c.bf16 %v6182, %v6182
        %v6309 = vpack.c.bf16 %v6183, %v6183
        %v6310 = vpack.c.bf16 %v6184, %v6184
        %v6311 = vpack.c.bf16 %v6185, %v6185
        %v6312 = vpack.c.bf16 %v6186, %v6186
        %v6313 = vpack.c.bf16 %v6187, %v6187
        %v6314 = vpack.c.bf16 %v6188, %v6188
        %v6315 = vpack.c.bf16 %v6189, %v6189
        %v6316 = vpack.c.bf16 %v6190, %v6190
        %v6317 = vpack.c.bf16 %v6191, %v6191
        %v6318 = vpack.c.bf16 %v6192, %v6192
        %v6319 = vpack.c.bf16 %v6193, %v6193
        %v6320 = vpack.c.bf16 %v6194, %v6194
        %v6321 = vpack.c.bf16 %v6195, %v6195
        %v6322 = vpack.c.bf16 %v6196, %v6196
        %v6323 = vpack.c.bf16 %v6197, %v6197
        %v6324 = vpack.c.bf16 %v6198, %v6198
        %v6325 = vpack.c.bf16 %v6199, %v6199
        %v6326 = vpack.c.bf16 %v6200, %v6200
        %v6327 = vpack.c.bf16 %v6201, %v6201
        %v6328 = vpack.c.bf16 %v6202, %v6202
        %v6329 = vpack.c.bf16 %v6203, %v6203
        %v6330 = vpack.c.bf16 %v6204, %v6204
        %v6331 = vpack.c.bf16 %v6205, %v6205
        %v6332 = vpack.c.bf16 %v6206, %v6206
        %v6333 = vpack.c.bf16 %v6207, %v6207
        %v6334 = vpack.c.bf16 %v6208, %v6208
        %v6335 = vpack.c.bf16 %v6209, %v6209
        %v6336 = vpack.c.bf16 %v6210, %v6210
        %v6337 = vpack.c.bf16 %v6211, %v6211
        %v6338 = vpack.c.bf16 %v6212, %v6212
        %v6339 = vpack.c.bf16 %v6213, %v6213
        %v6340 = vpack.c.bf16 %v6214, %v6214
        %v6341 = vpack.c.bf16 %v6215, %v6215
        %v6342 = vpack.c.bf16 %v6216, %v6216
        %v6343 = vpack.c.bf16 %v6217, %v6217
        %v6344 = vpack.c.bf16 %v6218, %v6218
        %v6345 = vpack.c.bf16 %v6219, %v6219
        %v6346 = vpack.c.bf16 %v6220, %v6220
        %v6347 = vpack.c.bf16 %v6221, %v6221
        %v6348 = vpack.c.bf16 %v6222, %v6222
        %v6349 = vpack.c.bf16 %v6223, %v6223
        %v6350 = vpack.c.bf16 %v6224, %v6224
        %v6351 = vpack.c.bf16 %v6225, %v6225
        %v6352 = vpack.c.bf16 %v6226, %v6226
        %v6353 = vpack.c.bf16 %v6227, %v6227
        %v6354 = vpack.c.bf16 %v6228, %v6228
        %v6355 = vpack.c.bf16 %v6229, %v6229
        %v6356 = vpack.c.bf16 %v6230, %v6230
        %v6357 = vpack.c.bf16 %v6231, %v6231
        %v6358 = vpack.c.bf16 %v6232, %v6232
        %v6359 = vpack.c.bf16 %v6233, %v6233
        %v6360 = vpack.c.bf16 %v6234, %v6234
        %v6361 = vpack.c.bf16 %v6235, %v6235
        %v6362 = vpack.c.bf16 %v6236, %v6236
        %v6363 = vpack.c.bf16 %v6237, %v6237
        %v6364 = vpack.c.bf16 %v6238, %v6238
        %v6365 = vpack.c.bf16 %v6239, %v6239
        %v6366 = vpack.c.bf16 %v6240, %v6240
        %v6367 = vpack.c.bf16 %v6241, %v6241
        %v6368 = vpack.c.bf16 %v6242, %v6242
        %v6369 = vpack.c.bf16 %v6243, %v6243
        %v6370 = vpack.c.bf16 %v6244, %v6244
        %v6371 = vpack.c.bf16 %v6245, %v6245
        %v6372 = vpack.c.bf16 %v6246, %v6246
        %v6373 = vpack.c.bf16 %v6247, %v6247
        %v6374 = vpack.c.bf16 %v6248, %v6248
        %v6375 = vpack.c.bf16 %v6249, %v6249
        %v6376 = vpack.c.bf16 %v6250, %v6250
        %v6377 = vpack.c.bf16 %v6251, %v6251
        %v6378 = vpack.c.bf16 %v6252, %v6252
        %v6379 = vpack.c.bf16 %v6253, %v6253
        %v6380 = vpack.c.bf16 %v6254, %v6254
        %v6381 = vpack.c.bf16 %v6255, %v6255
        %v6382 = vpack.c.bf16 %v6256, %v6256
        %v6383 = vpack.c.bf16 %v6257, %v6257
        %v6384 = vpack.c.bf16 %v6258, %v6258
        %v6385 = vpack.c.bf16 %v6259, %v6259
        %v6386 = vpack.c.bf16 %v6260, %v6260
        %v6387 = vpack.c.bf16 %v6261, %v6261
        %v6388 = vpack.c.bf16 %v6262, %v6262
        %v6389 = vpack.c.bf16 %v6263, %v6263
        %v6390 = vpack.c.bf16 %v6264, %v6264
        %v6391 = vpack.c.bf16 %v6265, %v6265
        %v6392 = vpack.c.bf16 %v6266, %v6266
        %v6393 = vpack.c.bf16 %v6267, %v6267
        %v6394 = vpack.c.bf16 %v6268, %v6268
        %v6395 = vpack.c.bf16 %v6269, %v6269
        %v6396 = vpack.c.bf16 %v6270, %v6270
        %v6397 = vpack.c.bf16 %v6271, %v6271
        %v6398 = vpack.c.bf16 %v6272, %v6272
        %v6525 = vcombine.low %v6273, %v6274
        %v6526 = vcombine.low %v6275, %v6276
        %v6527 = vcombine.low %v6277, %v6278
        %v6528 = vcombine.low %v6279, %v6280
        %v6530 = vunpack.c.l.s4 1966171168
        %v6531 = vunpack.c.0.s8 %v6530
        %v6532 = vlaneseq
        %v6533 = vshrl.u32 %v6532, 7
        %v6534 = vsub.s32 %v6531, %v6533
        %v6535 = vrot.slane %v6525, %v6534
        %v6537 = vunpack.c.l.s4 1966171168
        %v6538 = vunpack.c.0.s8 %v6537
        %v6539 = vlaneseq
        %v6540 = vshrl.u32 %v6539, 7
        %v6541 = vsub.s32 %v6538, %v6540
        %v6542 = vrot.slane %v6526, %v6541
        %v6544 = vunpack.c.l.s4 1966171168
        %v6545 = vunpack.c.0.s8 %v6544
        %v6546 = vlaneseq
        %v6547 = vshrl.u32 %v6546, 7
        %v6548 = vsub.s32 %v6545, %v6547
        %v6549 = vrot.slane %v6527, %v6548
        %v6551 = vunpack.c.l.s4 1966171168
        %v6552 = vunpack.c.0.s8 %v6551
        %v6553 = vlaneseq
        %v6554 = vshrl.u32 %v6553, 7
        %v6555 = vsub.s32 %v6552, %v6554
        %v6556 = vrot.slane %v6528, %v6555
        %v6557 = vcombine.low %v6535, %v6542
        %v6558 = vcombine.low %v6549, %v6556
        %v6560 = vunpack.c.l.s4 1966171168
        %v6561 = vunpack.c.0.s8 %v6560
        %v6562 = vlaneseq
        %v6563 = vshrl.u32 %v6562, 7
        %v6564 = vsub.s32 %v6561, %v6563
        %v6565 = vrot.slane %v6557, %v6564
        %v6567 = vunpack.c.l.s4 1966171168
        %v6568 = vunpack.c.0.s8 %v6567
        %v6569 = vlaneseq
        %v6570 = vshrl.u32 %v6569, 7
        %v6571 = vsub.s32 %v6568, %v6570
        %v6572 = vrot.slane %v6558, %v6571
        %v6573 = vcombine.low %v6565, %v6572
        %v6574 = vcombine.low %v6281, %v6282
        %v6575 = vcombine.low %v6283, %v6284
        %v6576 = vcombine.low %v6285, %v6286
        %v6577 = vcombine.low %v6287, %v6288
        %v6579 = vunpack.c.l.s4 1966171168
        %v6580 = vunpack.c.0.s8 %v6579
        %v6581 = vlaneseq
        %v6582 = vshrl.u32 %v6581, 7
        %v6583 = vsub.s32 %v6580, %v6582
        %v6584 = vrot.slane %v6574, %v6583
        %v6586 = vunpack.c.l.s4 1966171168
        %v6587 = vunpack.c.0.s8 %v6586
        %v6588 = vlaneseq
        %v6589 = vshrl.u32 %v6588, 7
        %v6590 = vsub.s32 %v6587, %v6589
        %v6591 = vrot.slane %v6575, %v6590
        %v6593 = vunpack.c.l.s4 1966171168
        %v6594 = vunpack.c.0.s8 %v6593
        %v6595 = vlaneseq
        %v6596 = vshrl.u32 %v6595, 7
        %v6597 = vsub.s32 %v6594, %v6596
        %v6598 = vrot.slane %v6576, %v6597
        %v6600 = vunpack.c.l.s4 1966171168
        %v6601 = vunpack.c.0.s8 %v6600
        %v6602 = vlaneseq
        %v6603 = vshrl.u32 %v6602, 7
        %v6604 = vsub.s32 %v6601, %v6603
        %v6605 = vrot.slane %v6577, %v6604
        %v6606 = vcombine.low %v6584, %v6591
        %v6607 = vcombine.low %v6598, %v6605
        %v6609 = vunpack.c.l.s4 1966171168
        %v6610 = vunpack.c.0.s8 %v6609
        %v6611 = vlaneseq
        %v6612 = vshrl.u32 %v6611, 7
        %v6613 = vsub.s32 %v6610, %v6612
        %v6614 = vrot.slane %v6606, %v6613
        %v6616 = vunpack.c.l.s4 1966171168
        %v6617 = vunpack.c.0.s8 %v6616
        %v6618 = vlaneseq
        %v6619 = vshrl.u32 %v6618, 7
        %v6620 = vsub.s32 %v6617, %v6619
        %v6621 = vrot.slane %v6607, %v6620
        %v6622 = vcombine.low %v6614, %v6621
        %v6623 = vcombine.low %v6289, %v6290
        %v6624 = vcombine.low %v6291, %v6292
        %v6625 = vcombine.low %v6293, %v6294
        %v6626 = vcombine.low %v6295, %v6296
        %v6628 = vunpack.c.l.s4 1966171168
        %v6629 = vunpack.c.0.s8 %v6628
        %v6630 = vlaneseq
        %v6631 = vshrl.u32 %v6630, 7
        %v6632 = vsub.s32 %v6629, %v6631
        %v6633 = vrot.slane %v6623, %v6632
        %v6635 = vunpack.c.l.s4 1966171168
        %v6636 = vunpack.c.0.s8 %v6635
        %v6637 = vlaneseq
        %v6638 = vshrl.u32 %v6637, 7
        %v6639 = vsub.s32 %v6636, %v6638
        %v6640 = vrot.slane %v6624, %v6639
        %v6642 = vunpack.c.l.s4 1966171168
        %v6643 = vunpack.c.0.s8 %v6642
        %v6644 = vlaneseq
        %v6645 = vshrl.u32 %v6644, 7
        %v6646 = vsub.s32 %v6643, %v6645
        %v6647 = vrot.slane %v6625, %v6646
        %v6649 = vunpack.c.l.s4 1966171168
        %v6650 = vunpack.c.0.s8 %v6649
        %v6651 = vlaneseq
        %v6652 = vshrl.u32 %v6651, 7
        %v6653 = vsub.s32 %v6650, %v6652
        %v6654 = vrot.slane %v6626, %v6653
        %v6655 = vcombine.low %v6633, %v6640
        %v6656 = vcombine.low %v6647, %v6654
        %v6658 = vunpack.c.l.s4 1966171168
        %v6659 = vunpack.c.0.s8 %v6658
        %v6660 = vlaneseq
        %v6661 = vshrl.u32 %v6660, 7
        %v6662 = vsub.s32 %v6659, %v6661
        %v6663 = vrot.slane %v6655, %v6662
        %v6665 = vunpack.c.l.s4 1966171168
        %v6666 = vunpack.c.0.s8 %v6665
        %v6667 = vlaneseq
        %v6668 = vshrl.u32 %v6667, 7
        %v6669 = vsub.s32 %v6666, %v6668
        %v6670 = vrot.slane %v6656, %v6669
        %v6671 = vcombine.low %v6663, %v6670
        %v6672 = vcombine.low %v6297, %v6298
        %v6673 = vcombine.low %v6299, %v6300
        %v6674 = vcombine.low %v6301, %v6302
        %v6675 = vcombine.low %v6303, %v6304
        %v6677 = vunpack.c.l.s4 1966171168
        %v6678 = vunpack.c.0.s8 %v6677
        %v6679 = vlaneseq
        %v6680 = vshrl.u32 %v6679, 7
        %v6681 = vsub.s32 %v6678, %v6680
        %v6682 = vrot.slane %v6672, %v6681
        %v6684 = vunpack.c.l.s4 1966171168
        %v6685 = vunpack.c.0.s8 %v6684
        %v6686 = vlaneseq
        %v6687 = vshrl.u32 %v6686, 7
        %v6688 = vsub.s32 %v6685, %v6687
        %v6689 = vrot.slane %v6673, %v6688
        %v6691 = vunpack.c.l.s4 1966171168
        %v6692 = vunpack.c.0.s8 %v6691
        %v6693 = vlaneseq
        %v6694 = vshrl.u32 %v6693, 7
        %v6695 = vsub.s32 %v6692, %v6694
        %v6696 = vrot.slane %v6674, %v6695
        %v6698 = vunpack.c.l.s4 1966171168
        %v6699 = vunpack.c.0.s8 %v6698
        %v6700 = vlaneseq
        %v6701 = vshrl.u32 %v6700, 7
        %v6702 = vsub.s32 %v6699, %v6701
        %v6703 = vrot.slane %v6675, %v6702
        %v6704 = vcombine.low %v6682, %v6689
        %v6705 = vcombine.low %v6696, %v6703
        %v6707 = vunpack.c.l.s4 1966171168
        %v6708 = vunpack.c.0.s8 %v6707
        %v6709 = vlaneseq
        %v6710 = vshrl.u32 %v6709, 7
        %v6711 = vsub.s32 %v6708, %v6710
        %v6712 = vrot.slane %v6704, %v6711
        %v6714 = vunpack.c.l.s4 1966171168
        %v6715 = vunpack.c.0.s8 %v6714
        %v6716 = vlaneseq
        %v6717 = vshrl.u32 %v6716, 7
        %v6718 = vsub.s32 %v6715, %v6717
        %v6719 = vrot.slane %v6705, %v6718
        %v6720 = vcombine.low %v6712, %v6719
        %v6721 = vcombine.low %v6305, %v6306
        %v6722 = vcombine.low %v6307, %v6308
        %v6723 = vcombine.low %v6309, %v6310
        %v6724 = vcombine.low %v6311, %v6312
        %v6726 = vunpack.c.l.s4 1966171168
        %v6727 = vunpack.c.0.s8 %v6726
        %v6728 = vlaneseq
        %v6729 = vshrl.u32 %v6728, 7
        %v6730 = vsub.s32 %v6727, %v6729
        %v6731 = vrot.slane %v6721, %v6730
        %v6733 = vunpack.c.l.s4 1966171168
        %v6734 = vunpack.c.0.s8 %v6733
        %v6735 = vlaneseq
        %v6736 = vshrl.u32 %v6735, 7
        %v6737 = vsub.s32 %v6734, %v6736
        %v6738 = vrot.slane %v6722, %v6737
        %v6740 = vunpack.c.l.s4 1966171168
        %v6741 = vunpack.c.0.s8 %v6740
        %v6742 = vlaneseq
        %v6743 = vshrl.u32 %v6742, 7
        %v6744 = vsub.s32 %v6741, %v6743
        %v6745 = vrot.slane %v6723, %v6744
        %v6747 = vunpack.c.l.s4 1966171168
        %v6748 = vunpack.c.0.s8 %v6747
        %v6749 = vlaneseq
        %v6750 = vshrl.u32 %v6749, 7
        %v6751 = vsub.s32 %v6748, %v6750
        %v6752 = vrot.slane %v6724, %v6751
        %v6753 = vcombine.low %v6731, %v6738
        %v6754 = vcombine.low %v6745, %v6752
        %v6756 = vunpack.c.l.s4 1966171168
        %v6757 = vunpack.c.0.s8 %v6756
        %v6758 = vlaneseq
        %v6759 = vshrl.u32 %v6758, 7
        %v6760 = vsub.s32 %v6757, %v6759
        %v6761 = vrot.slane %v6753, %v6760
        %v6763 = vunpack.c.l.s4 1966171168
        %v6764 = vunpack.c.0.s8 %v6763
        %v6765 = vlaneseq
        %v6766 = vshrl.u32 %v6765, 7
        %v6767 = vsub.s32 %v6764, %v6766
        %v6768 = vrot.slane %v6754, %v6767
        %v6769 = vcombine.low %v6761, %v6768
        %v6770 = vcombine.low %v6313, %v6314
        %v6771 = vcombine.low %v6315, %v6316
        %v6772 = vcombine.low %v6317, %v6318
        %v6773 = vcombine.low %v6319, %v6320
        %v6775 = vunpack.c.l.s4 1966171168
        %v6776 = vunpack.c.0.s8 %v6775
        %v6777 = vlaneseq
        %v6778 = vshrl.u32 %v6777, 7
        %v6779 = vsub.s32 %v6776, %v6778
        %v6780 = vrot.slane %v6770, %v6779
        %v6782 = vunpack.c.l.s4 1966171168
        %v6783 = vunpack.c.0.s8 %v6782
        %v6784 = vlaneseq
        %v6785 = vshrl.u32 %v6784, 7
        %v6786 = vsub.s32 %v6783, %v6785
        %v6787 = vrot.slane %v6771, %v6786
        %v6789 = vunpack.c.l.s4 1966171168
        %v6790 = vunpack.c.0.s8 %v6789
        %v6791 = vlaneseq
        %v6792 = vshrl.u32 %v6791, 7
        %v6793 = vsub.s32 %v6790, %v6792
        %v6794 = vrot.slane %v6772, %v6793
        %v6796 = vunpack.c.l.s4 1966171168
        %v6797 = vunpack.c.0.s8 %v6796
        %v6798 = vlaneseq
        %v6799 = vshrl.u32 %v6798, 7
        %v6800 = vsub.s32 %v6797, %v6799
        %v6801 = vrot.slane %v6773, %v6800
        %v6802 = vcombine.low %v6780, %v6787
        %v6803 = vcombine.low %v6794, %v6801
        %v6805 = vunpack.c.l.s4 1966171168
        %v6806 = vunpack.c.0.s8 %v6805
        %v6807 = vlaneseq
        %v6808 = vshrl.u32 %v6807, 7
        %v6809 = vsub.s32 %v6806, %v6808
        %v6810 = vrot.slane %v6802, %v6809
        %v6812 = vunpack.c.l.s4 1966171168
        %v6813 = vunpack.c.0.s8 %v6812
        %v6814 = vlaneseq
        %v6815 = vshrl.u32 %v6814, 7
        %v6816 = vsub.s32 %v6813, %v6815
        %v6817 = vrot.slane %v6803, %v6816
        %v6818 = vcombine.low %v6810, %v6817
        %v6819 = vcombine.low %v6321, %v6322
        %v6820 = vcombine.low %v6323, %v6324
        %v6821 = vcombine.low %v6325, %v6326
        %v6822 = vcombine.low %v6327, %v6328
        %v6824 = vunpack.c.l.s4 1966171168
        %v6825 = vunpack.c.0.s8 %v6824
        %v6826 = vlaneseq
        %v6827 = vshrl.u32 %v6826, 7
        %v6828 = vsub.s32 %v6825, %v6827
        %v6829 = vrot.slane %v6819, %v6828
        %v6831 = vunpack.c.l.s4 1966171168
        %v6832 = vunpack.c.0.s8 %v6831
        %v6833 = vlaneseq
        %v6834 = vshrl.u32 %v6833, 7
        %v6835 = vsub.s32 %v6832, %v6834
        %v6836 = vrot.slane %v6820, %v6835
        %v6838 = vunpack.c.l.s4 1966171168
        %v6839 = vunpack.c.0.s8 %v6838
        %v6840 = vlaneseq
        %v6841 = vshrl.u32 %v6840, 7
        %v6842 = vsub.s32 %v6839, %v6841
        %v6843 = vrot.slane %v6821, %v6842
        %v6845 = vunpack.c.l.s4 1966171168
        %v6846 = vunpack.c.0.s8 %v6845
        %v6847 = vlaneseq
        %v6848 = vshrl.u32 %v6847, 7
        %v6849 = vsub.s32 %v6846, %v6848
        %v6850 = vrot.slane %v6822, %v6849
        %v6851 = vcombine.low %v6829, %v6836
        %v6852 = vcombine.low %v6843, %v6850
        %v6854 = vunpack.c.l.s4 1966171168
        %v6855 = vunpack.c.0.s8 %v6854
        %v6856 = vlaneseq
        %v6857 = vshrl.u32 %v6856, 7
        %v6858 = vsub.s32 %v6855, %v6857
        %v6859 = vrot.slane %v6851, %v6858
        %v6861 = vunpack.c.l.s4 1966171168
        %v6862 = vunpack.c.0.s8 %v6861
        %v6863 = vlaneseq
        %v6864 = vshrl.u32 %v6863, 7
        %v6865 = vsub.s32 %v6862, %v6864
        %v6866 = vrot.slane %v6852, %v6865
        %v6867 = vcombine.low %v6859, %v6866
        %v6868 = vcombine.low %v6329, %v6330
        %v6869 = vcombine.low %v6331, %v6332
        %v6870 = vcombine.low %v6333, %v6334
        %v6871 = vcombine.low %v6335, %v6336
        %v6873 = vunpack.c.l.s4 1966171168
        %v6874 = vunpack.c.0.s8 %v6873
        %v6875 = vlaneseq
        %v6876 = vshrl.u32 %v6875, 7
        %v6877 = vsub.s32 %v6874, %v6876
        %v6878 = vrot.slane %v6868, %v6877
        %v6880 = vunpack.c.l.s4 1966171168
        %v6881 = vunpack.c.0.s8 %v6880
        %v6882 = vlaneseq
        %v6883 = vshrl.u32 %v6882, 7
        %v6884 = vsub.s32 %v6881, %v6883
        %v6885 = vrot.slane %v6869, %v6884
        %v6887 = vunpack.c.l.s4 1966171168
        %v6888 = vunpack.c.0.s8 %v6887
        %v6889 = vlaneseq
        %v6890 = vshrl.u32 %v6889, 7
        %v6891 = vsub.s32 %v6888, %v6890
        %v6892 = vrot.slane %v6870, %v6891
        %v6894 = vunpack.c.l.s4 1966171168
        %v6895 = vunpack.c.0.s8 %v6894
        %v6896 = vlaneseq
        %v6897 = vshrl.u32 %v6896, 7
        %v6898 = vsub.s32 %v6895, %v6897
        %v6899 = vrot.slane %v6871, %v6898
        %v6900 = vcombine.low %v6878, %v6885
        %v6901 = vcombine.low %v6892, %v6899
        %v6903 = vunpack.c.l.s4 1966171168
        %v6904 = vunpack.c.0.s8 %v6903
        %v6905 = vlaneseq
        %v6906 = vshrl.u32 %v6905, 7
        %v6907 = vsub.s32 %v6904, %v6906
        %v6908 = vrot.slane %v6900, %v6907
        %v6910 = vunpack.c.l.s4 1966171168
        %v6911 = vunpack.c.0.s8 %v6910
        %v6912 = vlaneseq
        %v6913 = vshrl.u32 %v6912, 7
        %v6914 = vsub.s32 %v6911, %v6913
        %v6915 = vrot.slane %v6901, %v6914
        %v6916 = vcombine.low %v6908, %v6915
        %v6917 = vcombine.low %v6337, %v6338
        %v6918 = vcombine.low %v6339, %v6340
        %v6919 = vcombine.low %v6341, %v6342
        %v6920 = vcombine.low %v6343, %v6344
        %v6922 = vunpack.c.l.s4 1966171168
        %v6923 = vunpack.c.0.s8 %v6922
        %v6924 = vlaneseq
        %v6925 = vshrl.u32 %v6924, 7
        %v6926 = vsub.s32 %v6923, %v6925
        %v6927 = vrot.slane %v6917, %v6926
        %v6929 = vunpack.c.l.s4 1966171168
        %v6930 = vunpack.c.0.s8 %v6929
        %v6931 = vlaneseq
        %v6932 = vshrl.u32 %v6931, 7
        %v6933 = vsub.s32 %v6930, %v6932
        %v6934 = vrot.slane %v6918, %v6933
        %v6936 = vunpack.c.l.s4 1966171168
        %v6937 = vunpack.c.0.s8 %v6936
        %v6938 = vlaneseq
        %v6939 = vshrl.u32 %v6938, 7
        %v6940 = vsub.s32 %v6937, %v6939
        %v6941 = vrot.slane %v6919, %v6940
        %v6943 = vunpack.c.l.s4 1966171168
        %v6944 = vunpack.c.0.s8 %v6943
        %v6945 = vlaneseq
        %v6946 = vshrl.u32 %v6945, 7
        %v6947 = vsub.s32 %v6944, %v6946
        %v6948 = vrot.slane %v6920, %v6947
        %v6949 = vcombine.low %v6927, %v6934
        %v6950 = vcombine.low %v6941, %v6948
        %v6952 = vunpack.c.l.s4 1966171168
        %v6953 = vunpack.c.0.s8 %v6952
        %v6954 = vlaneseq
        %v6955 = vshrl.u32 %v6954, 7
        %v6956 = vsub.s32 %v6953, %v6955
        %v6957 = vrot.slane %v6949, %v6956
        %v6959 = vunpack.c.l.s4 1966171168
        %v6960 = vunpack.c.0.s8 %v6959
        %v6961 = vlaneseq
        %v6962 = vshrl.u32 %v6961, 7
        %v6963 = vsub.s32 %v6960, %v6962
        %v6964 = vrot.slane %v6950, %v6963
        %v6965 = vcombine.low %v6957, %v6964
        %v6966 = vcombine.low %v6345, %v6346
        %v6967 = vcombine.low %v6347, %v6348
        %v6968 = vcombine.low %v6349, %v6350
        %v6969 = vcombine.low %v6351, %v6352
        %v6971 = vunpack.c.l.s4 1966171168
        %v6972 = vunpack.c.0.s8 %v6971
        %v6973 = vlaneseq
        %v6974 = vshrl.u32 %v6973, 7
        %v6975 = vsub.s32 %v6972, %v6974
        %v6976 = vrot.slane %v6966, %v6975
        %v6978 = vunpack.c.l.s4 1966171168
        %v6979 = vunpack.c.0.s8 %v6978
        %v6980 = vlaneseq
        %v6981 = vshrl.u32 %v6980, 7
        %v6982 = vsub.s32 %v6979, %v6981
        %v6983 = vrot.slane %v6967, %v6982
        %v6985 = vunpack.c.l.s4 1966171168
        %v6986 = vunpack.c.0.s8 %v6985
        %v6987 = vlaneseq
        %v6988 = vshrl.u32 %v6987, 7
        %v6989 = vsub.s32 %v6986, %v6988
        %v6990 = vrot.slane %v6968, %v6989
        %v6992 = vunpack.c.l.s4 1966171168
        %v6993 = vunpack.c.0.s8 %v6992
        %v6994 = vlaneseq
        %v6995 = vshrl.u32 %v6994, 7
        %v6996 = vsub.s32 %v6993, %v6995
        %v6997 = vrot.slane %v6969, %v6996
        %v6998 = vcombine.low %v6976, %v6983
        %v6999 = vcombine.low %v6990, %v6997
        %v7001 = vunpack.c.l.s4 1966171168
        %v7002 = vunpack.c.0.s8 %v7001
        %v7003 = vlaneseq
        %v7004 = vshrl.u32 %v7003, 7
        %v7005 = vsub.s32 %v7002, %v7004
        %v7006 = vrot.slane %v6998, %v7005
        %v7008 = vunpack.c.l.s4 1966171168
        %v7009 = vunpack.c.0.s8 %v7008
        %v7010 = vlaneseq
        %v7011 = vshrl.u32 %v7010, 7
        %v7012 = vsub.s32 %v7009, %v7011
        %v7013 = vrot.slane %v6999, %v7012
        %v7014 = vcombine.low %v7006, %v7013
        %v7015 = vcombine.low %v6353, %v6354
        %v7016 = vcombine.low %v6355, %v6356
        %v7017 = vcombine.low %v6357, %v6358
        %v7018 = vcombine.low %v6359, %v6360
        %v7020 = vunpack.c.l.s4 1966171168
        %v7021 = vunpack.c.0.s8 %v7020
        %v7022 = vlaneseq
        %v7023 = vshrl.u32 %v7022, 7
        %v7024 = vsub.s32 %v7021, %v7023
        %v7025 = vrot.slane %v7015, %v7024
        %v7027 = vunpack.c.l.s4 1966171168
        %v7028 = vunpack.c.0.s8 %v7027
        %v7029 = vlaneseq
        %v7030 = vshrl.u32 %v7029, 7
        %v7031 = vsub.s32 %v7028, %v7030
        %v7032 = vrot.slane %v7016, %v7031
        %v7034 = vunpack.c.l.s4 1966171168
        %v7035 = vunpack.c.0.s8 %v7034
        %v7036 = vlaneseq
        %v7037 = vshrl.u32 %v7036, 7
        %v7038 = vsub.s32 %v7035, %v7037
        %v7039 = vrot.slane %v7017, %v7038
        %v7041 = vunpack.c.l.s4 1966171168
        %v7042 = vunpack.c.0.s8 %v7041
        %v7043 = vlaneseq
        %v7044 = vshrl.u32 %v7043, 7
        %v7045 = vsub.s32 %v7042, %v7044
        %v7046 = vrot.slane %v7018, %v7045
        %v7047 = vcombine.low %v7025, %v7032
        %v7048 = vcombine.low %v7039, %v7046
        %v7050 = vunpack.c.l.s4 1966171168
        %v7051 = vunpack.c.0.s8 %v7050
        %v7052 = vlaneseq
        %v7053 = vshrl.u32 %v7052, 7
        %v7054 = vsub.s32 %v7051, %v7053
        %v7055 = vrot.slane %v7047, %v7054
        %v7057 = vunpack.c.l.s4 1966171168
        %v7058 = vunpack.c.0.s8 %v7057
        %v7059 = vlaneseq
        %v7060 = vshrl.u32 %v7059, 7
        %v7061 = vsub.s32 %v7058, %v7060
        %v7062 = vrot.slane %v7048, %v7061
        %v7063 = vcombine.low %v7055, %v7062
        %v7064 = vcombine.low %v6361, %v6362
        %v7065 = vcombine.low %v6363, %v6364
        %v7066 = vcombine.low %v6365, %v6366
        %v7067 = vcombine.low %v6367, %v6368
        %v7069 = vunpack.c.l.s4 1966171168
        %v7070 = vunpack.c.0.s8 %v7069
        %v7071 = vlaneseq
        %v7072 = vshrl.u32 %v7071, 7
        %v7073 = vsub.s32 %v7070, %v7072
        %v7074 = vrot.slane %v7064, %v7073
        %v7076 = vunpack.c.l.s4 1966171168
        %v7077 = vunpack.c.0.s8 %v7076
        %v7078 = vlaneseq
        %v7079 = vshrl.u32 %v7078, 7
        %v7080 = vsub.s32 %v7077, %v7079
        %v7081 = vrot.slane %v7065, %v7080
        %v7083 = vunpack.c.l.s4 1966171168
        %v7084 = vunpack.c.0.s8 %v7083
        %v7085 = vlaneseq
        %v7086 = vshrl.u32 %v7085, 7
        %v7087 = vsub.s32 %v7084, %v7086
        %v7088 = vrot.slane %v7066, %v7087
        %v7090 = vunpack.c.l.s4 1966171168
        %v7091 = vunpack.c.0.s8 %v7090
        %v7092 = vlaneseq
        %v7093 = vshrl.u32 %v7092, 7
        %v7094 = vsub.s32 %v7091, %v7093
        %v7095 = vrot.slane %v7067, %v7094
        %v7096 = vcombine.low %v7074, %v7081
        %v7097 = vcombine.low %v7088, %v7095
        %v7099 = vunpack.c.l.s4 1966171168
        %v7100 = vunpack.c.0.s8 %v7099
        %v7101 = vlaneseq
        %v7102 = vshrl.u32 %v7101, 7
        %v7103 = vsub.s32 %v7100, %v7102
        %v7104 = vrot.slane %v7096, %v7103
        %v7106 = vunpack.c.l.s4 1966171168
        %v7107 = vunpack.c.0.s8 %v7106
        %v7108 = vlaneseq
        %v7109 = vshrl.u32 %v7108, 7
        %v7110 = vsub.s32 %v7107, %v7109
        %v7111 = vrot.slane %v7097, %v7110
        %v7112 = vcombine.low %v7104, %v7111
        %v7113 = vcombine.low %v6369, %v6370
        %v7114 = vcombine.low %v6371, %v6372
        %v7115 = vcombine.low %v6373, %v6374
        %v7116 = vcombine.low %v6375, %v6376
        %v7118 = vunpack.c.l.s4 1966171168
        %v7119 = vunpack.c.0.s8 %v7118
        %v7120 = vlaneseq
        %v7121 = vshrl.u32 %v7120, 7
        %v7122 = vsub.s32 %v7119, %v7121
        %v7123 = vrot.slane %v7113, %v7122
        %v7125 = vunpack.c.l.s4 1966171168
        %v7126 = vunpack.c.0.s8 %v7125
        %v7127 = vlaneseq
        %v7128 = vshrl.u32 %v7127, 7
        %v7129 = vsub.s32 %v7126, %v7128
        %v7130 = vrot.slane %v7114, %v7129
        %v7132 = vunpack.c.l.s4 1966171168
        %v7133 = vunpack.c.0.s8 %v7132
        %v7134 = vlaneseq
        %v7135 = vshrl.u32 %v7134, 7
        %v7136 = vsub.s32 %v7133, %v7135
        %v7137 = vrot.slane %v7115, %v7136
        %v7139 = vunpack.c.l.s4 1966171168
        %v7140 = vunpack.c.0.s8 %v7139
        %v7141 = vlaneseq
        %v7142 = vshrl.u32 %v7141, 7
        %v7143 = vsub.s32 %v7140, %v7142
        %v7144 = vrot.slane %v7116, %v7143
        %v7145 = vcombine.low %v7123, %v7130
        %v7146 = vcombine.low %v7137, %v7144
        %v7148 = vunpack.c.l.s4 1966171168
        %v7149 = vunpack.c.0.s8 %v7148
        %v7150 = vlaneseq
        %v7151 = vshrl.u32 %v7150, 7
        %v7152 = vsub.s32 %v7149, %v7151
        %v7153 = vrot.slane %v7145, %v7152
        %v7155 = vunpack.c.l.s4 1966171168
        %v7156 = vunpack.c.0.s8 %v7155
        %v7157 = vlaneseq
        %v7158 = vshrl.u32 %v7157, 7
        %v7159 = vsub.s32 %v7156, %v7158
        %v7160 = vrot.slane %v7146, %v7159
        %v7161 = vcombine.low %v7153, %v7160
        %v7162 = vcombine.low %v6377, %v6378
        %v7163 = vcombine.low %v6379, %v6380
        %v7164 = vcombine.low %v6381, %v6382
        %v7165 = vcombine.low %v6383, %v6384
        %v7167 = vunpack.c.l.s4 1966171168
        %v7168 = vunpack.c.0.s8 %v7167
        %v7169 = vlaneseq
        %v7170 = vshrl.u32 %v7169, 7
        %v7171 = vsub.s32 %v7168, %v7170
        %v7172 = vrot.slane %v7162, %v7171
        %v7174 = vunpack.c.l.s4 1966171168
        %v7175 = vunpack.c.0.s8 %v7174
        %v7176 = vlaneseq
        %v7177 = vshrl.u32 %v7176, 7
        %v7178 = vsub.s32 %v7175, %v7177
        %v7179 = vrot.slane %v7163, %v7178
        %v7181 = vunpack.c.l.s4 1966171168
        %v7182 = vunpack.c.0.s8 %v7181
        %v7183 = vlaneseq
        %v7184 = vshrl.u32 %v7183, 7
        %v7185 = vsub.s32 %v7182, %v7184
        %v7186 = vrot.slane %v7164, %v7185
        %v7188 = vunpack.c.l.s4 1966171168
        %v7189 = vunpack.c.0.s8 %v7188
        %v7190 = vlaneseq
        %v7191 = vshrl.u32 %v7190, 7
        %v7192 = vsub.s32 %v7189, %v7191
        %v7193 = vrot.slane %v7165, %v7192
        %v7194 = vcombine.low %v7172, %v7179
        %v7195 = vcombine.low %v7186, %v7193
        %v7197 = vunpack.c.l.s4 1966171168
        %v7198 = vunpack.c.0.s8 %v7197
        %v7199 = vlaneseq
        %v7200 = vshrl.u32 %v7199, 7
        %v7201 = vsub.s32 %v7198, %v7200
        %v7202 = vrot.slane %v7194, %v7201
        %v7204 = vunpack.c.l.s4 1966171168
        %v7205 = vunpack.c.0.s8 %v7204
        %v7206 = vlaneseq
        %v7207 = vshrl.u32 %v7206, 7
        %v7208 = vsub.s32 %v7205, %v7207
        %v7209 = vrot.slane %v7195, %v7208
        %v7210 = vcombine.low %v7202, %v7209
        %v7211 = vcombine.low %v6385, %v6386
        %v7212 = vcombine.low %v6387, %v6388
        %v7213 = vcombine.low %v6389, %v6390
        %v7214 = vcombine.low %v6391, %v6392
        %v7216 = vunpack.c.l.s4 1966171168
        %v7217 = vunpack.c.0.s8 %v7216
        %v7218 = vlaneseq
        %v7219 = vshrl.u32 %v7218, 7
        %v7220 = vsub.s32 %v7217, %v7219
        %v7221 = vrot.slane %v7211, %v7220
        %v7223 = vunpack.c.l.s4 1966171168
        %v7224 = vunpack.c.0.s8 %v7223
        %v7225 = vlaneseq
        %v7226 = vshrl.u32 %v7225, 7
        %v7227 = vsub.s32 %v7224, %v7226
        %v7228 = vrot.slane %v7212, %v7227
        %v7230 = vunpack.c.l.s4 1966171168
        %v7231 = vunpack.c.0.s8 %v7230
        %v7232 = vlaneseq
        %v7233 = vshrl.u32 %v7232, 7
        %v7234 = vsub.s32 %v7231, %v7233
        %v7235 = vrot.slane %v7213, %v7234
        %v7237 = vunpack.c.l.s4 1966171168
        %v7238 = vunpack.c.0.s8 %v7237
        %v7239 = vlaneseq
        %v7240 = vshrl.u32 %v7239, 7
        %v7241 = vsub.s32 %v7238, %v7240
        %v7242 = vrot.slane %v7214, %v7241
        %v7243 = vcombine.low %v7221, %v7228
        %v7244 = vcombine.low %v7235, %v7242
        %v7246 = vunpack.c.l.s4 1966171168
        %v7247 = vunpack.c.0.s8 %v7246
        %v7248 = vlaneseq
        %v7249 = vshrl.u32 %v7248, 7
        %v7250 = vsub.s32 %v7247, %v7249
        %v7251 = vrot.slane %v7243, %v7250
        %v7253 = vunpack.c.l.s4 1966171168
        %v7254 = vunpack.c.0.s8 %v7253
        %v7255 = vlaneseq
        %v7256 = vshrl.u32 %v7255, 7
        %v7257 = vsub.s32 %v7254, %v7256
        %v7258 = vrot.slane %v7244, %v7257
        %v7259 = vcombine.low %v7251, %v7258
        %v7260 = vcombine.low %v6393, %v6394
        %v7261 = vcombine.low %v6395, %v6396
        %v7262 = vcombine.low %v6397, %v6398
        %v7264 = vunpack.c.l.s4 1966171168
        %v7265 = vunpack.c.0.s8 %v7264
        %v7266 = vlaneseq
        %v7267 = vshrl.u32 %v7266, 7
        %v7268 = vsub.s32 %v7265, %v7267
        %v7269 = vrot.slane %v7260, %v7268
        %v7271 = vunpack.c.l.s4 1966171168
        %v7272 = vunpack.c.0.s8 %v7271
        %v7273 = vlaneseq
        %v7274 = vshrl.u32 %v7273, 7
        %v7275 = vsub.s32 %v7272, %v7274
        %v7276 = vrot.slane %v7261, %v7275
        %v7278 = vunpack.c.l.s4 1966171168
        %v7279 = vunpack.c.0.s8 %v7278
        %v7280 = vlaneseq
        %v7281 = vshrl.u32 %v7280, 7
        %v7282 = vsub.s32 %v7279, %v7281
        %v7283 = vrot.slane %v7262, %v7282
        %v7284 = vcombine.low %v7269, %v7276
        %v7286 = vunpack.c.l.s4 1966171168
        %v7287 = vunpack.c.0.s8 %v7286
        %v7288 = vlaneseq
        %v7289 = vshrl.u32 %v7288, 7
        %v7290 = vsub.s32 %v7287, %v7289
        %v7291 = vrot.slane %v7284, %v7290
        %v7293 = vunpack.c.l.s4 1966171168
        %v7294 = vunpack.c.0.s8 %v7293
        %v7295 = vlaneseq
        %v7296 = vshrl.u32 %v7295, 7
        %v7297 = vsub.s32 %v7294, %v7296
        %v7298 = vrot.slane %v7283, %v7297
        %v7299 = vcombine.low %v7291, %v7298
        %7316 = vst [vmem:[%s385] sm:$0xff] %v6573
        %7317 = vst [vmem:[%s385 + $0x8] sm:$0xff] %v6622
        %7318 = vst [vmem:[%s385 + $0x10] sm:$0xff] %v6671
        %7319 = vst [vmem:[%s385 + $0x18] sm:$0xff] %v6720
        %7320 = vst [vmem:[%s385 + $0x20] sm:$0xff] %v6769
        %7321 = vst [vmem:[%s385 + $0x28] sm:$0xff] %v6818
        %7322 = vst [vmem:[%s385 + $0x30] sm:$0xff] %v6867
        %7323 = vst [vmem:[%s385 + $0x38] sm:$0xff] %v6916
        %7324 = vst [vmem:[%s385 + $0x40] sm:$0xff] %v6965
        %7325 = vst [vmem:[%s385 + $0x48] sm:$0xff] %v7014
        %7326 = vst [vmem:[%s385 + $0x50] sm:$0xff] %v7063
        %7327 = vst [vmem:[%s385 + $0x58] sm:$0xff] %v7112
        %7328 = vst [vmem:[%s385 + $0x60] sm:$0xff] %v7161
        %7329 = vst [vmem:[%s385 + $0x68] sm:$0xff] %v7210
        %7330 = vst [vmem:[%s385 + $0x70] sm:$0xff] %v7259
        %7331 = vst [vmem:[%s385 + $0x78] sm:$0x3f] %v7299
        %s7332 = smul.u32 126, %s25
        %p7333 = scmp.lt.s32.totalorder %s7332, 251
        %s7334 = scalar_select %p7333, %s7332, 251
        %s7335 = scalar_lea.vmem %s6, %s7334
        // Predicated region
        $region69: #{decoder_forward.2} parent=43 // pred_check
          %p7336 = pneg %p184
        $region70: #{decoder_forward.2} parent=43 // pred_check_branch
          %7338 = sbr.rel (%p7336) target = $region72
        $region71: #{decoder_forward.2} parent=43 // pred_region
          %s7339 = smul.u32 126, %s25
        $region72: #{decoder_forward.2} parent=43 // pred_fallthru
          _
      $region44: #{decoder_forward.2} parent=5 // pred_fallthru
        _
      %p7340 = scmp.le.s32.totalorder 2, %s20
      // Predicated region
      $region73: #{decoder_forward.2} parent=5 // pred_check
        %p7341 = pneg %p7340
      $region74: #{decoder_forward.2} parent=5 // pred_check_branch
        %7343 = sbr.rel (%p7341) target = $region76
      $region75: #{decoder_forward.2} parent=5 // pred_region
        %s7344 = ssub.s32 %s20, 2
        // Predicated region
        $region77: #{decoder_forward.2} parent=75 // pred_check
          %p7345 = pneg %p190
        $region78: #{decoder_forward.2} parent=75 // pred_check_branch
          %7347 = sbr.rel (%p7345) target = $region80
        $region79: #{decoder_forward.2} parent=75 // pred_region
          %s7348 = smul.u32 126, %s26
          %p7349 = scmp.lt.s32.totalorder %s7348, 251
          %s7350 = scalar_select %p7349, %s7348, 251
          %s7351 = scalar_lea.vmem %s6, %s7350
        $region80: #{decoder_forward.2} parent=75 // pred_fallthru
          _
      $region76: #{decoder_forward.2} parent=5 // pred_fallthru
        _
    $region6: #{decoder_forward.2} parent=1 // loop_footer
      %s24 = sadd.s32 1, %s20
    $region7: #{decoder_forward.2} parent=1 // loop_footer_branch
      %19 = sbr.rel target = $region3
    $region8: #{decoder_forward.2} parent=1 // loop_exit
      _
    %7352 = vsyncpa [#allocation3], 1
    %s7353 = scalar_lea.sflag [#allocation3], 1
    %7354 = vsyncpa %s7353, 1
    %7355 = vsyncpa [#allocation5], 1
    %7356 = vsyncpa [#allocation8], 1
    %s7357 = scalar_lea.sflag [#allocation8], 1
    %7358 = vsyncpa %s7357, 1
    %7359 = vsyncpa [#allocation11], 1
    %s7360 = scalar_lea.sflag [#allocation11], 1
    %7361 = vsyncpa %s7360, 1

</llo_original>
